<compile_context>
chip_gen: v7x
topology: tpu7x:2x2x1
jax: 0.10.0
libtpu: 0.0.40
codegen_flags: <defaults>
</compile_context>

<pallas_src>
import numpy as np
import jax
import jax.numpy as jnp
from jax.experimental import pallas as pl
from jax.experimental.pallas import tpu as pltpu

EPS = 1e-5  # PyTorch InstanceNorm2d default eps


# --------------------------------------------------------------------------- host-side weight prep
def _freq_sizes(F0, k1f, k2f, scale):
    G = [(F0 - k1f) // 2 + 1]
    for _ in range(scale):
        G.append((G[-1] - k2f) // 2 + 1)
    return G


def _conv_tap_toeplitz(W, fin, fout, stride, fin_valid=None):
    """Conv2d weight (Co, Ci, kt, kf), stride (1, stride) over (T, F) -> per-time-tap
    block-Toeplitz matrices (kt, Co*fout, Ci*fin) acting on channel-major (Ci*fin) rows."""
    W = np.asarray(W, np.float32)
    Co, Ci, kt, kf = W.shape
    if fin_valid is None:
        fin_valid = fin
    # every referenced input frequency must be a real bin, never the zero padding
    assert stride * (fout - 1) + kf - 1 < fin_valid, "conv taps would read padded freq rows"
    M = np.zeros((kt, Co * fout, Ci * fin), np.float32)
    for co in range(Co):
        for fo in range(fout):
            r = co * fout + fo
            for ci in range(Ci):
                for dt in range(kt):
                    for df in range(kf):
                        fi = stride * fo + df
                        M[dt, r, ci * fin + fi] = W[co, ci, dt, df]
    return M


def _deconv_tap_toeplitz(W, fin, fout, stride):
    """ConvTranspose2d weight (Ci, Co, kt, kf), stride (1, stride), output_padding 0 ->
    per-time-tap matrices (kt, Co*fout, Ci*fin); the kt taps are overlap-added in-kernel."""
    W = np.asarray(W, np.float32)
    Ci, Co, kt, kf = W.shape
    assert stride * (fin - 1) + kf == fout, "decoder freq geometry must invert the encoder"
    M = np.zeros((kt, Co * fout, Ci * fin), np.float32)
    for ci in range(Ci):
        for fi in range(fin):
            c = ci * fin + fi
            for co in range(Co):
                for dt in range(kt):
                    for df in range(kf):
                        fo = stride * fi + df
                        M[dt, co * fout + fo, c] = W[ci, co, dt, df]
    return M


# --------------------------------------------------------------------------- fused kernel
def _make_kernel(cfg):
    C, scale = cfg["cout"], cfg["scale"]
    kt2 = cfg["k2"][0]
    G = cfg["G"]
    T0, Bl = cfg["T"], cfg["B_lane"]
    N = Bl * T0                      # lanes: Bl samples x T0-frame slots
    cat = cfg["intra_connect"] == "cat"
    nG = scale + 1
    MXU = jnp.bfloat16               # MXU inputs; accumulation stays f32

    def kernel(*refs):
        x_ref, w_in_ref, gbias_ref = refs[0], refs[1], refs[2]
        we = refs[3:3 + scale]
        wd = refs[3 + scale:3 + 2 * scale]
        p = 3 + 2 * scale
        rowpars_ref, chg_ref = refs[p], refs[p + 1]
        rowpool = refs[p + 2:p + 2 + nG]
        rowexp = refs[p + 2 + nG:p + 2 + 2 * nG]
        lanepool_ref = refs[p + 2 + 2 * nG]
        laneexp_ref = refs[p + 3 + 2 * nG]
        lanemask_ref = refs[p + 4 + 2 * nG]
        out_ref = refs[p + 5 + 2 * nG]

        def f32dot(a, b):
            return jnp.dot(a, b, preferred_element_type=jnp.float32)

        def in_prelu(h, j, lidx):
            """InstanceNorm2d(affine) + PReLU for all Bl samples at once.
            h: (C*G[j], N) f32.  Stats per (sample, channel) over the G[j] freq rows of
            the channel and the (T0 - j) valid time columns of the sample's lane slot."""
            cf = C * G[j]
            inv_n = 1.0 / float(G[j] * (T0 - j))
            rp = rowpool[j][...]           # (C, cf)   0/1 freq-row pool
            re = rowexp[j][...]            # (cf, C)   row expand
            lp = lanepool_ref[j]           # (N, Bl)   0/1 valid-lane pool
            le = laneexp_ref[j]            # (Bl, N)   lane expand (valid lanes only)
            pars = rowpars_ref[lidx]       # (Rmax, 2) row-expanded beta / prelu-a
            beta_row, alpha_row = pars[:cf, 0:1], pars[:cf, 1:2]
            gamma_c = chg_ref[lidx]        # (C, 1)

            mean_cb = f32dot(f32dot(rp, h), lp) * inv_n                 # (C, Bl)
            mean_full = f32dot(re, f32dot(mean_cb, le))                 # (cf, N)
            hc = h - mean_full                                          # centered (two-pass var)
            var_cb = f32dot(f32dot(rp, hc * hc), lp) * inv_n            # (C, Bl)
            scale_cb = jax.lax.rsqrt(var_cb + EPS) * gamma_c            # rstd * gamma
            scale_full = f32dot(re, f32dot(scale_cb, le))               # (cf, N)
            y = hc * scale_full + beta_row
            y = jnp.where(y >= 0.0, y, alpha_row * y)                   # PReLU
            if j > 0:                       # zero invalid (slot-padding) lane columns
                y = y * lanemask_ref[j]
            return y

        def conv_unit(h, w_ref):
            """Valid conv over time (stride 1); freq conv folded into per-tap Toeplitz
            weights.  out[:, t] = sum_dt W_dt @ h[:, t+dt]; tap shift is a lane roll."""
            hb = h.astype(MXU)
            acc = jnp.dot(w_ref[0], hb, preferred_element_type=jnp.float32)
            for dt in range(1, kt2):
                y = jnp.dot(w_ref[dt], hb, preferred_element_type=jnp.float32)
                acc = acc + pltpu.roll(y, N - dt, axis=1)   # out[c] = y[c + dt]
            return acc

        def deconv_unit(h, w_ref):
            """Transposed conv over time (stride 1, overlap-add); freq deconv folded into
            per-tap Toeplitz weights.  out[:, t] = sum_dt W_dt @ h[:, t-dt]."""
            hb = h.astype(MXU)
            acc = jnp.dot(w_ref[0], hb, preferred_element_type=jnp.float32)
            for dt in range(1, kt2):
                y = jnp.dot(w_ref[dt], hb, preferred_element_type=jnp.float32)
                acc = acc + pltpu.roll(y, dt, axis=1)       # out[c] = y[c - dt]
            return acc

        # ---- in_conv: GateConv2d (causal time taps pre-stacked host-side) + IN + PReLU
        r0 = C * G[0]
        g = jnp.dot(w_in_ref[...], x_ref[...].astype(MXU),
                    preferred_element_type=jnp.float32) + gbias_ref[...]   # (2*r0, N)
        u = g[:r0, :] * jax.nn.sigmoid(g[r0:, :])
        x_resi = in_prelu(u, 0, 0)

        # ---- encoder (Conv2dunit x scale)
        h = x_resi
        skips = []
        for i in range(scale):
            h = conv_unit(h, we[i])
            h = in_prelu(h, i + 1, 1 + i)
            skips.append(h)

        # ---- decoder (Deconv2dunit x scale, with skip connections)
        for i in range(scale):
            if i > 0:
                s = skips[scale - 1 - i]
                h = jnp.concatenate([h, s], axis=0) if cat else h + s
            h = deconv_unit(h, wd[i])
            h = in_prelu(h, scale - 1 - i, 1 + scale + i)

        out_ref[...] = x_resi + h      # lane-dense (128) store

    return kernel


def make_forward(cfg):
    assert cfg["norm_type"] == "IN", "TODO(synk): norm_type='BN' is not implemented"
    kernel = _make_kernel(cfg)
    cin, C = cfg["cin"], cfg["cout"]
    kt1 = cfg["k1"][0]
    G, F, F0p, T0, Bl = cfg["G"], cfg["F"], cfg["F_pad"], cfg["T"], cfg["B_lane"]
    N = Bl * T0
    K_in = kt1 * cin * F0p
    Rout = C * G[0]

    @jax.jit
    def forward(kp, x):
        B = x.shape[0]
        assert B % Bl == 0, "batch must be a multiple of B_lane"
        Bg = B // Bl
        # ---- layout plumbing (wrapper/XLA side): causal time pad, freq zero-pad,
        #      kt1-stacked im2col over time, fold Bl samples into the lane axis.
        xp = jnp.pad(x, ((0, 0), (0, 0), (kt1 - 1, 0), (0, F0p - F)))
        taps = jnp.stack([xp[:, :, dt:dt + T0, :] for dt in range(kt1)], axis=0)
        xk = jnp.transpose(taps, (0, 2, 4, 1, 3)).reshape(K_in, Bg, N)   # (K_in, Bg, Bl*T0)
        xk = jnp.transpose(xk, (1, 0, 2))                                # (Bg, K_in, N)

        operands = [xk, kp["w_in"], kp["gbias"], *kp["we"], *kp["wd"],
                    kp["rowpars"], kp["chgamma"], *kp["rowpool"], *kp["rowexp"],
                    kp["lanepool"], kp["laneexp"], kp["lanemask"]]
        in_specs = [pl.BlockSpec((None, K_in, N), lambda b: (b, 0, 0))]
        in_specs += [pl.BlockSpec(op.shape, lambda b, _n=op.ndim: (0,) * _n)
                     for op in operands[1:]]

        out = pl.pallas_call(
            kernel,
            out_shape=jax.ShapeDtypeStruct((Bg, Rout, N), jnp.float32),
            grid=(Bg,),
            in_specs=in_specs,
            out_specs=pl.BlockSpec((None, Rout, N), lambda b: (b, 0, 0)),
            compiler_params=pltpu.CompilerParams(dimension_semantics=("parallel",)),
        )(*operands)

        # back to PyTorch layout (B, cout, T, F1)
        out = out.reshape(Bg, C, G[0], Bl, T0)
        return jnp.transpose(out, (0, 3, 1, 4, 2)).reshape(B, C, T0, G[0])

    return forward


# --------------------------------------------------------------------------- parameters
def init_torch_params(key, cfg):
    cin, cout, scale = cfg["cin"], cfg["cout"], cfg["scale"]
    kt1, kf1 = cfg["k1"]
    kt2, kf2 = cfg["k2"]
    cat = cfg["intra_connect"] == "cat"
    keys = iter(jax.random.split(key, 256))

    def w(shape, s=0.2):
        return s * jax.random.normal(next(keys), shape, dtype=jnp.float32)

    def norm_prelu():
        return dict(gamma=1.0 + w((cout,)), beta=w((cout,)), a=0.25 + w((cout,), 0.05))

    p = dict(
        gate_w=w((2 * cout, cin, kt1, kf1)),
        gate_b=w((2 * cout,)),
        in_np=norm_prelu(),
        enco=[dict(w=w((cout, cout, kt2, kf2)), b=w((cout,)), **norm_prelu())
              for _ in range(scale)],
        deco=[],
    )
    for i in range(scale):
        ci = cout if (i == 0 or not cat) else 2 * cout
        p["deco"].append(dict(w=w((ci, cout, kt2, kf2)), b=w((cout,)), **norm_prelu()))
    return p


def pack_params(tp, cfg):
    C, scale = cfg["cout"], cfg["scale"]
    G, F, F0p, T0, Bl = cfg["G"], cfg["F"], cfg["F_pad"], cfg["T"], cfg["B_lane"]
    N = Bl * T0
    Rmax = C * G[0]
    L = 1 + 2 * scale
    MXU = jnp.bfloat16

    # -- in_conv block-Toeplitz (kt1 taps stacked along the contraction/column axis)
    w_in_taps = _conv_tap_toeplitz(np.asarray(tp["gate_w"]), F0p, G[0], 2, fin_valid=F)
    w_in = jnp.asarray(np.concatenate(list(w_in_taps), axis=1), dtype=MXU)
    gbias = jnp.asarray(np.repeat(np.asarray(tp["gate_b"], np.float32), G[0])[:, None])

    # -- encoder / decoder per-tap Toeplitz weights (bf16 at the MXU)
    we = [jnp.asarray(_conv_tap_toeplitz(np.asarray(tp["enco"][i]["w"]), G[i], G[i + 1], 2),
                      dtype=MXU) for i in range(scale)]
    wd = [jnp.asarray(_deconv_tap_toeplitz(np.asarray(tp["deco"][i]["w"]),
                                           G[scale - i], G[scale - 1 - i], 2), dtype=MXU)
          for i in range(scale)]
    # NOTE: encoder/decoder conv biases are omitted on purpose: a per-channel constant
    # added before InstanceNorm is exactly removed by the per-(sample,channel) mean.

    # -- per-layer norm/PReLU params: row-expanded beta & prelu-a, per-channel gamma
    layer_np = ([dict(g=G[0], **tp["in_np"])]
                + [dict(g=G[i + 1], gamma=tp["enco"][i]["gamma"], beta=tp["enco"][i]["beta"],
                        a=tp["enco"][i]["a"]) for i in range(scale)]
                + [dict(g=G[scale - 1 - i], gamma=tp["deco"][i]["gamma"],
                        beta=tp["deco"][i]["beta"], a=tp["deco"][i]["a"])
                   for i in range(scale)])
    rowpars = np.zeros((L, Rmax, 2), np.float32)
    chgamma = np.zeros((L, C, 1), np.float32)
    for l, lay in enumerate(layer_np):
        rows = C * lay["g"]
        rowpars[l, :rows, 0] = np.repeat(np.asarray(lay["beta"], np.float32), lay["g"])
        rowpars[l, :rows, 1] = np.repeat(np.asarray(lay["a"], np.float32), lay["g"])
        chgamma[l, :, 0] = np.asarray(lay["gamma"], np.float32)

    # -- InstanceNorm pooling / expansion constants (hoisted out of the kernel)
    rowpool, rowexp = [], []
    for j in range(scale + 1):
        P = np.zeros((C, C * G[j]), np.float32)
        for c in range(C):
            P[c, c * G[j]:(c + 1) * G[j]] = 1.0
        rowpool.append(jnp.asarray(P))
        rowexp.append(jnp.asarray(np.ascontiguousarray(P.T)))

    lanepool = np.zeros((scale + 1, N, Bl), np.float32)
    laneexp = np.zeros((scale + 1, Bl, N), np.float32)
    lanemask = np.zeros((scale + 1, 1, N), np.float32)
    for j in range(scale + 1):
        tv = T0 - j
        for b in range(Bl):
            lanepool[j, b * T0:b * T0 + tv, b] = 1.0
            laneexp[j, b, b * T0:b * T0 + tv] = 1.0
            lanemask[j, 0, b * T0:b * T0 + tv] = 1.0

    return dict(w_in=w_in, gbias=gbias, we=we, wd=wd,
                rowpars=jnp.asarray(rowpars), chgamma=jnp.asarray(chgamma),
                rowpool=rowpool, rowexp=rowexp,
                lanepool=jnp.asarray(lanepool), laneexp=jnp.asarray(laneexp),
                lanemask=jnp.asarray(lanemask))


# --------------------------------------------------------------------------- pure-JAX reference (PyTorch semantics)
def ref_forward(tp, x, cfg):
    HI = jax.lax.Precision.HIGHEST
    cout, scale = cfg["cout"], cfg["scale"]
    kt1, _ = cfg["k1"]
    cat = cfg["intra_connect"] == "cat"

    def prelu(h, a):
        return jnp.where(h >= 0, h, a.reshape(1, -1, 1, 1) * h)

    def inorm(h, g, b):
        m = jnp.mean(h, axis=(2, 3), keepdims=True)
        v = jnp.mean((h - m) ** 2, axis=(2, 3), keepdims=True)
        return (h - m) / jnp.sqrt(v + EPS) * g.reshape(1, -1, 1, 1) + b.reshape(1, -1, 1, 1)

    def conv2d(h, W, b, pad_t=0):
        Co, Ci, kt, kf = W.shape
        if pad_t:
            h = jnp.pad(h, ((0, 0), (0, 0), (pad_t, 0), (0, 0)))
        Bn, _, Tn, Fn = h.shape
        To, Fo = Tn - kt + 1, (Fn - kf) // 2 + 1
        out = jnp.zeros((Bn, Co, To, Fo), jnp.float32)
        for dt in range(kt):
            for df in range(kf):
                xs = h[:, :, dt:dt + To, df:df + 2 * (Fo - 1) + 1:2]
                out = out + jnp.einsum("oi,bitf->botf", W[:, :, dt, df], xs, precision=HI)
        return out + b.reshape(1, -1, 1, 1)

    def deconv2d(h, W, b):
        Ci, Co, kt, kf = W.shape
        Bn, _, Tn, Fn = h.shape
        To, Fo = Tn + kt - 1, (Fn - 1) * 2 + kf
        out = jnp.zeros((Bn, Co, To, Fo), jnp.float32)
        for dt in range(kt):
            for df in range(kf):
                contrib = jnp.einsum("io,bitf->botf", W[:, :, dt, df], h, precision=HI)
                out = out.at[:, :, dt:dt + Tn, df:df + 2 * (Fn - 1) + 1:2].add(contrib)
        return out + b.reshape(1, -1, 1, 1)

    g = conv2d(x, tp["gate_w"], tp["gate_b"], pad_t=kt1 - 1)
    u = g[:, :cout] * jax.nn.sigmoid(g[:, cout:])
    x_resi = prelu(inorm(u, tp["in_np"]["gamma"], tp["in_np"]["beta"]), tp["in_np"]["a"])

    h = x_resi
    skips = []
    for i in range(scale):
        e = tp["enco"][i]
        h = prelu(inorm(conv2d(h, e["w"], e["b"]), e["gamma"], e["beta"]), e["a"])
        skips.append(h)
    for i in range(scale):
        d = tp["deco"][i]
        if i > 0:
            s = skips[scale - 1 - i]
            h = jnp.concatenate([h, s], axis=1) if cat else h + s
        h = prelu(inorm(deconv2d(h, d["w"], d["b"]), d["gamma"], d["beta"]), d["a"])
    return x_resi + h


# --------------------------------------------------------------------------- main
if __name__ == "__main__":
    cfg = dict(cin=2, cout=16, k1=(2, 5), k2=(2, 3), intra_connect="cat",
               norm_type="IN", scale=2, T=16, F=17, B_lane=8)
    G = _freq_sizes(cfg["F"], cfg["k1"][1], cfg["k2"][1], cfg["scale"])
    for i in range(cfg["scale"]):   # module only shape-checks when decoder inverts encoder
        assert 2 * (G[i + 1] - 1) + cfg["k2"][1] == G[i], "inconsistent U-Net shapes"
    cfg["G"] = tuple(G)
    F0p = cfg["F"]
    while (cfg["cin"] * F0p) % 8:   # zero-pad freq so input rows are sublane aligned
        F0p += 1
    cfg["F_pad"] = F0p

    key = jax.random.PRNGKey(0)
    kparam_key, kx = jax.random.split(key)
    tparams = init_torch_params(kparam_key, cfg)
    kparams = pack_params(tparams, cfg)

    B = 2 * cfg["B_lane"]           # 2 lane-groups -> grid=(2,), "parallel" for megacore
    x = jax.random.normal(kx, (B, cfg["cin"], cfg["T"], cfg["F"]), dtype=jnp.float32)

    fwd = make_forward(cfg)
    out = jax.block_until_ready(fwd(kparams, x))
    assert out.shape == (B, cfg["cout"], cfg["T"], cfg["G"][0]), out.shape

    ref = ref_forward(tparams, x, cfg)
    diff = out - ref
    max_err = float(jnp.max(jnp.abs(diff)))
    rel_l2 = float(jnp.linalg.norm(diff.ravel()) / jnp.linalg.norm(ref.ravel()))
    # bf16 MXU inputs with f32 accumulation -> judge with a relative criterion
    assert rel_l2 < 1e-2 and max_err < 0.25, (max_err, rel_l2)
    print("KERNEL_OK")
</pallas_src>

<mosaic_0001>
module attributes {stable_mosaic.version = 11 : i64} {
  func.func @kernel(%arg0: i32, %arg1: memref<1x80x128xf32, #tpu.memory_space<vmem>>, %arg2: memref<224x80xbf16, #tpu.memory_space<vmem>>, %arg3: memref<224x1xf32, #tpu.memory_space<vmem>>, %arg4: memref<2x48x112xbf16, #tpu.memory_space<vmem>>, %arg5: memref<2x16x48xbf16, #tpu.memory_space<vmem>>, %arg6: memref<2x48x16xbf16, #tpu.memory_space<vmem>>, %arg7: memref<2x112x96xbf16, #tpu.memory_space<vmem>>, %arg8: memref<5x112x2xf32, #tpu.memory_space<vmem>>, %arg9: memref<5x16x1xf32, #tpu.memory_space<vmem>>, %arg10: memref<16x112xf32, #tpu.memory_space<vmem>>, %arg11: memref<16x48xf32, #tpu.memory_space<vmem>>, %arg12: memref<16x16xf32, #tpu.memory_space<vmem>>, %arg13: memref<112x16xf32, #tpu.memory_space<vmem>>, %arg14: memref<48x16xf32, #tpu.memory_space<vmem>>, %arg15: memref<16x16xf32, #tpu.memory_space<vmem>>, %arg16: memref<3x128x8xf32, #tpu.memory_space<vmem>>, %arg17: memref<3x8x128xf32, #tpu.memory_space<vmem>>, %arg18: memref<3x1x128xf32, #tpu.memory_space<vmem>>, %arg19: memref<1x112x128xf32, #tpu.memory_space<vmem>>) attributes {dimension_semantics = [#tpu.dimension_semantics<parallel>], iteration_bounds = array<i64: 2>, scalar_prefetch = 0 : i64, scratch_operands = 0 : i64, tpu.core_type = #tpu.core_type<tc>, window_params = [{transform_indices = @transform_0, window_bounds = array<i64: 1, 80, 128>}, {pipeline_mode = #tpu.pipeline_mode<synchronous>, transform_indices = @transform_1, window_bounds = array<i64: 224, 80>}, {pipeline_mode = #tpu.pipeline_mode<synchronous>, transform_indices = @transform_2, window_bounds = array<i64: 224, 1>}, {pipeline_mode = #tpu.pipeline_mode<synchronous>, transform_indices = @transform_3, window_bounds = array<i64: 2, 48, 112>}, {pipeline_mode = #tpu.pipeline_mode<synchronous>, transform_indices = @transform_4, window_bounds = array<i64: 2, 16, 48>}, {pipeline_mode = #tpu.pipeline_mode<synchronous>, transform_indices = @transform_5, window_bounds = array<i64: 2, 48, 16>}, {pipeline_mode = #tpu.pipeline_mode<synchronous>, transform_indices = @transform_6, window_bounds = array<i64: 2, 112, 96>}, {pipeline_mode = #tpu.pipeline_mode<synchronous>, transform_indices = @transform_7, window_bounds = array<i64: 5, 112, 2>}, {pipeline_mode = #tpu.pipeline_mode<synchronous>, transform_indices = @transform_8, window_bounds = array<i64: 5, 16, 1>}, {pipeline_mode = #tpu.pipeline_mode<synchronous>, transform_indices = @transform_9, window_bounds = array<i64: 16, 112>}, {pipeline_mode = #tpu.pipeline_mode<synchronous>, transform_indices = @transform_10, window_bounds = array<i64: 16, 48>}, {pipeline_mode = #tpu.pipeline_mode<synchronous>, transform_indices = @transform_11, window_bounds = array<i64: 16, 16>}, {pipeline_mode = #tpu.pipeline_mode<synchronous>, transform_indices = @transform_12, window_bounds = array<i64: 112, 16>}, {pipeline_mode = #tpu.pipeline_mode<synchronous>, transform_indices = @transform_13, window_bounds = array<i64: 48, 16>}, {pipeline_mode = #tpu.pipeline_mode<synchronous>, transform_indices = @transform_14, window_bounds = array<i64: 16, 16>}, {pipeline_mode = #tpu.pipeline_mode<synchronous>, transform_indices = @transform_15, window_bounds = array<i64: 3, 128, 8>}, {pipeline_mode = #tpu.pipeline_mode<synchronous>, transform_indices = @transform_16, window_bounds = array<i64: 3, 8, 128>}, {pipeline_mode = #tpu.pipeline_mode<synchronous>, transform_indices = @transform_17, window_bounds = array<i64: 3, 1, 128>}, {transform_indices = @transform_18, window_bounds = array<i64: 1, 112, 128>}]} {
    %c0 = arith.constant 0 : index
    %c0_0 = arith.constant 0 : index
    %0 = vector.load %arg2[%c0, %c0_0] : memref<224x80xbf16, #tpu.memory_space<vmem>>, vector<224x80xbf16>
    %c0_1 = arith.constant 0 : index
    %c0_2 = arith.constant 0 : index
    %c0_3 = arith.constant 0 : index
    %1 = vector.load %arg1[%c0_1, %c0_2, %c0_3] : memref<1x80x128xf32, #tpu.memory_space<vmem>>, vector<1x80x128xf32>
    %2 = vector.shape_cast %1 : vector<1x80x128xf32> to vector<80x128xf32>
    %3 = arith.truncf %2 : vector<80x128xf32> to vector<80x128xbf16>
    %cst = arith.constant dense<0.000000e+00> : vector<224x128xf32>
    %4 = tpu.matmul %0, %3, %cst {dimension_numbers = #tpu.dot_dimension_numbers<[1], [0], [0], [1], [0, 0, 1, 1], [], []>} : vector<224x80xbf16>, vector<80x128xbf16>, vector<224x128xf32> -> vector<224x128xf32>
    %c0_4 = arith.constant 0 : index
    %c0_5 = arith.constant 0 : index
    %5 = vector.load %arg3[%c0_4, %c0_5] : memref<224x1xf32, #tpu.memory_space<vmem>>, vector<224x1xf32>
    %6 = vector.broadcast %5 : vector<224x1xf32> to vector<224x128xf32>
    %7 = arith.addf %4, %6 : vector<224x128xf32>
    %8 = vector.extract_strided_slice %7 {offsets = [0, 0], sizes = [112, 128], strides = [1, 1]} : vector<224x128xf32> to vector<112x128xf32>
    %9 = vector.extract_strided_slice %7 {offsets = [112, 0], sizes = [112, 128], strides = [1, 1]} : vector<224x128xf32> to vector<112x128xf32>
    %10 = arith.negf %9 : vector<112x128xf32>
    %11 = math.exp %10 : vector<112x128xf32>
    %cst_6 = arith.constant 1.000000e+00 : f32
    %12 = vector.broadcast %cst_6 : f32 to vector<112x128xf32>
    %13 = arith.addf %12, %11 : vector<112x128xf32>
    %14 = arith.divf %12, %13 : vector<112x128xf32>
    %15 = arith.mulf %8, %14 : vector<112x128xf32>
    %c0_7 = arith.constant 0 : index
    %c0_8 = arith.constant 0 : index
    %16 = vector.load %arg10[%c0_7, %c0_8] : memref<16x112xf32, #tpu.memory_space<vmem>>, vector<16x112xf32>
    %c0_9 = arith.constant 0 : index
    %c0_10 = arith.constant 0 : index
    %17 = vector.load %arg13[%c0_9, %c0_10] : memref<112x16xf32, #tpu.memory_space<vmem>>, vector<112x16xf32>
    %c0_11 = arith.constant 0 : index
    %c0_12 = arith.constant 0 : index
    %c0_13 = arith.constant 0 : index
    %18 = vector.load %arg16[%c0_11, %c0_12, %c0_13] : memref<3x128x8xf32, #tpu.memory_space<vmem>>, vector<1x128x8xf32>
    %19 = vector.shape_cast %18 : vector<1x128x8xf32> to vector<128x8xf32>
    %c0_14 = arith.constant 0 : index
    %c0_15 = arith.constant 0 : index
    %c0_16 = arith.constant 0 : index
    %20 = vector.load %arg17[%c0_14, %c0_15, %c0_16] : memref<3x8x128xf32, #tpu.memory_space<vmem>>, vector<1x8x128xf32>
    %21 = vector.shape_cast %20 : vector<1x8x128xf32> to vector<8x128xf32>
    %c0_17 = arith.constant 0 : index
    %c0_18 = arith.constant 0 : index
    %c0_19 = arith.constant 0 : index
    %22 = vector.load %arg8[%c0_17, %c0_18, %c0_19] : memref<5x112x2xf32, #tpu.memory_space<vmem>>, vector<1x112x2xf32>
    %23 = vector.shape_cast %22 : vector<1x112x2xf32> to vector<112x2xf32>
    %24 = vector.extract_strided_slice %23 {offsets = [0, 0], sizes = [112, 1], strides = [1, 1]} : vector<112x2xf32> to vector<112x1xf32>
    %25 = vector.extract_strided_slice %23 {offsets = [0, 1], sizes = [112, 1], strides = [1, 1]} : vector<112x2xf32> to vector<112x1xf32>
    %c0_20 = arith.constant 0 : index
    %c0_21 = arith.constant 0 : index
    %c0_22 = arith.constant 0 : index
    %26 = vector.load %arg9[%c0_20, %c0_21, %c0_22] : memref<5x16x1xf32, #tpu.memory_space<vmem>>, vector<1x16x1xf32>
    %27 = vector.shape_cast %26 : vector<1x16x1xf32> to vector<16x1xf32>
    %cst_23 = arith.constant dense<0.000000e+00> : vector<16x128xf32>
    %28 = tpu.matmul %16, %15, %cst_23 {dimension_numbers = #tpu.dot_dimension_numbers<[1], [0], [0], [1], [0, 0, 1, 1], [], []>} : vector<16x112xf32>, vector<112x128xf32>, vector<16x128xf32> -> vector<16x128xf32>
    %cst_24 = arith.constant dense<0.000000e+00> : vector<16x8xf32>
    %29 = tpu.matmul %28, %19, %cst_24 {dimension_numbers = #tpu.dot_dimension_numbers<[1], [0], [0], [1], [0, 0, 1, 1], [], []>} : vector<16x128xf32>, vector<128x8xf32>, vector<16x8xf32> -> vector<16x8xf32>
    %cst_25 = arith.constant 0.00892857183 : f32
    %30 = vector.broadcast %cst_25 : f32 to vector<16x8xf32>
    %31 = arith.mulf %29, %30 : vector<16x8xf32>
    %cst_26 = arith.constant dense<0.000000e+00> : vector<16x128xf32>
    %32 = tpu.matmul %31, %21, %cst_26 {dimension_numbers = #tpu.dot_dimension_numbers<[1], [0], [0], [1], [0, 0, 1, 1], [], []>} : vector<16x8xf32>, vector<8x128xf32>, vector<16x128xf32> -> vector<16x128xf32>
    %cst_27 = arith.constant dense<0.000000e+00> : vector<112x128xf32>
    %33 = tpu.matmul %17, %32, %cst_27 {dimension_numbers = #tpu.dot_dimension_numbers<[1], [0], [0], [1], [0, 0, 1, 1], [], []>} : vector<112x16xf32>, vector<16x128xf32>, vector<112x128xf32> -> vector<112x128xf32>
    %34 = arith.subf %15, %33 : vector<112x128xf32>
    %35 = arith.mulf %34, %34 : vector<112x128xf32>
    %cst_28 = arith.constant dense<0.000000e+00> : vector<16x128xf32>
    %36 = tpu.matmul %16, %35, %cst_28 {dimension_numbers = #tpu.dot_dimension_numbers<[1], [0], [0], [1], [0, 0, 1, 1], [], []>} : vector<16x112xf32>, vector<112x128xf32>, vector<16x128xf32> -> vector<16x128xf32>
    %cst_29 = arith.constant dense<0.000000e+00> : vector<16x8xf32>
    %37 = tpu.matmul %36, %19, %cst_29 {dimension_numbers = #tpu.dot_dimension_numbers<[1], [0], [0], [1], [0, 0, 1, 1], [], []>} : vector<16x128xf32>, vector<128x8xf32>, vector<16x8xf32> -> vector<16x8xf32>
    %cst_30 = arith.constant 0.00892857183 : f32
    %38 = vector.broadcast %cst_30 : f32 to vector<16x8xf32>
    %39 = arith.mulf %37, %38 : vector<16x8xf32>
    %cst_31 = arith.constant 9.99999974E-6 : f32
    %40 = vector.broadcast %cst_31 : f32 to vector<16x8xf32>
    %41 = arith.addf %39, %40 : vector<16x8xf32>
    %42 = math.rsqrt %41 : vector<16x8xf32>
    %43 = vector.broadcast %27 : vector<16x1xf32> to vector<16x8xf32>
    %44 = arith.mulf %42, %43 : vector<16x8xf32>
    %cst_32 = arith.constant dense<0.000000e+00> : vector<16x128xf32>
    %45 = tpu.matmul %44, %21, %cst_32 {dimension_numbers = #tpu.dot_dimension_numbers<[1], [0], [0], [1], [0, 0, 1, 1], [], []>} : vector<16x8xf32>, vector<8x128xf32>, vector<16x128xf32> -> vector<16x128xf32>
    %cst_33 = arith.constant dense<0.000000e+00> : vector<112x128xf32>
    %46 = tpu.matmul %17, %45, %cst_33 {dimension_numbers = #tpu.dot_dimension_numbers<[1], [0], [0], [1], [0, 0, 1, 1], [], []>} : vector<112x16xf32>, vector<16x128xf32>, vector<112x128xf32> -> vector<112x128xf32>
    %47 = arith.mulf %34, %46 : vector<112x128xf32>
    %48 = vector.broadcast %24 : vector<112x1xf32> to vector<112x128xf32>
    %49 = arith.addf %47, %48 : vector<112x128xf32>
    %cst_34 = arith.constant 0.000000e+00 : f32
    %50 = vector.broadcast %cst_34 : f32 to vector<112x128xf32>
    %51 = arith.cmpf oge, %49, %50 : vector<112x128xf32>
    %52 = vector.broadcast %25 : vector<112x1xf32> to vector<112x128xf32>
    %53 = arith.mulf %52, %49 : vector<112x128xf32>
    %54 = arith.select %51, %49, %53 : vector<112x128xi1>, vector<112x128xf32>
    %55 = arith.truncf %54 : vector<112x128xf32> to vector<112x128xbf16>
    %c0_35 = arith.constant 0 : index
    %c0_36 = arith.constant 0 : index
    %c0_37 = arith.constant 0 : index
    %56 = vector.load %arg4[%c0_35, %c0_36, %c0_37] : memref<2x48x112xbf16, #tpu.memory_space<vmem>>, vector<1x48x112xbf16>
    %57 = vector.shape_cast %56 : vector<1x48x112xbf16> to vector<48x112xbf16>
    %cst_38 = arith.constant dense<0.000000e+00> : vector<48x128xf32>
    %58 = tpu.matmul %57, %55, %cst_38 {dimension_numbers = #tpu.dot_dimension_numbers<[1], [0], [0], [1], [0, 0, 1, 1], [], []>} : vector<48x112xbf16>, vector<112x128xbf16>, vector<48x128xf32> -> vector<48x128xf32>
    %c1 = arith.constant 1 : index
    %c0_39 = arith.constant 0 : index
    %c0_40 = arith.constant 0 : index
    %59 = vector.load %arg4[%c1, %c0_39, %c0_40] : memref<2x48x112xbf16, #tpu.memory_space<vmem>>, vector<1x48x112xbf16>
    %60 = vector.shape_cast %59 : vector<1x48x112xbf16> to vector<48x112xbf16>
    %cst_41 = arith.constant dense<0.000000e+00> : vector<48x128xf32>
    %61 = tpu.matmul %60, %55, %cst_41 {dimension_numbers = #tpu.dot_dimension_numbers<[1], [0], [0], [1], [0, 0, 1, 1], [], []>} : vector<48x112xbf16>, vector<112x128xbf16>, vector<48x128xf32> -> vector<48x128xf32>
    %c127_i32 = arith.constant 127 : i32
    %62 = tpu.dynamic_rotate %61 by %c127_i32 dim 1 : vector<48x128xf32>, i32 -> vector<48x128xf32>
    %63 = arith.addf %58, %62 : vector<48x128xf32>
    %c0_42 = arith.constant 0 : index
    %c0_43 = arith.constant 0 : index
    %64 = vector.load %arg11[%c0_42, %c0_43] : memref<16x48xf32, #tpu.memory_space<vmem>>, vector<16x48xf32>
    %c0_44 = arith.constant 0 : index
    %c0_45 = arith.constant 0 : index
    %65 = vector.load %arg14[%c0_44, %c0_45] : memref<48x16xf32, #tpu.memory_space<vmem>>, vector<48x16xf32>
    %c1_46 = arith.constant 1 : index
    %c0_47 = arith.constant 0 : index
    %c0_48 = arith.constant 0 : index
    %66 = vector.load %arg16[%c1_46, %c0_47, %c0_48] : memref<3x128x8xf32, #tpu.memory_space<vmem>>, vector<1x128x8xf32>
    %67 = vector.shape_cast %66 : vector<1x128x8xf32> to vector<128x8xf32>
    %c1_49 = arith.constant 1 : index
    %c0_50 = arith.constant 0 : index
    %c0_51 = arith.constant 0 : index
    %68 = vector.load %arg17[%c1_49, %c0_50, %c0_51] : memref<3x8x128xf32, #tpu.memory_space<vmem>>, vector<1x8x128xf32>
    %69 = vector.shape_cast %68 : vector<1x8x128xf32> to vector<8x128xf32>
    %c1_52 = arith.constant 1 : index
    %c0_53 = arith.constant 0 : index
    %c0_54 = arith.constant 0 : index
    %70 = vector.load %arg8[%c1_52, %c0_53, %c0_54] : memref<5x112x2xf32, #tpu.memory_space<vmem>>, vector<1x112x2xf32>
    %71 = vector.shape_cast %70 : vector<1x112x2xf32> to vector<112x2xf32>
    %72 = vector.extract_strided_slice %71 {offsets = [0, 0], sizes = [48, 1], strides = [1, 1]} : vector<112x2xf32> to vector<48x1xf32>
    %73 = vector.extract_strided_slice %71 {offsets = [0, 1], sizes = [48, 1], strides = [1, 1]} : vector<112x2xf32> to vector<48x1xf32>
    %c1_55 = arith.constant 1 : index
    %c0_56 = arith.constant 0 : index
    %c0_57 = arith.constant 0 : index
    %74 = vector.load %arg9[%c1_55, %c0_56, %c0_57] : memref<5x16x1xf32, #tpu.memory_space<vmem>>, vector<1x16x1xf32>
    %75 = vector.shape_cast %74 : vector<1x16x1xf32> to vector<16x1xf32>
    %cst_58 = arith.constant dense<0.000000e+00> : vector<16x128xf32>
    %76 = tpu.matmul %64, %63, %cst_58 {dimension_numbers = #tpu.dot_dimension_numbers<[1], [0], [0], [1], [0, 0, 1, 1], [], []>} : vector<16x48xf32>, vector<48x128xf32>, vector<16x128xf32> -> vector<16x128xf32>
    %cst_59 = arith.constant dense<0.000000e+00> : vector<16x8xf32>
    %77 = tpu.matmul %76, %67, %cst_59 {dimension_numbers = #tpu.dot_dimension_numbers<[1], [0], [0], [1], [0, 0, 1, 1], [], []>} : vector<16x128xf32>, vector<128x8xf32>, vector<16x8xf32> -> vector<16x8xf32>
    %cst_60 = arith.constant 0.0222222228 : f32
    %78 = vector.broadcast %cst_60 : f32 to vector<16x8xf32>
    %79 = arith.mulf %77, %78 : vector<16x8xf32>
    %cst_61 = arith.constant dense<0.000000e+00> : vector<16x128xf32>
    %80 = tpu.matmul %79, %69, %cst_61 {dimension_numbers = #tpu.dot_dimension_numbers<[1], [0], [0], [1], [0, 0, 1, 1], [], []>} : vector<16x8xf32>, vector<8x128xf32>, vector<16x128xf32> -> vector<16x128xf32>
    %cst_62 = arith.constant dense<0.000000e+00> : vector<48x128xf32>
    %81 = tpu.matmul %65, %80, %cst_62 {dimension_numbers = #tpu.dot_dimension_numbers<[1], [0], [0], [1], [0, 0, 1, 1], [], []>} : vector<48x16xf32>, vector<16x128xf32>, vector<48x128xf32> -> vector<48x128xf32>
    %82 = arith.subf %63, %81 : vector<48x128xf32>
    %83 = arith.mulf %82, %82 : vector<48x128xf32>
    %cst_63 = arith.constant dense<0.000000e+00> : vector<16x128xf32>
    %84 = tpu.matmul %64, %83, %cst_63 {dimension_numbers = #tpu.dot_dimension_numbers<[1], [0], [0], [1], [0, 0, 1, 1], [], []>} : vector<16x48xf32>, vector<48x128xf32>, vector<16x128xf32> -> vector<16x128xf32>
    %cst_64 = arith.constant dense<0.000000e+00> : vector<16x8xf32>
    %85 = tpu.matmul %84, %67, %cst_64 {dimension_numbers = #tpu.dot_dimension_numbers<[1], [0], [0], [1], [0, 0, 1, 1], [], []>} : vector<16x128xf32>, vector<128x8xf32>, vector<16x8xf32> -> vector<16x8xf32>
    %cst_65 = arith.constant 0.0222222228 : f32
    %86 = vector.broadcast %cst_65 : f32 to vector<16x8xf32>
    %87 = arith.mulf %85, %86 : vector<16x8xf32>
    %cst_66 = arith.constant 9.99999974E-6 : f32
    %88 = vector.broadcast %cst_66 : f32 to vector<16x8xf32>
    %89 = arith.addf %87, %88 : vector<16x8xf32>
    %90 = math.rsqrt %89 : vector<16x8xf32>
    %91 = vector.broadcast %75 : vector<16x1xf32> to vector<16x8xf32>
    %92 = arith.mulf %90, %91 : vector<16x8xf32>
    %cst_67 = arith.constant dense<0.000000e+00> : vector<16x128xf32>
    %93 = tpu.matmul %92, %69, %cst_67 {dimension_numbers = #tpu.dot_dimension_numbers<[1], [0], [0], [1], [0, 0, 1, 1], [], []>} : vector<16x8xf32>, vector<8x128xf32>, vector<16x128xf32> -> vector<16x128xf32>
    %cst_68 = arith.constant dense<0.000000e+00> : vector<48x128xf32>
    %94 = tpu.matmul %65, %93, %cst_68 {dimension_numbers = #tpu.dot_dimension_numbers<[1], [0], [0], [1], [0, 0, 1, 1], [], []>} : vector<48x16xf32>, vector<16x128xf32>, vector<48x128xf32> -> vector<48x128xf32>
    %95 = arith.mulf %82, %94 : vector<48x128xf32>
    %96 = vector.broadcast %72 : vector<48x1xf32> to vector<48x128xf32>
    %97 = arith.addf %95, %96 : vector<48x128xf32>
    %cst_69 = arith.constant 0.000000e+00 : f32
    %98 = vector.broadcast %cst_69 : f32 to vector<48x128xf32>
    %99 = arith.cmpf oge, %97, %98 : vector<48x128xf32>
    %100 = vector.broadcast %73 : vector<48x1xf32> to vector<48x128xf32>
    %101 = arith.mulf %100, %97 : vector<48x128xf32>
    %102 = arith.select %99, %97, %101 : vector<48x128xi1>, vector<48x128xf32>
    %c1_70 = arith.constant 1 : index
    %c0_71 = arith.constant 0 : index
    %c0_72 = arith.constant 0 : index
    %103 = vector.load %arg18[%c1_70, %c0_71, %c0_72] : memref<3x1x128xf32, #tpu.memory_space<vmem>>, vector<1x1x128xf32>
    %104 = vector.shape_cast %103 : vector<1x1x128xf32> to vector<1x128xf32>
    %105 = vector.broadcast %104 : vector<1x128xf32> to vector<48x128xf32>
    %106 = arith.mulf %102, %105 : vector<48x128xf32>
    %107 = arith.truncf %106 : vector<48x128xf32> to vector<48x128xbf16>
    %c0_73 = arith.constant 0 : index
    %c0_74 = arith.constant 0 : index
    %c0_75 = arith.constant 0 : index
    %108 = vector.load %arg5[%c0_73, %c0_74, %c0_75] : memref<2x16x48xbf16, #tpu.memory_space<vmem>>, vector<1x16x48xbf16>
    %109 = vector.shape_cast %108 : vector<1x16x48xbf16> to vector<16x48xbf16>
    %cst_76 = arith.constant dense<0.000000e+00> : vector<16x128xf32>
    %110 = tpu.matmul %109, %107, %cst_76 {dimension_numbers = #tpu.dot_dimension_numbers<[1], [0], [0], [1], [0, 0, 1, 1], [], []>} : vector<16x48xbf16>, vector<48x128xbf16>, vector<16x128xf32> -> vector<16x128xf32>
    %c1_77 = arith.constant 1 : index
    %c0_78 = arith.constant 0 : index
    %c0_79 = arith.constant 0 : index
    %111 = vector.load %arg5[%c1_77, %c0_78, %c0_79] : memref<2x16x48xbf16, #tpu.memory_space<vmem>>, vector<1x16x48xbf16>
    %112 = vector.shape_cast %111 : vector<1x16x48xbf16> to vector<16x48xbf16>
    %cst_80 = arith.constant dense<0.000000e+00> : vector<16x128xf32>
    %113 = tpu.matmul %112, %107, %cst_80 {dimension_numbers = #tpu.dot_dimension_numbers<[1], [0], [0], [1], [0, 0, 1, 1], [], []>} : vector<16x48xbf16>, vector<48x128xbf16>, vector<16x128xf32> -> vector<16x128xf32>
    %c127_i32_81 = arith.constant 127 : i32
    %114 = tpu.dynamic_rotate %113 by %c127_i32_81 dim 1 : vector<16x128xf32>, i32 -> vector<16x128xf32>
    %115 = arith.addf %110, %114 : vector<16x128xf32>
    %c0_82 = arith.constant 0 : index
    %c0_83 = arith.constant 0 : index
    %116 = vector.load %arg12[%c0_82, %c0_83] : memref<16x16xf32, #tpu.memory_space<vmem>>, vector<16x16xf32>
    %c0_84 = arith.constant 0 : index
    %c0_85 = arith.constant 0 : index
    %117 = vector.load %arg15[%c0_84, %c0_85] : memref<16x16xf32, #tpu.memory_space<vmem>>, vector<16x16xf32>
    %c2 = arith.constant 2 : index
    %c0_86 = arith.constant 0 : index
    %c0_87 = arith.constant 0 : index
    %118 = vector.load %arg16[%c2, %c0_86, %c0_87] : memref<3x128x8xf32, #tpu.memory_space<vmem>>, vector<1x128x8xf32>
    %119 = vector.shape_cast %118 : vector<1x128x8xf32> to vector<128x8xf32>
    %c2_88 = arith.constant 2 : index
    %c0_89 = arith.constant 0 : index
    %c0_90 = arith.constant 0 : index
    %120 = vector.load %arg17[%c2_88, %c0_89, %c0_90] : memref<3x8x128xf32, #tpu.memory_space<vmem>>, vector<1x8x128xf32>
    %121 = vector.shape_cast %120 : vector<1x8x128xf32> to vector<8x128xf32>
    %c2_91 = arith.constant 2 : index
    %c0_92 = arith.constant 0 : index
    %c0_93 = arith.constant 0 : index
    %122 = vector.load %arg8[%c2_91, %c0_92, %c0_93] : memref<5x112x2xf32, #tpu.memory_space<vmem>>, vector<1x112x2xf32>
    %123 = vector.shape_cast %122 : vector<1x112x2xf32> to vector<112x2xf32>
    %124 = vector.extract_strided_slice %123 {offsets = [0, 0], sizes = [16, 1], strides = [1, 1]} : vector<112x2xf32> to vector<16x1xf32>
    %125 = vector.extract_strided_slice %123 {offsets = [0, 1], sizes = [16, 1], strides = [1, 1]} : vector<112x2xf32> to vector<16x1xf32>
    %c2_94 = arith.constant 2 : index
    %c0_95 = arith.constant 0 : index
    %c0_96 = arith.constant 0 : index
    %126 = vector.load %arg9[%c2_94, %c0_95, %c0_96] : memref<5x16x1xf32, #tpu.memory_space<vmem>>, vector<1x16x1xf32>
    %127 = vector.shape_cast %126 : vector<1x16x1xf32> to vector<16x1xf32>
    %cst_97 = arith.constant dense<0.000000e+00> : vector<16x128xf32>
    %128 = tpu.matmul %116, %115, %cst_97 {dimension_numbers = #tpu.dot_dimension_numbers<[1], [0], [0], [1], [0, 0, 1, 1], [], []>} : vector<16x16xf32>, vector<16x128xf32>, vector<16x128xf32> -> vector<16x128xf32>
    %cst_98 = arith.constant dense<0.000000e+00> : vector<16x8xf32>
    %129 = tpu.matmul %128, %119, %cst_98 {dimension_numbers = #tpu.dot_dimension_numbers<[1], [0], [0], [1], [0, 0, 1, 1], [], []>} : vector<16x128xf32>, vector<128x8xf32>, vector<16x8xf32> -> vector<16x8xf32>
    %cst_99 = arith.constant 0.0714285746 : f32
    %130 = vector.broadcast %cst_99 : f32 to vector<16x8xf32>
    %131 = arith.mulf %129, %130 : vector<16x8xf32>
    %cst_100 = arith.constant dense<0.000000e+00> : vector<16x128xf32>
    %132 = tpu.matmul %131, %121, %cst_100 {dimension_numbers = #tpu.dot_dimension_numbers<[1], [0], [0], [1], [0, 0, 1, 1], [], []>} : vector<16x8xf32>, vector<8x128xf32>, vector<16x128xf32> -> vector<16x128xf32>
    %cst_101 = arith.constant dense<0.000000e+00> : vector<16x128xf32>
    %133 = tpu.matmul %117, %132, %cst_101 {dimension_numbers = #tpu.dot_dimension_numbers<[1], [0], [0], [1], [0, 0, 1, 1], [], []>} : vector<16x16xf32>, vector<16x128xf32>, vector<16x128xf32> -> vector<16x128xf32>
    %134 = arith.subf %115, %133 : vector<16x128xf32>
    %135 = arith.mulf %134, %134 : vector<16x128xf32>
    %cst_102 = arith.constant dense<0.000000e+00> : vector<16x128xf32>
    %136 = tpu.matmul %116, %135, %cst_102 {dimension_numbers = #tpu.dot_dimension_numbers<[1], [0], [0], [1], [0, 0, 1, 1], [], []>} : vector<16x16xf32>, vector<16x128xf32>, vector<16x128xf32> -> vector<16x128xf32>
    %cst_103 = arith.constant dense<0.000000e+00> : vector<16x8xf32>
    %137 = tpu.matmul %136, %119, %cst_103 {dimension_numbers = #tpu.dot_dimension_numbers<[1], [0], [0], [1], [0, 0, 1, 1], [], []>} : vector<16x128xf32>, vector<128x8xf32>, vector<16x8xf32> -> vector<16x8xf32>
    %cst_104 = arith.constant 0.0714285746 : f32
    %138 = vector.broadcast %cst_104 : f32 to vector<16x8xf32>
    %139 = arith.mulf %137, %138 : vector<16x8xf32>
    %cst_105 = arith.constant 9.99999974E-6 : f32
    %140 = vector.broadcast %cst_105 : f32 to vector<16x8xf32>
    %141 = arith.addf %139, %140 : vector<16x8xf32>
    %142 = math.rsqrt %141 : vector<16x8xf32>
    %143 = vector.broadcast %127 : vector<16x1xf32> to vector<16x8xf32>
    %144 = arith.mulf %142, %143 : vector<16x8xf32>
    %cst_106 = arith.constant dense<0.000000e+00> : vector<16x128xf32>
    %145 = tpu.matmul %144, %121, %cst_106 {dimension_numbers = #tpu.dot_dimension_numbers<[1], [0], [0], [1], [0, 0, 1, 1], [], []>} : vector<16x8xf32>, vector<8x128xf32>, vector<16x128xf32> -> vector<16x128xf32>
    %cst_107 = arith.constant dense<0.000000e+00> : vector<16x128xf32>
    %146 = tpu.matmul %117, %145, %cst_107 {dimension_numbers = #tpu.dot_dimension_numbers<[1], [0], [0], [1], [0, 0, 1, 1], [], []>} : vector<16x16xf32>, vector<16x128xf32>, vector<16x128xf32> -> vector<16x128xf32>
    %147 = arith.mulf %134, %146 : vector<16x128xf32>
    %148 = vector.broadcast %124 : vector<16x1xf32> to vector<16x128xf32>
    %149 = arith.addf %147, %148 : vector<16x128xf32>
    %cst_108 = arith.constant 0.000000e+00 : f32
    %150 = vector.broadcast %cst_108 : f32 to vector<16x128xf32>
    %151 = arith.cmpf oge, %149, %150 : vector<16x128xf32>
    %152 = vector.broadcast %125 : vector<16x1xf32> to vector<16x128xf32>
    %153 = arith.mulf %152, %149 : vector<16x128xf32>
    %154 = arith.select %151, %149, %153 : vector<16x128xi1>, vector<16x128xf32>
    %c2_109 = arith.constant 2 : index
    %c0_110 = arith.constant 0 : index
    %c0_111 = arith.constant 0 : index
    %155 = vector.load %arg18[%c2_109, %c0_110, %c0_111] : memref<3x1x128xf32, #tpu.memory_space<vmem>>, vector<1x1x128xf32>
    %156 = vector.shape_cast %155 : vector<1x1x128xf32> to vector<1x128xf32>
    %157 = vector.broadcast %156 : vector<1x128xf32> to vector<16x128xf32>
    %158 = arith.mulf %154, %157 : vector<16x128xf32>
    %159 = arith.truncf %158 : vector<16x128xf32> to vector<16x128xbf16>
    %c0_112 = arith.constant 0 : index
    %c0_113 = arith.constant 0 : index
    %c0_114 = arith.constant 0 : index
    %160 = vector.load %arg6[%c0_112, %c0_113, %c0_114] : memref<2x48x16xbf16, #tpu.memory_space<vmem>>, vector<1x48x16xbf16>
    %161 = vector.shape_cast %160 : vector<1x48x16xbf16> to vector<48x16xbf16>
    %cst_115 = arith.constant dense<0.000000e+00> : vector<48x128xf32>
    %162 = tpu.matmul %161, %159, %cst_115 {dimension_numbers = #tpu.dot_dimension_numbers<[1], [0], [0], [1], [0, 0, 1, 1], [], []>} : vector<48x16xbf16>, vector<16x128xbf16>, vector<48x128xf32> -> vector<48x128xf32>
    %c1_116 = arith.constant 1 : index
    %c0_117 = arith.constant 0 : index
    %c0_118 = arith.constant 0 : index
    %163 = vector.load %arg6[%c1_116, %c0_117, %c0_118] : memref<2x48x16xbf16, #tpu.memory_space<vmem>>, vector<1x48x16xbf16>
    %164 = vector.shape_cast %163 : vector<1x48x16xbf16> to vector<48x16xbf16>
    %cst_119 = arith.constant dense<0.000000e+00> : vector<48x128xf32>
    %165 = tpu.matmul %164, %159, %cst_119 {dimension_numbers = #tpu.dot_dimension_numbers<[1], [0], [0], [1], [0, 0, 1, 1], [], []>} : vector<48x16xbf16>, vector<16x128xbf16>, vector<48x128xf32> -> vector<48x128xf32>
    %c1_i32 = arith.constant 1 : i32
    %166 = tpu.dynamic_rotate %165 by %c1_i32 dim 1 : vector<48x128xf32>, i32 -> vector<48x128xf32>
    %167 = arith.addf %162, %166 : vector<48x128xf32>
    %c0_120 = arith.constant 0 : index
    %c0_121 = arith.constant 0 : index
    %168 = vector.load %arg11[%c0_120, %c0_121] : memref<16x48xf32, #tpu.memory_space<vmem>>, vector<16x48xf32>
    %c0_122 = arith.constant 0 : index
    %c0_123 = arith.constant 0 : index
    %169 = vector.load %arg14[%c0_122, %c0_123] : memref<48x16xf32, #tpu.memory_space<vmem>>, vector<48x16xf32>
    %c1_124 = arith.constant 1 : index
    %c0_125 = arith.constant 0 : index
    %c0_126 = arith.constant 0 : index
    %170 = vector.load %arg16[%c1_124, %c0_125, %c0_126] : memref<3x128x8xf32, #tpu.memory_space<vmem>>, vector<1x128x8xf32>
    %171 = vector.shape_cast %170 : vector<1x128x8xf32> to vector<128x8xf32>
    %c1_127 = arith.constant 1 : index
    %c0_128 = arith.constant 0 : index
    %c0_129 = arith.constant 0 : index
    %172 = vector.load %arg17[%c1_127, %c0_128, %c0_129] : memref<3x8x128xf32, #tpu.memory_space<vmem>>, vector<1x8x128xf32>
    %173 = vector.shape_cast %172 : vector<1x8x128xf32> to vector<8x128xf32>
    %c3 = arith.constant 3 : index
    %c0_130 = arith.constant 0 : index
    %c0_131 = arith.constant 0 : index
    %174 = vector.load %arg8[%c3, %c0_130, %c0_131] : memref<5x112x2xf32, #tpu.memory_space<vmem>>, vector<1x112x2xf32>
    %175 = vector.shape_cast %174 : vector<1x112x2xf32> to vector<112x2xf32>
    %176 = vector.extract_strided_slice %175 {offsets = [0, 0], sizes = [48, 1], strides = [1, 1]} : vector<112x2xf32> to vector<48x1xf32>
    %177 = vector.extract_strided_slice %175 {offsets = [0, 1], sizes = [48, 1], strides = [1, 1]} : vector<112x2xf32> to vector<48x1xf32>
    %c3_132 = arith.constant 3 : index
    %c0_133 = arith.constant 0 : index
    %c0_134 = arith.constant 0 : index
    %178 = vector.load %arg9[%c3_132, %c0_133, %c0_134] : memref<5x16x1xf32, #tpu.memory_space<vmem>>, vector<1x16x1xf32>
    %179 = vector.shape_cast %178 : vector<1x16x1xf32> to vector<16x1xf32>
    %cst_135 = arith.constant dense<0.000000e+00> : vector<16x128xf32>
    %180 = tpu.matmul %168, %167, %cst_135 {dimension_numbers = #tpu.dot_dimension_numbers<[1], [0], [0], [1], [0, 0, 1, 1], [], []>} : vector<16x48xf32>, vector<48x128xf32>, vector<16x128xf32> -> vector<16x128xf32>
    %cst_136 = arith.constant dense<0.000000e+00> : vector<16x8xf32>
    %181 = tpu.matmul %180, %171, %cst_136 {dimension_numbers = #tpu.dot_dimension_numbers<[1], [0], [0], [1], [0, 0, 1, 1], [], []>} : vector<16x128xf32>, vector<128x8xf32>, vector<16x8xf32> -> vector<16x8xf32>
    %cst_137 = arith.constant 0.0222222228 : f32
    %182 = vector.broadcast %cst_137 : f32 to vector<16x8xf32>
    %183 = arith.mulf %181, %182 : vector<16x8xf32>
    %cst_138 = arith.constant dense<0.000000e+00> : vector<16x128xf32>
    %184 = tpu.matmul %183, %173, %cst_138 {dimension_numbers = #tpu.dot_dimension_numbers<[1], [0], [0], [1], [0, 0, 1, 1], [], []>} : vector<16x8xf32>, vector<8x128xf32>, vector<16x128xf32> -> vector<16x128xf32>
    %cst_139 = arith.constant dense<0.000000e+00> : vector<48x128xf32>
    %185 = tpu.matmul %169, %184, %cst_139 {dimension_numbers = #tpu.dot_dimension_numbers<[1], [0], [0], [1], [0, 0, 1, 1], [], []>} : vector<48x16xf32>, vector<16x128xf32>, vector<48x128xf32> -> vector<48x128xf32>
    %186 = arith.subf %167, %185 : vector<48x128xf32>
    %187 = arith.mulf %186, %186 : vector<48x128xf32>
    %cst_140 = arith.constant dense<0.000000e+00> : vector<16x128xf32>
    %188 = tpu.matmul %168, %187, %cst_140 {dimension_numbers = #tpu.dot_dimension_numbers<[1], [0], [0], [1], [0, 0, 1, 1], [], []>} : vector<16x48xf32>, vector<48x128xf32>, vector<16x128xf32> -> vector<16x128xf32>
    %cst_141 = arith.constant dense<0.000000e+00> : vector<16x8xf32>
    %189 = tpu.matmul %188, %171, %cst_141 {dimension_numbers = #tpu.dot_dimension_numbers<[1], [0], [0], [1], [0, 0, 1, 1], [], []>} : vector<16x128xf32>, vector<128x8xf32>, vector<16x8xf32> -> vector<16x8xf32>
    %cst_142 = arith.constant 0.0222222228 : f32
    %190 = vector.broadcast %cst_142 : f32 to vector<16x8xf32>
    %191 = arith.mulf %189, %190 : vector<16x8xf32>
    %cst_143 = arith.constant 9.99999974E-6 : f32
    %192 = vector.broadcast %cst_143 : f32 to vector<16x8xf32>
    %193 = arith.addf %191, %192 : vector<16x8xf32>
    %194 = math.rsqrt %193 : vector<16x8xf32>
    %195 = vector.broadcast %179 : vector<16x1xf32> to vector<16x8xf32>
    %196 = arith.mulf %194, %195 : vector<16x8xf32>
    %cst_144 = arith.constant dense<0.000000e+00> : vector<16x128xf32>
    %197 = tpu.matmul %196, %173, %cst_144 {dimension_numbers = #tpu.dot_dimension_numbers<[1], [0], [0], [1], [0, 0, 1, 1], [], []>} : vector<16x8xf32>, vector<8x128xf32>, vector<16x128xf32> -> vector<16x128xf32>
    %cst_145 = arith.constant dense<0.000000e+00> : vector<48x128xf32>
    %198 = tpu.matmul %169, %197, %cst_145 {dimension_numbers = #tpu.dot_dimension_numbers<[1], [0], [0], [1], [0, 0, 1, 1], [], []>} : vector<48x16xf32>, vector<16x128xf32>, vector<48x128xf32> -> vector<48x128xf32>
    %199 = arith.mulf %186, %198 : vector<48x128xf32>
    %200 = vector.broadcast %176 : vector<48x1xf32> to vector<48x128xf32>
    %201 = arith.addf %199, %200 : vector<48x128xf32>
    %cst_146 = arith.constant 0.000000e+00 : f32
    %202 = vector.broadcast %cst_146 : f32 to vector<48x128xf32>
    %203 = arith.cmpf oge, %201, %202 : vector<48x128xf32>
    %204 = vector.broadcast %177 : vector<48x1xf32> to vector<48x128xf32>
    %205 = arith.mulf %204, %201 : vector<48x128xf32>
    %206 = arith.select %203, %201, %205 : vector<48x128xi1>, vector<48x128xf32>
    %c1_147 = arith.constant 1 : index
    %c0_148 = arith.constant 0 : index
    %c0_149 = arith.constant 0 : index
    %207 = vector.load %arg18[%c1_147, %c0_148, %c0_149] : memref<3x1x128xf32, #tpu.memory_space<vmem>>, vector<1x1x128xf32>
    %208 = vector.shape_cast %207 : vector<1x1x128xf32> to vector<1x128xf32>
    %209 = vector.broadcast %208 : vector<1x128xf32> to vector<48x128xf32>
    %210 = arith.mulf %206, %209 : vector<48x128xf32>
    %211 = tpu.concatenate %210, %106 in 0 : vector<48x128xf32>, vector<48x128xf32> -> vector<96x128xf32>
    %212 = arith.truncf %211 : vector<96x128xf32> to vector<96x128xbf16>
    %c0_150 = arith.constant 0 : index
    %c0_151 = arith.constant 0 : index
    %c0_152 = arith.constant 0 : index
    %213 = vector.load %arg7[%c0_150, %c0_151, %c0_152] : memref<2x112x96xbf16, #tpu.memory_space<vmem>>, vector<1x112x96xbf16>
    %214 = vector.shape_cast %213 : vector<1x112x96xbf16> to vector<112x96xbf16>
    %cst_153 = arith.constant dense<0.000000e+00> : vector<112x128xf32>
    %215 = tpu.matmul %214, %212, %cst_153 {dimension_numbers = #tpu.dot_dimension_numbers<[1], [0], [0], [1], [0, 0, 1, 1], [], []>} : vector<112x96xbf16>, vector<96x128xbf16>, vector<112x128xf32> -> vector<112x128xf32>
    %c1_154 = arith.constant 1 : index
    %c0_155 = arith.constant 0 : index
    %c0_156 = arith.constant 0 : index
    %216 = vector.load %arg7[%c1_154, %c0_155, %c0_156] : memref<2x112x96xbf16, #tpu.memory_space<vmem>>, vector<1x112x96xbf16>
    %217 = vector.shape_cast %216 : vector<1x112x96xbf16> to vector<112x96xbf16>
    %cst_157 = arith.constant dense<0.000000e+00> : vector<112x128xf32>
    %218 = tpu.matmul %217, %212, %cst_157 {dimension_numbers = #tpu.dot_dimension_numbers<[1], [0], [0], [1], [0, 0, 1, 1], [], []>} : vector<112x96xbf16>, vector<96x128xbf16>, vector<112x128xf32> -> vector<112x128xf32>
    %c1_i32_158 = arith.constant 1 : i32
    %219 = tpu.dynamic_rotate %218 by %c1_i32_158 dim 1 : vector<112x128xf32>, i32 -> vector<112x128xf32>
    %220 = arith.addf %215, %219 : vector<112x128xf32>
    %c0_159 = arith.constant 0 : index
    %c0_160 = arith.constant 0 : index
    %221 = vector.load %arg10[%c0_159, %c0_160] : memref<16x112xf32, #tpu.memory_space<vmem>>, vector<16x112xf32>
    %c0_161 = arith.constant 0 : index
    %c0_162 = arith.constant 0 : index
    %222 = vector.load %arg13[%c0_161, %c0_162] : memref<112x16xf32, #tpu.memory_space<vmem>>, vector<112x16xf32>
    %c0_163 = arith.constant 0 : index
    %c0_164 = arith.constant 0 : index
    %c0_165 = arith.constant 0 : index
    %223 = vector.load %arg16[%c0_163, %c0_164, %c0_165] : memref<3x128x8xf32, #tpu.memory_space<vmem>>, vector<1x128x8xf32>
    %224 = vector.shape_cast %223 : vector<1x128x8xf32> to vector<128x8xf32>
    %c0_166 = arith.constant 0 : index
    %c0_167 = arith.constant 0 : index
    %c0_168 = arith.constant 0 : index
    %225 = vector.load %arg17[%c0_166, %c0_167, %c0_168] : memref<3x8x128xf32, #tpu.memory_space<vmem>>, vector<1x8x128xf32>
    %226 = vector.shape_cast %225 : vector<1x8x128xf32> to vector<8x128xf32>
    %c4 = arith.constant 4 : index
    %c0_169 = arith.constant 0 : index
    %c0_170 = arith.constant 0 : index
    %227 = vector.load %arg8[%c4, %c0_169, %c0_170] : memref<5x112x2xf32, #tpu.memory_space<vmem>>, vector<1x112x2xf32>
    %228 = vector.shape_cast %227 : vector<1x112x2xf32> to vector<112x2xf32>
    %229 = vector.extract_strided_slice %228 {offsets = [0, 0], sizes = [112, 1], strides = [1, 1]} : vector<112x2xf32> to vector<112x1xf32>
    %230 = vector.extract_strided_slice %228 {offsets = [0, 1], sizes = [112, 1], strides = [1, 1]} : vector<112x2xf32> to vector<112x1xf32>
    %c4_171 = arith.constant 4 : index
    %c0_172 = arith.constant 0 : index
    %c0_173 = arith.constant 0 : index
    %231 = vector.load %arg9[%c4_171, %c0_172, %c0_173] : memref<5x16x1xf32, #tpu.memory_space<vmem>>, vector<1x16x1xf32>
    %232 = vector.shape_cast %231 : vector<1x16x1xf32> to vector<16x1xf32>
    %cst_174 = arith.constant dense<0.000000e+00> : vector<16x128xf32>
    %233 = tpu.matmul %221, %220, %cst_174 {dimension_numbers = #tpu.dot_dimension_numbers<[1], [0], [0], [1], [0, 0, 1, 1], [], []>} : vector<16x112xf32>, vector<112x128xf32>, vector<16x128xf32> -> vector<16x128xf32>
    %cst_175 = arith.constant dense<0.000000e+00> : vector<16x8xf32>
    %234 = tpu.matmul %233, %224, %cst_175 {dimension_numbers = #tpu.dot_dimension_numbers<[1], [0], [0], [1], [0, 0, 1, 1], [], []>} : vector<16x128xf32>, vector<128x8xf32>, vector<16x8xf32> -> vector<16x8xf32>
    %cst_176 = arith.constant 0.00892857183 : f32
    %235 = vector.broadcast %cst_176 : f32 to vector<16x8xf32>
    %236 = arith.mulf %234, %235 : vector<16x8xf32>
    %cst_177 = arith.constant dense<0.000000e+00> : vector<16x128xf32>
    %237 = tpu.matmul %236, %226, %cst_177 {dimension_numbers = #tpu.dot_dimension_numbers<[1], [0], [0], [1], [0, 0, 1, 1], [], []>} : vector<16x8xf32>, vector<8x128xf32>, vector<16x128xf32> -> vector<16x128xf32>
    %cst_178 = arith.constant dense<0.000000e+00> : vector<112x128xf32>
    %238 = tpu.matmul %222, %237, %cst_178 {dimension_numbers = #tpu.dot_dimension_numbers<[1], [0], [0], [1], [0, 0, 1, 1], [], []>} : vector<112x16xf32>, vector<16x128xf32>, vector<112x128xf32> -> vector<112x128xf32>
    %239 = arith.subf %220, %238 : vector<112x128xf32>
    %240 = arith.mulf %239, %239 : vector<112x128xf32>
    %cst_179 = arith.constant dense<0.000000e+00> : vector<16x128xf32>
    %241 = tpu.matmul %221, %240, %cst_179 {dimension_numbers = #tpu.dot_dimension_numbers<[1], [0], [0], [1], [0, 0, 1, 1], [], []>} : vector<16x112xf32>, vector<112x128xf32>, vector<16x128xf32> -> vector<16x128xf32>
    %cst_180 = arith.constant dense<0.000000e+00> : vector<16x8xf32>
    %242 = tpu.matmul %241, %224, %cst_180 {dimension_numbers = #tpu.dot_dimension_numbers<[1], [0], [0], [1], [0, 0, 1, 1], [], []>} : vector<16x128xf32>, vector<128x8xf32>, vector<16x8xf32> -> vector<16x8xf32>
    %cst_181 = arith.constant 0.00892857183 : f32
    %243 = vector.broadcast %cst_181 : f32 to vector<16x8xf32>
    %244 = arith.mulf %242, %243 : vector<16x8xf32>
    %cst_182 = arith.constant 9.99999974E-6 : f32
    %245 = vector.broadcast %cst_182 : f32 to vector<16x8xf32>
    %246 = arith.addf %244, %245 : vector<16x8xf32>
    %247 = math.rsqrt %246 : vector<16x8xf32>
    %248 = vector.broadcast %232 : vector<16x1xf32> to vector<16x8xf32>
    %249 = arith.mulf %247, %248 : vector<16x8xf32>
    %cst_183 = arith.constant dense<0.000000e+00> : vector<16x128xf32>
    %250 = tpu.matmul %249, %226, %cst_183 {dimension_numbers = #tpu.dot_dimension_numbers<[1], [0], [0], [1], [0, 0, 1, 1], [], []>} : vector<16x8xf32>, vector<8x128xf32>, vector<16x128xf32> -> vector<16x128xf32>
    %cst_184 = arith.constant dense<0.000000e+00> : vector<112x128xf32>
    %251 = tpu.matmul %222, %250, %cst_184 {dimension_numbers = #tpu.dot_dimension_numbers<[1], [0], [0], [1], [0, 0, 1, 1], [], []>} : vector<112x16xf32>, vector<16x128xf32>, vector<112x128xf32> -> vector<112x128xf32>
    %252 = arith.mulf %239, %251 : vector<112x128xf32>
    %253 = vector.broadcast %229 : vector<112x1xf32> to vector<112x128xf32>
    %254 = arith.addf %252, %253 : vector<112x128xf32>
    %cst_185 = arith.constant 0.000000e+00 : f32
    %255 = vector.broadcast %cst_185 : f32 to vector<112x128xf32>
    %256 = arith.cmpf oge, %254, %255 : vector<112x128xf32>
    %257 = vector.broadcast %230 : vector<112x1xf32> to vector<112x128xf32>
    %258 = arith.mulf %257, %254 : vector<112x128xf32>
    %259 = arith.select %256, %254, %258 : vector<112x128xi1>, vector<112x128xf32>
    %260 = arith.addf %54, %259 : vector<112x128xf32>
    %c0_186 = arith.constant 0 : index
    %c0_187 = arith.constant 0 : index
    %c0_188 = arith.constant 0 : index
    %261 = vector.load %arg19[%c0_186, %c0_187, %c0_188] : memref<1x112x128xf32, #tpu.memory_space<vmem>>, vector<1x112x128xf32>
    %262 = vector.shape_cast %261 : vector<1x112x128xf32> to vector<112x128xf32>
    %263 = vector.shape_cast %260 : vector<112x128xf32> to vector<1x112x128xf32>
    tpu.vector_store %arg19[%c0_186, %c0_187, %c0_188], %263 {strides = array<i32>} : memref<1x112x128xf32, #tpu.memory_space<vmem>>, vector<1x112x128xf32>,
    return
  }
  func.func @transform_0(%arg0: i32) -> (i32, i32, i32) {
    %c0_i32 = arith.constant 0 : i32
    %c0_i32_0 = arith.constant 0 : i32
    %c0_i32_1 = arith.constant 0 : i32
    return %arg0, %c0_i32, %c0_i32_0 : i32, i32, i32
  }
  func.func @transform_1(%arg0: i32) -> (i32, i32) {
    %c0_i32 = arith.constant 0 : i32
    %c0_i32_0 = arith.constant 0 : i32
    %c0_i32_1 = arith.constant 0 : i32
    return %c0_i32, %c0_i32_0 : i32, i32
  }
  func.func @transform_2(%arg0: i32) -> (i32, i32) {
    %c0_i32 = arith.constant 0 : i32
    %c0_i32_0 = arith.constant 0 : i32
    %c0_i32_1 = arith.constant 0 : i32
    return %c0_i32, %c0_i32_0 : i32, i32
  }
  func.func @transform_3(%arg0: i32) -> (i32, i32, i32) {
    %c0_i32 = arith.constant 0 : i32
    %c0_i32_0 = arith.constant 0 : i32
    %c0_i32_1 = arith.constant 0 : i32
    %c0_i32_2 = arith.constant 0 : i32
    return %c0_i32, %c0_i32_0, %c0_i32_1 : i32, i32, i32
  }
  func.func @transform_4(%arg0: i32) -> (i32, i32, i32) {
    %c0_i32 = arith.constant 0 : i32
    %c0_i32_0 = arith.constant 0 : i32
    %c0_i32_1 = arith.constant 0 : i32
    %c0_i32_2 = arith.constant 0 : i32
    return %c0_i32, %c0_i32_0, %c0_i32_1 : i32, i32, i32
  }
  func.func @transform_5(%arg0: i32) -> (i32, i32, i32) {
    %c0_i32 = arith.constant 0 : i32
    %c0_i32_0 = arith.constant 0 : i32
    %c0_i32_1 = arith.constant 0 : i32
    %c0_i32_2 = arith.constant 0 : i32
    return %c0_i32, %c0_i32_0, %c0_i32_1 : i32, i32, i32
  }
  func.func @transform_6(%arg0: i32) -> (i32, i32, i32) {
    %c0_i32 = arith.constant 0 : i32
    %c0_i32_0 = arith.constant 0 : i32
    %c0_i32_1 = arith.constant 0 : i32
    %c0_i32_2 = arith.constant 0 : i32
    return %c0_i32, %c0_i32_0, %c0_i32_1 : i32, i32, i32
  }
  func.func @transform_7(%arg0: i32) -> (i32, i32, i32) {
    %c0_i32 = arith.constant 0 : i32
    %c0_i32_0 = arith.constant 0 : i32
    %c0_i32_1 = arith.constant 0 : i32
    %c0_i32_2 = arith.constant 0 : i32
    return %c0_i32, %c0_i32_0, %c0_i32_1 : i32, i32, i32
  }
  func.func @transform_8(%arg0: i32) -> (i32, i32, i32) {
    %c0_i32 = arith.constant 0 : i32
    %c0_i32_0 = arith.constant 0 : i32
    %c0_i32_1 = arith.constant 0 : i32
    %c0_i32_2 = arith.constant 0 : i32
    return %c0_i32, %c0_i32_0, %c0_i32_1 : i32, i32, i32
  }
  func.func @transform_9(%arg0: i32) -> (i32, i32) {
    %c0_i32 = arith.constant 0 : i32
    %c0_i32_0 = arith.constant 0 : i32
    %c0_i32_1 = arith.constant 0 : i32
    return %c0_i32, %c0_i32_0 : i32, i32
  }
  func.func @transform_10(%arg0: i32) -> (i32, i32) {
    %c0_i32 = arith.constant 0 : i32
    %c0_i32_0 = arith.constant 0 : i32
    %c0_i32_1 = arith.constant 0 : i32
    return %c0_i32, %c0_i32_0 : i32, i32
  }
  func.func @transform_11(%arg0: i32) -> (i32, i32) {
    %c0_i32 = arith.constant 0 : i32
    %c0_i32_0 = arith.constant 0 : i32
    %c0_i32_1 = arith.constant 0 : i32
    return %c0_i32, %c0_i32_0 : i32, i32
  }
  func.func @transform_12(%arg0: i32) -> (i32, i32) {
    %c0_i32 = arith.constant 0 : i32
    %c0_i32_0 = arith.constant 0 : i32
    %c0_i32_1 = arith.constant 0 : i32
    return %c0_i32, %c0_i32_0 : i32, i32
  }
  func.func @transform_13(%arg0: i32) -> (i32, i32) {
    %c0_i32 = arith.constant 0 : i32
    %c0_i32_0 = arith.constant 0 : i32
    %c0_i32_1 = arith.constant 0 : i32
    return %c0_i32, %c0_i32_0 : i32, i32
  }
  func.func @transform_14(%arg0: i32) -> (i32, i32) {
    %c0_i32 = arith.constant 0 : i32
    %c0_i32_0 = arith.constant 0 : i32
    %c0_i32_1 = arith.constant 0 : i32
    return %c0_i32, %c0_i32_0 : i32, i32
  }
  func.func @transform_15(%arg0: i32) -> (i32, i32, i32) {
    %c0_i32 = arith.constant 0 : i32
    %c0_i32_0 = arith.constant 0 : i32
    %c0_i32_1 = arith.constant 0 : i32
    %c0_i32_2 = arith.constant 0 : i32
    return %c0_i32, %c0_i32_0, %c0_i32_1 : i32, i32, i32
  }
  func.func @transform_16(%arg0: i32) -> (i32, i32, i32) {
    %c0_i32 = arith.constant 0 : i32
    %c0_i32_0 = arith.constant 0 : i32
    %c0_i32_1 = arith.constant 0 : i32
    %c0_i32_2 = arith.constant 0 : i32
    return %c0_i32, %c0_i32_0, %c0_i32_1 : i32, i32, i32
  }
  func.func @transform_17(%arg0: i32) -> (i32, i32, i32) {
    %c0_i32 = arith.constant 0 : i32
    %c0_i32_0 = arith.constant 0 : i32
    %c0_i32_1 = arith.constant 0 : i32
    %c0_i32_2 = arith.constant 0 : i32
    return %c0_i32, %c0_i32_0, %c0_i32_1 : i32, i32, i32
  }
  func.func @transform_18(%arg0: i32) -> (i32, i32, i32) {
    %c0_i32 = arith.constant 0 : i32
    %c0_i32_0 = arith.constant 0 : i32
    %c0_i32_1 = arith.constant 0 : i32
    return %arg0, %c0_i32, %c0_i32_0 : i32, i32, i32
  }
}

</mosaic_0001>

<llo_original>
// kernel: forward.1
$region0: #{forward.1}
  #allocation0 [shape = 'u32[]', space=smem, size = 0x4, offset = 0x4, fixed_abs, tag = 'smem constant byte address 0x4 - core index']
  #allocation1 [shape = 'u32[144,128]{1,0:T(1,128)}', space=vmem, size = 0x12000, scoped, tag = 'internal scratch']
  %s0 = inlined_call_operand.vmem [shape: f32[2,80,128], index: 0, kind: input, shape index: {}]
  %s1 = inlined_call_operand.vmem [shape: bf16[224,80], index: 1, kind: input, shape index: {}]
  %s2 = inlined_call_operand.vmem [shape: f32[224,1], index: 2, kind: input, shape index: {}]
  %s3 = inlined_call_operand.vmem [shape: bf16[2,48,112], index: 3, kind: input, shape index: {}]
  %s4 = inlined_call_operand.vmem [shape: bf16[2,16,48], index: 4, kind: input, shape index: {}]
  %s5 = inlined_call_operand.vmem [shape: bf16[2,48,16], index: 5, kind: input, shape index: {}]
  %s6 = inlined_call_operand.vmem [shape: bf16[2,112,96], index: 6, kind: input, shape index: {}]
  %s7 = inlined_call_operand.vmem [shape: f32[5,112,2], index: 7, kind: input, shape index: {}]
  %s8 = inlined_call_operand.vmem [shape: f32[5,16,1], index: 8, kind: input, shape index: {}]
  %s9 = inlined_call_operand.vmem [shape: f32[16,112], index: 9, kind: input, shape index: {}]
  %s10 = inlined_call_operand.vmem [shape: f32[16,48], index: 10, kind: input, shape index: {}]
  %s11 = inlined_call_operand.vmem [shape: f32[16,16], index: 11, kind: input, shape index: {}]
  %s12 = inlined_call_operand.vmem [shape: f32[112,16], index: 12, kind: input, shape index: {}]
  %s13 = inlined_call_operand.vmem [shape: f32[48,16], index: 13, kind: input, shape index: {}]
  %s14 = inlined_call_operand.vmem [shape: f32[16,16], index: 14, kind: input, shape index: {}]
  %s15 = inlined_call_operand.vmem [shape: f32[3,128,8], index: 15, kind: input, shape index: {}]
  %s16 = inlined_call_operand.vmem [shape: f32[3,8,128], index: 16, kind: input, shape index: {}]
  %s17 = inlined_call_operand.vmem [shape: f32[3,1,128], index: 17, kind: input, shape index: {}]
  %s18 = inlined_call_operand.vmem [shape: f32[2,112,128], index: 18, kind: output, shape index: {}]
  %s19 = sld [smem:[#allocation0]]
  $region105: #{forward.1} parent=0
    _
  %s21 = ssub.s32 1, %s19
  %s22 = scalar_select 0, %s21, %s19
  loop: start=0, step=1, limit=4
  $region2: #{forward.1} parent=0 // loop_pre_header
    _
  $region3: #{forward.1} parent=0 // loop_header
    %s24 = sphi 0, %s28
    %p25 = scmp.ge.s32.totalorder %s24, 4
    %s34 = sphi 0, %s36
    %s37 = sphi 0, %s34
    %s38 = sphi 0, %s37
    %s54 = sphi 0, %s38
    %s58 = sphi 0, %s58
    %s60 = sphi 0, %s58
    %s61 = sphi 0, %s60
    %s75 = sphi 0, %s61
    %s79 = sphi 0, %s79
    %s81 = sphi 0, %s79
    %s82 = sphi 0, %s81
    %s96 = sphi 0, %s82
    %s100 = sphi 0, %s100
    %s102 = sphi 0, %s100
    %s103 = sphi 0, %s102
    %s117 = sphi 0, %s103
    %s121 = sphi 0, %s121
    %s123 = sphi 0, %s121
    %s124 = sphi 0, %s123
    %s138 = sphi 0, %s124
    %s142 = sphi 0, %s142
    %s144 = sphi 0, %s142
    %s145 = sphi 0, %s144
    %s159 = sphi 0, %s145
    %s163 = sphi 0, %s163
    %s165 = sphi 0, %s163
    %s166 = sphi 0, %s165
    %s180 = sphi 0, %s166
    %s184 = sphi 0, %s184
    %s186 = sphi 0, %s184
    %s187 = sphi 0, %s186
    %s201 = sphi 0, %s187
    %s205 = sphi 0, %s205
    %s207 = sphi 0, %s205
    %s208 = sphi 0, %s207
    %s222 = sphi 0, %s208
    %s226 = sphi 0, %s226
    %s228 = sphi 0, %s226
    %s229 = sphi 0, %s228
    %s243 = sphi 0, %s229
    %s247 = sphi 0, %s247
    %s249 = sphi 0, %s247
    %s250 = sphi 0, %s249
    %s264 = sphi 0, %s250
    %s268 = sphi 0, %s268
    %s270 = sphi 0, %s268
    %s271 = sphi 0, %s270
    %s285 = sphi 0, %s271
    %s289 = sphi 0, %s289
    %s291 = sphi 0, %s289
    %s292 = sphi 0, %s291
    %s306 = sphi 0, %s292
    %s310 = sphi 0, %s310
    %s312 = sphi 0, %s310
    %s313 = sphi 0, %s312
    %s327 = sphi 0, %s313
    %s331 = sphi 0, %s331
    %s333 = sphi 0, %s331
    %s334 = sphi 0, %s333
    %s348 = sphi 0, %s334
    %s352 = sphi 0, %s352
    %s354 = sphi 0, %s352
    %s355 = sphi 0, %s354
    %s369 = sphi 0, %s355
    %s373 = sphi 0, %s373
    %s375 = sphi 0, %s373
    %s376 = sphi 0, %s375
    %s390 = sphi 0, %s376
    %s394 = sphi 0, %s394
    %s396 = sphi 0, %s394
    %s397 = sphi 0, %s396
    %s411 = sphi 0, %s397
    %s417 = sphi 0, %s419
    %s420 = sphi 0, %s417
    %s421 = sphi 0, %s420
    %s437 = sphi 0, %s421
  $region4: #{forward.1} parent=0 // loop_header_branch
    %27 = sbr.rel (%p25) target = $region8
  $region5: #{forward.1} parent=0 // loop_body
    %s29 = ssub.s32 %s24, 1
    %s30 = ssub.s32 %s24, 2
    %s31 = sadd.s32 %s24, 1
    %s32 = ssub.s32 %s24, %s31
    %p33 = scmp.eq.s32.totalorder %s32, 0
    %s35 = sadd.s32 %s34, 1
    %s36 = scalar_select %p33, %s34, %s35
    %p39 = pneg %p33
    %p40 = scmp.eq.s32.totalorder %s24, 1
    %p41 = por %p39, %p40
    %p42 = scmp.ne.s32.totalorder %s34, %s37
    %p43 = scmp.eq.s32.totalorder %s24, 0
    %p44 = por %p42, %p43
    %p45 = scmp.ne.s32.totalorder %s34, %s37
    %p46 = scmp.eq.s32.totalorder %s29, 1
    %p47 = por %p45, %p46
    %p48 = scmp.ne.s32.totalorder %s37, %s38
    %p49 = scmp.eq.s32.totalorder %s29, 0
    %p50 = por %p48, %p49
    %p51 = scmp.ne.s32.totalorder %s37, %s38
    %p52 = scmp.eq.s32.totalorder %s30, 1
    %p53 = por %p51, %p52
    %p55 = scmp.ne.s32.totalorder %s38, %s54
    %p56 = scmp.eq.s32.totalorder %s30, 0
    %p57 = por %p55, %p56
    %s59 = sadd.s32 %s58, 1
    %p62 = scmp.eq.s32.totalorder %s24, 1
    %p63 = scmp.ne.s32.totalorder %s58, %s60
    %p64 = scmp.eq.s32.totalorder %s24, 0
    %p65 = por %p63, %p64
    %p66 = scmp.ne.s32.totalorder %s58, %s60
    %p67 = scmp.eq.s32.totalorder %s29, 1
    %p68 = por %p66, %p67
    %p69 = scmp.ne.s32.totalorder %s60, %s61
    %p70 = scmp.eq.s32.totalorder %s29, 0
    %p71 = por %p69, %p70
    %p72 = scmp.ne.s32.totalorder %s60, %s61
    %p73 = scmp.eq.s32.totalorder %s30, 1
    %p74 = por %p72, %p73
    %p76 = scmp.ne.s32.totalorder %s61, %s75
    %p77 = scmp.eq.s32.totalorder %s30, 0
    %p78 = por %p76, %p77
    %s80 = sadd.s32 %s79, 1
    %p83 = scmp.eq.s32.totalorder %s24, 1
    %p84 = scmp.ne.s32.totalorder %s79, %s81
    %p85 = scmp.eq.s32.totalorder %s24, 0
    %p86 = por %p84, %p85
    %p87 = scmp.ne.s32.totalorder %s79, %s81
    %p88 = scmp.eq.s32.totalorder %s29, 1
    %p89 = por %p87, %p88
    %p90 = scmp.ne.s32.totalorder %s81, %s82
    %p91 = scmp.eq.s32.totalorder %s29, 0
    %p92 = por %p90, %p91
    %p93 = scmp.ne.s32.totalorder %s81, %s82
    %p94 = scmp.eq.s32.totalorder %s30, 1
    %p95 = por %p93, %p94
    %p97 = scmp.ne.s32.totalorder %s82, %s96
    %p98 = scmp.eq.s32.totalorder %s30, 0
    %p99 = por %p97, %p98
    %s101 = sadd.s32 %s100, 1
    %p104 = scmp.eq.s32.totalorder %s24, 1
    %p105 = scmp.ne.s32.totalorder %s100, %s102
    %p106 = scmp.eq.s32.totalorder %s24, 0
    %p107 = por %p105, %p106
    %p108 = scmp.ne.s32.totalorder %s100, %s102
    %p109 = scmp.eq.s32.totalorder %s29, 1
    %p110 = por %p108, %p109
    %p111 = scmp.ne.s32.totalorder %s102, %s103
    %p112 = scmp.eq.s32.totalorder %s29, 0
    %p113 = por %p111, %p112
    %p114 = scmp.ne.s32.totalorder %s102, %s103
    %p115 = scmp.eq.s32.totalorder %s30, 1
    %p116 = por %p114, %p115
    %p118 = scmp.ne.s32.totalorder %s103, %s117
    %p119 = scmp.eq.s32.totalorder %s30, 0
    %p120 = por %p118, %p119
    %s122 = sadd.s32 %s121, 1
    %p125 = scmp.eq.s32.totalorder %s24, 1
    %p126 = scmp.ne.s32.totalorder %s121, %s123
    %p127 = scmp.eq.s32.totalorder %s24, 0
    %p128 = por %p126, %p127
    %p129 = scmp.ne.s32.totalorder %s121, %s123
    %p130 = scmp.eq.s32.totalorder %s29, 1
    %p131 = por %p129, %p130
    %p132 = scmp.ne.s32.totalorder %s123, %s124
    %p133 = scmp.eq.s32.totalorder %s29, 0
    %p134 = por %p132, %p133
    %p135 = scmp.ne.s32.totalorder %s123, %s124
    %p136 = scmp.eq.s32.totalorder %s30, 1
    %p137 = por %p135, %p136
    %p139 = scmp.ne.s32.totalorder %s124, %s138
    %p140 = scmp.eq.s32.totalorder %s30, 0
    %p141 = por %p139, %p140
    %s143 = sadd.s32 %s142, 1
    %p146 = scmp.eq.s32.totalorder %s24, 1
    %p147 = scmp.ne.s32.totalorder %s142, %s144
    %p148 = scmp.eq.s32.totalorder %s24, 0
    %p149 = por %p147, %p148
    %p150 = scmp.ne.s32.totalorder %s142, %s144
    %p151 = scmp.eq.s32.totalorder %s29, 1
    %p152 = por %p150, %p151
    %p153 = scmp.ne.s32.totalorder %s144, %s145
    %p154 = scmp.eq.s32.totalorder %s29, 0
    %p155 = por %p153, %p154
    %p156 = scmp.ne.s32.totalorder %s144, %s145
    %p157 = scmp.eq.s32.totalorder %s30, 1
    %p158 = por %p156, %p157
    %p160 = scmp.ne.s32.totalorder %s145, %s159
    %p161 = scmp.eq.s32.totalorder %s30, 0
    %p162 = por %p160, %p161
    %s164 = sadd.s32 %s163, 1
    %p167 = scmp.eq.s32.totalorder %s24, 1
    %p168 = scmp.ne.s32.totalorder %s163, %s165
    %p169 = scmp.eq.s32.totalorder %s24, 0
    %p170 = por %p168, %p169
    %p171 = scmp.ne.s32.totalorder %s163, %s165
    %p172 = scmp.eq.s32.totalorder %s29, 1
    %p173 = por %p171, %p172
    %p174 = scmp.ne.s32.totalorder %s165, %s166
    %p175 = scmp.eq.s32.totalorder %s29, 0
    %p176 = por %p174, %p175
    %p177 = scmp.ne.s32.totalorder %s165, %s166
    %p178 = scmp.eq.s32.totalorder %s30, 1
    %p179 = por %p177, %p178
    %p181 = scmp.ne.s32.totalorder %s166, %s180
    %p182 = scmp.eq.s32.totalorder %s30, 0
    %p183 = por %p181, %p182
    %s185 = sadd.s32 %s184, 1
    %p188 = scmp.eq.s32.totalorder %s24, 1
    %p189 = scmp.ne.s32.totalorder %s184, %s186
    %p190 = scmp.eq.s32.totalorder %s24, 0
    %p191 = por %p189, %p190
    %p192 = scmp.ne.s32.totalorder %s184, %s186
    %p193 = scmp.eq.s32.totalorder %s29, 1
    %p194 = por %p192, %p193
    %p195 = scmp.ne.s32.totalorder %s186, %s187
    %p196 = scmp.eq.s32.totalorder %s29, 0
    %p197 = por %p195, %p196
    %p198 = scmp.ne.s32.totalorder %s186, %s187
    %p199 = scmp.eq.s32.totalorder %s30, 1
    %p200 = por %p198, %p199
    %p202 = scmp.ne.s32.totalorder %s187, %s201
    %p203 = scmp.eq.s32.totalorder %s30, 0
    %p204 = por %p202, %p203
    %s206 = sadd.s32 %s205, 1
    %p209 = scmp.eq.s32.totalorder %s24, 1
    %p210 = scmp.ne.s32.totalorder %s205, %s207
    %p211 = scmp.eq.s32.totalorder %s24, 0
    %p212 = por %p210, %p211
    %p213 = scmp.ne.s32.totalorder %s205, %s207
    %p214 = scmp.eq.s32.totalorder %s29, 1
    %p215 = por %p213, %p214
    %p216 = scmp.ne.s32.totalorder %s207, %s208
    %p217 = scmp.eq.s32.totalorder %s29, 0
    %p218 = por %p216, %p217
    %p219 = scmp.ne.s32.totalorder %s207, %s208
    %p220 = scmp.eq.s32.totalorder %s30, 1
    %p221 = por %p219, %p220
    %p223 = scmp.ne.s32.totalorder %s208, %s222
    %p224 = scmp.eq.s32.totalorder %s30, 0
    %p225 = por %p223, %p224
    %s227 = sadd.s32 %s226, 1
    %p230 = scmp.eq.s32.totalorder %s24, 1
    %p231 = scmp.ne.s32.totalorder %s226, %s228
    %p232 = scmp.eq.s32.totalorder %s24, 0
    %p233 = por %p231, %p232
    %p234 = scmp.ne.s32.totalorder %s226, %s228
    %p235 = scmp.eq.s32.totalorder %s29, 1
    %p236 = por %p234, %p235
    %p237 = scmp.ne.s32.totalorder %s228, %s229
    %p238 = scmp.eq.s32.totalorder %s29, 0
    %p239 = por %p237, %p238
    %p240 = scmp.ne.s32.totalorder %s228, %s229
    %p241 = scmp.eq.s32.totalorder %s30, 1
    %p242 = por %p240, %p241
    %p244 = scmp.ne.s32.totalorder %s229, %s243
    %p245 = scmp.eq.s32.totalorder %s30, 0
    %p246 = por %p244, %p245
    %s248 = sadd.s32 %s247, 1
    %p251 = scmp.eq.s32.totalorder %s24, 1
    %p252 = scmp.ne.s32.totalorder %s247, %s249
    %p253 = scmp.eq.s32.totalorder %s24, 0
    %p254 = por %p252, %p253
    %p255 = scmp.ne.s32.totalorder %s247, %s249
    %p256 = scmp.eq.s32.totalorder %s29, 1
    %p257 = por %p255, %p256
    %p258 = scmp.ne.s32.totalorder %s249, %s250
    %p259 = scmp.eq.s32.totalorder %s29, 0
    %p260 = por %p258, %p259
    %p261 = scmp.ne.s32.totalorder %s249, %s250
    %p262 = scmp.eq.s32.totalorder %s30, 1
    %p263 = por %p261, %p262
    %p265 = scmp.ne.s32.totalorder %s250, %s264
    %p266 = scmp.eq.s32.totalorder %s30, 0
    %p267 = por %p265, %p266
    %s269 = sadd.s32 %s268, 1
    %p272 = scmp.eq.s32.totalorder %s24, 1
    %p273 = scmp.ne.s32.totalorder %s268, %s270
    %p274 = scmp.eq.s32.totalorder %s24, 0
    %p275 = por %p273, %p274
    %p276 = scmp.ne.s32.totalorder %s268, %s270
    %p277 = scmp.eq.s32.totalorder %s29, 1
    %p278 = por %p276, %p277
    %p279 = scmp.ne.s32.totalorder %s270, %s271
    %p280 = scmp.eq.s32.totalorder %s29, 0
    %p281 = por %p279, %p280
    %p282 = scmp.ne.s32.totalorder %s270, %s271
    %p283 = scmp.eq.s32.totalorder %s30, 1
    %p284 = por %p282, %p283
    %p286 = scmp.ne.s32.totalorder %s271, %s285
    %p287 = scmp.eq.s32.totalorder %s30, 0
    %p288 = por %p286, %p287
    %s290 = sadd.s32 %s289, 1
    %p293 = scmp.eq.s32.totalorder %s24, 1
    %p294 = scmp.ne.s32.totalorder %s289, %s291
    %p295 = scmp.eq.s32.totalorder %s24, 0
    %p296 = por %p294, %p295
    %p297 = scmp.ne.s32.totalorder %s289, %s291
    %p298 = scmp.eq.s32.totalorder %s29, 1
    %p299 = por %p297, %p298
    %p300 = scmp.ne.s32.totalorder %s291, %s292
    %p301 = scmp.eq.s32.totalorder %s29, 0
    %p302 = por %p300, %p301
    %p303 = scmp.ne.s32.totalorder %s291, %s292
    %p304 = scmp.eq.s32.totalorder %s30, 1
    %p305 = por %p303, %p304
    %p307 = scmp.ne.s32.totalorder %s292, %s306
    %p308 = scmp.eq.s32.totalorder %s30, 0
    %p309 = por %p307, %p308
    %s311 = sadd.s32 %s310, 1
    %p314 = scmp.eq.s32.totalorder %s24, 1
    %p315 = scmp.ne.s32.totalorder %s310, %s312
    %p316 = scmp.eq.s32.totalorder %s24, 0
    %p317 = por %p315, %p316
    %p318 = scmp.ne.s32.totalorder %s310, %s312
    %p319 = scmp.eq.s32.totalorder %s29, 1
    %p320 = por %p318, %p319
    %p321 = scmp.ne.s32.totalorder %s312, %s313
    %p322 = scmp.eq.s32.totalorder %s29, 0
    %p323 = por %p321, %p322
    %p324 = scmp.ne.s32.totalorder %s312, %s313
    %p325 = scmp.eq.s32.totalorder %s30, 1
    %p326 = por %p324, %p325
    %p328 = scmp.ne.s32.totalorder %s313, %s327
    %p329 = scmp.eq.s32.totalorder %s30, 0
    %p330 = por %p328, %p329
    %s332 = sadd.s32 %s331, 1
    %p335 = scmp.eq.s32.totalorder %s24, 1
    %p336 = scmp.ne.s32.totalorder %s331, %s333
    %p337 = scmp.eq.s32.totalorder %s24, 0
    %p338 = por %p336, %p337
    %p339 = scmp.ne.s32.totalorder %s331, %s333
    %p340 = scmp.eq.s32.totalorder %s29, 1
    %p341 = por %p339, %p340
    %p342 = scmp.ne.s32.totalorder %s333, %s334
    %p343 = scmp.eq.s32.totalorder %s29, 0
    %p344 = por %p342, %p343
    %p345 = scmp.ne.s32.totalorder %s333, %s334
    %p346 = scmp.eq.s32.totalorder %s30, 1
    %p347 = por %p345, %p346
    %p349 = scmp.ne.s32.totalorder %s334, %s348
    %p350 = scmp.eq.s32.totalorder %s30, 0
    %p351 = por %p349, %p350
    %s353 = sadd.s32 %s352, 1
    %p356 = scmp.eq.s32.totalorder %s24, 1
    %p357 = scmp.ne.s32.totalorder %s352, %s354
    %p358 = scmp.eq.s32.totalorder %s24, 0
    %p359 = por %p357, %p358
    %p360 = scmp.ne.s32.totalorder %s352, %s354
    %p361 = scmp.eq.s32.totalorder %s29, 1
    %p362 = por %p360, %p361
    %p363 = scmp.ne.s32.totalorder %s354, %s355
    %p364 = scmp.eq.s32.totalorder %s29, 0
    %p365 = por %p363, %p364
    %p366 = scmp.ne.s32.totalorder %s354, %s355
    %p367 = scmp.eq.s32.totalorder %s30, 1
    %p368 = por %p366, %p367
    %p370 = scmp.ne.s32.totalorder %s355, %s369
    %p371 = scmp.eq.s32.totalorder %s30, 0
    %p372 = por %p370, %p371
    %s374 = sadd.s32 %s373, 1
    %p377 = scmp.eq.s32.totalorder %s24, 1
    %p378 = scmp.ne.s32.totalorder %s373, %s375
    %p379 = scmp.eq.s32.totalorder %s24, 0
    %p380 = por %p378, %p379
    %p381 = scmp.ne.s32.totalorder %s373, %s375
    %p382 = scmp.eq.s32.totalorder %s29, 1
    %p383 = por %p381, %p382
    %p384 = scmp.ne.s32.totalorder %s375, %s376
    %p385 = scmp.eq.s32.totalorder %s29, 0
    %p386 = por %p384, %p385
    %p387 = scmp.ne.s32.totalorder %s375, %s376
    %p388 = scmp.eq.s32.totalorder %s30, 1
    %p389 = por %p387, %p388
    %p391 = scmp.ne.s32.totalorder %s376, %s390
    %p392 = scmp.eq.s32.totalorder %s30, 0
    %p393 = por %p391, %p392
    %s395 = sadd.s32 %s394, 1
    %p398 = scmp.eq.s32.totalorder %s24, 1
    %p399 = scmp.ne.s32.totalorder %s394, %s396
    %p400 = scmp.eq.s32.totalorder %s24, 0
    %p401 = por %p399, %p400
    %p402 = scmp.ne.s32.totalorder %s394, %s396
    %p403 = scmp.eq.s32.totalorder %s29, 1
    %p404 = por %p402, %p403
    %p405 = scmp.ne.s32.totalorder %s396, %s397
    %p406 = scmp.eq.s32.totalorder %s29, 0
    %p407 = por %p405, %p406
    %p408 = scmp.ne.s32.totalorder %s396, %s397
    %p409 = scmp.eq.s32.totalorder %s30, 1
    %p410 = por %p408, %p409
    %p412 = scmp.ne.s32.totalorder %s397, %s411
    %p413 = scmp.eq.s32.totalorder %s30, 0
    %p414 = por %p412, %p413
    %s415 = ssub.s32 %s24, %s31
    %p416 = scmp.eq.s32.totalorder %s415, 0
    %s418 = sadd.s32 %s417, 1
    %s419 = scalar_select %p416, %s417, %s418
    %p422 = pneg %p416
    %p423 = scmp.eq.s32.totalorder %s24, 1
    %p424 = por %p422, %p423
    %p425 = scmp.ne.s32.totalorder %s417, %s420
    %p426 = scmp.eq.s32.totalorder %s24, 0
    %p427 = por %p425, %p426
    %p428 = scmp.ne.s32.totalorder %s417, %s420
    %p429 = scmp.eq.s32.totalorder %s29, 1
    %p430 = por %p428, %p429
    %p431 = scmp.ne.s32.totalorder %s420, %s421
    %p432 = scmp.eq.s32.totalorder %s29, 0
    %p433 = por %p431, %p432
    %p434 = scmp.ne.s32.totalorder %s420, %s421
    %p435 = scmp.eq.s32.totalorder %s30, 1
    %p436 = por %p434, %p435
    %p438 = scmp.ne.s32.totalorder %s421, %s437
    %p439 = scmp.eq.s32.totalorder %s30, 0
    %p440 = por %p438, %p439
    %p441 = scmp.le.s32.totalorder 1, %s24
    %p442 = scmp.lt.s32.totalorder %s24, 3
    %p443 = pnand %p441, %p442
    %p444 = pneg %p443
    // Predicated region
    $region9: #{forward.1} parent=5 // pred_check
      _
    $region10: #{forward.1} parent=5 // pred_check_branch
      %446 = sbr.rel (%p443) target = $region12
    $region11: #{forward.1} parent=5 // pred_region
      %s447 = ssub.s32 %s24, 1
      // Predicated region
      $region13: #{forward.1} parent=11 // pred_check
        %p448 = pneg %p71
      $region14: #{forward.1} parent=11 // pred_check_branch
        %450 = sbr.rel (%p448) target = $region16
      $region15: #{forward.1} parent=11 // pred_region
        _
      $region16: #{forward.1} parent=11 // pred_fallthru
        _
      // Predicated region
      $region17: #{forward.1} parent=11 // pred_check
        %p451 = pneg %p92
      $region18: #{forward.1} parent=11 // pred_check_branch
        %453 = sbr.rel (%p451) target = $region20
      $region19: #{forward.1} parent=11 // pred_region
        _
      $region20: #{forward.1} parent=11 // pred_fallthru
        _
      // Predicated region
      $region21: #{forward.1} parent=11 // pred_check
        %p454 = pneg %p113
      $region22: #{forward.1} parent=11 // pred_check_branch
        %456 = sbr.rel (%p454) target = $region24
      $region23: #{forward.1} parent=11 // pred_region
        _
      $region24: #{forward.1} parent=11 // pred_fallthru
        _
      // Predicated region
      $region25: #{forward.1} parent=11 // pred_check
        %p457 = pneg %p134
      $region26: #{forward.1} parent=11 // pred_check_branch
        %459 = sbr.rel (%p457) target = $region28
      $region27: #{forward.1} parent=11 // pred_region
        _
      $region28: #{forward.1} parent=11 // pred_fallthru
        _
      // Predicated region
      $region29: #{forward.1} parent=11 // pred_check
        %p460 = pneg %p155
      $region30: #{forward.1} parent=11 // pred_check_branch
        %462 = sbr.rel (%p460) target = $region32
      $region31: #{forward.1} parent=11 // pred_region
        _
      $region32: #{forward.1} parent=11 // pred_fallthru
        _
      // Predicated region
      $region33: #{forward.1} parent=11 // pred_check
        %p463 = pneg %p176
      $region34: #{forward.1} parent=11 // pred_check_branch
        %465 = sbr.rel (%p463) target = $region36
      $region35: #{forward.1} parent=11 // pred_region
        _
      $region36: #{forward.1} parent=11 // pred_fallthru
        _
      // Predicated region
      $region37: #{forward.1} parent=11 // pred_check
        %p466 = pneg %p197
      $region38: #{forward.1} parent=11 // pred_check_branch
        %468 = sbr.rel (%p466) target = $region40
      $region39: #{forward.1} parent=11 // pred_region
        _
      $region40: #{forward.1} parent=11 // pred_fallthru
        _
      // Predicated region
      $region41: #{forward.1} parent=11 // pred_check
        %p469 = pneg %p218
      $region42: #{forward.1} parent=11 // pred_check_branch
        %471 = sbr.rel (%p469) target = $region44
      $region43: #{forward.1} parent=11 // pred_region
        _
      $region44: #{forward.1} parent=11 // pred_fallthru
        _
      // Predicated region
      $region45: #{forward.1} parent=11 // pred_check
        %p472 = pneg %p239
      $region46: #{forward.1} parent=11 // pred_check_branch
        %474 = sbr.rel (%p472) target = $region48
      $region47: #{forward.1} parent=11 // pred_region
        _
      $region48: #{forward.1} parent=11 // pred_fallthru
        _
      // Predicated region
      $region49: #{forward.1} parent=11 // pred_check
        %p475 = pneg %p260
      $region50: #{forward.1} parent=11 // pred_check_branch
        %477 = sbr.rel (%p475) target = $region52
      $region51: #{forward.1} parent=11 // pred_region
        _
      $region52: #{forward.1} parent=11 // pred_fallthru
        _
      // Predicated region
      $region53: #{forward.1} parent=11 // pred_check
        %p478 = pneg %p281
      $region54: #{forward.1} parent=11 // pred_check_branch
        %480 = sbr.rel (%p478) target = $region56
      $region55: #{forward.1} parent=11 // pred_region
        _
      $region56: #{forward.1} parent=11 // pred_fallthru
        _
      // Predicated region
      $region57: #{forward.1} parent=11 // pred_check
        %p481 = pneg %p302
      $region58: #{forward.1} parent=11 // pred_check_branch
        %483 = sbr.rel (%p481) target = $region60
      $region59: #{forward.1} parent=11 // pred_region
        _
      $region60: #{forward.1} parent=11 // pred_fallthru
        _
      // Predicated region
      $region61: #{forward.1} parent=11 // pred_check
        %p484 = pneg %p323
      $region62: #{forward.1} parent=11 // pred_check_branch
        %486 = sbr.rel (%p484) target = $region64
      $region63: #{forward.1} parent=11 // pred_region
        _
      $region64: #{forward.1} parent=11 // pred_fallthru
        _
      // Predicated region
      $region65: #{forward.1} parent=11 // pred_check
        %p487 = pneg %p344
      $region66: #{forward.1} parent=11 // pred_check_branch
        %489 = sbr.rel (%p487) target = $region68
      $region67: #{forward.1} parent=11 // pred_region
        _
      $region68: #{forward.1} parent=11 // pred_fallthru
        _
      // Predicated region
      $region69: #{forward.1} parent=11 // pred_check
        %p490 = pneg %p365
      $region70: #{forward.1} parent=11 // pred_check_branch
        %492 = sbr.rel (%p490) target = $region72
      $region71: #{forward.1} parent=11 // pred_region
        _
      $region72: #{forward.1} parent=11 // pred_fallthru
        _
      // Predicated region
      $region73: #{forward.1} parent=11 // pred_check
        %p493 = pneg %p386
      $region74: #{forward.1} parent=11 // pred_check_branch
        %495 = sbr.rel (%p493) target = $region76
      $region75: #{forward.1} parent=11 // pred_region
        _
      $region76: #{forward.1} parent=11 // pred_fallthru
        _
      // Predicated region
      $region77: #{forward.1} parent=11 // pred_check
        %p496 = pneg %p407
      $region78: #{forward.1} parent=11 // pred_check_branch
        %498 = sbr.rel (%p496) target = $region80
      $region79: #{forward.1} parent=11 // pred_region
        _
      $region80: #{forward.1} parent=11 // pred_fallthru
        _
    $region12: #{forward.1} parent=5 // pred_fallthru
      _
    %p499 = scmp.lt.s32.totalorder %s24, 2
    // Predicated region
    $region81: #{forward.1} parent=5 // pred_check
      %p500 = pneg %p499
    $region82: #{forward.1} parent=5 // pred_check_branch
      %502 = sbr.rel (%p500) target = $region84
    $region83: #{forward.1} parent=5 // pred_region
      // Predicated region
      $region85: #{forward.1} parent=83 // pred_check
        %p503 = pneg %p44
      $region86: #{forward.1} parent=83 // pred_check_branch
        %505 = sbr.rel (%p503) target = $region88
      $region87: #{forward.1} parent=83 // pred_region
        %p506 = scmp.lt.s32.totalorder %s24, 1
        %s507 = scalar_select %p506, %s24, 1
        %s508 = smul.addr %s507, 10
        %s509 = smul.addr %s508, 8
        %s510 = scalar_lea.vmem %s0, %s509
      $region88: #{forward.1} parent=83 // pred_fallthru
        _
    $region84: #{forward.1} parent=5 // pred_fallthru
      _
    %p511 = scmp.le.s32.totalorder 1, %s24
    %p512 = scmp.lt.s32.totalorder %s24, 3
    %p513 = pnand %p511, %p512
    %p514 = pneg %p513
    // Predicated region
    $region89: #{forward.1} parent=5 // pred_check
      _
    $region90: #{forward.1} parent=5 // pred_check_branch
      %516 = sbr.rel (%p513) target = $region92
    $region91: #{forward.1} parent=5 // pred_region
      %s517 = ssub.s32 %s24, 1
      %p518 = scmp.lt.s32.totalorder %s29, 1
      %s519 = scalar_select %p518, %s29, 1
      %s520 = smul.addr %s519, 10
      %s521 = smul.addr %s520, 8
      %s522 = scalar_lea.vmem %s0, %s521
      %p523 = pneg %p50
      %p524 = pneg %p47
      %p525 = pneg %p71
      %p526 = pneg %p68
      %p527 = pneg %p92
      %p528 = pneg %p89
      %p529 = pneg %p113
      %p530 = pneg %p110
      %p531 = pneg %p134
      %p532 = pneg %p131
      %p533 = pneg %p155
      %p534 = pneg %p152
      %p535 = pneg %p176
      %p536 = pneg %p173
      %p537 = pneg %p197
      %p538 = pneg %p194
      %p539 = pneg %p218
      %p540 = pneg %p215
      %p541 = pneg %p239
      %p542 = pneg %p236
      %p543 = pneg %p260
      %p544 = pneg %p257
      %p545 = pneg %p281
      %p546 = pneg %p278
      %p547 = pneg %p302
      %p548 = pneg %p299
      %p549 = pneg %p323
      %p550 = pneg %p320
      %p551 = pneg %p344
      %p552 = pneg %p341
      %p553 = pneg %p365
      %p554 = pneg %p362
      %p555 = pneg %p386
      %p556 = pneg %p383
      %p557 = pneg %p407
      %p558 = pneg %p404
      %p559 = pneg %p433
      %p560 = pneg %p430
      %p561 = scmp.lt.s32.totalorder %s29, 1
      %s562 = scalar_select %p561, %s29, 1
      %s563 = smul.addr %s562, 14
      %s564 = smul.addr %s563, 8
      %s565 = scalar_lea.vmem %s18, %s564
      %p566 = scmp.lt.s32.totalorder %s29, 1
      %s567 = scalar_select %p566, %s29, 1
      %s568 = smul.addr %s567, 10
      %s569 = smul.addr %s568, 8
      %s570 = scalar_lea.vmem %s0, %s569
      %p571 = scmp.lt.s32.totalorder %s29, 1
      %s572 = scalar_select %p571, %s29, 1
      %s573 = smul.addr %s572, 14
      %s574 = smul.addr %s573, 8
      %s575 = scalar_lea.vmem %s18, %s574
      %v577 = vld [vmem:[%s1] sm:$0xf]
      %v578 = vld [vmem:[%s1 + $0x4] sm:$0xf]
      %v579 = vld [vmem:[%s1 + $0x8] sm:$0xf]
      %v580 = vld [vmem:[%s1 + $0xc] sm:$0xf]
      %v581 = vld [vmem:[%s1 + $0x10] sm:$0xf]
      %v582 = vld [vmem:[%s1 + $0x14] sm:$0xf]
      %v583 = vld [vmem:[%s1 + $0x18] sm:$0xf]
      %v584 = vld [vmem:[%s1 + $0x1c] sm:$0xf]
      %v585 = vld [vmem:[%s1 + $0x20] sm:$0xf]
      %v586 = vld [vmem:[%s1 + $0x24] sm:$0xf]
      %v587 = vld [vmem:[%s1 + $0x28] sm:$0xf]
      %v588 = vld [vmem:[%s1 + $0x2c] sm:$0xf]
      %v589 = vld [vmem:[%s1 + $0x30] sm:$0xf]
      %v590 = vld [vmem:[%s1 + $0x34] sm:$0xf]
      %v591 = vld [vmem:[%s1 + $0x38] sm:$0xf]
      %v592 = vld [vmem:[%s1 + $0x3c] sm:$0xf]
      %v593 = vld [vmem:[%s1 + $0x40] sm:$0xf]
      %v594 = vld [vmem:[%s1 + $0x44] sm:$0xf]
      %v595 = vld [vmem:[%s1 + $0x48] sm:$0xf]
      %v596 = vld [vmem:[%s1 + $0x4c] sm:$0xf]
      %v597 = vld [vmem:[%s1 + $0x50] sm:$0xf]
      %v598 = vld [vmem:[%s1 + $0x54] sm:$0xf]
      %v599 = vld [vmem:[%s1 + $0x58] sm:$0xf]
      %v600 = vld [vmem:[%s1 + $0x5c] sm:$0xf]
      %v601 = vld [vmem:[%s1 + $0x60] sm:$0xf]
      %v602 = vld [vmem:[%s1 + $0x64] sm:$0xf]
      %v603 = vld [vmem:[%s1 + $0x68] sm:$0xf]
      %v604 = vld [vmem:[%s1 + $0x6c] sm:$0xf]
      %v605 = vld [vmem:[%s570] sm:$0xff]
      %v606 = vld [vmem:[%s570 + $0x8] sm:$0xff]
      %v607 = vld [vmem:[%s570 + $0x10] sm:$0xff]
      %v608 = vld [vmem:[%s570 + $0x18] sm:$0xff]
      %v609 = vld [vmem:[%s570 + $0x20] sm:$0xff]
      %v610 = vld [vmem:[%s570 + $0x28] sm:$0xff]
      %v611 = vld [vmem:[%s570 + $0x30] sm:$0xff]
      %v612 = vld [vmem:[%s570 + $0x38] sm:$0xff]
      %v613 = vld [vmem:[%s570 + $0x40] sm:$0xff]
      %v614 = vld [vmem:[%s570 + $0x48] sm:$0xff]
      %v615 = vpack.c.bf16 %v606, %v605
      %v616 = vpack.c.bf16 %v608, %v607
      %v617 = vpack.c.bf16 %v610, %v609
      %v618 = vpack.c.bf16 %v612, %v611
      %v619 = vpack.c.bf16 %v614, %v613
      %v620 = vld [vmem:[%s2] sm:$0xff]
      %v621 = vld [vmem:[%s2 + $0x8] sm:$0xff]
      %v622 = vld [vmem:[%s2 + $0x10] sm:$0xff]
      %v623 = vld [vmem:[%s2 + $0x18] sm:$0xff]
      %v624 = vld [vmem:[%s2 + $0x20] sm:$0xff]
      %v625 = vld [vmem:[%s2 + $0x28] sm:$0xff]
      %v626 = vld [vmem:[%s2 + $0x30] sm:$0xff]
      %v627 = vld [vmem:[%s2 + $0x38] sm:$0xff]
      %v628 = vld [vmem:[%s2 + $0x40] sm:$0xff]
      %v629 = vld [vmem:[%s2 + $0x48] sm:$0xff]
      %v630 = vld [vmem:[%s2 + $0x50] sm:$0xff]
      %v631 = vld [vmem:[%s2 + $0x58] sm:$0xff]
      %v632 = vld [vmem:[%s2 + $0x60] sm:$0xff]
      %v633 = vld [vmem:[%s2 + $0x68] sm:$0xff]
      %v634 = vld [vmem:[%s2 + $0x70] sm:$0xff]
      %v635 = vld [vmem:[%s2 + $0x78] sm:$0xff]
      %v636 = vld [vmem:[%s2 + $0x80] sm:$0xff]
      %v637 = vld [vmem:[%s2 + $0x88] sm:$0xff]
      %v638 = vld [vmem:[%s2 + $0x90] sm:$0xff]
      %v639 = vld [vmem:[%s2 + $0x98] sm:$0xff]
      %v640 = vld [vmem:[%s2 + $0xa0] sm:$0xff]
      %v641 = vld [vmem:[%s2 + $0xa8] sm:$0xff]
      %v642 = vld [vmem:[%s2 + $0xb0] sm:$0xff]
      %v643 = vld [vmem:[%s2 + $0xb8] sm:$0xff]
      %v644 = vld [vmem:[%s2 + $0xc0] sm:$0xff]
      %v645 = vld [vmem:[%s2 + $0xc8] sm:$0xff]
      %v646 = vld [vmem:[%s2 + $0xd0] sm:$0xff]
      %v647 = vld [vmem:[%s2 + $0xd8] sm:$0xff]
      %649 = vset.pattern.permute.xlu0 0
      %650 = vperm.xlu0 %649, %v620
      %v651 = vpop.permute.xlu0 %650
      %654 = vset.pattern.permute.xlu0 0
      %655 = vperm.xlu0 %654, %v621
      %v656 = vpop.permute.xlu0 %655
      %659 = vset.pattern.permute.xlu0 0
      %660 = vperm.xlu0 %659, %v622
      %v661 = vpop.permute.xlu0 %660
      %664 = vset.pattern.permute.xlu0 0
      %665 = vperm.xlu0 %664, %v623
      %v666 = vpop.permute.xlu0 %665
      %669 = vset.pattern.permute.xlu0 0
      %670 = vperm.xlu0 %669, %v624
      %v671 = vpop.permute.xlu0 %670
      %674 = vset.pattern.permute.xlu0 0
      %675 = vperm.xlu0 %674, %v625
      %v676 = vpop.permute.xlu0 %675
      %679 = vset.pattern.permute.xlu0 0
      %680 = vperm.xlu0 %679, %v626
      %v681 = vpop.permute.xlu0 %680
      %684 = vset.pattern.permute.xlu0 0
      %685 = vperm.xlu0 %684, %v627
      %v686 = vpop.permute.xlu0 %685
      %689 = vset.pattern.permute.xlu0 0
      %690 = vperm.xlu0 %689, %v628
      %v691 = vpop.permute.xlu0 %690
      %694 = vset.pattern.permute.xlu0 0
      %695 = vperm.xlu0 %694, %v629
      %v696 = vpop.permute.xlu0 %695
      %699 = vset.pattern.permute.xlu0 0
      %700 = vperm.xlu0 %699, %v630
      %v701 = vpop.permute.xlu0 %700
      %704 = vset.pattern.permute.xlu0 0
      %705 = vperm.xlu0 %704, %v631
      %v706 = vpop.permute.xlu0 %705
      %709 = vset.pattern.permute.xlu0 0
      %710 = vperm.xlu0 %709, %v632
      %v711 = vpop.permute.xlu0 %710
      %714 = vset.pattern.permute.xlu0 0
      %715 = vperm.xlu0 %714, %v633
      %v716 = vpop.permute.xlu0 %715
      %719 = vset.pattern.permute.xlu0 0
      %720 = vperm.xlu0 %719, %v634
      %v721 = vpop.permute.xlu0 %720
      %724 = vset.pattern.permute.xlu0 0
      %725 = vperm.xlu0 %724, %v635
      %v726 = vpop.permute.xlu0 %725
      %729 = vset.pattern.permute.xlu0 0
      %730 = vperm.xlu0 %729, %v636
      %v731 = vpop.permute.xlu0 %730
      %734 = vset.pattern.permute.xlu0 0
      %735 = vperm.xlu0 %734, %v637
      %v736 = vpop.permute.xlu0 %735
      %739 = vset.pattern.permute.xlu0 0
      %740 = vperm.xlu0 %739, %v638
      %v741 = vpop.permute.xlu0 %740
      %744 = vset.pattern.permute.xlu0 0
      %745 = vperm.xlu0 %744, %v639
      %v746 = vpop.permute.xlu0 %745
      %749 = vset.pattern.permute.xlu0 0
      %750 = vperm.xlu0 %749, %v640
      %v751 = vpop.permute.xlu0 %750
      %754 = vset.pattern.permute.xlu0 0
      %755 = vperm.xlu0 %754, %v641
      %v756 = vpop.permute.xlu0 %755
      %759 = vset.pattern.permute.xlu0 0
      %760 = vperm.xlu0 %759, %v642
      %v761 = vpop.permute.xlu0 %760
      %764 = vset.pattern.permute.xlu0 0
      %765 = vperm.xlu0 %764, %v643
      %v766 = vpop.permute.xlu0 %765
      %769 = vset.pattern.permute.xlu0 0
      %770 = vperm.xlu0 %769, %v644
      %v771 = vpop.permute.xlu0 %770
      %774 = vset.pattern.permute.xlu0 0
      %775 = vperm.xlu0 %774, %v645
      %v776 = vpop.permute.xlu0 %775
      %779 = vset.pattern.permute.xlu0 0
      %780 = vperm.xlu0 %779, %v646
      %v781 = vpop.permute.xlu0 %780
      %784 = vset.pattern.permute.xlu0 0
      %785 = vperm.xlu0 %784, %v647
      %v786 = vpop.permute.xlu0 %785
      %v816 = vunpack.c.l.b16 %v577
      %v817 = vunpack.c.l.b16 %v578
      %v818 = vunpack.c.l.b16 %v579
      %v819 = vunpack.c.l.b16 %v580
      %v820 = vunpack.c.l.b16 %v581
      %v821 = vunpack.c.l.b16 %v582
      %v822 = vunpack.c.l.b16 %v583
      %v823 = vunpack.c.l.b16 %v584
      %v824 = vunpack.c.l.b16 %v585
      %v825 = vunpack.c.l.b16 %v586
      %v826 = vunpack.c.l.b16 %v587
      %v827 = vunpack.c.l.b16 %v588
      %v828 = vunpack.c.l.b16 %v589
      %v829 = vunpack.c.l.b16 %v590
      %v830 = vunpack.c.l.b16 %v591
      %v831 = vunpack.c.l.b16 %v592
      %v832 = vunpack.c.l.b16 %v593
      %v833 = vunpack.c.l.b16 %v594
      %v834 = vunpack.c.l.b16 %v595
      %v835 = vunpack.c.l.b16 %v596
      %v836 = vunpack.c.l.b16 %v597
      %v837 = vunpack.c.l.b16 %v598
      %v838 = vunpack.c.l.b16 %v599
      %v839 = vunpack.c.l.b16 %v600
      %v840 = vunpack.c.l.b16 %v601
      %v841 = vunpack.c.l.b16 %v602
      %v842 = vunpack.c.l.b16 %v603
      %v843 = vunpack.c.l.b16 %v604
      %v844 = vpack.c.b16 %v817, %v816
      %v845 = vpack.c.b16 %v819, %v818
      %v846 = vpack.c.b16 %v821, %v820
      %v847 = vpack.c.b16 %v823, %v822
      %v848 = vpack.c.b16 %v825, %v824
      %v849 = vpack.c.b16 %v827, %v826
      %v850 = vpack.c.b16 %v829, %v828
      %v851 = vpack.c.b16 %v831, %v830
      %v852 = vpack.c.b16 %v833, %v832
      %v853 = vpack.c.b16 %v835, %v834
      %v854 = vpack.c.b16 %v837, %v836
      %v855 = vpack.c.b16 %v839, %v838
      %v856 = vpack.c.b16 %v841, %v840
      %v857 = vpack.c.b16 %v843, %v842
      %vm858 = vcmask 654336
      %v860 = vsel %vm858, %v844, 0
      %v863 = vsel %vm858, %v845, 0
      %v866 = vsel %vm858, %v846, 0
      %v869 = vsel %vm858, %v847, 0
      %v872 = vsel %vm858, %v848, 0
      %v875 = vsel %vm858, %v849, 0
      %v878 = vsel %vm858, %v850, 0
      %v881 = vsel %vm858, %v851, 0
      %v884 = vsel %vm858, %v852, 0
      %v887 = vsel %vm858, %v853, 0
      %v890 = vsel %vm858, %v854, 0
      %v893 = vsel %vm858, %v855, 0
      %v896 = vsel %vm858, %v856, 0
      %v899 = vsel %vm858, %v857, 0
      %901 = vmatprep.subr.bf16.mxu0 0
      %902 = vmatpush1.bf16.msra.mxu0 %v615
      %903 = vmatprep.subr.bf16.mxu0 0
      %904 = vmatpush1.bf16.msra.mxu0 %v616
      %905 = vmatprep.subr.bf16.mxu0 0
      %906 = vmatpush1.bf16.msra.mxu0 %v617
      %907 = vmatprep.subr.bf16.mxu0 0
      %908 = vmatpush1.bf16.msra.mxu0 %v618
      %909 = vmatprep.subr.bf16.mxu0 0
      %910 = vmatpush1.bf16.msra.mxu0 %v619
      %911 = vmatprep.subr.bf16.mxu0 0
      %912 = vmatpush1.bf16.msra.mxu0 0
      %913 = vmatprep.subr.bf16.mxu0 0
      %914 = vmatpush1.bf16.msra.mxu0 0
      %915 = vmatprep.subr.bf16.mxu0 0
      %916 = vmatpush1.bf16.msra.mxu0 0
      %917 = vmatprep.subr.bf16.mxu0 0
      %918 = vmatpush1.bf16.msra.mxu0 0
      %919 = vmatprep.subr.bf16.mxu0 0
      %920 = vmatpush1.bf16.msra.mxu0 0
      %921 = vmatprep.subr.bf16.mxu0 0
      %922 = vmatpush1.bf16.msra.mxu0 0
      %923 = vmatprep.subr.bf16.mxu0 0
      %924 = vmatpush1.bf16.msra.mxu0 0
      %925 = vmatprep.subr.bf16.mxu0 0
      %926 = vmatpush1.bf16.msra.mxu0 0
      %927 = vmatprep.subr.bf16.mxu0 0
      %928 = vmatpush1.bf16.msra.mxu0 0
      %929 = vmatprep.subr.bf16.mxu0 0
      %930 = vmatpush1.bf16.msra.mxu0 0
      %931 = vmatprep.subr.bf16.mxu0 0
      %932 = vmatpush1.bf16.msra.mxu0 0
      %933 = vmatprep.mubr.bf16.mxu0 0
      %934 = vmatmul.mubr.bf16.gmra.mrb[0].mxu0 %v860
      %v935 = vpop.f32.mrb[0].mxu0
      %v936 = vadd.f32 %v651, %v935
      %v937 = vpop.f32.mrb[0].mxu0
      %v938 = vpop.f32.mrb[0].mxu0
      %v939 = vadd.f32 %v656, %v938
      %v940 = vpop.f32.mrb[0].mxu0
      %941 = vmatprep.mubr.bf16.mxu0 0
      %942 = vmatmul.mubr.bf16.gmra.mrb[0].mxu0 %v863
      %v943 = vpop.f32.mrb[0].mxu0
      %v944 = vadd.f32 %v661, %v943
      %v945 = vpop.f32.mrb[0].mxu0
      %v946 = vpop.f32.mrb[0].mxu0
      %v947 = vadd.f32 %v666, %v946
      %v948 = vpop.f32.mrb[0].mxu0
      %949 = vmatprep.mubr.bf16.mxu0 0
      %950 = vmatmul.mubr.bf16.gmra.mrb[0].mxu0 %v866
      %v951 = vpop.f32.mrb[0].mxu0
      %v952 = vadd.f32 %v671, %v951
      %v953 = vpop.f32.mrb[0].mxu0
      %v954 = vpop.f32.mrb[0].mxu0
      %v955 = vadd.f32 %v676, %v954
      %v956 = vpop.f32.mrb[0].mxu0
      %957 = vmatprep.mubr.bf16.mxu0 0
      %958 = vmatmul.mubr.bf16.gmra.mrb[0].mxu0 %v869
      %v959 = vpop.f32.mrb[0].mxu0
      %v960 = vadd.f32 %v681, %v959
      %v961 = vpop.f32.mrb[0].mxu0
      %v962 = vpop.f32.mrb[0].mxu0
      %v963 = vadd.f32 %v686, %v962
      %v964 = vpop.f32.mrb[0].mxu0
      %965 = vmatprep.mubr.bf16.mxu0 0
      %966 = vmatmul.mubr.bf16.gmra.mrb[0].mxu0 %v872
      %v967 = vpop.f32.mrb[0].mxu0
      %v968 = vadd.f32 %v691, %v967
      %v969 = vpop.f32.mrb[0].mxu0
      %v970 = vpop.f32.mrb[0].mxu0
      %v971 = vadd.f32 %v696, %v970
      %v972 = vpop.f32.mrb[0].mxu0
      %973 = vmatprep.mubr.bf16.mxu0 0
      %974 = vmatmul.mubr.bf16.gmra.mrb[0].mxu0 %v875
      %v975 = vpop.f32.mrb[0].mxu0
      %v976 = vadd.f32 %v701, %v975
      %v977 = vpop.f32.mrb[0].mxu0
      %v978 = vpop.f32.mrb[0].mxu0
      %v979 = vadd.f32 %v706, %v978
      %v980 = vpop.f32.mrb[0].mxu0
      %981 = vmatprep.mubr.bf16.mxu0 0
      %982 = vmatmul.mubr.bf16.gmra.mrb[0].mxu0 %v878
      %v983 = vpop.f32.mrb[0].mxu0
      %v984 = vadd.f32 %v711, %v983
      %v985 = vpop.f32.mrb[0].mxu0
      %v986 = vpop.f32.mrb[0].mxu0
      %v987 = vadd.f32 %v716, %v986
      %v988 = vpop.f32.mrb[0].mxu0
      %989 = vmatprep.mubr.bf16.mxu0 0
      %990 = vmatmul.mubr.bf16.gmra.mrb[0].mxu0 %v881
      %v991 = vpop.f32.mrb[0].mxu0
      %v992 = vadd.f32 %v721, %v991
      %v993 = vpop.f32.mrb[0].mxu0
      %v994 = vpop.f32.mrb[0].mxu0
      %v995 = vadd.f32 %v726, %v994
      %v996 = vpop.f32.mrb[0].mxu0
      %997 = vmatprep.mubr.bf16.mxu0 0
      %998 = vmatmul.mubr.bf16.gmra.mrb[0].mxu0 %v884
      %v999 = vpop.f32.mrb[0].mxu0
      %v1000 = vadd.f32 %v731, %v999
      %v1001 = vpop.f32.mrb[0].mxu0
      %v1002 = vpop.f32.mrb[0].mxu0
      %v1003 = vadd.f32 %v736, %v1002
      %v1004 = vpop.f32.mrb[0].mxu0
      %1005 = vmatprep.mubr.bf16.mxu0 0
      %1006 = vmatmul.mubr.bf16.gmra.mrb[0].mxu0 %v887
      %v1007 = vpop.f32.mrb[0].mxu0
      %v1008 = vadd.f32 %v741, %v1007
      %v1009 = vpop.f32.mrb[0].mxu0
      %v1010 = vpop.f32.mrb[0].mxu0
      %v1011 = vadd.f32 %v746, %v1010
      %v1012 = vpop.f32.mrb[0].mxu0
      %1013 = vmatprep.mubr.bf16.mxu0 0
      %1014 = vmatmul.mubr.bf16.gmra.mrb[0].mxu0 %v890
      %v1015 = vpop.f32.mrb[0].mxu0
      %v1016 = vadd.f32 %v751, %v1015
      %v1017 = vpop.f32.mrb[0].mxu0
      %v1018 = vpop.f32.mrb[0].mxu0
      %v1019 = vadd.f32 %v756, %v1018
      %v1020 = vpop.f32.mrb[0].mxu0
      %1021 = vmatprep.mubr.bf16.mxu0 0
      %1022 = vmatmul.mubr.bf16.gmra.mrb[0].mxu0 %v893
      %v1023 = vpop.f32.mrb[0].mxu0
      %v1024 = vadd.f32 %v761, %v1023
      %v1025 = vpop.f32.mrb[0].mxu0
      %v1026 = vpop.f32.mrb[0].mxu0
      %v1027 = vadd.f32 %v766, %v1026
      %v1028 = vpop.f32.mrb[0].mxu0
      %1029 = vmatprep.mubr.bf16.mxu0 0
      %1030 = vmatmul.mubr.bf16.gmra.mrb[0].mxu0 %v896
      %v1031 = vpop.f32.mrb[0].mxu0
      %v1032 = vadd.f32 %v771, %v1031
      %v1033 = vpop.f32.mrb[0].mxu0
      %v1034 = vpop.f32.mrb[0].mxu0
      %v1035 = vadd.f32 %v776, %v1034
      %v1036 = vpop.f32.mrb[0].mxu0
      %1037 = vmatprep.mubr.bf16.mxu0 0
      %1038 = vmatmul.mubr.bf16.gmra.mrb[0].mxu0 %v899
      %v1039 = vpop.f32.mrb[0].mxu0
      %v1040 = vadd.f32 %v781, %v1039
      %v1041 = vpop.f32.mrb[0].mxu0
      %v1042 = vpop.f32.mrb[0].mxu0
      %v1043 = vadd.f32 %v786, %v1042
      %v1044 = vpop.f32.mrb[0].mxu0
      %1045 = vdwg.mxu0
      %v1046 = vxor.u32 %v992, 2147483648
      %v1047 = vxor.u32 %v995, 2147483648
      %v1048 = vxor.u32 %v1000, 2147483648
      %v1049 = vxor.u32 %v1003, 2147483648
      %v1050 = vxor.u32 %v1008, 2147483648
      %v1051 = vxor.u32 %v1011, 2147483648
      %v1052 = vxor.u32 %v1016, 2147483648
      %v1053 = vxor.u32 %v1019, 2147483648
      %v1054 = vxor.u32 %v1024, 2147483648
      %v1055 = vxor.u32 %v1027, 2147483648
      %v1056 = vxor.u32 %v1032, 2147483648
      %v1057 = vxor.u32 %v1035, 2147483648
      %v1058 = vxor.u32 %v1040, 2147483648
      %v1059 = vxor.u32 %v1043, 2147483648
      %v1060 = vmul.f32 %v1046, 1.442695
      %v1061 = vpow.pop %v1060
      %v1062 = vmul.f32 %v1047, 1.442695
      %v1063 = vpow.pop %v1062
      %v1064 = vmul.f32 %v1048, 1.442695
      %v1065 = vpow.pop %v1064
      %v1066 = vmul.f32 %v1049, 1.442695
      %v1067 = vpow.pop %v1066
      %v1068 = vmul.f32 %v1050, 1.442695
      %v1069 = vpow.pop %v1068
      %v1070 = vmul.f32 %v1051, 1.442695
      %v1071 = vpow.pop %v1070
      %v1072 = vmul.f32 %v1052, 1.442695
      %v1073 = vpow.pop %v1072
      %v1074 = vmul.f32 %v1053, 1.442695
      %v1075 = vpow.pop %v1074
      %v1076 = vmul.f32 %v1054, 1.442695
      %v1077 = vpow.pop %v1076
      %v1078 = vmul.f32 %v1055, 1.442695
      %v1079 = vpow.pop %v1078
      %v1080 = vmul.f32 %v1056, 1.442695
      %v1081 = vpow.pop %v1080
      %v1082 = vmul.f32 %v1057, 1.442695
      %v1083 = vpow.pop %v1082
      %v1084 = vmul.f32 %v1058, 1.442695
      %v1085 = vpow.pop %v1084
      %v1086 = vmul.f32 %v1059, 1.442695
      %v1087 = vpow.pop %v1086
      %v1088 = vadd.f32 %v1061, 1.0
      %v1089 = vadd.f32 %v1063, 1.0
      %v1090 = vadd.f32 %v1065, 1.0
      %v1091 = vadd.f32 %v1067, 1.0
      %v1092 = vadd.f32 %v1069, 1.0
      %v1093 = vadd.f32 %v1071, 1.0
      %v1094 = vadd.f32 %v1073, 1.0
      %v1095 = vadd.f32 %v1075, 1.0
      %v1096 = vadd.f32 %v1077, 1.0
      %v1097 = vadd.f32 %v1079, 1.0
      %v1098 = vadd.f32 %v1081, 1.0
      %v1099 = vadd.f32 %v1083, 1.0
      %v1100 = vadd.f32 %v1085, 1.0
      %v1101 = vadd.f32 %v1087, 1.0
      %v1102 = vrcp.pop %v1088
      %v1103 = vmul.f32 1.0, %v1102
      %v1104 = vrcp.pop %v1089
      %v1105 = vmul.f32 1.0, %v1104
      %v1106 = vrcp.pop %v1090
      %v1107 = vmul.f32 1.0, %v1106
      %v1108 = vrcp.pop %v1091
      %v1109 = vmul.f32 1.0, %v1108
      %v1110 = vrcp.pop %v1092
      %v1111 = vmul.f32 1.0, %v1110
      %v1112 = vrcp.pop %v1093
      %v1113 = vmul.f32 1.0, %v1112
      %v1114 = vrcp.pop %v1094
      %v1115 = vmul.f32 1.0, %v1114
      %v1116 = vrcp.pop %v1095
      %v1117 = vmul.f32 1.0, %v1116
      %v1118 = vrcp.pop %v1096
      %v1119 = vmul.f32 1.0, %v1118
      %v1120 = vrcp.pop %v1097
      %v1121 = vmul.f32 1.0, %v1120
      %v1122 = vrcp.pop %v1098
      %v1123 = vmul.f32 1.0, %v1122
      %v1124 = vrcp.pop %v1099
      %v1125 = vmul.f32 1.0, %v1124
      %v1126 = vrcp.pop %v1100
      %v1127 = vmul.f32 1.0, %v1126
      %v1128 = vrcp.pop %v1101
      %v1129 = vmul.f32 1.0, %v1128
      %v1130 = vmul.f32 %v936, %v1103
      %v1131 = vmul.f32 %v939, %v1105
      %v1132 = vmul.f32 %v944, %v1107
      %v1133 = vmul.f32 %v947, %v1109
      %v1134 = vmul.f32 %v952, %v1111
      %v1135 = vmul.f32 %v955, %v1113
      %v1136 = vmul.f32 %v960, %v1115
      %v1137 = vmul.f32 %v963, %v1117
      %v1138 = vmul.f32 %v968, %v1119
      %v1139 = vmul.f32 %v971, %v1121
      %v1140 = vmul.f32 %v976, %v1123
      %v1141 = vmul.f32 %v979, %v1125
      %v1142 = vmul.f32 %v984, %v1127
      %v1143 = vmul.f32 %v987, %v1129
      %v1144 = vld [vmem:[%s9] sm:$0xff]
      %v1145 = vld [vmem:[%s9 + $0x8] sm:$0xff]
      %v1146 = vld [vmem:[%s12] sm:$0xff]
      %v1147 = vld [vmem:[%s12 + $0x8] sm:$0xff]
      %v1148 = vld [vmem:[%s12 + $0x10] sm:$0xff]
      %v1149 = vld [vmem:[%s12 + $0x18] sm:$0xff]
      %v1150 = vld [vmem:[%s12 + $0x20] sm:$0xff]
      %v1151 = vld [vmem:[%s12 + $0x28] sm:$0xff]
      %v1152 = vld [vmem:[%s12 + $0x30] sm:$0xff]
      %v1153 = vld [vmem:[%s12 + $0x38] sm:$0xff]
      %v1154 = vld [vmem:[%s12 + $0x40] sm:$0xff]
      %v1155 = vld [vmem:[%s12 + $0x48] sm:$0xff]
      %v1156 = vld [vmem:[%s12 + $0x50] sm:$0xff]
      %v1157 = vld [vmem:[%s12 + $0x58] sm:$0xff]
      %v1158 = vld [vmem:[%s12 + $0x60] sm:$0xff]
      %v1159 = vld [vmem:[%s12 + $0x68] sm:$0xff]
      %v1160 = vld [vmem:[%s15] sm:$0xff]
      %v1161 = vld [vmem:[%s15 + $0x8] sm:$0xff]
      %v1162 = vld [vmem:[%s15 + $0x10] sm:$0xff]
      %v1163 = vld [vmem:[%s15 + $0x18] sm:$0xff]
      %v1164 = vld [vmem:[%s15 + $0x20] sm:$0xff]
      %v1165 = vld [vmem:[%s15 + $0x28] sm:$0xff]
      %v1166 = vld [vmem:[%s15 + $0x30] sm:$0xff]
      %v1167 = vld [vmem:[%s15 + $0x38] sm:$0xff]
      %v1168 = vld [vmem:[%s15 + $0x40] sm:$0xff]
      %v1169 = vld [vmem:[%s15 + $0x48] sm:$0xff]
      %v1170 = vld [vmem:[%s15 + $0x50] sm:$0xff]
      %v1171 = vld [vmem:[%s15 + $0x58] sm:$0xff]
      %v1172 = vld [vmem:[%s15 + $0x60] sm:$0xff]
      %v1173 = vld [vmem:[%s15 + $0x68] sm:$0xff]
      %v1174 = vld [vmem:[%s15 + $0x70] sm:$0xff]
      %v1175 = vld [vmem:[%s15 + $0x78] sm:$0xff]
      %v1176 = vld [vmem:[%s16] sm:$0xff]
      %v1177 = vld [vmem:[%s7] sm:$0xff]
      %v1178 = vld [vmem:[%s7 + $0x8] sm:$0xff]
      %v1179 = vld [vmem:[%s7 + $0x10] sm:$0xff]
      %v1180 = vld [vmem:[%s7 + $0x18] sm:$0xff]
      %v1181 = vld [vmem:[%s7 + $0x20] sm:$0xff]
      %v1182 = vld [vmem:[%s7 + $0x28] sm:$0xff]
      %v1183 = vld [vmem:[%s7 + $0x30] sm:$0xff]
      %v1184 = vld [vmem:[%s7 + $0x38] sm:$0xff]
      %v1185 = vld [vmem:[%s7 + $0x40] sm:$0xff]
      %v1186 = vld [vmem:[%s7 + $0x48] sm:$0xff]
      %v1187 = vld [vmem:[%s7 + $0x50] sm:$0xff]
      %v1188 = vld [vmem:[%s7 + $0x58] sm:$0xff]
      %v1189 = vld [vmem:[%s7 + $0x60] sm:$0xff]
      %v1190 = vld [vmem:[%s7 + $0x68] sm:$0xff]
      %v1191 = vld [vmem:[%s8] sm:$0xff]
      %v1192 = vld [vmem:[%s8 + $0x8] sm:$0xff]
      %vm1193 = vcmask 916480
      %v1195 = vsel %vm1193, %v1144, 0
      %v1198 = vsel %vm1193, %v1145, 0
      %1200 = vmatprep.subr.mxu0 0.0
      %1201 = vmatpush1.msra.mxu0 %v1130
      %1202 = vmatprep.subr.mxu0 0.0
      %1203 = vmatpush1.msra.mxu0 %v1131
      %1204 = vmatprep.subr.mxu0 0.0
      %1205 = vmatpush1.msra.mxu0 %v1132
      %1206 = vmatprep.subr.mxu0 0.0
      %1207 = vmatpush1.msra.mxu0 %v1133
      %1208 = vmatprep.subr.mxu0 0.0
      %1209 = vmatpush1.msra.mxu0 %v1134
      %1210 = vmatprep.subr.mxu0 0.0
      %1211 = vmatpush1.msra.mxu0 %v1135
      %1212 = vmatprep.subr.mxu0 0.0
      %1213 = vmatpush1.msra.mxu0 %v1136
      %1214 = vmatprep.subr.mxu0 0.0
      %1215 = vmatpush1.msra.mxu0 %v1137
      %1216 = vmatprep.subr.mxu0 0.0
      %1217 = vmatpush1.msra.mxu0 %v1138
      %1218 = vmatprep.subr.mxu0 0.0
      %1219 = vmatpush1.msra.mxu0 %v1139
      %1220 = vmatprep.subr.mxu0 0.0
      %1221 = vmatpush1.msra.mxu0 %v1140
      %1222 = vmatprep.subr.mxu0 0.0
      %1223 = vmatpush1.msra.mxu0 %v1141
      %1224 = vmatprep.subr.mxu0 0.0
      %1225 = vmatpush1.msra.mxu0 %v1142
      %1226 = vmatprep.subr.mxu0 0.0
      %1227 = vmatpush1.msra.mxu0 %v1143
      %1228 = vmatprep.subr.mxu0 0.0
      %1229 = vmatpush1.msra.mxu0 0.0
      %1230 = vmatprep.subr.mxu0 0.0
      %1231 = vmatpush1.msra.mxu0 0.0
      %1232 = vmatprep.subr.mxu0 0.0
      %1233 = vmatpush1.msra.mxu0 0.0
      %1234 = vmatprep.subr.mxu0 0.0
      %1235 = vmatpush1.msra.mxu0 0.0
      %1236 = vmatprep.subr.mxu0 0.0
      %1237 = vmatpush1.msra.mxu0 0.0
      %1238 = vmatprep.subr.mxu0 0.0
      %1239 = vmatpush1.msra.mxu0 0.0
      %1240 = vmatprep.subr.mxu0 0.0
      %1241 = vmatpush1.msra.mxu0 0.0
      %1242 = vmatprep.subr.mxu0 0.0
      %1243 = vmatpush1.msra.mxu0 0.0
      %1244 = vmatprep.subr.mxu0 0.0
      %1245 = vmatpush1.msra.mxu0 0.0
      %1246 = vmatprep.subr.mxu0 0.0
      %1247 = vmatpush1.msra.mxu0 0.0
      %1248 = vmatprep.subr.mxu0 0.0
      %1249 = vmatpush1.msra.mxu0 0.0
      %1250 = vmatprep.subr.mxu0 0.0
      %1251 = vmatpush1.msra.mxu0 0.0
      %1252 = vmatprep.subr.mxu0 0.0
      %1253 = vmatpush1.msra.mxu0 0.0
      %1254 = vmatprep.subr.mxu0 0.0
      %1255 = vmatpush1.msra.mxu0 0.0
      %1256 = vmatprep.subr.mxu0 0.0
      %1257 = vmatpush1.msra.mxu0 0.0
      %1258 = vmatprep.subr.mxu0 0.0
      %1259 = vmatpush1.msra.mxu0 0.0
      %1260 = vmatprep.subr.mxu0 0.0
      %1261 = vmatpush1.msra.mxu0 0.0
      %1262 = vmatprep.subr.mxu0 0.0
      %1263 = vmatpush1.msra.mxu0 0.0
      %1264 = vmatprep.mubr.f32.mxu0 0.0
      %1265 = vmatmul.mubr.f32.gmra.mrb[0].mxu0 %v1195
      %v1266 = vpop.f32.mrb[0].mxu0
      %v1267 = vadd.f32 0.0, %v1266
      %v1268 = vpop.f32.mrb[0].mxu0
      %1269 = vmatprep.mubr.f32.mxu0 0.0
      %1270 = vmatmul.mubr.f32.gmra.mrb[0].mxu0 %v1198
      %v1271 = vpop.f32.mrb[0].mxu0
      %v1272 = vadd.f32 0.0, %v1271
      %v1273 = vpop.f32.mrb[0].mxu0
      %1274 = vdwg.mxu0
      %1275 = vmatprep.subr.mxu0 0.0
      %1276 = vmatpush1.msra.mxu0 %v1160
      %1277 = vmatprep.subr.mxu0 0.0
      %1278 = vmatpush1.msra.mxu0 %v1161
      %1279 = vmatprep.subr.mxu0 0.0
      %1280 = vmatpush1.msra.mxu0 %v1162
      %1281 = vmatprep.subr.mxu0 0.0
      %1282 = vmatpush1.msra.mxu0 %v1163
      %1283 = vmatprep.subr.mxu0 0.0
      %1284 = vmatpush1.msra.mxu0 %v1164
      %1285 = vmatprep.subr.mxu0 0.0
      %1286 = vmatpush1.msra.mxu0 %v1165
      %1287 = vmatprep.subr.mxu0 0.0
      %1288 = vmatpush1.msra.mxu0 %v1166
      %1289 = vmatprep.subr.mxu0 0.0
      %1290 = vmatpush1.msra.mxu0 %v1167
      %1291 = vmatprep.subr.mxu0 0.0
      %1292 = vmatpush1.msra.mxu0 %v1168
      %1293 = vmatprep.subr.mxu0 0.0
      %1294 = vmatpush1.msra.mxu0 %v1169
      %1295 = vmatprep.subr.mxu0 0.0
      %1296 = vmatpush1.msra.mxu0 %v1170
      %1297 = vmatprep.subr.mxu0 0.0
      %1298 = vmatpush1.msra.mxu0 %v1171
      %1299 = vmatprep.subr.mxu0 0.0
      %1300 = vmatpush1.msra.mxu0 %v1172
      %1301 = vmatprep.subr.mxu0 0.0
      %1302 = vmatpush1.msra.mxu0 %v1173
      %1303 = vmatprep.subr.mxu0 0.0
      %1304 = vmatpush1.msra.mxu0 %v1174
      %1305 = vmatprep.subr.mxu0 0.0
      %1306 = vmatpush1.msra.mxu0 %v1175
      %1307 = vmatprep.subr.mxu0 0.0
      %1308 = vmatpush1.msra.mxu0 0.0
      %1309 = vmatprep.subr.mxu0 0.0
      %1310 = vmatpush1.msra.mxu0 0.0
      %1311 = vmatprep.subr.mxu0 0.0
      %1312 = vmatpush1.msra.mxu0 0.0
      %1313 = vmatprep.subr.mxu0 0.0
      %1314 = vmatpush1.msra.mxu0 0.0
      %1315 = vmatprep.subr.mxu0 0.0
      %1316 = vmatpush1.msra.mxu0 0.0
      %1317 = vmatprep.subr.mxu0 0.0
      %1318 = vmatpush1.msra.mxu0 0.0
      %1319 = vmatprep.subr.mxu0 0.0
      %1320 = vmatpush1.msra.mxu0 0.0
      %1321 = vmatprep.subr.mxu0 0.0
      %1322 = vmatpush1.msra.mxu0 0.0
      %1323 = vmatprep.subr.mxu0 0.0
      %1324 = vmatpush1.msra.mxu0 0.0
      %1325 = vmatprep.subr.mxu0 0.0
      %1326 = vmatpush1.msra.mxu0 0.0
      %1327 = vmatprep.subr.mxu0 0.0
      %1328 = vmatpush1.msra.mxu0 0.0
      %1329 = vmatprep.subr.mxu0 0.0
      %1330 = vmatpush1.msra.mxu0 0.0
      %1331 = vmatprep.subr.mxu0 0.0
      %1332 = vmatpush1.msra.mxu0 0.0
      %1333 = vmatprep.subr.mxu0 0.0
      %1334 = vmatpush1.msra.mxu0 0.0
      %1335 = vmatprep.subr.mxu0 0.0
      %1336 = vmatpush1.msra.mxu0 0.0
      %1337 = vmatprep.subr.mxu0 0.0
      %1338 = vmatpush1.msra.mxu0 0.0
      %1339 = vmatprep.mubr.f32.mxu0 0.0
      %1340 = vmatmul.mubr.f32.gmra.mrb[0].mxu0 %v1267
      %v1341 = vpop.f32.mrb[0].mxu0
      %v1342 = vadd.f32 0.0, %v1341
      %v1343 = vpop.f32.mrb[0].mxu0
      %1344 = vmatprep.mubr.f32.mxu0 0.0
      %1345 = vmatmul.mubr.f32.gmra.mrb[0].mxu0 %v1272
      %v1346 = vpop.f32.mrb[0].mxu0
      %v1347 = vadd.f32 0.0, %v1346
      %v1348 = vpop.f32.mrb[0].mxu0
      %1349 = vdwg.mxu0
      %v1350 = vmul.f32 %v1342, 0.008928572
      %v1351 = vmul.f32 %v1347, 0.008928572
      %vm1352 = vcmask 64512
      %v1354 = vsel %vm1352, %v1350, 0
      %v1357 = vsel %vm1352, %v1351, 0
      %1359 = vmatprep.subr.mxu0 0.0
      %1360 = vmatpush1.msra.mxu0 %v1176
      %1361 = vmatprep.subr.mxu0 0.0
      %1362 = vmatpush1.msra.mxu0 0.0
      %1363 = vmatprep.subr.mxu0 0.0
      %1364 = vmatpush1.msra.mxu0 0.0
      %1365 = vmatprep.subr.mxu0 0.0
      %1366 = vmatpush1.msra.mxu0 0.0
      %1367 = vmatprep.subr.mxu0 0.0
      %1368 = vmatpush1.msra.mxu0 0.0
      %1369 = vmatprep.subr.mxu0 0.0
      %1370 = vmatpush1.msra.mxu0 0.0
      %1371 = vmatprep.subr.mxu0 0.0
      %1372 = vmatpush1.msra.mxu0 0.0
      %1373 = vmatprep.subr.mxu0 0.0
      %1374 = vmatpush1.msra.mxu0 0.0
      %1375 = vmatprep.subr.mxu0 0.0
      %1376 = vmatpush1.msra.mxu0 0.0
      %1377 = vmatprep.subr.mxu0 0.0
      %1378 = vmatpush1.msra.mxu0 0.0
      %1379 = vmatprep.subr.mxu0 0.0
      %1380 = vmatpush1.msra.mxu0 0.0
      %1381 = vmatprep.subr.mxu0 0.0
      %1382 = vmatpush1.msra.mxu0 0.0
      %1383 = vmatprep.subr.mxu0 0.0
      %1384 = vmatpush1.msra.mxu0 0.0
      %1385 = vmatprep.subr.mxu0 0.0
      %1386 = vmatpush1.msra.mxu0 0.0
      %1387 = vmatprep.subr.mxu0 0.0
      %1388 = vmatpush1.msra.mxu0 0.0
      %1389 = vmatprep.subr.mxu0 0.0
      %1390 = vmatpush1.msra.mxu0 0.0
      %1391 = vmatprep.subr.mxu0 0.0
      %1392 = vmatpush1.msra.mxu0 0.0
      %1393 = vmatprep.subr.mxu0 0.0
      %1394 = vmatpush1.msra.mxu0 0.0
      %1395 = vmatprep.subr.mxu0 0.0
      %1396 = vmatpush1.msra.mxu0 0.0
      %1397 = vmatprep.subr.mxu0 0.0
      %1398 = vmatpush1.msra.mxu0 0.0
      %1399 = vmatprep.subr.mxu0 0.0
      %1400 = vmatpush1.msra.mxu0 0.0
      %1401 = vmatprep.subr.mxu0 0.0
      %1402 = vmatpush1.msra.mxu0 0.0
      %1403 = vmatprep.subr.mxu0 0.0
      %1404 = vmatpush1.msra.mxu0 0.0
      %1405 = vmatprep.subr.mxu0 0.0
      %1406 = vmatpush1.msra.mxu0 0.0
      %1407 = vmatprep.subr.mxu0 0.0
      %1408 = vmatpush1.msra.mxu0 0.0
      %1409 = vmatprep.subr.mxu0 0.0
      %1410 = vmatpush1.msra.mxu0 0.0
      %1411 = vmatprep.subr.mxu0 0.0
      %1412 = vmatpush1.msra.mxu0 0.0
      %1413 = vmatprep.subr.mxu0 0.0
      %1414 = vmatpush1.msra.mxu0 0.0
      %1415 = vmatprep.subr.mxu0 0.0
      %1416 = vmatpush1.msra.mxu0 0.0
      %1417 = vmatprep.subr.mxu0 0.0
      %1418 = vmatpush1.msra.mxu0 0.0
      %1419 = vmatprep.subr.mxu0 0.0
      %1420 = vmatpush1.msra.mxu0 0.0
      %1421 = vmatprep.subr.mxu0 0.0
      %1422 = vmatpush1.msra.mxu0 0.0
      %1423 = vmatprep.mubr.f32.mxu0 0.0
      %1424 = vmatmul.mubr.f32.gmra.mrb[0].mxu0 %v1354
      %v1425 = vpop.f32.mrb[0].mxu0
      %v1426 = vadd.f32 0.0, %v1425
      %v1427 = vpop.f32.mrb[0].mxu0
      %1428 = vmatprep.mubr.f32.mxu0 0.0
      %1429 = vmatmul.mubr.f32.gmra.mrb[0].mxu0 %v1357
      %v1430 = vpop.f32.mrb[0].mxu0
      %v1431 = vadd.f32 0.0, %v1430
      %v1432 = vpop.f32.mrb[0].mxu0
      %1433 = vdwg.mxu0
      %vm1434 = vcmask 130048
      %v1436 = vsel %vm1434, %v1146, 0
      %v1439 = vsel %vm1434, %v1147, 0
      %v1442 = vsel %vm1434, %v1148, 0
      %v1445 = vsel %vm1434, %v1149, 0
      %v1448 = vsel %vm1434, %v1150, 0
      %v1451 = vsel %vm1434, %v1151, 0
      %v1454 = vsel %vm1434, %v1152, 0
      %v1457 = vsel %vm1434, %v1153, 0
      %v1460 = vsel %vm1434, %v1154, 0
      %v1463 = vsel %vm1434, %v1155, 0
      %v1466 = vsel %vm1434, %v1156, 0
      %v1469 = vsel %vm1434, %v1157, 0
      %v1472 = vsel %vm1434, %v1158, 0
      %v1475 = vsel %vm1434, %v1159, 0
      %1477 = vmatprep.subr.mxu0 0.0
      %1478 = vmatpush1.msra.mxu0 %v1426
      %1479 = vmatprep.subr.mxu0 0.0
      %1480 = vmatpush1.msra.mxu0 %v1431
      %1481 = vmatprep.subr.mxu0 0.0
      %1482 = vmatpush1.msra.mxu0 0.0
      %1483 = vmatprep.subr.mxu0 0.0
      %1484 = vmatpush1.msra.mxu0 0.0
      %1485 = vmatprep.subr.mxu0 0.0
      %1486 = vmatpush1.msra.mxu0 0.0
      %1487 = vmatprep.subr.mxu0 0.0
      %1488 = vmatpush1.msra.mxu0 0.0
      %1489 = vmatprep.subr.mxu0 0.0
      %1490 = vmatpush1.msra.mxu0 0.0
      %1491 = vmatprep.subr.mxu0 0.0
      %1492 = vmatpush1.msra.mxu0 0.0
      %1493 = vmatprep.subr.mxu0 0.0
      %1494 = vmatpush1.msra.mxu0 0.0
      %1495 = vmatprep.subr.mxu0 0.0
      %1496 = vmatpush1.msra.mxu0 0.0
      %1497 = vmatprep.subr.mxu0 0.0
      %1498 = vmatpush1.msra.mxu0 0.0
      %1499 = vmatprep.subr.mxu0 0.0
      %1500 = vmatpush1.msra.mxu0 0.0
      %1501 = vmatprep.subr.mxu0 0.0
      %1502 = vmatpush1.msra.mxu0 0.0
      %1503 = vmatprep.subr.mxu0 0.0
      %1504 = vmatpush1.msra.mxu0 0.0
      %1505 = vmatprep.subr.mxu0 0.0
      %1506 = vmatpush1.msra.mxu0 0.0
      %1507 = vmatprep.subr.mxu0 0.0
      %1508 = vmatpush1.msra.mxu0 0.0
      %1509 = vmatprep.subr.mxu0 0.0
      %1510 = vmatpush1.msra.mxu0 0.0
      %1511 = vmatprep.subr.mxu0 0.0
      %1512 = vmatpush1.msra.mxu0 0.0
      %1513 = vmatprep.subr.mxu0 0.0
      %1514 = vmatpush1.msra.mxu0 0.0
      %1515 = vmatprep.subr.mxu0 0.0
      %1516 = vmatpush1.msra.mxu0 0.0
      %1517 = vmatprep.subr.mxu0 0.0
      %1518 = vmatpush1.msra.mxu0 0.0
      %1519 = vmatprep.subr.mxu0 0.0
      %1520 = vmatpush1.msra.mxu0 0.0
      %1521 = vmatprep.subr.mxu0 0.0
      %1522 = vmatpush1.msra.mxu0 0.0
      %1523 = vmatprep.subr.mxu0 0.0
      %1524 = vmatpush1.msra.mxu0 0.0
      %1525 = vmatprep.subr.mxu0 0.0
      %1526 = vmatpush1.msra.mxu0 0.0
      %1527 = vmatprep.subr.mxu0 0.0
      %1528 = vmatpush1.msra.mxu0 0.0
      %1529 = vmatprep.subr.mxu0 0.0
      %1530 = vmatpush1.msra.mxu0 0.0
      %1531 = vmatprep.subr.mxu0 0.0
      %1532 = vmatpush1.msra.mxu0 0.0
      %1533 = vmatprep.subr.mxu0 0.0
      %1534 = vmatpush1.msra.mxu0 0.0
      %1535 = vmatprep.subr.mxu0 0.0
      %1536 = vmatpush1.msra.mxu0 0.0
      %1537 = vmatprep.subr.mxu0 0.0
      %1538 = vmatpush1.msra.mxu0 0.0
      %1539 = vmatprep.subr.mxu0 0.0
      %1540 = vmatpush1.msra.mxu0 0.0
      %1541 = vmatprep.mubr.f32.mxu0 0.0
      %1542 = vmatmul.mubr.f32.gmra.mrb[0].mxu0 %v1436
      %v1543 = vpop.f32.mrb[0].mxu0
      %v1544 = vadd.f32 0.0, %v1543
      %v1545 = vpop.f32.mrb[0].mxu0
      %1546 = vmatprep.mubr.f32.mxu0 0.0
      %1547 = vmatmul.mubr.f32.gmra.mrb[0].mxu0 %v1439
      %v1548 = vpop.f32.mrb[0].mxu0
      %v1549 = vadd.f32 0.0, %v1548
      %v1550 = vpop.f32.mrb[0].mxu0
      %1551 = vmatprep.mubr.f32.mxu0 0.0
      %1552 = vmatmul.mubr.f32.gmra.mrb[0].mxu0 %v1442
      %v1553 = vpop.f32.mrb[0].mxu0
      %v1554 = vadd.f32 0.0, %v1553
      %v1555 = vpop.f32.mrb[0].mxu0
      %1556 = vmatprep.mubr.f32.mxu0 0.0
      %1557 = vmatmul.mubr.f32.gmra.mrb[0].mxu0 %v1445
      %v1558 = vpop.f32.mrb[0].mxu0
      %v1559 = vadd.f32 0.0, %v1558
      %v1560 = vpop.f32.mrb[0].mxu0
      %1561 = vmatprep.mubr.f32.mxu0 0.0
      %1562 = vmatmul.mubr.f32.gmra.mrb[0].mxu0 %v1448
      %v1563 = vpop.f32.mrb[0].mxu0
      %v1564 = vadd.f32 0.0, %v1563
      %v1565 = vpop.f32.mrb[0].mxu0
      %1566 = vmatprep.mubr.f32.mxu0 0.0
      %1567 = vmatmul.mubr.f32.gmra.mrb[0].mxu0 %v1451
      %v1568 = vpop.f32.mrb[0].mxu0
      %v1569 = vadd.f32 0.0, %v1568
      %v1570 = vpop.f32.mrb[0].mxu0
      %1571 = vmatprep.mubr.f32.mxu0 0.0
      %1572 = vmatmul.mubr.f32.gmra.mrb[0].mxu0 %v1454
      %v1573 = vpop.f32.mrb[0].mxu0
      %v1574 = vadd.f32 0.0, %v1573
      %v1575 = vpop.f32.mrb[0].mxu0
      %1576 = vmatprep.mubr.f32.mxu0 0.0
      %1577 = vmatmul.mubr.f32.gmra.mrb[0].mxu0 %v1457
      %v1578 = vpop.f32.mrb[0].mxu0
      %v1579 = vadd.f32 0.0, %v1578
      %v1580 = vpop.f32.mrb[0].mxu0
      %1581 = vmatprep.mubr.f32.mxu0 0.0
      %1582 = vmatmul.mubr.f32.gmra.mrb[0].mxu0 %v1460
      %v1583 = vpop.f32.mrb[0].mxu0
      %v1584 = vadd.f32 0.0, %v1583
      %v1585 = vpop.f32.mrb[0].mxu0
      %1586 = vmatprep.mubr.f32.mxu0 0.0
      %1587 = vmatmul.mubr.f32.gmra.mrb[0].mxu0 %v1463
      %v1588 = vpop.f32.mrb[0].mxu0
      %v1589 = vadd.f32 0.0, %v1588
      %v1590 = vpop.f32.mrb[0].mxu0
      %1591 = vmatprep.mubr.f32.mxu0 0.0
      %1592 = vmatmul.mubr.f32.gmra.mrb[0].mxu0 %v1466
      %v1593 = vpop.f32.mrb[0].mxu0
      %v1594 = vadd.f32 0.0, %v1593
      %v1595 = vpop.f32.mrb[0].mxu0
      %1596 = vmatprep.mubr.f32.mxu0 0.0
      %1597 = vmatmul.mubr.f32.gmra.mrb[0].mxu0 %v1469
      %v1598 = vpop.f32.mrb[0].mxu0
      %v1599 = vadd.f32 0.0, %v1598
      %v1600 = vpop.f32.mrb[0].mxu0
      %1601 = vmatprep.mubr.f32.mxu0 0.0
      %1602 = vmatmul.mubr.f32.gmra.mrb[0].mxu0 %v1472
      %v1603 = vpop.f32.mrb[0].mxu0
      %v1604 = vadd.f32 0.0, %v1603
      %v1605 = vpop.f32.mrb[0].mxu0
      %1606 = vmatprep.mubr.f32.mxu0 0.0
      %1607 = vmatmul.mubr.f32.gmra.mrb[0].mxu0 %v1475
      %v1608 = vpop.f32.mrb[0].mxu0
      %v1609 = vadd.f32 0.0, %v1608
      %v1610 = vpop.f32.mrb[0].mxu0
      %1611 = vdwg.mxu0
      %v1612 = vsub.f32 %v1130, %v1544
      %v1613 = vsub.f32 %v1131, %v1549
      %v1614 = vsub.f32 %v1132, %v1554
      %v1615 = vsub.f32 %v1133, %v1559
      %v1616 = vsub.f32 %v1134, %v1564
      %v1617 = vsub.f32 %v1135, %v1569
      %v1618 = vsub.f32 %v1136, %v1574
      %v1619 = vsub.f32 %v1137, %v1579
      %v1620 = vsub.f32 %v1138, %v1584
      %v1621 = vsub.f32 %v1139, %v1589
      %v1622 = vsub.f32 %v1140, %v1594
      %v1623 = vsub.f32 %v1141, %v1599
      %v1624 = vsub.f32 %v1142, %v1604
      %v1625 = vsub.f32 %v1143, %v1609
      %v1626 = vmul.f32 %v1612, %v1612
      %v1627 = vmul.f32 %v1613, %v1613
      %v1628 = vmul.f32 %v1614, %v1614
      %v1629 = vmul.f32 %v1615, %v1615
      %v1630 = vmul.f32 %v1616, %v1616
      %v1631 = vmul.f32 %v1617, %v1617
      %v1632 = vmul.f32 %v1618, %v1618
      %v1633 = vmul.f32 %v1619, %v1619
      %v1634 = vmul.f32 %v1620, %v1620
      %v1635 = vmul.f32 %v1621, %v1621
      %v1636 = vmul.f32 %v1622, %v1622
      %v1637 = vmul.f32 %v1623, %v1623
      %v1638 = vmul.f32 %v1624, %v1624
      %v1639 = vmul.f32 %v1625, %v1625
      %1640 = vmatprep.subr.mxu0 0.0
      %1641 = vmatpush1.msra.mxu0 %v1626
      %1642 = vmatprep.subr.mxu0 0.0
      %1643 = vmatpush1.msra.mxu0 %v1627
      %1644 = vmatprep.subr.mxu0 0.0
      %1645 = vmatpush1.msra.mxu0 %v1628
      %1646 = vmatprep.subr.mxu0 0.0
      %1647 = vmatpush1.msra.mxu0 %v1629
      %1648 = vmatprep.subr.mxu0 0.0
      %1649 = vmatpush1.msra.mxu0 %v1630
      %1650 = vmatprep.subr.mxu0 0.0
      %1651 = vmatpush1.msra.mxu0 %v1631
      %1652 = vmatprep.subr.mxu0 0.0
      %1653 = vmatpush1.msra.mxu0 %v1632
      %1654 = vmatprep.subr.mxu0 0.0
      %1655 = vmatpush1.msra.mxu0 %v1633
      %1656 = vmatprep.subr.mxu0 0.0
      %1657 = vmatpush1.msra.mxu0 %v1634
      %1658 = vmatprep.subr.mxu0 0.0
      %1659 = vmatpush1.msra.mxu0 %v1635
      %1660 = vmatprep.subr.mxu0 0.0
      %1661 = vmatpush1.msra.mxu0 %v1636
      %1662 = vmatprep.subr.mxu0 0.0
      %1663 = vmatpush1.msra.mxu0 %v1637
      %1664 = vmatprep.subr.mxu0 0.0
      %1665 = vmatpush1.msra.mxu0 %v1638
      %1666 = vmatprep.subr.mxu0 0.0
      %1667 = vmatpush1.msra.mxu0 %v1639
      %1668 = vmatprep.subr.mxu0 0.0
      %1669 = vmatpush1.msra.mxu0 0.0
      %1670 = vmatprep.subr.mxu0 0.0
      %1671 = vmatpush1.msra.mxu0 0.0
      %1672 = vmatprep.subr.mxu0 0.0
      %1673 = vmatpush1.msra.mxu0 0.0
      %1674 = vmatprep.subr.mxu0 0.0
      %1675 = vmatpush1.msra.mxu0 0.0
      %1676 = vmatprep.subr.mxu0 0.0
      %1677 = vmatpush1.msra.mxu0 0.0
      %1678 = vmatprep.subr.mxu0 0.0
      %1679 = vmatpush1.msra.mxu0 0.0
      %1680 = vmatprep.subr.mxu0 0.0
      %1681 = vmatpush1.msra.mxu0 0.0
      %1682 = vmatprep.subr.mxu0 0.0
      %1683 = vmatpush1.msra.mxu0 0.0
      %1684 = vmatprep.subr.mxu0 0.0
      %1685 = vmatpush1.msra.mxu0 0.0
      %1686 = vmatprep.subr.mxu0 0.0
      %1687 = vmatpush1.msra.mxu0 0.0
      %1688 = vmatprep.subr.mxu0 0.0
      %1689 = vmatpush1.msra.mxu0 0.0
      %1690 = vmatprep.subr.mxu0 0.0
      %1691 = vmatpush1.msra.mxu0 0.0
      %1692 = vmatprep.subr.mxu0 0.0
      %1693 = vmatpush1.msra.mxu0 0.0
      %1694 = vmatprep.subr.mxu0 0.0
      %1695 = vmatpush1.msra.mxu0 0.0
      %1696 = vmatprep.subr.mxu0 0.0
      %1697 = vmatpush1.msra.mxu0 0.0
      %1698 = vmatprep.subr.mxu0 0.0
      %1699 = vmatpush1.msra.mxu0 0.0
      %1700 = vmatprep.subr.mxu0 0.0
      %1701 = vmatpush1.msra.mxu0 0.0
      %1702 = vmatprep.subr.mxu0 0.0
      %1703 = vmatpush1.msra.mxu0 0.0
      %1704 = vmatprep.mubr.f32.mxu0 0.0
      %1705 = vmatmul.mubr.f32.gmra.mrb[0].mxu0 %v1195
      %v1706 = vpop.f32.mrb[0].mxu0
      %v1707 = vadd.f32 0.0, %v1706
      %v1708 = vpop.f32.mrb[0].mxu0
      %1709 = vmatprep.mubr.f32.mxu0 0.0
      %1710 = vmatmul.mubr.f32.gmra.mrb[0].mxu0 %v1198
      %v1711 = vpop.f32.mrb[0].mxu0
      %v1712 = vadd.f32 0.0, %v1711
      %v1713 = vpop.f32.mrb[0].mxu0
      %1714 = vdwg.mxu0
      %1715 = vmatprep.subr.mxu0 0.0
      %1716 = vmatpush1.msra.mxu0 %v1160
      %1717 = vmatprep.subr.mxu0 0.0
      %1718 = vmatpush1.msra.mxu0 %v1161
      %1719 = vmatprep.subr.mxu0 0.0
      %1720 = vmatpush1.msra.mxu0 %v1162
      %1721 = vmatprep.subr.mxu0 0.0
      %1722 = vmatpush1.msra.mxu0 %v1163
      %1723 = vmatprep.subr.mxu0 0.0
      %1724 = vmatpush1.msra.mxu0 %v1164
      %1725 = vmatprep.subr.mxu0 0.0
      %1726 = vmatpush1.msra.mxu0 %v1165
      %1727 = vmatprep.subr.mxu0 0.0
      %1728 = vmatpush1.msra.mxu0 %v1166
      %1729 = vmatprep.subr.mxu0 0.0
      %1730 = vmatpush1.msra.mxu0 %v1167
      %1731 = vmatprep.subr.mxu0 0.0
      %1732 = vmatpush1.msra.mxu0 %v1168
      %1733 = vmatprep.subr.mxu0 0.0
      %1734 = vmatpush1.msra.mxu0 %v1169
      %1735 = vmatprep.subr.mxu0 0.0
      %1736 = vmatpush1.msra.mxu0 %v1170
      %1737 = vmatprep.subr.mxu0 0.0
      %1738 = vmatpush1.msra.mxu0 %v1171
      %1739 = vmatprep.subr.mxu0 0.0
      %1740 = vmatpush1.msra.mxu0 %v1172
      %1741 = vmatprep.subr.mxu0 0.0
      %1742 = vmatpush1.msra.mxu0 %v1173
      %1743 = vmatprep.subr.mxu0 0.0
      %1744 = vmatpush1.msra.mxu0 %v1174
      %1745 = vmatprep.subr.mxu0 0.0
      %1746 = vmatpush1.msra.mxu0 %v1175
      %1747 = vmatprep.subr.mxu0 0.0
      %1748 = vmatpush1.msra.mxu0 0.0
      %1749 = vmatprep.subr.mxu0 0.0
      %1750 = vmatpush1.msra.mxu0 0.0
      %1751 = vmatprep.subr.mxu0 0.0
      %1752 = vmatpush1.msra.mxu0 0.0
      %1753 = vmatprep.subr.mxu0 0.0
      %1754 = vmatpush1.msra.mxu0 0.0
      %1755 = vmatprep.subr.mxu0 0.0
      %1756 = vmatpush1.msra.mxu0 0.0
      %1757 = vmatprep.subr.mxu0 0.0
      %1758 = vmatpush1.msra.mxu0 0.0
      %1759 = vmatprep.subr.mxu0 0.0
      %1760 = vmatpush1.msra.mxu0 0.0
      %1761 = vmatprep.subr.mxu0 0.0
      %1762 = vmatpush1.msra.mxu0 0.0
      %1763 = vmatprep.subr.mxu0 0.0
      %1764 = vmatpush1.msra.mxu0 0.0
      %1765 = vmatprep.subr.mxu0 0.0
      %1766 = vmatpush1.msra.mxu0 0.0
      %1767 = vmatprep.subr.mxu0 0.0
      %1768 = vmatpush1.msra.mxu0 0.0
      %1769 = vmatprep.subr.mxu0 0.0
      %1770 = vmatpush1.msra.mxu0 0.0
      %1771 = vmatprep.subr.mxu0 0.0
      %1772 = vmatpush1.msra.mxu0 0.0
      %1773 = vmatprep.subr.mxu0 0.0
      %1774 = vmatpush1.msra.mxu0 0.0
      %1775 = vmatprep.subr.mxu0 0.0
      %1776 = vmatpush1.msra.mxu0 0.0
      %1777 = vmatprep.subr.mxu0 0.0
      %1778 = vmatpush1.msra.mxu0 0.0
      %1779 = vmatprep.mubr.f32.mxu0 0.0
      %1780 = vmatmul.mubr.f32.gmra.mrb[0].mxu0 %v1707
      %v1781 = vpop.f32.mrb[0].mxu0
      %v1782 = vadd.f32 0.0, %v1781
      %v1783 = vpop.f32.mrb[0].mxu0
      %1784 = vmatprep.mubr.f32.mxu0 0.0
      %1785 = vmatmul.mubr.f32.gmra.mrb[0].mxu0 %v1712
      %v1786 = vpop.f32.mrb[0].mxu0
      %v1787 = vadd.f32 0.0, %v1786
      %v1788 = vpop.f32.mrb[0].mxu0
      %1789 = vdwg.mxu0
      %v1790 = vmul.f32 %v1782, 0.008928572
      %v1791 = vmul.f32 %v1787, 0.008928572
      %v1792 = vadd.f32 %v1790, 1e-05
      %v1793 = vadd.f32 %v1791, 1e-05
      %v1794 = vrsqrt.pop %v1792
      %v1795 = vrsqrt.pop %v1793
      %1797 = vset.pattern.permute.xlu0 0
      %1798 = vperm.xlu0 %1797, %v1191
      %v1799 = vpop.permute.xlu0 %1798
      %1802 = vset.pattern.permute.xlu0 0
      %1803 = vperm.xlu0 %1802, %v1192
      %v1804 = vpop.permute.xlu0 %1803
      %v1806 = vmul.f32 %v1794, %v1799
      %v1807 = vmul.f32 %v1795, %v1804
      %v1809 = vsel %vm1352, %v1806, 0
      %v1812 = vsel %vm1352, %v1807, 0
      %1814 = vmatprep.subr.mxu0 0.0
      %1815 = vmatpush1.msra.mxu0 %v1176
      %1816 = vmatprep.subr.mxu0 0.0
      %1817 = vmatpush1.msra.mxu0 0.0
      %1818 = vmatprep.subr.mxu0 0.0
      %1819 = vmatpush1.msra.mxu0 0.0
      %1820 = vmatprep.subr.mxu0 0.0
      %1821 = vmatpush1.msra.mxu0 0.0
      %1822 = vmatprep.subr.mxu0 0.0
      %1823 = vmatpush1.msra.mxu0 0.0
      %1824 = vmatprep.subr.mxu0 0.0
      %1825 = vmatpush1.msra.mxu0 0.0
      %1826 = vmatprep.subr.mxu0 0.0
      %1827 = vmatpush1.msra.mxu0 0.0
      %1828 = vmatprep.subr.mxu0 0.0
      %1829 = vmatpush1.msra.mxu0 0.0
      %1830 = vmatprep.subr.mxu0 0.0
      %1831 = vmatpush1.msra.mxu0 0.0
      %1832 = vmatprep.subr.mxu0 0.0
      %1833 = vmatpush1.msra.mxu0 0.0
      %1834 = vmatprep.subr.mxu0 0.0
      %1835 = vmatpush1.msra.mxu0 0.0
      %1836 = vmatprep.subr.mxu0 0.0
      %1837 = vmatpush1.msra.mxu0 0.0
      %1838 = vmatprep.subr.mxu0 0.0
      %1839 = vmatpush1.msra.mxu0 0.0
      %1840 = vmatprep.subr.mxu0 0.0
      %1841 = vmatpush1.msra.mxu0 0.0
      %1842 = vmatprep.subr.mxu0 0.0
      %1843 = vmatpush1.msra.mxu0 0.0
      %1844 = vmatprep.subr.mxu0 0.0
      %1845 = vmatpush1.msra.mxu0 0.0
      %1846 = vmatprep.subr.mxu0 0.0
      %1847 = vmatpush1.msra.mxu0 0.0
      %1848 = vmatprep.subr.mxu0 0.0
      %1849 = vmatpush1.msra.mxu0 0.0
      %1850 = vmatprep.subr.mxu0 0.0
      %1851 = vmatpush1.msra.mxu0 0.0
      %1852 = vmatprep.subr.mxu0 0.0
      %1853 = vmatpush1.msra.mxu0 0.0
      %1854 = vmatprep.subr.mxu0 0.0
      %1855 = vmatpush1.msra.mxu0 0.0
      %1856 = vmatprep.subr.mxu0 0.0
      %1857 = vmatpush1.msra.mxu0 0.0
      %1858 = vmatprep.subr.mxu0 0.0
      %1859 = vmatpush1.msra.mxu0 0.0
      %1860 = vmatprep.subr.mxu0 0.0
      %1861 = vmatpush1.msra.mxu0 0.0
      %1862 = vmatprep.subr.mxu0 0.0
      %1863 = vmatpush1.msra.mxu0 0.0
      %1864 = vmatprep.subr.mxu0 0.0
      %1865 = vmatpush1.msra.mxu0 0.0
      %1866 = vmatprep.subr.mxu0 0.0
      %1867 = vmatpush1.msra.mxu0 0.0
      %1868 = vmatprep.subr.mxu0 0.0
      %1869 = vmatpush1.msra.mxu0 0.0
      %1870 = vmatprep.subr.mxu0 0.0
      %1871 = vmatpush1.msra.mxu0 0.0
      %1872 = vmatprep.subr.mxu0 0.0
      %1873 = vmatpush1.msra.mxu0 0.0
      %1874 = vmatprep.subr.mxu0 0.0
      %1875 = vmatpush1.msra.mxu0 0.0
      %1876 = vmatprep.subr.mxu0 0.0
      %1877 = vmatpush1.msra.mxu0 0.0
      %1878 = vmatprep.mubr.f32.mxu0 0.0
      %1879 = vmatmul.mubr.f32.gmra.mrb[0].mxu0 %v1809
      %v1880 = vpop.f32.mrb[0].mxu0
      %v1881 = vadd.f32 0.0, %v1880
      %v1882 = vpop.f32.mrb[0].mxu0
      %1883 = vmatprep.mubr.f32.mxu0 0.0
      %1884 = vmatmul.mubr.f32.gmra.mrb[0].mxu0 %v1812
      %v1885 = vpop.f32.mrb[0].mxu0
      %v1886 = vadd.f32 0.0, %v1885
      %v1887 = vpop.f32.mrb[0].mxu0
      %1888 = vdwg.mxu0
      %1889 = vmatprep.subr.mxu0 0.0
      %1890 = vmatpush1.msra.mxu0 %v1881
      %1891 = vmatprep.subr.mxu0 0.0
      %1892 = vmatpush1.msra.mxu0 %v1886
      %1893 = vmatprep.subr.mxu0 0.0
      %1894 = vmatpush1.msra.mxu0 0.0
      %1895 = vmatprep.subr.mxu0 0.0
      %1896 = vmatpush1.msra.mxu0 0.0
      %1897 = vmatprep.subr.mxu0 0.0
      %1898 = vmatpush1.msra.mxu0 0.0
      %1899 = vmatprep.subr.mxu0 0.0
      %1900 = vmatpush1.msra.mxu0 0.0
      %1901 = vmatprep.subr.mxu0 0.0
      %1902 = vmatpush1.msra.mxu0 0.0
      %1903 = vmatprep.subr.mxu0 0.0
      %1904 = vmatpush1.msra.mxu0 0.0
      %1905 = vmatprep.subr.mxu0 0.0
      %1906 = vmatpush1.msra.mxu0 0.0
      %1907 = vmatprep.subr.mxu0 0.0
      %1908 = vmatpush1.msra.mxu0 0.0
      %1909 = vmatprep.subr.mxu0 0.0
      %1910 = vmatpush1.msra.mxu0 0.0
      %1911 = vmatprep.subr.mxu0 0.0
      %1912 = vmatpush1.msra.mxu0 0.0
      %1913 = vmatprep.subr.mxu0 0.0
      %1914 = vmatpush1.msra.mxu0 0.0
      %1915 = vmatprep.subr.mxu0 0.0
      %1916 = vmatpush1.msra.mxu0 0.0
      %1917 = vmatprep.subr.mxu0 0.0
      %1918 = vmatpush1.msra.mxu0 0.0
      %1919 = vmatprep.subr.mxu0 0.0
      %1920 = vmatpush1.msra.mxu0 0.0
      %1921 = vmatprep.subr.mxu0 0.0
      %1922 = vmatpush1.msra.mxu0 0.0
      %1923 = vmatprep.subr.mxu0 0.0
      %1924 = vmatpush1.msra.mxu0 0.0
      %1925 = vmatprep.subr.mxu0 0.0
      %1926 = vmatpush1.msra.mxu0 0.0
      %1927 = vmatprep.subr.mxu0 0.0
      %1928 = vmatpush1.msra.mxu0 0.0
      %1929 = vmatprep.subr.mxu0 0.0
      %1930 = vmatpush1.msra.mxu0 0.0
      %1931 = vmatprep.subr.mxu0 0.0
      %1932 = vmatpush1.msra.mxu0 0.0
      %1933 = vmatprep.subr.mxu0 0.0
      %1934 = vmatpush1.msra.mxu0 0.0
      %1935 = vmatprep.subr.mxu0 0.0
      %1936 = vmatpush1.msra.mxu0 0.0
      %1937 = vmatprep.subr.mxu0 0.0
      %1938 = vmatpush1.msra.mxu0 0.0
      %1939 = vmatprep.subr.mxu0 0.0
      %1940 = vmatpush1.msra.mxu0 0.0
      %1941 = vmatprep.subr.mxu0 0.0
      %1942 = vmatpush1.msra.mxu0 0.0
      %1943 = vmatprep.subr.mxu0 0.0
      %1944 = vmatpush1.msra.mxu0 0.0
      %1945 = vmatprep.subr.mxu0 0.0
      %1946 = vmatpush1.msra.mxu0 0.0
      %1947 = vmatprep.subr.mxu0 0.0
      %1948 = vmatpush1.msra.mxu0 0.0
      %1949 = vmatprep.subr.mxu0 0.0
      %1950 = vmatpush1.msra.mxu0 0.0
      %1951 = vmatprep.subr.mxu0 0.0
      %1952 = vmatpush1.msra.mxu0 0.0
      %1953 = vmatprep.mubr.f32.mxu0 0.0
      %1954 = vmatmul.mubr.f32.gmra.mrb[0].mxu0 %v1436
      %v1955 = vpop.f32.mrb[0].mxu0
      %v1956 = vadd.f32 0.0, %v1955
      %v1957 = vpop.f32.mrb[0].mxu0
      %1958 = vmatprep.mubr.f32.mxu0 0.0
      %1959 = vmatmul.mubr.f32.gmra.mrb[0].mxu0 %v1439
      %v1960 = vpop.f32.mrb[0].mxu0
      %v1961 = vadd.f32 0.0, %v1960
      %v1962 = vpop.f32.mrb[0].mxu0
      %1963 = vmatprep.mubr.f32.mxu0 0.0
      %1964 = vmatmul.mubr.f32.gmra.mrb[0].mxu0 %v1442
      %v1965 = vpop.f32.mrb[0].mxu0
      %v1966 = vadd.f32 0.0, %v1965
      %v1967 = vpop.f32.mrb[0].mxu0
      %1968 = vmatprep.mubr.f32.mxu0 0.0
      %1969 = vmatmul.mubr.f32.gmra.mrb[0].mxu0 %v1445
      %v1970 = vpop.f32.mrb[0].mxu0
      %v1971 = vadd.f32 0.0, %v1970
      %v1972 = vpop.f32.mrb[0].mxu0
      %1973 = vmatprep.mubr.f32.mxu0 0.0
      %1974 = vmatmul.mubr.f32.gmra.mrb[0].mxu0 %v1448
      %v1975 = vpop.f32.mrb[0].mxu0
      %v1976 = vadd.f32 0.0, %v1975
      %v1977 = vpop.f32.mrb[0].mxu0
      %1978 = vmatprep.mubr.f32.mxu0 0.0
      %1979 = vmatmul.mubr.f32.gmra.mrb[0].mxu0 %v1451
      %v1980 = vpop.f32.mrb[0].mxu0
      %v1981 = vadd.f32 0.0, %v1980
      %v1982 = vpop.f32.mrb[0].mxu0
      %1983 = vmatprep.mubr.f32.mxu0 0.0
      %1984 = vmatmul.mubr.f32.gmra.mrb[0].mxu0 %v1454
      %v1985 = vpop.f32.mrb[0].mxu0
      %v1986 = vadd.f32 0.0, %v1985
      %v1987 = vpop.f32.mrb[0].mxu0
      %1988 = vmatprep.mubr.f32.mxu0 0.0
      %1989 = vmatmul.mubr.f32.gmra.mrb[0].mxu0 %v1457
      %v1990 = vpop.f32.mrb[0].mxu0
      %v1991 = vadd.f32 0.0, %v1990
      %v1992 = vpop.f32.mrb[0].mxu0
      %1993 = vmatprep.mubr.f32.mxu0 0.0
      %1994 = vmatmul.mubr.f32.gmra.mrb[0].mxu0 %v1460
      %v1995 = vpop.f32.mrb[0].mxu0
      %v1996 = vadd.f32 0.0, %v1995
      %v1997 = vpop.f32.mrb[0].mxu0
      %1998 = vmatprep.mubr.f32.mxu0 0.0
      %1999 = vmatmul.mubr.f32.gmra.mrb[0].mxu0 %v1463
      %v2000 = vpop.f32.mrb[0].mxu0
      %v2001 = vadd.f32 0.0, %v2000
      %v2002 = vpop.f32.mrb[0].mxu0
      %2003 = vmatprep.mubr.f32.mxu0 0.0
      %2004 = vmatmul.mubr.f32.gmra.mrb[0].mxu0 %v1466
      %v2005 = vpop.f32.mrb[0].mxu0
      %v2006 = vadd.f32 0.0, %v2005
      %v2007 = vpop.f32.mrb[0].mxu0
      %2008 = vmatprep.mubr.f32.mxu0 0.0
      %2009 = vmatmul.mubr.f32.gmra.mrb[0].mxu0 %v1469
      %v2010 = vpop.f32.mrb[0].mxu0
      %v2011 = vadd.f32 0.0, %v2010
      %v2012 = vpop.f32.mrb[0].mxu0
      %2013 = vmatprep.mubr.f32.mxu0 0.0
      %2014 = vmatmul.mubr.f32.gmra.mrb[0].mxu0 %v1472
      %v2015 = vpop.f32.mrb[0].mxu0
      %v2016 = vadd.f32 0.0, %v2015
      %v2017 = vpop.f32.mrb[0].mxu0
      %2018 = vmatprep.mubr.f32.mxu0 0.0
      %2019 = vmatmul.mubr.f32.gmra.mrb[0].mxu0 %v1475
      %v2020 = vpop.f32.mrb[0].mxu0
      %v2021 = vadd.f32 0.0, %v2020
      %v2022 = vpop.f32.mrb[0].mxu0
      %2023 = vdwg.mxu0
      %v2024 = vmul.f32 %v1612, %v1956
      %v2025 = vmul.f32 %v1613, %v1961
      %v2026 = vmul.f32 %v1614, %v1966
      %v2027 = vmul.f32 %v1615, %v1971
      %v2028 = vmul.f32 %v1616, %v1976
      %v2029 = vmul.f32 %v1617, %v1981
      %v2030 = vmul.f32 %v1618, %v1986
      %v2031 = vmul.f32 %v1619, %v1991
      %v2032 = vmul.f32 %v1620, %v1996
      %v2033 = vmul.f32 %v1621, %v2001
      %v2034 = vmul.f32 %v1622, %v2006
      %v2035 = vmul.f32 %v1623, %v2011
      %v2036 = vmul.f32 %v1624, %v2016
      %v2037 = vmul.f32 %v1625, %v2021
      %2039 = vset.pattern.permute.xlu0 0
      %2040 = vperm.xlu0 %2039, %v1177
      %v2041 = vpop.permute.xlu0 %2040
      %2044 = vset.pattern.permute.xlu0 0
      %2045 = vperm.xlu0 %2044, %v1178
      %v2046 = vpop.permute.xlu0 %2045
      %2049 = vset.pattern.permute.xlu0 0
      %2050 = vperm.xlu0 %2049, %v1179
      %v2051 = vpop.permute.xlu0 %2050
      %2054 = vset.pattern.permute.xlu0 0
      %2055 = vperm.xlu0 %2054, %v1180
      %v2056 = vpop.permute.xlu0 %2055
      %2059 = vset.pattern.permute.xlu0 0
      %2060 = vperm.xlu0 %2059, %v1181
      %v2061 = vpop.permute.xlu0 %2060
      %2064 = vset.pattern.permute.xlu0 0
      %2065 = vperm.xlu0 %2064, %v1182
      %v2066 = vpop.permute.xlu0 %2065
      %2069 = vset.pattern.permute.xlu0 0
      %2070 = vperm.xlu0 %2069, %v1183
      %v2071 = vpop.permute.xlu0 %2070
      %2074 = vset.pattern.permute.xlu0 0
      %2075 = vperm.xlu0 %2074, %v1184
      %v2076 = vpop.permute.xlu0 %2075
      %2079 = vset.pattern.permute.xlu0 0
      %2080 = vperm.xlu0 %2079, %v1185
      %v2081 = vpop.permute.xlu0 %2080
      %2084 = vset.pattern.permute.xlu0 0
      %2085 = vperm.xlu0 %2084, %v1186
      %v2086 = vpop.permute.xlu0 %2085
      %2089 = vset.pattern.permute.xlu0 0
      %2090 = vperm.xlu0 %2089, %v1187
      %v2091 = vpop.permute.xlu0 %2090
      %2094 = vset.pattern.permute.xlu0 0
      %2095 = vperm.xlu0 %2094, %v1188
      %v2096 = vpop.permute.xlu0 %2095
      %2099 = vset.pattern.permute.xlu0 0
      %2100 = vperm.xlu0 %2099, %v1189
      %v2101 = vpop.permute.xlu0 %2100
      %2104 = vset.pattern.permute.xlu0 0
      %2105 = vperm.xlu0 %2104, %v1190
      %v2106 = vpop.permute.xlu0 %2105
      %v2108 = vadd.f32 %v2024, %v2041
      %v2109 = vadd.f32 %v2025, %v2046
      %v2110 = vadd.f32 %v2026, %v2051
      %v2111 = vadd.f32 %v2027, %v2056
      %v2112 = vadd.f32 %v2028, %v2061
      %v2113 = vadd.f32 %v2029, %v2066
      %v2114 = vadd.f32 %v2030, %v2071
      %v2115 = vadd.f32 %v2031, %v2076
      %v2116 = vadd.f32 %v2032, %v2081
      %v2117 = vadd.f32 %v2033, %v2086
      %v2118 = vadd.f32 %v2034, %v2091
      %v2119 = vadd.f32 %v2035, %v2096
      %v2120 = vadd.f32 %v2036, %v2101
      %v2121 = vadd.f32 %v2037, %v2106
      %vm2122 = vcmp.ge.f32.partialorder %v2108, 0.0
      %vm2123 = vcmp.ge.f32.partialorder %v2109, 0.0
      %vm2124 = vcmp.ge.f32.partialorder %v2110, 0.0
      %vm2125 = vcmp.ge.f32.partialorder %v2111, 0.0
      %vm2126 = vcmp.ge.f32.partialorder %v2112, 0.0
      %vm2127 = vcmp.ge.f32.partialorder %v2113, 0.0
      %vm2128 = vcmp.ge.f32.partialorder %v2114, 0.0
      %vm2129 = vcmp.ge.f32.partialorder %v2115, 0.0
      %vm2130 = vcmp.ge.f32.partialorder %v2116, 0.0
      %vm2131 = vcmp.ge.f32.partialorder %v2117, 0.0
      %vm2132 = vcmp.ge.f32.partialorder %v2118, 0.0
      %vm2133 = vcmp.ge.f32.partialorder %v2119, 0.0
      %vm2134 = vcmp.ge.f32.partialorder %v2120, 0.0
      %vm2135 = vcmp.ge.f32.partialorder %v2121, 0.0
      %2136 = vset.pattern.permute.xlu0 1
      %2137 = vperm.xlu0 %2136, %v1177
      %v2138 = vpop.permute.xlu0 %2137
      %2140 = vset.pattern.permute.xlu0 1
      %2141 = vperm.xlu0 %2140, %v1178
      %v2142 = vpop.permute.xlu0 %2141
      %2144 = vset.pattern.permute.xlu0 1
      %2145 = vperm.xlu0 %2144, %v1179
      %v2146 = vpop.permute.xlu0 %2145
      %2148 = vset.pattern.permute.xlu0 1
      %2149 = vperm.xlu0 %2148, %v1180
      %v2150 = vpop.permute.xlu0 %2149
      %2152 = vset.pattern.permute.xlu0 1
      %2153 = vperm.xlu0 %2152, %v1181
      %v2154 = vpop.permute.xlu0 %2153
      %2156 = vset.pattern.permute.xlu0 1
      %2157 = vperm.xlu0 %2156, %v1182
      %v2158 = vpop.permute.xlu0 %2157
      %2160 = vset.pattern.permute.xlu0 1
      %2161 = vperm.xlu0 %2160, %v1183
      %v2162 = vpop.permute.xlu0 %2161
      %2164 = vset.pattern.permute.xlu0 1
      %2165 = vperm.xlu0 %2164, %v1184
      %v2166 = vpop.permute.xlu0 %2165
      %2168 = vset.pattern.permute.xlu0 1
      %2169 = vperm.xlu0 %2168, %v1185
      %v2170 = vpop.permute.xlu0 %2169
      %2172 = vset.pattern.permute.xlu0 1
      %2173 = vperm.xlu0 %2172, %v1186
      %v2174 = vpop.permute.xlu0 %2173
      %2176 = vset.pattern.permute.xlu0 1
      %2177 = vperm.xlu0 %2176, %v1187
      %v2178 = vpop.permute.xlu0 %2177
      %2180 = vset.pattern.permute.xlu0 1
      %2181 = vperm.xlu0 %2180, %v1188
      %v2182 = vpop.permute.xlu0 %2181
      %2184 = vset.pattern.permute.xlu0 1
      %2185 = vperm.xlu0 %2184, %v1189
      %v2186 = vpop.permute.xlu0 %2185
      %2188 = vset.pattern.permute.xlu0 1
      %2189 = vperm.xlu0 %2188, %v1190
      %v2190 = vpop.permute.xlu0 %2189
      %v2192 = vmul.f32 %v2138, %v2108
      %v2193 = vmul.f32 %v2142, %v2109
      %v2194 = vmul.f32 %v2146, %v2110
      %v2195 = vmul.f32 %v2150, %v2111
      %v2196 = vmul.f32 %v2154, %v2112
      %v2197 = vmul.f32 %v2158, %v2113
      %v2198 = vmul.f32 %v2162, %v2114
      %v2199 = vmul.f32 %v2166, %v2115
      %v2200 = vmul.f32 %v2170, %v2116
      %v2201 = vmul.f32 %v2174, %v2117
      %v2202 = vmul.f32 %v2178, %v2118
      %v2203 = vmul.f32 %v2182, %v2119
      %v2204 = vmul.f32 %v2186, %v2120
      %v2205 = vmul.f32 %v2190, %v2121
      %v2206 = vsel %vm2122, %v2108, %v2192
      %v2207 = vsel %vm2123, %v2109, %v2193
      %v2208 = vsel %vm2124, %v2110, %v2194
      %v2209 = vsel %vm2125, %v2111, %v2195
      %v2210 = vsel %vm2126, %v2112, %v2196
      %v2211 = vsel %vm2127, %v2113, %v2197
      %v2212 = vsel %vm2128, %v2114, %v2198
      %v2213 = vsel %vm2129, %v2115, %v2199
      %v2214 = vsel %vm2130, %v2116, %v2200
      %v2215 = vsel %vm2131, %v2117, %v2201
      %v2216 = vsel %vm2132, %v2118, %v2202
      %v2217 = vsel %vm2133, %v2119, %v2203
      %v2218 = vsel %vm2134, %v2120, %v2204
      %v2219 = vsel %vm2135, %v2121, %v2205
      %v2220 = vpack.c.bf16 %v2207, %v2206
      %v2221 = vpack.c.bf16 %v2209, %v2208
      %v2222 = vpack.c.bf16 %v2211, %v2210
      %v2223 = vpack.c.bf16 %v2213, %v2212
      %v2224 = vpack.c.bf16 %v2215, %v2214
      %v2225 = vpack.c.bf16 %v2217, %v2216
      %v2226 = vpack.c.bf16 %v2219, %v2218
      %v2227 = vld [vmem:[%s3] sm:$0xf]
      %v2228 = vld [vmem:[%s3 + $0x4] sm:$0xf]
      %v2229 = vld [vmem:[%s3 + $0x8] sm:$0xf]
      %v2230 = vld [vmem:[%s3 + $0xc] sm:$0xf]
      %v2231 = vld [vmem:[%s3 + $0x10] sm:$0xf]
      %v2232 = vld [vmem:[%s3 + $0x14] sm:$0xf]
      %s2233 = scalar_lea.vmem %s3, 24
      %v2234 = vld [vmem:[%s2233] sm:$0xf]
      %v2235 = vld [vmem:[%s2233 + $0x4] sm:$0xf]
      %v2236 = vld [vmem:[%s2233 + $0x8] sm:$0xf]
      %v2237 = vld [vmem:[%s2233 + $0xc] sm:$0xf]
      %v2238 = vld [vmem:[%s2233 + $0x10] sm:$0xf]
      %v2239 = vld [vmem:[%s2233 + $0x14] sm:$0xf]
      %v2246 = vunpack.c.l.b16 %v2234
      %v2247 = vunpack.c.l.b16 %v2235
      %v2248 = vunpack.c.l.b16 %v2236
      %v2249 = vunpack.c.l.b16 %v2237
      %v2250 = vunpack.c.l.b16 %v2238
      %v2251 = vunpack.c.l.b16 %v2239
      %v2252 = vpack.c.b16 %v2247, %v2246
      %v2253 = vpack.c.b16 %v2249, %v2248
      %v2254 = vpack.c.b16 %v2251, %v2250
      %v2256 = vsel %vm1193, %v2252, 0
      %v2259 = vsel %vm1193, %v2253, 0
      %v2262 = vsel %vm1193, %v2254, 0
      %2264 = vmatprep.subr.bf16.mxu0 0
      %2265 = vmatpush1.bf16.msra.mxu0 %v2220
      %2266 = vmatprep.subr.bf16.mxu0 0
      %2267 = vmatpush1.bf16.msra.mxu0 %v2221
      %2268 = vmatprep.subr.bf16.mxu0 0
      %2269 = vmatpush1.bf16.msra.mxu0 %v2222
      %2270 = vmatprep.subr.bf16.mxu0 0
      %2271 = vmatpush1.bf16.msra.mxu0 %v2223
      %2272 = vmatprep.subr.bf16.mxu0 0
      %2273 = vmatpush1.bf16.msra.mxu0 %v2224
      %2274 = vmatprep.subr.bf16.mxu0 0
      %2275 = vmatpush1.bf16.msra.mxu0 %v2225
      %2276 = vmatprep.subr.bf16.mxu0 0
      %2277 = vmatpush1.bf16.msra.mxu0 %v2226
      %2278 = vmatprep.subr.bf16.mxu0 0
      %2279 = vmatpush1.bf16.msra.mxu0 0
      %2280 = vmatprep.subr.bf16.mxu0 0
      %2281 = vmatpush1.bf16.msra.mxu0 0
      %2282 = vmatprep.subr.bf16.mxu0 0
      %2283 = vmatpush1.bf16.msra.mxu0 0
      %2284 = vmatprep.subr.bf16.mxu0 0
      %2285 = vmatpush1.bf16.msra.mxu0 0
      %2286 = vmatprep.subr.bf16.mxu0 0
      %2287 = vmatpush1.bf16.msra.mxu0 0
      %2288 = vmatprep.subr.bf16.mxu0 0
      %2289 = vmatpush1.bf16.msra.mxu0 0
      %2290 = vmatprep.subr.bf16.mxu0 0
      %2291 = vmatpush1.bf16.msra.mxu0 0
      %2292 = vmatprep.subr.bf16.mxu0 0
      %2293 = vmatpush1.bf16.msra.mxu0 0
      %2294 = vmatprep.subr.bf16.mxu0 0
      %2295 = vmatpush1.bf16.msra.mxu0 0
      %2296 = vmatprep.mubr.bf16.mxu0 0
      %2297 = vmatmul.mubr.bf16.gmra.mrb[0].mxu0 %v2256
      %v2298 = vpop.f32.mrb[0].mxu0
      %v2299 = vadd.f32 0.0, %v2298
      %v2300 = vpop.f32.mrb[0].mxu0
      %v2301 = vpop.f32.mrb[0].mxu0
      %v2302 = vadd.f32 0.0, %v2301
      %v2303 = vpop.f32.mrb[0].mxu0
      %2304 = vmatprep.mubr.bf16.mxu0 0
      %2305 = vmatmul.mubr.bf16.gmra.mrb[0].mxu0 %v2259
      %v2306 = vpop.f32.mrb[0].mxu0
      %v2307 = vadd.f32 0.0, %v2306
      %v2308 = vpop.f32.mrb[0].mxu0
      %v2309 = vpop.f32.mrb[0].mxu0
      %v2310 = vadd.f32 0.0, %v2309
      %v2311 = vpop.f32.mrb[0].mxu0
      %2312 = vmatprep.mubr.bf16.mxu0 0
      %2313 = vmatmul.mubr.bf16.gmra.mrb[0].mxu0 %v2262
      %v2314 = vpop.f32.mrb[0].mxu0
      %v2315 = vadd.f32 0.0, %v2314
      %v2316 = vpop.f32.mrb[0].mxu0
      %v2317 = vpop.f32.mrb[0].mxu0
      %v2318 = vadd.f32 0.0, %v2317
      %v2319 = vpop.f32.mrb[0].mxu0
      %2320 = vdwg.mxu0
      %2321 = vrot.lane.b32.xlu0 %v2299, 127
      %v2322 = vpop.permute.xlu0 %2321
      %2323 = vrot.lane.b32.xlu0 %v2302, 127
      %v2324 = vpop.permute.xlu0 %2323
      %2325 = vrot.lane.b32.xlu0 %v2307, 127
      %v2326 = vpop.permute.xlu0 %2325
      %2327 = vrot.lane.b32.xlu0 %v2310, 127
      %v2328 = vpop.permute.xlu0 %2327
      %2329 = vrot.lane.b32.xlu0 %v2315, 127
      %v2330 = vpop.permute.xlu0 %2329
      %2331 = vrot.lane.b32.xlu0 %v2318, 127
      %v2332 = vpop.permute.xlu0 %2331
      %v2339 = vunpack.c.l.b16 %v2227
      %v2340 = vunpack.c.l.b16 %v2228
      %v2341 = vunpack.c.l.b16 %v2229
      %v2342 = vunpack.c.l.b16 %v2230
      %v2343 = vunpack.c.l.b16 %v2231
      %v2344 = vunpack.c.l.b16 %v2232
      %v2345 = vpack.c.b16 %v2340, %v2339
      %v2346 = vpack.c.b16 %v2342, %v2341
      %v2347 = vpack.c.b16 %v2344, %v2343
      %v2349 = vsel %vm1193, %v2345, 0
      %v2352 = vsel %vm1193, %v2346, 0
      %v2355 = vsel %vm1193, %v2347, 0
      %2357 = vmatprep.subr.bf16.mxu0 0
      %2358 = vmatpush1.bf16.msra.mxu0 %v2220
      %2359 = vmatprep.subr.bf16.mxu0 0
      %2360 = vmatpush1.bf16.msra.mxu0 %v2221
      %2361 = vmatprep.subr.bf16.mxu0 0
      %2362 = vmatpush1.bf16.msra.mxu0 %v2222
      %2363 = vmatprep.subr.bf16.mxu0 0
      %2364 = vmatpush1.bf16.msra.mxu0 %v2223
      %2365 = vmatprep.subr.bf16.mxu0 0
      %2366 = vmatpush1.bf16.msra.mxu0 %v2224
      %2367 = vmatprep.subr.bf16.mxu0 0
      %2368 = vmatpush1.bf16.msra.mxu0 %v2225
      %2369 = vmatprep.subr.bf16.mxu0 0
      %2370 = vmatpush1.bf16.msra.mxu0 %v2226
      %2371 = vmatprep.subr.bf16.mxu0 0
      %2372 = vmatpush1.bf16.msra.mxu0 0
      %2373 = vmatprep.subr.bf16.mxu0 0
      %2374 = vmatpush1.bf16.msra.mxu0 0
      %2375 = vmatprep.subr.bf16.mxu0 0
      %2376 = vmatpush1.bf16.msra.mxu0 0
      %2377 = vmatprep.subr.bf16.mxu0 0
      %2378 = vmatpush1.bf16.msra.mxu0 0
      %2379 = vmatprep.subr.bf16.mxu0 0
      %2380 = vmatpush1.bf16.msra.mxu0 0
      %2381 = vmatprep.subr.bf16.mxu0 0
      %2382 = vmatpush1.bf16.msra.mxu0 0
      %2383 = vmatprep.subr.bf16.mxu0 0
      %2384 = vmatpush1.bf16.msra.mxu0 0
      %2385 = vmatprep.subr.bf16.mxu0 0
      %2386 = vmatpush1.bf16.msra.mxu0 0
      %2387 = vmatprep.subr.bf16.mxu0 0
      %2388 = vmatpush1.bf16.msra.mxu0 0
      %2389 = vmatprep.mubr.bf16.mxu0 0
      %2390 = vmatmul.mubr.bf16.gmra.mrb[0].mxu0 %v2349
      %v2391 = vpop.f32.mrb[0].mxu0
      %v2392 = vadd.f32 %v2322, %v2391
      %v2393 = vpop.f32.mrb[0].mxu0
      %v2394 = vpop.f32.mrb[0].mxu0
      %v2395 = vadd.f32 %v2324, %v2394
      %v2396 = vpop.f32.mrb[0].mxu0
      %2397 = vmatprep.mubr.bf16.mxu0 0
      %2398 = vmatmul.mubr.bf16.gmra.mrb[0].mxu0 %v2352
      %v2399 = vpop.f32.mrb[0].mxu0
      %v2400 = vadd.f32 %v2326, %v2399
      %v2401 = vpop.f32.mrb[0].mxu0
      %v2402 = vpop.f32.mrb[0].mxu0
      %v2403 = vadd.f32 %v2328, %v2402
      %v2404 = vpop.f32.mrb[0].mxu0
      %2405 = vmatprep.mubr.bf16.mxu0 0
      %2406 = vmatmul.mubr.bf16.gmra.mrb[0].mxu0 %v2355
      %v2407 = vpop.f32.mrb[0].mxu0
      %v2408 = vadd.f32 %v2330, %v2407
      %v2409 = vpop.f32.mrb[0].mxu0
      %v2410 = vpop.f32.mrb[0].mxu0
      %v2411 = vadd.f32 %v2332, %v2410
      %v2412 = vpop.f32.mrb[0].mxu0
      %2413 = vdwg.mxu0
      %v2414 = vld [vmem:[%s10] sm:$0xff]
      %v2415 = vld [vmem:[%s10 + $0x8] sm:$0xff]
      %v2416 = vld [vmem:[%s13] sm:$0xff]
      %v2417 = vld [vmem:[%s13 + $0x8] sm:$0xff]
      %v2418 = vld [vmem:[%s13 + $0x10] sm:$0xff]
      %v2419 = vld [vmem:[%s13 + $0x18] sm:$0xff]
      %v2420 = vld [vmem:[%s13 + $0x20] sm:$0xff]
      %v2421 = vld [vmem:[%s13 + $0x28] sm:$0xff]
      %s2422 = scalar_lea.vmem %s15, 128
      %v2423 = vld [vmem:[%s2422] sm:$0xff]
      %v2424 = vld [vmem:[%s2422 + $0x8] sm:$0xff]
      %v2425 = vld [vmem:[%s2422 + $0x10] sm:$0xff]
      %v2426 = vld [vmem:[%s2422 + $0x18] sm:$0xff]
      %v2427 = vld [vmem:[%s2422 + $0x20] sm:$0xff]
      %v2428 = vld [vmem:[%s2422 + $0x28] sm:$0xff]
      %v2429 = vld [vmem:[%s2422 + $0x30] sm:$0xff]
      %v2430 = vld [vmem:[%s2422 + $0x38] sm:$0xff]
      %v2431 = vld [vmem:[%s2422 + $0x40] sm:$0xff]
      %v2432 = vld [vmem:[%s2422 + $0x48] sm:$0xff]
      %v2433 = vld [vmem:[%s2422 + $0x50] sm:$0xff]
      %v2434 = vld [vmem:[%s2422 + $0x58] sm:$0xff]
      %v2435 = vld [vmem:[%s2422 + $0x60] sm:$0xff]
      %v2436 = vld [vmem:[%s2422 + $0x68] sm:$0xff]
      %v2437 = vld [vmem:[%s2422 + $0x70] sm:$0xff]
      %v2438 = vld [vmem:[%s2422 + $0x78] sm:$0xff]
      %s2439 = scalar_lea.vmem %s16, 8
      %v2440 = vld [vmem:[%s2439] sm:$0xff]
      %s2441 = scalar_lea.vmem %s7, 112
      %v2442 = vld [vmem:[%s2441] sm:$0xff]
      %v2443 = vld [vmem:[%s2441 + $0x8] sm:$0xff]
      %v2444 = vld [vmem:[%s2441 + $0x10] sm:$0xff]
      %v2445 = vld [vmem:[%s2441 + $0x18] sm:$0xff]
      %v2446 = vld [vmem:[%s2441 + $0x20] sm:$0xff]
      %v2447 = vld [vmem:[%s2441 + $0x28] sm:$0xff]
      %s2448 = scalar_lea.vmem %s8, 16
      %v2449 = vld [vmem:[%s2448] sm:$0xff]
      %v2450 = vld [vmem:[%s2448 + $0x8] sm:$0xff]
      %vm2451 = vcmask 392192
      %v2453 = vsel %vm2451, %v2414, 0
      %v2456 = vsel %vm2451, %v2415, 0
      %2458 = vmatprep.subr.mxu0 0.0
      %2459 = vmatpush1.msra.mxu0 %v2392
      %2460 = vmatprep.subr.mxu0 0.0
      %2461 = vmatpush1.msra.mxu0 %v2395
      %2462 = vmatprep.subr.mxu0 0.0
      %2463 = vmatpush1.msra.mxu0 %v2400
      %2464 = vmatprep.subr.mxu0 0.0
      %2465 = vmatpush1.msra.mxu0 %v2403
      %2466 = vmatprep.subr.mxu0 0.0
      %2467 = vmatpush1.msra.mxu0 %v2408
      %2468 = vmatprep.subr.mxu0 0.0
      %2469 = vmatpush1.msra.mxu0 %v2411
      %2470 = vmatprep.subr.mxu0 0.0
      %2471 = vmatpush1.msra.mxu0 0.0
      %2472 = vmatprep.subr.mxu0 0.0
      %2473 = vmatpush1.msra.mxu0 0.0
      %2474 = vmatprep.subr.mxu0 0.0
      %2475 = vmatpush1.msra.mxu0 0.0
      %2476 = vmatprep.subr.mxu0 0.0
      %2477 = vmatpush1.msra.mxu0 0.0
      %2478 = vmatprep.subr.mxu0 0.0
      %2479 = vmatpush1.msra.mxu0 0.0
      %2480 = vmatprep.subr.mxu0 0.0
      %2481 = vmatpush1.msra.mxu0 0.0
      %2482 = vmatprep.subr.mxu0 0.0
      %2483 = vmatpush1.msra.mxu0 0.0
      %2484 = vmatprep.subr.mxu0 0.0
      %2485 = vmatpush1.msra.mxu0 0.0
      %2486 = vmatprep.subr.mxu0 0.0
      %2487 = vmatpush1.msra.mxu0 0.0
      %2488 = vmatprep.subr.mxu0 0.0
      %2489 = vmatpush1.msra.mxu0 0.0
      %2490 = vmatprep.subr.mxu0 0.0
      %2491 = vmatpush1.msra.mxu0 0.0
      %2492 = vmatprep.subr.mxu0 0.0
      %2493 = vmatpush1.msra.mxu0 0.0
      %2494 = vmatprep.subr.mxu0 0.0
      %2495 = vmatpush1.msra.mxu0 0.0
      %2496 = vmatprep.subr.mxu0 0.0
      %2497 = vmatpush1.msra.mxu0 0.0
      %2498 = vmatprep.subr.mxu0 0.0
      %2499 = vmatpush1.msra.mxu0 0.0
      %2500 = vmatprep.subr.mxu0 0.0
      %2501 = vmatpush1.msra.mxu0 0.0
      %2502 = vmatprep.subr.mxu0 0.0
      %2503 = vmatpush1.msra.mxu0 0.0
      %2504 = vmatprep.subr.mxu0 0.0
      %2505 = vmatpush1.msra.mxu0 0.0
      %2506 = vmatprep.subr.mxu0 0.0
      %2507 = vmatpush1.msra.mxu0 0.0
      %2508 = vmatprep.subr.mxu0 0.0
      %2509 = vmatpush1.msra.mxu0 0.0
      %2510 = vmatprep.subr.mxu0 0.0
      %2511 = vmatpush1.msra.mxu0 0.0
      %2512 = vmatprep.subr.mxu0 0.0
      %2513 = vmatpush1.msra.mxu0 0.0
      %2514 = vmatprep.subr.mxu0 0.0
      %2515 = vmatpush1.msra.mxu0 0.0
      %2516 = vmatprep.subr.mxu0 0.0
      %2517 = vmatpush1.msra.mxu0 0.0
      %2518 = vmatprep.subr.mxu0 0.0
      %2519 = vmatpush1.msra.mxu0 0.0
      %2520 = vmatprep.subr.mxu0 0.0
      %2521 = vmatpush1.msra.mxu0 0.0
      %2522 = vmatprep.mubr.f32.mxu0 0.0
      %2523 = vmatmul.mubr.f32.gmra.mrb[0].mxu0 %v2453
      %v2524 = vpop.f32.mrb[0].mxu0
      %v2525 = vadd.f32 0.0, %v2524
      %v2526 = vpop.f32.mrb[0].mxu0
      %2527 = vmatprep.mubr.f32.mxu0 0.0
      %2528 = vmatmul.mubr.f32.gmra.mrb[0].mxu0 %v2456
      %v2529 = vpop.f32.mrb[0].mxu0
      %v2530 = vadd.f32 0.0, %v2529
      %v2531 = vpop.f32.mrb[0].mxu0
      %2532 = vdwg.mxu0
      %2533 = vmatprep.subr.mxu0 0.0
      %2534 = vmatpush1.msra.mxu0 %v2423
      %2535 = vmatprep.subr.mxu0 0.0
      %2536 = vmatpush1.msra.mxu0 %v2424
      %2537 = vmatprep.subr.mxu0 0.0
      %2538 = vmatpush1.msra.mxu0 %v2425
      %2539 = vmatprep.subr.mxu0 0.0
      %2540 = vmatpush1.msra.mxu0 %v2426
      %2541 = vmatprep.subr.mxu0 0.0
      %2542 = vmatpush1.msra.mxu0 %v2427
      %2543 = vmatprep.subr.mxu0 0.0
      %2544 = vmatpush1.msra.mxu0 %v2428
      %2545 = vmatprep.subr.mxu0 0.0
      %2546 = vmatpush1.msra.mxu0 %v2429
      %2547 = vmatprep.subr.mxu0 0.0
      %2548 = vmatpush1.msra.mxu0 %v2430
      %2549 = vmatprep.subr.mxu0 0.0
      %2550 = vmatpush1.msra.mxu0 %v2431
      %2551 = vmatprep.subr.mxu0 0.0
      %2552 = vmatpush1.msra.mxu0 %v2432
      %2553 = vmatprep.subr.mxu0 0.0
      %2554 = vmatpush1.msra.mxu0 %v2433
      %2555 = vmatprep.subr.mxu0 0.0
      %2556 = vmatpush1.msra.mxu0 %v2434
      %2557 = vmatprep.subr.mxu0 0.0
      %2558 = vmatpush1.msra.mxu0 %v2435
      %2559 = vmatprep.subr.mxu0 0.0
      %2560 = vmatpush1.msra.mxu0 %v2436
      %2561 = vmatprep.subr.mxu0 0.0
      %2562 = vmatpush1.msra.mxu0 %v2437
      %2563 = vmatprep.subr.mxu0 0.0
      %2564 = vmatpush1.msra.mxu0 %v2438
      %2565 = vmatprep.subr.mxu0 0.0
      %2566 = vmatpush1.msra.mxu0 0.0
      %2567 = vmatprep.subr.mxu0 0.0
      %2568 = vmatpush1.msra.mxu0 0.0
      %2569 = vmatprep.subr.mxu0 0.0
      %2570 = vmatpush1.msra.mxu0 0.0
      %2571 = vmatprep.subr.mxu0 0.0
      %2572 = vmatpush1.msra.mxu0 0.0
      %2573 = vmatprep.subr.mxu0 0.0
      %2574 = vmatpush1.msra.mxu0 0.0
      %2575 = vmatprep.subr.mxu0 0.0
      %2576 = vmatpush1.msra.mxu0 0.0
      %2577 = vmatprep.subr.mxu0 0.0
      %2578 = vmatpush1.msra.mxu0 0.0
      %2579 = vmatprep.subr.mxu0 0.0
      %2580 = vmatpush1.msra.mxu0 0.0
      %2581 = vmatprep.subr.mxu0 0.0
      %2582 = vmatpush1.msra.mxu0 0.0
      %2583 = vmatprep.subr.mxu0 0.0
      %2584 = vmatpush1.msra.mxu0 0.0
      %2585 = vmatprep.subr.mxu0 0.0
      %2586 = vmatpush1.msra.mxu0 0.0
      %2587 = vmatprep.subr.mxu0 0.0
      %2588 = vmatpush1.msra.mxu0 0.0
      %2589 = vmatprep.subr.mxu0 0.0
      %2590 = vmatpush1.msra.mxu0 0.0
      %2591 = vmatprep.subr.mxu0 0.0
      %2592 = vmatpush1.msra.mxu0 0.0
      %2593 = vmatprep.subr.mxu0 0.0
      %2594 = vmatpush1.msra.mxu0 0.0
      %2595 = vmatprep.subr.mxu0 0.0
      %2596 = vmatpush1.msra.mxu0 0.0
      %2597 = vmatprep.mubr.f32.mxu0 0.0
      %2598 = vmatmul.mubr.f32.gmra.mrb[0].mxu0 %v2525
      %v2599 = vpop.f32.mrb[0].mxu0
      %v2600 = vadd.f32 0.0, %v2599
      %v2601 = vpop.f32.mrb[0].mxu0
      %2602 = vmatprep.mubr.f32.mxu0 0.0
      %2603 = vmatmul.mubr.f32.gmra.mrb[0].mxu0 %v2530
      %v2604 = vpop.f32.mrb[0].mxu0
      %v2605 = vadd.f32 0.0, %v2604
      %v2606 = vpop.f32.mrb[0].mxu0
      %2607 = vdwg.mxu0
      %v2608 = vmul.f32 %v2600, 0.022222223
      %v2609 = vmul.f32 %v2605, 0.022222223
      %v2611 = vsel %vm1352, %v2608, 0
      %v2614 = vsel %vm1352, %v2609, 0
      %2616 = vmatprep.subr.mxu0 0.0
      %2617 = vmatpush1.msra.mxu0 %v2440
      %2618 = vmatprep.subr.mxu0 0.0
      %2619 = vmatpush1.msra.mxu0 0.0
      %2620 = vmatprep.subr.mxu0 0.0
      %2621 = vmatpush1.msra.mxu0 0.0
      %2622 = vmatprep.subr.mxu0 0.0
      %2623 = vmatpush1.msra.mxu0 0.0
      %2624 = vmatprep.subr.mxu0 0.0
      %2625 = vmatpush1.msra.mxu0 0.0
      %2626 = vmatprep.subr.mxu0 0.0
      %2627 = vmatpush1.msra.mxu0 0.0
      %2628 = vmatprep.subr.mxu0 0.0
      %2629 = vmatpush1.msra.mxu0 0.0
      %2630 = vmatprep.subr.mxu0 0.0
      %2631 = vmatpush1.msra.mxu0 0.0
      %2632 = vmatprep.subr.mxu0 0.0
      %2633 = vmatpush1.msra.mxu0 0.0
      %2634 = vmatprep.subr.mxu0 0.0
      %2635 = vmatpush1.msra.mxu0 0.0
      %2636 = vmatprep.subr.mxu0 0.0
      %2637 = vmatpush1.msra.mxu0 0.0
      %2638 = vmatprep.subr.mxu0 0.0
      %2639 = vmatpush1.msra.mxu0 0.0
      %2640 = vmatprep.subr.mxu0 0.0
      %2641 = vmatpush1.msra.mxu0 0.0
      %2642 = vmatprep.subr.mxu0 0.0
      %2643 = vmatpush1.msra.mxu0 0.0
      %2644 = vmatprep.subr.mxu0 0.0
      %2645 = vmatpush1.msra.mxu0 0.0
      %2646 = vmatprep.subr.mxu0 0.0
      %2647 = vmatpush1.msra.mxu0 0.0
      %2648 = vmatprep.subr.mxu0 0.0
      %2649 = vmatpush1.msra.mxu0 0.0
      %2650 = vmatprep.subr.mxu0 0.0
      %2651 = vmatpush1.msra.mxu0 0.0
      %2652 = vmatprep.subr.mxu0 0.0
      %2653 = vmatpush1.msra.mxu0 0.0
      %2654 = vmatprep.subr.mxu0 0.0
      %2655 = vmatpush1.msra.mxu0 0.0
      %2656 = vmatprep.subr.mxu0 0.0
      %2657 = vmatpush1.msra.mxu0 0.0
      %2658 = vmatprep.subr.mxu0 0.0
      %2659 = vmatpush1.msra.mxu0 0.0
      %2660 = vmatprep.subr.mxu0 0.0
      %2661 = vmatpush1.msra.mxu0 0.0
      %2662 = vmatprep.subr.mxu0 0.0
      %2663 = vmatpush1.msra.mxu0 0.0
      %2664 = vmatprep.subr.mxu0 0.0
      %2665 = vmatpush1.msra.mxu0 0.0
      %2666 = vmatprep.subr.mxu0 0.0
      %2667 = vmatpush1.msra.mxu0 0.0
      %2668 = vmatprep.subr.mxu0 0.0
      %2669 = vmatpush1.msra.mxu0 0.0
      %2670 = vmatprep.subr.mxu0 0.0
      %2671 = vmatpush1.msra.mxu0 0.0
      %2672 = vmatprep.subr.mxu0 0.0
      %2673 = vmatpush1.msra.mxu0 0.0
      %2674 = vmatprep.subr.mxu0 0.0
      %2675 = vmatpush1.msra.mxu0 0.0
      %2676 = vmatprep.subr.mxu0 0.0
      %2677 = vmatpush1.msra.mxu0 0.0
      %2678 = vmatprep.subr.mxu0 0.0
      %2679 = vmatpush1.msra.mxu0 0.0
      %2680 = vmatprep.mubr.f32.mxu0 0.0
      %2681 = vmatmul.mubr.f32.gmra.mrb[0].mxu0 %v2611
      %v2682 = vpop.f32.mrb[0].mxu0
      %v2683 = vadd.f32 0.0, %v2682
      %v2684 = vpop.f32.mrb[0].mxu0
      %2685 = vmatprep.mubr.f32.mxu0 0.0
      %2686 = vmatmul.mubr.f32.gmra.mrb[0].mxu0 %v2614
      %v2687 = vpop.f32.mrb[0].mxu0
      %v2688 = vadd.f32 0.0, %v2687
      %v2689 = vpop.f32.mrb[0].mxu0
      %2690 = vdwg.mxu0
      %v2692 = vsel %vm1434, %v2416, 0
      %v2695 = vsel %vm1434, %v2417, 0
      %v2698 = vsel %vm1434, %v2418, 0
      %v2701 = vsel %vm1434, %v2419, 0
      %v2704 = vsel %vm1434, %v2420, 0
      %v2707 = vsel %vm1434, %v2421, 0
      %2709 = vmatprep.subr.mxu0 0.0
      %2710 = vmatpush1.msra.mxu0 %v2683
      %2711 = vmatprep.subr.mxu0 0.0
      %2712 = vmatpush1.msra.mxu0 %v2688
      %2713 = vmatprep.subr.mxu0 0.0
      %2714 = vmatpush1.msra.mxu0 0.0
      %2715 = vmatprep.subr.mxu0 0.0
      %2716 = vmatpush1.msra.mxu0 0.0
      %2717 = vmatprep.subr.mxu0 0.0
      %2718 = vmatpush1.msra.mxu0 0.0
      %2719 = vmatprep.subr.mxu0 0.0
      %2720 = vmatpush1.msra.mxu0 0.0
      %2721 = vmatprep.subr.mxu0 0.0
      %2722 = vmatpush1.msra.mxu0 0.0
      %2723 = vmatprep.subr.mxu0 0.0
      %2724 = vmatpush1.msra.mxu0 0.0
      %2725 = vmatprep.subr.mxu0 0.0
      %2726 = vmatpush1.msra.mxu0 0.0
      %2727 = vmatprep.subr.mxu0 0.0
      %2728 = vmatpush1.msra.mxu0 0.0
      %2729 = vmatprep.subr.mxu0 0.0
      %2730 = vmatpush1.msra.mxu0 0.0
      %2731 = vmatprep.subr.mxu0 0.0
      %2732 = vmatpush1.msra.mxu0 0.0
      %2733 = vmatprep.subr.mxu0 0.0
      %2734 = vmatpush1.msra.mxu0 0.0
      %2735 = vmatprep.subr.mxu0 0.0
      %2736 = vmatpush1.msra.mxu0 0.0
      %2737 = vmatprep.subr.mxu0 0.0
      %2738 = vmatpush1.msra.mxu0 0.0
      %2739 = vmatprep.subr.mxu0 0.0
      %2740 = vmatpush1.msra.mxu0 0.0
      %2741 = vmatprep.subr.mxu0 0.0
      %2742 = vmatpush1.msra.mxu0 0.0
      %2743 = vmatprep.subr.mxu0 0.0
      %2744 = vmatpush1.msra.mxu0 0.0
      %2745 = vmatprep.subr.mxu0 0.0
      %2746 = vmatpush1.msra.mxu0 0.0
      %2747 = vmatprep.subr.mxu0 0.0
      %2748 = vmatpush1.msra.mxu0 0.0
      %2749 = vmatprep.subr.mxu0 0.0
      %2750 = vmatpush1.msra.mxu0 0.0
      %2751 = vmatprep.subr.mxu0 0.0
      %2752 = vmatpush1.msra.mxu0 0.0
      %2753 = vmatprep.subr.mxu0 0.0
      %2754 = vmatpush1.msra.mxu0 0.0
      %2755 = vmatprep.subr.mxu0 0.0
      %2756 = vmatpush1.msra.mxu0 0.0
      %2757 = vmatprep.subr.mxu0 0.0
      %2758 = vmatpush1.msra.mxu0 0.0
      %2759 = vmatprep.subr.mxu0 0.0
      %2760 = vmatpush1.msra.mxu0 0.0
      %2761 = vmatprep.subr.mxu0 0.0
      %2762 = vmatpush1.msra.mxu0 0.0
      %2763 = vmatprep.subr.mxu0 0.0
      %2764 = vmatpush1.msra.mxu0 0.0
      %2765 = vmatprep.subr.mxu0 0.0
      %2766 = vmatpush1.msra.mxu0 0.0
      %2767 = vmatprep.subr.mxu0 0.0
      %2768 = vmatpush1.msra.mxu0 0.0
      %2769 = vmatprep.subr.mxu0 0.0
      %2770 = vmatpush1.msra.mxu0 0.0
      %2771 = vmatprep.subr.mxu0 0.0
      %2772 = vmatpush1.msra.mxu0 0.0
      %2773 = vmatprep.mubr.f32.mxu0 0.0
      %2774 = vmatmul.mubr.f32.gmra.mrb[0].mxu0 %v2692
      %v2775 = vpop.f32.mrb[0].mxu0
      %v2776 = vadd.f32 0.0, %v2775
      %v2777 = vpop.f32.mrb[0].mxu0
      %2778 = vmatprep.mubr.f32.mxu0 0.0
      %2779 = vmatmul.mubr.f32.gmra.mrb[0].mxu0 %v2695
      %v2780 = vpop.f32.mrb[0].mxu0
      %v2781 = vadd.f32 0.0, %v2780
      %v2782 = vpop.f32.mrb[0].mxu0
      %2783 = vmatprep.mubr.f32.mxu0 0.0
      %2784 = vmatmul.mubr.f32.gmra.mrb[0].mxu0 %v2698
      %v2785 = vpop.f32.mrb[0].mxu0
      %v2786 = vadd.f32 0.0, %v2785
      %v2787 = vpop.f32.mrb[0].mxu0
      %2788 = vmatprep.mubr.f32.mxu0 0.0
      %2789 = vmatmul.mubr.f32.gmra.mrb[0].mxu0 %v2701
      %v2790 = vpop.f32.mrb[0].mxu0
      %v2791 = vadd.f32 0.0, %v2790
      %v2792 = vpop.f32.mrb[0].mxu0
      %2793 = vmatprep.mubr.f32.mxu0 0.0
      %2794 = vmatmul.mubr.f32.gmra.mrb[0].mxu0 %v2704
      %v2795 = vpop.f32.mrb[0].mxu0
      %v2796 = vadd.f32 0.0, %v2795
      %v2797 = vpop.f32.mrb[0].mxu0
      %2798 = vmatprep.mubr.f32.mxu0 0.0
      %2799 = vmatmul.mubr.f32.gmra.mrb[0].mxu0 %v2707
      %v2800 = vpop.f32.mrb[0].mxu0
      %v2801 = vadd.f32 0.0, %v2800
      %v2802 = vpop.f32.mrb[0].mxu0
      %2803 = vdwg.mxu0
      %v2804 = vsub.f32 %v2392, %v2776
      %v2805 = vsub.f32 %v2395, %v2781
      %v2806 = vsub.f32 %v2400, %v2786
      %v2807 = vsub.f32 %v2403, %v2791
      %v2808 = vsub.f32 %v2408, %v2796
      %v2809 = vsub.f32 %v2411, %v2801
      %v2810 = vmul.f32 %v2804, %v2804
      %v2811 = vmul.f32 %v2805, %v2805
      %v2812 = vmul.f32 %v2806, %v2806
      %v2813 = vmul.f32 %v2807, %v2807
      %v2814 = vmul.f32 %v2808, %v2808
      %v2815 = vmul.f32 %v2809, %v2809
      %2816 = vmatprep.subr.mxu0 0.0
      %2817 = vmatpush1.msra.mxu0 %v2810
      %2818 = vmatprep.subr.mxu0 0.0
      %2819 = vmatpush1.msra.mxu0 %v2811
      %2820 = vmatprep.subr.mxu0 0.0
      %2821 = vmatpush1.msra.mxu0 %v2812
      %2822 = vmatprep.subr.mxu0 0.0
      %2823 = vmatpush1.msra.mxu0 %v2813
      %2824 = vmatprep.subr.mxu0 0.0
      %2825 = vmatpush1.msra.mxu0 %v2814
      %2826 = vmatprep.subr.mxu0 0.0
      %2827 = vmatpush1.msra.mxu0 %v2815
      %2828 = vmatprep.subr.mxu0 0.0
      %2829 = vmatpush1.msra.mxu0 0.0
      %2830 = vmatprep.subr.mxu0 0.0
      %2831 = vmatpush1.msra.mxu0 0.0
      %2832 = vmatprep.subr.mxu0 0.0
      %2833 = vmatpush1.msra.mxu0 0.0
      %2834 = vmatprep.subr.mxu0 0.0
      %2835 = vmatpush1.msra.mxu0 0.0
      %2836 = vmatprep.subr.mxu0 0.0
      %2837 = vmatpush1.msra.mxu0 0.0
      %2838 = vmatprep.subr.mxu0 0.0
      %2839 = vmatpush1.msra.mxu0 0.0
      %2840 = vmatprep.subr.mxu0 0.0
      %2841 = vmatpush1.msra.mxu0 0.0
      %2842 = vmatprep.subr.mxu0 0.0
      %2843 = vmatpush1.msra.mxu0 0.0
      %2844 = vmatprep.subr.mxu0 0.0
      %2845 = vmatpush1.msra.mxu0 0.0
      %2846 = vmatprep.subr.mxu0 0.0
      %2847 = vmatpush1.msra.mxu0 0.0
      %2848 = vmatprep.subr.mxu0 0.0
      %2849 = vmatpush1.msra.mxu0 0.0
      %2850 = vmatprep.subr.mxu0 0.0
      %2851 = vmatpush1.msra.mxu0 0.0
      %2852 = vmatprep.subr.mxu0 0.0
      %2853 = vmatpush1.msra.mxu0 0.0
      %2854 = vmatprep.subr.mxu0 0.0
      %2855 = vmatpush1.msra.mxu0 0.0
      %2856 = vmatprep.subr.mxu0 0.0
      %2857 = vmatpush1.msra.mxu0 0.0
      %2858 = vmatprep.subr.mxu0 0.0
      %2859 = vmatpush1.msra.mxu0 0.0
      %2860 = vmatprep.subr.mxu0 0.0
      %2861 = vmatpush1.msra.mxu0 0.0
      %2862 = vmatprep.subr.mxu0 0.0
      %2863 = vmatpush1.msra.mxu0 0.0
      %2864 = vmatprep.subr.mxu0 0.0
      %2865 = vmatpush1.msra.mxu0 0.0
      %2866 = vmatprep.subr.mxu0 0.0
      %2867 = vmatpush1.msra.mxu0 0.0
      %2868 = vmatprep.subr.mxu0 0.0
      %2869 = vmatpush1.msra.mxu0 0.0
      %2870 = vmatprep.subr.mxu0 0.0
      %2871 = vmatpush1.msra.mxu0 0.0
      %2872 = vmatprep.subr.mxu0 0.0
      %2873 = vmatpush1.msra.mxu0 0.0
      %2874 = vmatprep.subr.mxu0 0.0
      %2875 = vmatpush1.msra.mxu0 0.0
      %2876 = vmatprep.subr.mxu0 0.0
      %2877 = vmatpush1.msra.mxu0 0.0
      %2878 = vmatprep.subr.mxu0 0.0
      %2879 = vmatpush1.msra.mxu0 0.0
      %2880 = vmatprep.mubr.f32.mxu0 0.0
      %2881 = vmatmul.mubr.f32.gmra.mrb[0].mxu0 %v2453
      %v2882 = vpop.f32.mrb[0].mxu0
      %v2883 = vadd.f32 0.0, %v2882
      %v2884 = vpop.f32.mrb[0].mxu0
      %2885 = vmatprep.mubr.f32.mxu0 0.0
      %2886 = vmatmul.mubr.f32.gmra.mrb[0].mxu0 %v2456
      %v2887 = vpop.f32.mrb[0].mxu0
      %v2888 = vadd.f32 0.0, %v2887
      %v2889 = vpop.f32.mrb[0].mxu0
      %2890 = vdwg.mxu0
      %2891 = vmatprep.subr.mxu0 0.0
      %2892 = vmatpush1.msra.mxu0 %v2423
      %2893 = vmatprep.subr.mxu0 0.0
      %2894 = vmatpush1.msra.mxu0 %v2424
      %2895 = vmatprep.subr.mxu0 0.0
      %2896 = vmatpush1.msra.mxu0 %v2425
      %2897 = vmatprep.subr.mxu0 0.0
      %2898 = vmatpush1.msra.mxu0 %v2426
      %2899 = vmatprep.subr.mxu0 0.0
      %2900 = vmatpush1.msra.mxu0 %v2427
      %2901 = vmatprep.subr.mxu0 0.0
      %2902 = vmatpush1.msra.mxu0 %v2428
      %2903 = vmatprep.subr.mxu0 0.0
      %2904 = vmatpush1.msra.mxu0 %v2429
      %2905 = vmatprep.subr.mxu0 0.0
      %2906 = vmatpush1.msra.mxu0 %v2430
      %2907 = vmatprep.subr.mxu0 0.0
      %2908 = vmatpush1.msra.mxu0 %v2431
      %2909 = vmatprep.subr.mxu0 0.0
      %2910 = vmatpush1.msra.mxu0 %v2432
      %2911 = vmatprep.subr.mxu0 0.0
      %2912 = vmatpush1.msra.mxu0 %v2433
      %2913 = vmatprep.subr.mxu0 0.0
      %2914 = vmatpush1.msra.mxu0 %v2434
      %2915 = vmatprep.subr.mxu0 0.0
      %2916 = vmatpush1.msra.mxu0 %v2435
      %2917 = vmatprep.subr.mxu0 0.0
      %2918 = vmatpush1.msra.mxu0 %v2436
      %2919 = vmatprep.subr.mxu0 0.0
      %2920 = vmatpush1.msra.mxu0 %v2437
      %2921 = vmatprep.subr.mxu0 0.0
      %2922 = vmatpush1.msra.mxu0 %v2438
      %2923 = vmatprep.subr.mxu0 0.0
      %2924 = vmatpush1.msra.mxu0 0.0
      %2925 = vmatprep.subr.mxu0 0.0
      %2926 = vmatpush1.msra.mxu0 0.0
      %2927 = vmatprep.subr.mxu0 0.0
      %2928 = vmatpush1.msra.mxu0 0.0
      %2929 = vmatprep.subr.mxu0 0.0
      %2930 = vmatpush1.msra.mxu0 0.0
      %2931 = vmatprep.subr.mxu0 0.0
      %2932 = vmatpush1.msra.mxu0 0.0
      %2933 = vmatprep.subr.mxu0 0.0
      %2934 = vmatpush1.msra.mxu0 0.0
      %2935 = vmatprep.subr.mxu0 0.0
      %2936 = vmatpush1.msra.mxu0 0.0
      %2937 = vmatprep.subr.mxu0 0.0
      %2938 = vmatpush1.msra.mxu0 0.0
      %2939 = vmatprep.subr.mxu0 0.0
      %2940 = vmatpush1.msra.mxu0 0.0
      %2941 = vmatprep.subr.mxu0 0.0
      %2942 = vmatpush1.msra.mxu0 0.0
      %2943 = vmatprep.subr.mxu0 0.0
      %2944 = vmatpush1.msra.mxu0 0.0
      %2945 = vmatprep.subr.mxu0 0.0
      %2946 = vmatpush1.msra.mxu0 0.0
      %2947 = vmatprep.subr.mxu0 0.0
      %2948 = vmatpush1.msra.mxu0 0.0
      %2949 = vmatprep.subr.mxu0 0.0
      %2950 = vmatpush1.msra.mxu0 0.0
      %2951 = vmatprep.subr.mxu0 0.0
      %2952 = vmatpush1.msra.mxu0 0.0
      %2953 = vmatprep.subr.mxu0 0.0
      %2954 = vmatpush1.msra.mxu0 0.0
      %2955 = vmatprep.mubr.f32.mxu0 0.0
      %2956 = vmatmul.mubr.f32.gmra.mrb[0].mxu0 %v2883
      %v2957 = vpop.f32.mrb[0].mxu0
      %v2958 = vadd.f32 0.0, %v2957
      %v2959 = vpop.f32.mrb[0].mxu0
      %2960 = vmatprep.mubr.f32.mxu0 0.0
      %2961 = vmatmul.mubr.f32.gmra.mrb[0].mxu0 %v2888
      %v2962 = vpop.f32.mrb[0].mxu0
      %v2963 = vadd.f32 0.0, %v2962
      %v2964 = vpop.f32.mrb[0].mxu0
      %2965 = vdwg.mxu0
      %v2966 = vmul.f32 %v2958, 0.022222223
      %v2967 = vmul.f32 %v2963, 0.022222223
      %v2968 = vadd.f32 %v2966, 1e-05
      %v2969 = vadd.f32 %v2967, 1e-05
      %v2970 = vrsqrt.pop %v2968
      %v2971 = vrsqrt.pop %v2969
      %2973 = vset.pattern.permute.xlu0 0
      %2974 = vperm.xlu0 %2973, %v2449
      %v2975 = vpop.permute.xlu0 %2974
      %2978 = vset.pattern.permute.xlu0 0
      %2979 = vperm.xlu0 %2978, %v2450
      %v2980 = vpop.permute.xlu0 %2979
      %v2982 = vmul.f32 %v2970, %v2975
      %v2983 = vmul.f32 %v2971, %v2980
      %v2985 = vsel %vm1352, %v2982, 0
      %v2988 = vsel %vm1352, %v2983, 0
      %2990 = vmatprep.subr.mxu0 0.0
      %2991 = vmatpush1.msra.mxu0 %v2440
      %2992 = vmatprep.subr.mxu0 0.0
      %2993 = vmatpush1.msra.mxu0 0.0
      %2994 = vmatprep.subr.mxu0 0.0
      %2995 = vmatpush1.msra.mxu0 0.0
      %2996 = vmatprep.subr.mxu0 0.0
      %2997 = vmatpush1.msra.mxu0 0.0
      %2998 = vmatprep.subr.mxu0 0.0
      %2999 = vmatpush1.msra.mxu0 0.0
      %3000 = vmatprep.subr.mxu0 0.0
      %3001 = vmatpush1.msra.mxu0 0.0
      %3002 = vmatprep.subr.mxu0 0.0
      %3003 = vmatpush1.msra.mxu0 0.0
      %3004 = vmatprep.subr.mxu0 0.0
      %3005 = vmatpush1.msra.mxu0 0.0
      %3006 = vmatprep.subr.mxu0 0.0
      %3007 = vmatpush1.msra.mxu0 0.0
      %3008 = vmatprep.subr.mxu0 0.0
      %3009 = vmatpush1.msra.mxu0 0.0
      %3010 = vmatprep.subr.mxu0 0.0
      %3011 = vmatpush1.msra.mxu0 0.0
      %3012 = vmatprep.subr.mxu0 0.0
      %3013 = vmatpush1.msra.mxu0 0.0
      %3014 = vmatprep.subr.mxu0 0.0
      %3015 = vmatpush1.msra.mxu0 0.0
      %3016 = vmatprep.subr.mxu0 0.0
      %3017 = vmatpush1.msra.mxu0 0.0
      %3018 = vmatprep.subr.mxu0 0.0
      %3019 = vmatpush1.msra.mxu0 0.0
      %3020 = vmatprep.subr.mxu0 0.0
      %3021 = vmatpush1.msra.mxu0 0.0
      %3022 = vmatprep.subr.mxu0 0.0
      %3023 = vmatpush1.msra.mxu0 0.0
      %3024 = vmatprep.subr.mxu0 0.0
      %3025 = vmatpush1.msra.mxu0 0.0
      %3026 = vmatprep.subr.mxu0 0.0
      %3027 = vmatpush1.msra.mxu0 0.0
      %3028 = vmatprep.subr.mxu0 0.0
      %3029 = vmatpush1.msra.mxu0 0.0
      %3030 = vmatprep.subr.mxu0 0.0
      %3031 = vmatpush1.msra.mxu0 0.0
      %3032 = vmatprep.subr.mxu0 0.0
      %3033 = vmatpush1.msra.mxu0 0.0
      %3034 = vmatprep.subr.mxu0 0.0
      %3035 = vmatpush1.msra.mxu0 0.0
      %3036 = vmatprep.subr.mxu0 0.0
      %3037 = vmatpush1.msra.mxu0 0.0
      %3038 = vmatprep.subr.mxu0 0.0
      %3039 = vmatpush1.msra.mxu0 0.0
      %3040 = vmatprep.subr.mxu0 0.0
      %3041 = vmatpush1.msra.mxu0 0.0
      %3042 = vmatprep.subr.mxu0 0.0
      %3043 = vmatpush1.msra.mxu0 0.0
      %3044 = vmatprep.subr.mxu0 0.0
      %3045 = vmatpush1.msra.mxu0 0.0
      %3046 = vmatprep.subr.mxu0 0.0
      %3047 = vmatpush1.msra.mxu0 0.0
      %3048 = vmatprep.subr.mxu0 0.0
      %3049 = vmatpush1.msra.mxu0 0.0
      %3050 = vmatprep.subr.mxu0 0.0
      %3051 = vmatpush1.msra.mxu0 0.0
      %3052 = vmatprep.subr.mxu0 0.0
      %3053 = vmatpush1.msra.mxu0 0.0
      %3054 = vmatprep.mubr.f32.mxu0 0.0
      %3055 = vmatmul.mubr.f32.gmra.mrb[0].mxu0 %v2985
      %v3056 = vpop.f32.mrb[0].mxu0
      %v3057 = vadd.f32 0.0, %v3056
      %v3058 = vpop.f32.mrb[0].mxu0
      %3059 = vmatprep.mubr.f32.mxu0 0.0
      %3060 = vmatmul.mubr.f32.gmra.mrb[0].mxu0 %v2988
      %v3061 = vpop.f32.mrb[0].mxu0
      %v3062 = vadd.f32 0.0, %v3061
      %v3063 = vpop.f32.mrb[0].mxu0
      %3064 = vdwg.mxu0
      %3065 = vmatprep.subr.mxu0 0.0
      %3066 = vmatpush1.msra.mxu0 %v3057
      %3067 = vmatprep.subr.mxu0 0.0
      %3068 = vmatpush1.msra.mxu0 %v3062
      %3069 = vmatprep.subr.mxu0 0.0
      %3070 = vmatpush1.msra.mxu0 0.0
      %3071 = vmatprep.subr.mxu0 0.0
      %3072 = vmatpush1.msra.mxu0 0.0
      %3073 = vmatprep.subr.mxu0 0.0
      %3074 = vmatpush1.msra.mxu0 0.0
      %3075 = vmatprep.subr.mxu0 0.0
      %3076 = vmatpush1.msra.mxu0 0.0
      %3077 = vmatprep.subr.mxu0 0.0
      %3078 = vmatpush1.msra.mxu0 0.0
      %3079 = vmatprep.subr.mxu0 0.0
      %3080 = vmatpush1.msra.mxu0 0.0
      %3081 = vmatprep.subr.mxu0 0.0
      %3082 = vmatpush1.msra.mxu0 0.0
      %3083 = vmatprep.subr.mxu0 0.0
      %3084 = vmatpush1.msra.mxu0 0.0
      %3085 = vmatprep.subr.mxu0 0.0
      %3086 = vmatpush1.msra.mxu0 0.0
      %3087 = vmatprep.subr.mxu0 0.0
      %3088 = vmatpush1.msra.mxu0 0.0
      %3089 = vmatprep.subr.mxu0 0.0
      %3090 = vmatpush1.msra.mxu0 0.0
      %3091 = vmatprep.subr.mxu0 0.0
      %3092 = vmatpush1.msra.mxu0 0.0
      %3093 = vmatprep.subr.mxu0 0.0
      %3094 = vmatpush1.msra.mxu0 0.0
      %3095 = vmatprep.subr.mxu0 0.0
      %3096 = vmatpush1.msra.mxu0 0.0
      %3097 = vmatprep.subr.mxu0 0.0
      %3098 = vmatpush1.msra.mxu0 0.0
      %3099 = vmatprep.subr.mxu0 0.0
      %3100 = vmatpush1.msra.mxu0 0.0
      %3101 = vmatprep.subr.mxu0 0.0
      %3102 = vmatpush1.msra.mxu0 0.0
      %3103 = vmatprep.subr.mxu0 0.0
      %3104 = vmatpush1.msra.mxu0 0.0
      %3105 = vmatprep.subr.mxu0 0.0
      %3106 = vmatpush1.msra.mxu0 0.0
      %3107 = vmatprep.subr.mxu0 0.0
      %3108 = vmatpush1.msra.mxu0 0.0
      %3109 = vmatprep.subr.mxu0 0.0
      %3110 = vmatpush1.msra.mxu0 0.0
      %3111 = vmatprep.subr.mxu0 0.0
      %3112 = vmatpush1.msra.mxu0 0.0
      %3113 = vmatprep.subr.mxu0 0.0
      %3114 = vmatpush1.msra.mxu0 0.0
      %3115 = vmatprep.subr.mxu0 0.0
      %3116 = vmatpush1.msra.mxu0 0.0
      %3117 = vmatprep.subr.mxu0 0.0
      %3118 = vmatpush1.msra.mxu0 0.0
      %3119 = vmatprep.subr.mxu0 0.0
      %3120 = vmatpush1.msra.mxu0 0.0
      %3121 = vmatprep.subr.mxu0 0.0
      %3122 = vmatpush1.msra.mxu0 0.0
      %3123 = vmatprep.subr.mxu0 0.0
      %3124 = vmatpush1.msra.mxu0 0.0
      %3125 = vmatprep.subr.mxu0 0.0
      %3126 = vmatpush1.msra.mxu0 0.0
      %3127 = vmatprep.subr.mxu0 0.0
      %3128 = vmatpush1.msra.mxu0 0.0
      %3129 = vmatprep.mubr.f32.mxu0 0.0
      %3130 = vmatmul.mubr.f32.gmra.mrb[0].mxu0 %v2692
      %v3131 = vpop.f32.mrb[0].mxu0
      %v3132 = vadd.f32 0.0, %v3131
      %v3133 = vpop.f32.mrb[0].mxu0
      %3134 = vmatprep.mubr.f32.mxu0 0.0
      %3135 = vmatmul.mubr.f32.gmra.mrb[0].mxu0 %v2695
      %v3136 = vpop.f32.mrb[0].mxu0
      %v3137 = vadd.f32 0.0, %v3136
      %v3138 = vpop.f32.mrb[0].mxu0
      %3139 = vmatprep.mubr.f32.mxu0 0.0
      %3140 = vmatmul.mubr.f32.gmra.mrb[0].mxu0 %v2698
      %v3141 = vpop.f32.mrb[0].mxu0
      %v3142 = vadd.f32 0.0, %v3141
      %v3143 = vpop.f32.mrb[0].mxu0
      %3144 = vmatprep.mubr.f32.mxu0 0.0
      %3145 = vmatmul.mubr.f32.gmra.mrb[0].mxu0 %v2701
      %v3146 = vpop.f32.mrb[0].mxu0
      %v3147 = vadd.f32 0.0, %v3146
      %v3148 = vpop.f32.mrb[0].mxu0
      %3149 = vmatprep.mubr.f32.mxu0 0.0
      %3150 = vmatmul.mubr.f32.gmra.mrb[0].mxu0 %v2704
      %v3151 = vpop.f32.mrb[0].mxu0
      %v3152 = vadd.f32 0.0, %v3151
      %v3153 = vpop.f32.mrb[0].mxu0
      %3154 = vmatprep.mubr.f32.mxu0 0.0
      %3155 = vmatmul.mubr.f32.gmra.mrb[0].mxu0 %v2707
      %v3156 = vpop.f32.mrb[0].mxu0
      %v3157 = vadd.f32 0.0, %v3156
      %v3158 = vpop.f32.mrb[0].mxu0
      %3159 = vdwg.mxu0
      %v3160 = vmul.f32 %v2804, %v3132
      %v3161 = vmul.f32 %v2805, %v3137
      %v3162 = vmul.f32 %v2806, %v3142
      %v3163 = vmul.f32 %v2807, %v3147
      %v3164 = vmul.f32 %v2808, %v3152
      %v3165 = vmul.f32 %v2809, %v3157
      %3167 = vset.pattern.permute.xlu0 0
      %3168 = vperm.xlu0 %3167, %v2442
      %v3169 = vpop.permute.xlu0 %3168
      %3172 = vset.pattern.permute.xlu0 0
      %3173 = vperm.xlu0 %3172, %v2443
      %v3174 = vpop.permute.xlu0 %3173
      %3177 = vset.pattern.permute.xlu0 0
      %3178 = vperm.xlu0 %3177, %v2444
      %v3179 = vpop.permute.xlu0 %3178
      %3182 = vset.pattern.permute.xlu0 0
      %3183 = vperm.xlu0 %3182, %v2445
      %v3184 = vpop.permute.xlu0 %3183
      %3187 = vset.pattern.permute.xlu0 0
      %3188 = vperm.xlu0 %3187, %v2446
      %v3189 = vpop.permute.xlu0 %3188
      %3192 = vset.pattern.permute.xlu0 0
      %3193 = vperm.xlu0 %3192, %v2447
      %v3194 = vpop.permute.xlu0 %3193
      %v3196 = vadd.f32 %v3160, %v3169
      %v3197 = vadd.f32 %v3161, %v3174
      %v3198 = vadd.f32 %v3162, %v3179
      %v3199 = vadd.f32 %v3163, %v3184
      %v3200 = vadd.f32 %v3164, %v3189
      %v3201 = vadd.f32 %v3165, %v3194
      %vm3202 = vcmp.ge.f32.partialorder %v3196, 0.0
      %vm3203 = vcmp.ge.f32.partialorder %v3197, 0.0
      %vm3204 = vcmp.ge.f32.partialorder %v3198, 0.0
      %vm3205 = vcmp.ge.f32.partialorder %v3199, 0.0
      %vm3206 = vcmp.ge.f32.partialorder %v3200, 0.0
      %vm3207 = vcmp.ge.f32.partialorder %v3201, 0.0
      %3208 = vset.pattern.permute.xlu0 1
      %3209 = vperm.xlu0 %3208, %v2442
      %v3210 = vpop.permute.xlu0 %3209
      %3212 = vset.pattern.permute.xlu0 1
      %3213 = vperm.xlu0 %3212, %v2443
      %v3214 = vpop.permute.xlu0 %3213
      %3216 = vset.pattern.permute.xlu0 1
      %3217 = vperm.xlu0 %3216, %v2444
      %v3218 = vpop.permute.xlu0 %3217
      %3220 = vset.pattern.permute.xlu0 1
      %3221 = vperm.xlu0 %3220, %v2445
      %v3222 = vpop.permute.xlu0 %3221
      %3224 = vset.pattern.permute.xlu0 1
      %3225 = vperm.xlu0 %3224, %v2446
      %v3226 = vpop.permute.xlu0 %3225
      %3228 = vset.pattern.permute.xlu0 1
      %3229 = vperm.xlu0 %3228, %v2447
      %v3230 = vpop.permute.xlu0 %3229
      %v3232 = vmul.f32 %v3210, %v3196
      %v3233 = vmul.f32 %v3214, %v3197
      %v3234 = vmul.f32 %v3218, %v3198
      %v3235 = vmul.f32 %v3222, %v3199
      %v3236 = vmul.f32 %v3226, %v3200
      %v3237 = vmul.f32 %v3230, %v3201
      %v3238 = vsel %vm3202, %v3196, %v3232
      %v3239 = vsel %vm3203, %v3197, %v3233
      %v3240 = vsel %vm3204, %v3198, %v3234
      %v3241 = vsel %vm3205, %v3199, %v3235
      %v3242 = vsel %vm3206, %v3200, %v3236
      %v3243 = vsel %vm3207, %v3201, %v3237
      %s3244 = scalar_lea.vmem %s17, 1
      %v3245 = vld [vmem:[%s3244] sm:$0x1]
      %v3247 = vlaneseq
      %v3248 = vshrl.u32 %v3247, 7
      %v3249 = vsub.s32 0, %v3248
      %v3250 = vrot.slane %v3245, %v3249
      %v3252 = vmul.f32 %v3238, %v3250
      %v3253 = vmul.f32 %v3239, %v3250
      %v3254 = vmul.f32 %v3240, %v3250
      %v3255 = vmul.f32 %v3241, %v3250
      %v3256 = vmul.f32 %v3242, %v3250
      %v3257 = vmul.f32 %v3243, %v3250
      %v3258 = vpack.c.bf16 %v3253, %v3252
      %v3259 = vpack.c.bf16 %v3255, %v3254
      %v3260 = vpack.c.bf16 %v3257, %v3256
      %v3261 = vld [vmem:[%s4] sm:$0xf]
      %v3262 = vld [vmem:[%s4 + $0x4] sm:$0xf]
      %s3263 = scalar_lea.vmem %s4, 8
      %v3264 = vld [vmem:[%s3263] sm:$0xf]
      %v3265 = vld [vmem:[%s3263 + $0x4] sm:$0xf]
      %v3268 = vunpack.c.l.b16 %v3264
      %v3269 = vunpack.c.l.b16 %v3265
      %v3270 = vpack.c.b16 %v3269, %v3268
      %v3272 = vsel %vm2451, %v3270, 0
      %3274 = vmatprep.subr.bf16.mxu0 0
      %3275 = vmatpush1.bf16.msra.mxu0 %v3258
      %3276 = vmatprep.subr.bf16.mxu0 0
      %3277 = vmatpush1.bf16.msra.mxu0 %v3259
      %3278 = vmatprep.subr.bf16.mxu0 0
      %3279 = vmatpush1.bf16.msra.mxu0 %v3260
      %3280 = vmatprep.subr.bf16.mxu0 0
      %3281 = vmatpush1.bf16.msra.mxu0 0
      %3282 = vmatprep.subr.bf16.mxu0 0
      %3283 = vmatpush1.bf16.msra.mxu0 0
      %3284 = vmatprep.subr.bf16.mxu0 0
      %3285 = vmatpush1.bf16.msra.mxu0 0
      %3286 = vmatprep.subr.bf16.mxu0 0
      %3287 = vmatpush1.bf16.msra.mxu0 0
      %3288 = vmatprep.subr.bf16.mxu0 0
      %3289 = vmatpush1.bf16.msra.mxu0 0
      %3290 = vmatprep.subr.bf16.mxu0 0
      %3291 = vmatpush1.bf16.msra.mxu0 0
      %3292 = vmatprep.subr.bf16.mxu0 0
      %3293 = vmatpush1.bf16.msra.mxu0 0
      %3294 = vmatprep.subr.bf16.mxu0 0
      %3295 = vmatpush1.bf16.msra.mxu0 0
      %3296 = vmatprep.subr.bf16.mxu0 0
      %3297 = vmatpush1.bf16.msra.mxu0 0
      %3298 = vmatprep.subr.bf16.mxu0 0
      %3299 = vmatpush1.bf16.msra.mxu0 0
      %3300 = vmatprep.subr.bf16.mxu0 0
      %3301 = vmatpush1.bf16.msra.mxu0 0
      %3302 = vmatprep.subr.bf16.mxu0 0
      %3303 = vmatpush1.bf16.msra.mxu0 0
      %3304 = vmatprep.subr.bf16.mxu0 0
      %3305 = vmatpush1.bf16.msra.mxu0 0
      %3306 = vmatprep.mubr.bf16.mxu0 0
      %3307 = vmatmul.mubr.bf16.gmra.mrb[0].mxu0 %v3272
      %v3308 = vpop.f32.mrb[0].mxu0
      %v3309 = vadd.f32 0.0, %v3308
      %v3310 = vpop.f32.mrb[0].mxu0
      %v3311 = vpop.f32.mrb[0].mxu0
      %v3312 = vadd.f32 0.0, %v3311
      %v3313 = vpop.f32.mrb[0].mxu0
      %3314 = vdwg.mxu0
      %3315 = vrot.lane.b32.xlu0 %v3309, 127
      %v3316 = vpop.permute.xlu0 %3315
      %3317 = vrot.lane.b32.xlu0 %v3312, 127
      %v3318 = vpop.permute.xlu0 %3317
      %v3321 = vunpack.c.l.b16 %v3261
      %v3322 = vunpack.c.l.b16 %v3262
      %v3323 = vpack.c.b16 %v3322, %v3321
      %v3325 = vsel %vm2451, %v3323, 0
      %3327 = vmatprep.subr.bf16.mxu0 0
      %3328 = vmatpush1.bf16.msra.mxu0 %v3258
      %3329 = vmatprep.subr.bf16.mxu0 0
      %3330 = vmatpush1.bf16.msra.mxu0 %v3259
      %3331 = vmatprep.subr.bf16.mxu0 0
      %3332 = vmatpush1.bf16.msra.mxu0 %v3260
      %3333 = vmatprep.subr.bf16.mxu0 0
      %3334 = vmatpush1.bf16.msra.mxu0 0
      %3335 = vmatprep.subr.bf16.mxu0 0
      %3336 = vmatpush1.bf16.msra.mxu0 0
      %3337 = vmatprep.subr.bf16.mxu0 0
      %3338 = vmatpush1.bf16.msra.mxu0 0
      %3339 = vmatprep.subr.bf16.mxu0 0
      %3340 = vmatpush1.bf16.msra.mxu0 0
      %3341 = vmatprep.subr.bf16.mxu0 0
      %3342 = vmatpush1.bf16.msra.mxu0 0
      %3343 = vmatprep.subr.bf16.mxu0 0
      %3344 = vmatpush1.bf16.msra.mxu0 0
      %3345 = vmatprep.subr.bf16.mxu0 0
      %3346 = vmatpush1.bf16.msra.mxu0 0
      %3347 = vmatprep.subr.bf16.mxu0 0
      %3348 = vmatpush1.bf16.msra.mxu0 0
      %3349 = vmatprep.subr.bf16.mxu0 0
      %3350 = vmatpush1.bf16.msra.mxu0 0
      %3351 = vmatprep.subr.bf16.mxu0 0
      %3352 = vmatpush1.bf16.msra.mxu0 0
      %3353 = vmatprep.subr.bf16.mxu0 0
      %3354 = vmatpush1.bf16.msra.mxu0 0
      %3355 = vmatprep.subr.bf16.mxu0 0
      %3356 = vmatpush1.bf16.msra.mxu0 0
      %3357 = vmatprep.subr.bf16.mxu0 0
      %3358 = vmatpush1.bf16.msra.mxu0 0
      %3359 = vmatprep.mubr.bf16.mxu0 0
      %3360 = vmatmul.mubr.bf16.gmra.mrb[0].mxu0 %v3325
      %v3361 = vpop.f32.mrb[0].mxu0
      %v3362 = vadd.f32 %v3316, %v3361
      %v3363 = vpop.f32.mrb[0].mxu0
      %v3364 = vpop.f32.mrb[0].mxu0
      %v3365 = vadd.f32 %v3318, %v3364
      %v3366 = vpop.f32.mrb[0].mxu0
      %3367 = vdwg.mxu0
      %v3368 = vld [vmem:[%s11] sm:$0xff]
      %v3369 = vld [vmem:[%s11 + $0x8] sm:$0xff]
      %v3370 = vld [vmem:[%s14] sm:$0xff]
      %v3371 = vld [vmem:[%s14 + $0x8] sm:$0xff]
      %s3372 = scalar_lea.vmem %s15, 256
      %v3373 = vld [vmem:[%s3372] sm:$0xff]
      %v3374 = vld [vmem:[%s3372 + $0x8] sm:$0xff]
      %v3375 = vld [vmem:[%s3372 + $0x10] sm:$0xff]
      %v3376 = vld [vmem:[%s3372 + $0x18] sm:$0xff]
      %v3377 = vld [vmem:[%s3372 + $0x20] sm:$0xff]
      %v3378 = vld [vmem:[%s3372 + $0x28] sm:$0xff]
      %v3379 = vld [vmem:[%s3372 + $0x30] sm:$0xff]
      %v3380 = vld [vmem:[%s3372 + $0x38] sm:$0xff]
      %v3381 = vld [vmem:[%s3372 + $0x40] sm:$0xff]
      %v3382 = vld [vmem:[%s3372 + $0x48] sm:$0xff]
      %v3383 = vld [vmem:[%s3372 + $0x50] sm:$0xff]
      %v3384 = vld [vmem:[%s3372 + $0x58] sm:$0xff]
      %v3385 = vld [vmem:[%s3372 + $0x60] sm:$0xff]
      %v3386 = vld [vmem:[%s3372 + $0x68] sm:$0xff]
      %v3387 = vld [vmem:[%s3372 + $0x70] sm:$0xff]
      %v3388 = vld [vmem:[%s3372 + $0x78] sm:$0xff]
      %s3389 = scalar_lea.vmem %s16, 16
      %v3390 = vld [vmem:[%s3389] sm:$0xff]
      %s3391 = scalar_lea.vmem %s7, 224
      %v3392 = vld [vmem:[%s3391] sm:$0xff]
      %v3393 = vld [vmem:[%s3391 + $0x8] sm:$0xff]
      %s3394 = scalar_lea.vmem %s8, 32
      %v3395 = vld [vmem:[%s3394] sm:$0xff]
      %v3396 = vld [vmem:[%s3394 + $0x8] sm:$0xff]
      %v3398 = vsel %vm1434, %v3368, 0
      %v3401 = vsel %vm1434, %v3369, 0
      %3403 = vmatprep.subr.mxu0 0.0
      %3404 = vmatpush1.msra.mxu0 %v3362
      %3405 = vmatprep.subr.mxu0 0.0
      %3406 = vmatpush1.msra.mxu0 %v3365
      %3407 = vmatprep.subr.mxu0 0.0
      %3408 = vmatpush1.msra.mxu0 0.0
      %3409 = vmatprep.subr.mxu0 0.0
      %3410 = vmatpush1.msra.mxu0 0.0
      %3411 = vmatprep.subr.mxu0 0.0
      %3412 = vmatpush1.msra.mxu0 0.0
      %3413 = vmatprep.subr.mxu0 0.0
      %3414 = vmatpush1.msra.mxu0 0.0
      %3415 = vmatprep.subr.mxu0 0.0
      %3416 = vmatpush1.msra.mxu0 0.0
      %3417 = vmatprep.subr.mxu0 0.0
      %3418 = vmatpush1.msra.mxu0 0.0
      %3419 = vmatprep.subr.mxu0 0.0
      %3420 = vmatpush1.msra.mxu0 0.0
      %3421 = vmatprep.subr.mxu0 0.0
      %3422 = vmatpush1.msra.mxu0 0.0
      %3423 = vmatprep.subr.mxu0 0.0
      %3424 = vmatpush1.msra.mxu0 0.0
      %3425 = vmatprep.subr.mxu0 0.0
      %3426 = vmatpush1.msra.mxu0 0.0
      %3427 = vmatprep.subr.mxu0 0.0
      %3428 = vmatpush1.msra.mxu0 0.0
      %3429 = vmatprep.subr.mxu0 0.0
      %3430 = vmatpush1.msra.mxu0 0.0
      %3431 = vmatprep.subr.mxu0 0.0
      %3432 = vmatpush1.msra.mxu0 0.0
      %3433 = vmatprep.subr.mxu0 0.0
      %3434 = vmatpush1.msra.mxu0 0.0
      %3435 = vmatprep.subr.mxu0 0.0
      %3436 = vmatpush1.msra.mxu0 0.0
      %3437 = vmatprep.subr.mxu0 0.0
      %3438 = vmatpush1.msra.mxu0 0.0
      %3439 = vmatprep.subr.mxu0 0.0
      %3440 = vmatpush1.msra.mxu0 0.0
      %3441 = vmatprep.subr.mxu0 0.0
      %3442 = vmatpush1.msra.mxu0 0.0
      %3443 = vmatprep.subr.mxu0 0.0
      %3444 = vmatpush1.msra.mxu0 0.0
      %3445 = vmatprep.subr.mxu0 0.0
      %3446 = vmatpush1.msra.mxu0 0.0
      %3447 = vmatprep.subr.mxu0 0.0
      %3448 = vmatpush1.msra.mxu0 0.0
      %3449 = vmatprep.subr.mxu0 0.0
      %3450 = vmatpush1.msra.mxu0 0.0
      %3451 = vmatprep.subr.mxu0 0.0
      %3452 = vmatpush1.msra.mxu0 0.0
      %3453 = vmatprep.subr.mxu0 0.0
      %3454 = vmatpush1.msra.mxu0 0.0
      %3455 = vmatprep.subr.mxu0 0.0
      %3456 = vmatpush1.msra.mxu0 0.0
      %3457 = vmatprep.subr.mxu0 0.0
      %3458 = vmatpush1.msra.mxu0 0.0
      %3459 = vmatprep.subr.mxu0 0.0
      %3460 = vmatpush1.msra.mxu0 0.0
      %3461 = vmatprep.subr.mxu0 0.0
      %3462 = vmatpush1.msra.mxu0 0.0
      %3463 = vmatprep.subr.mxu0 0.0
      %3464 = vmatpush1.msra.mxu0 0.0
      %3465 = vmatprep.subr.mxu0 0.0
      %3466 = vmatpush1.msra.mxu0 0.0
      %3467 = vmatprep.mubr.f32.mxu0 0.0
      %3468 = vmatmul.mubr.f32.gmra.mrb[0].mxu0 %v3398
      %v3469 = vpop.f32.mrb[0].mxu0
      %v3470 = vadd.f32 0.0, %v3469
      %v3471 = vpop.f32.mrb[0].mxu0
      %3472 = vmatprep.mubr.f32.mxu0 0.0
      %3473 = vmatmul.mubr.f32.gmra.mrb[0].mxu0 %v3401
      %v3474 = vpop.f32.mrb[0].mxu0
      %v3475 = vadd.f32 0.0, %v3474
      %v3476 = vpop.f32.mrb[0].mxu0
      %3477 = vdwg.mxu0
      %3478 = vmatprep.subr.mxu0 0.0
      %3479 = vmatpush1.msra.mxu0 %v3373
      %3480 = vmatprep.subr.mxu0 0.0
      %3481 = vmatpush1.msra.mxu0 %v3374
      %3482 = vmatprep.subr.mxu0 0.0
      %3483 = vmatpush1.msra.mxu0 %v3375
      %3484 = vmatprep.subr.mxu0 0.0
      %3485 = vmatpush1.msra.mxu0 %v3376
      %3486 = vmatprep.subr.mxu0 0.0
      %3487 = vmatpush1.msra.mxu0 %v3377
      %3488 = vmatprep.subr.mxu0 0.0
      %3489 = vmatpush1.msra.mxu0 %v3378
      %3490 = vmatprep.subr.mxu0 0.0
      %3491 = vmatpush1.msra.mxu0 %v3379
      %3492 = vmatprep.subr.mxu0 0.0
      %3493 = vmatpush1.msra.mxu0 %v3380
      %3494 = vmatprep.subr.mxu0 0.0
      %3495 = vmatpush1.msra.mxu0 %v3381
      %3496 = vmatprep.subr.mxu0 0.0
      %3497 = vmatpush1.msra.mxu0 %v3382
      %3498 = vmatprep.subr.mxu0 0.0
      %3499 = vmatpush1.msra.mxu0 %v3383
      %3500 = vmatprep.subr.mxu0 0.0
      %3501 = vmatpush1.msra.mxu0 %v3384
      %3502 = vmatprep.subr.mxu0 0.0
      %3503 = vmatpush1.msra.mxu0 %v3385
      %3504 = vmatprep.subr.mxu0 0.0
      %3505 = vmatpush1.msra.mxu0 %v3386
      %3506 = vmatprep.subr.mxu0 0.0
      %3507 = vmatpush1.msra.mxu0 %v3387
      %3508 = vmatprep.subr.mxu0 0.0
      %3509 = vmatpush1.msra.mxu0 %v3388
      %3510 = vmatprep.subr.mxu0 0.0
      %3511 = vmatpush1.msra.mxu0 0.0
      %3512 = vmatprep.subr.mxu0 0.0
      %3513 = vmatpush1.msra.mxu0 0.0
      %3514 = vmatprep.subr.mxu0 0.0
      %3515 = vmatpush1.msra.mxu0 0.0
      %3516 = vmatprep.subr.mxu0 0.0
      %3517 = vmatpush1.msra.mxu0 0.0
      %3518 = vmatprep.subr.mxu0 0.0
      %3519 = vmatpush1.msra.mxu0 0.0
      %3520 = vmatprep.subr.mxu0 0.0
      %3521 = vmatpush1.msra.mxu0 0.0
      %3522 = vmatprep.subr.mxu0 0.0
      %3523 = vmatpush1.msra.mxu0 0.0
      %3524 = vmatprep.subr.mxu0 0.0
      %3525 = vmatpush1.msra.mxu0 0.0
      %3526 = vmatprep.subr.mxu0 0.0
      %3527 = vmatpush1.msra.mxu0 0.0
      %3528 = vmatprep.subr.mxu0 0.0
      %3529 = vmatpush1.msra.mxu0 0.0
      %3530 = vmatprep.subr.mxu0 0.0
      %3531 = vmatpush1.msra.mxu0 0.0
      %3532 = vmatprep.subr.mxu0 0.0
      %3533 = vmatpush1.msra.mxu0 0.0
      %3534 = vmatprep.subr.mxu0 0.0
      %3535 = vmatpush1.msra.mxu0 0.0
      %3536 = vmatprep.subr.mxu0 0.0
      %3537 = vmatpush1.msra.mxu0 0.0
      %3538 = vmatprep.subr.mxu0 0.0
      %3539 = vmatpush1.msra.mxu0 0.0
      %3540 = vmatprep.subr.mxu0 0.0
      %3541 = vmatpush1.msra.mxu0 0.0
      %3542 = vmatprep.mubr.f32.mxu0 0.0
      %3543 = vmatmul.mubr.f32.gmra.mrb[0].mxu0 %v3470
      %v3544 = vpop.f32.mrb[0].mxu0
      %v3545 = vadd.f32 0.0, %v3544
      %v3546 = vpop.f32.mrb[0].mxu0
      %3547 = vmatprep.mubr.f32.mxu0 0.0
      %3548 = vmatmul.mubr.f32.gmra.mrb[0].mxu0 %v3475
      %v3549 = vpop.f32.mrb[0].mxu0
      %v3550 = vadd.f32 0.0, %v3549
      %v3551 = vpop.f32.mrb[0].mxu0
      %3552 = vdwg.mxu0
      %v3553 = vmul.f32 %v3545, 0.071428575
      %v3554 = vmul.f32 %v3550, 0.071428575
      %v3556 = vsel %vm1352, %v3553, 0
      %v3559 = vsel %vm1352, %v3554, 0
      %3561 = vmatprep.subr.mxu0 0.0
      %3562 = vmatpush1.msra.mxu0 %v3390
      %3563 = vmatprep.subr.mxu0 0.0
      %3564 = vmatpush1.msra.mxu0 0.0
      %3565 = vmatprep.subr.mxu0 0.0
      %3566 = vmatpush1.msra.mxu0 0.0
      %3567 = vmatprep.subr.mxu0 0.0
      %3568 = vmatpush1.msra.mxu0 0.0
      %3569 = vmatprep.subr.mxu0 0.0
      %3570 = vmatpush1.msra.mxu0 0.0
      %3571 = vmatprep.subr.mxu0 0.0
      %3572 = vmatpush1.msra.mxu0 0.0
      %3573 = vmatprep.subr.mxu0 0.0
      %3574 = vmatpush1.msra.mxu0 0.0
      %3575 = vmatprep.subr.mxu0 0.0
      %3576 = vmatpush1.msra.mxu0 0.0
      %3577 = vmatprep.subr.mxu0 0.0
      %3578 = vmatpush1.msra.mxu0 0.0
      %3579 = vmatprep.subr.mxu0 0.0
      %3580 = vmatpush1.msra.mxu0 0.0
      %3581 = vmatprep.subr.mxu0 0.0
      %3582 = vmatpush1.msra.mxu0 0.0
      %3583 = vmatprep.subr.mxu0 0.0
      %3584 = vmatpush1.msra.mxu0 0.0
      %3585 = vmatprep.subr.mxu0 0.0
      %3586 = vmatpush1.msra.mxu0 0.0
      %3587 = vmatprep.subr.mxu0 0.0
      %3588 = vmatpush1.msra.mxu0 0.0
      %3589 = vmatprep.subr.mxu0 0.0
      %3590 = vmatpush1.msra.mxu0 0.0
      %3591 = vmatprep.subr.mxu0 0.0
      %3592 = vmatpush1.msra.mxu0 0.0
      %3593 = vmatprep.subr.mxu0 0.0
      %3594 = vmatpush1.msra.mxu0 0.0
      %3595 = vmatprep.subr.mxu0 0.0
      %3596 = vmatpush1.msra.mxu0 0.0
      %3597 = vmatprep.subr.mxu0 0.0
      %3598 = vmatpush1.msra.mxu0 0.0
      %3599 = vmatprep.subr.mxu0 0.0
      %3600 = vmatpush1.msra.mxu0 0.0
      %3601 = vmatprep.subr.mxu0 0.0
      %3602 = vmatpush1.msra.mxu0 0.0
      %3603 = vmatprep.subr.mxu0 0.0
      %3604 = vmatpush1.msra.mxu0 0.0
      %3605 = vmatprep.subr.mxu0 0.0
      %3606 = vmatpush1.msra.mxu0 0.0
      %3607 = vmatprep.subr.mxu0 0.0
      %3608 = vmatpush1.msra.mxu0 0.0
      %3609 = vmatprep.subr.mxu0 0.0
      %3610 = vmatpush1.msra.mxu0 0.0
      %3611 = vmatprep.subr.mxu0 0.0
      %3612 = vmatpush1.msra.mxu0 0.0
      %3613 = vmatprep.subr.mxu0 0.0
      %3614 = vmatpush1.msra.mxu0 0.0
      %3615 = vmatprep.subr.mxu0 0.0
      %3616 = vmatpush1.msra.mxu0 0.0
      %3617 = vmatprep.subr.mxu0 0.0
      %3618 = vmatpush1.msra.mxu0 0.0
      %3619 = vmatprep.subr.mxu0 0.0
      %3620 = vmatpush1.msra.mxu0 0.0
      %3621 = vmatprep.subr.mxu0 0.0
      %3622 = vmatpush1.msra.mxu0 0.0
      %3623 = vmatprep.subr.mxu0 0.0
      %3624 = vmatpush1.msra.mxu0 0.0
      %3625 = vmatprep.mubr.f32.mxu0 0.0
      %3626 = vmatmul.mubr.f32.gmra.mrb[0].mxu0 %v3556
      %v3627 = vpop.f32.mrb[0].mxu0
      %v3628 = vadd.f32 0.0, %v3627
      %v3629 = vpop.f32.mrb[0].mxu0
      %3630 = vmatprep.mubr.f32.mxu0 0.0
      %3631 = vmatmul.mubr.f32.gmra.mrb[0].mxu0 %v3559
      %v3632 = vpop.f32.mrb[0].mxu0
      %v3633 = vadd.f32 0.0, %v3632
      %v3634 = vpop.f32.mrb[0].mxu0
      %3635 = vdwg.mxu0
      %v3637 = vsel %vm1434, %v3370, 0
      %v3640 = vsel %vm1434, %v3371, 0
      %3642 = vmatprep.subr.mxu0 0.0
      %3643 = vmatpush1.msra.mxu0 %v3628
      %3644 = vmatprep.subr.mxu0 0.0
      %3645 = vmatpush1.msra.mxu0 %v3633
      %3646 = vmatprep.subr.mxu0 0.0
      %3647 = vmatpush1.msra.mxu0 0.0
      %3648 = vmatprep.subr.mxu0 0.0
      %3649 = vmatpush1.msra.mxu0 0.0
      %3650 = vmatprep.subr.mxu0 0.0
      %3651 = vmatpush1.msra.mxu0 0.0
      %3652 = vmatprep.subr.mxu0 0.0
      %3653 = vmatpush1.msra.mxu0 0.0
      %3654 = vmatprep.subr.mxu0 0.0
      %3655 = vmatpush1.msra.mxu0 0.0
      %3656 = vmatprep.subr.mxu0 0.0
      %3657 = vmatpush1.msra.mxu0 0.0
      %3658 = vmatprep.subr.mxu0 0.0
      %3659 = vmatpush1.msra.mxu0 0.0
      %3660 = vmatprep.subr.mxu0 0.0
      %3661 = vmatpush1.msra.mxu0 0.0
      %3662 = vmatprep.subr.mxu0 0.0
      %3663 = vmatpush1.msra.mxu0 0.0
      %3664 = vmatprep.subr.mxu0 0.0
      %3665 = vmatpush1.msra.mxu0 0.0
      %3666 = vmatprep.subr.mxu0 0.0
      %3667 = vmatpush1.msra.mxu0 0.0
      %3668 = vmatprep.subr.mxu0 0.0
      %3669 = vmatpush1.msra.mxu0 0.0
      %3670 = vmatprep.subr.mxu0 0.0
      %3671 = vmatpush1.msra.mxu0 0.0
      %3672 = vmatprep.subr.mxu0 0.0
      %3673 = vmatpush1.msra.mxu0 0.0
      %3674 = vmatprep.subr.mxu0 0.0
      %3675 = vmatpush1.msra.mxu0 0.0
      %3676 = vmatprep.subr.mxu0 0.0
      %3677 = vmatpush1.msra.mxu0 0.0
      %3678 = vmatprep.subr.mxu0 0.0
      %3679 = vmatpush1.msra.mxu0 0.0
      %3680 = vmatprep.subr.mxu0 0.0
      %3681 = vmatpush1.msra.mxu0 0.0
      %3682 = vmatprep.subr.mxu0 0.0
      %3683 = vmatpush1.msra.mxu0 0.0
      %3684 = vmatprep.subr.mxu0 0.0
      %3685 = vmatpush1.msra.mxu0 0.0
      %3686 = vmatprep.subr.mxu0 0.0
      %3687 = vmatpush1.msra.mxu0 0.0
      %3688 = vmatprep.subr.mxu0 0.0
      %3689 = vmatpush1.msra.mxu0 0.0
      %3690 = vmatprep.subr.mxu0 0.0
      %3691 = vmatpush1.msra.mxu0 0.0
      %3692 = vmatprep.subr.mxu0 0.0
      %3693 = vmatpush1.msra.mxu0 0.0
      %3694 = vmatprep.subr.mxu0 0.0
      %3695 = vmatpush1.msra.mxu0 0.0
      %3696 = vmatprep.subr.mxu0 0.0
      %3697 = vmatpush1.msra.mxu0 0.0
      %3698 = vmatprep.subr.mxu0 0.0
      %3699 = vmatpush1.msra.mxu0 0.0
      %3700 = vmatprep.subr.mxu0 0.0
      %3701 = vmatpush1.msra.mxu0 0.0
      %3702 = vmatprep.subr.mxu0 0.0
      %3703 = vmatpush1.msra.mxu0 0.0
      %3704 = vmatprep.subr.mxu0 0.0
      %3705 = vmatpush1.msra.mxu0 0.0
      %3706 = vmatprep.mubr.f32.mxu0 0.0
      %3707 = vmatmul.mubr.f32.gmra.mrb[0].mxu0 %v3637
      %v3708 = vpop.f32.mrb[0].mxu0
      %v3709 = vadd.f32 0.0, %v3708
      %v3710 = vpop.f32.mrb[0].mxu0
      %3711 = vmatprep.mubr.f32.mxu0 0.0
      %3712 = vmatmul.mubr.f32.gmra.mrb[0].mxu0 %v3640
      %v3713 = vpop.f32.mrb[0].mxu0
      %v3714 = vadd.f32 0.0, %v3713
      %v3715 = vpop.f32.mrb[0].mxu0
      %3716 = vdwg.mxu0
      %v3717 = vsub.f32 %v3362, %v3709
      %v3718 = vsub.f32 %v3365, %v3714
      %v3719 = vmul.f32 %v3717, %v3717
      %v3720 = vmul.f32 %v3718, %v3718
      %3721 = vmatprep.subr.mxu0 0.0
      %3722 = vmatpush1.msra.mxu0 %v3719
      %3723 = vmatprep.subr.mxu0 0.0
      %3724 = vmatpush1.msra.mxu0 %v3720
      %3725 = vmatprep.subr.mxu0 0.0
      %3726 = vmatpush1.msra.mxu0 0.0
      %3727 = vmatprep.subr.mxu0 0.0
      %3728 = vmatpush1.msra.mxu0 0.0
      %3729 = vmatprep.subr.mxu0 0.0
      %3730 = vmatpush1.msra.mxu0 0.0
      %3731 = vmatprep.subr.mxu0 0.0
      %3732 = vmatpush1.msra.mxu0 0.0
      %3733 = vmatprep.subr.mxu0 0.0
      %3734 = vmatpush1.msra.mxu0 0.0
      %3735 = vmatprep.subr.mxu0 0.0
      %3736 = vmatpush1.msra.mxu0 0.0
      %3737 = vmatprep.subr.mxu0 0.0
      %3738 = vmatpush1.msra.mxu0 0.0
      %3739 = vmatprep.subr.mxu0 0.0
      %3740 = vmatpush1.msra.mxu0 0.0
      %3741 = vmatprep.subr.mxu0 0.0
      %3742 = vmatpush1.msra.mxu0 0.0
      %3743 = vmatprep.subr.mxu0 0.0
      %3744 = vmatpush1.msra.mxu0 0.0
      %3745 = vmatprep.subr.mxu0 0.0
      %3746 = vmatpush1.msra.mxu0 0.0
      %3747 = vmatprep.subr.mxu0 0.0
      %3748 = vmatpush1.msra.mxu0 0.0
      %3749 = vmatprep.subr.mxu0 0.0
      %3750 = vmatpush1.msra.mxu0 0.0
      %3751 = vmatprep.subr.mxu0 0.0
      %3752 = vmatpush1.msra.mxu0 0.0
      %3753 = vmatprep.subr.mxu0 0.0
      %3754 = vmatpush1.msra.mxu0 0.0
      %3755 = vmatprep.subr.mxu0 0.0
      %3756 = vmatpush1.msra.mxu0 0.0
      %3757 = vmatprep.subr.mxu0 0.0
      %3758 = vmatpush1.msra.mxu0 0.0
      %3759 = vmatprep.subr.mxu0 0.0
      %3760 = vmatpush1.msra.mxu0 0.0
      %3761 = vmatprep.subr.mxu0 0.0
      %3762 = vmatpush1.msra.mxu0 0.0
      %3763 = vmatprep.subr.mxu0 0.0
      %3764 = vmatpush1.msra.mxu0 0.0
      %3765 = vmatprep.subr.mxu0 0.0
      %3766 = vmatpush1.msra.mxu0 0.0
      %3767 = vmatprep.subr.mxu0 0.0
      %3768 = vmatpush1.msra.mxu0 0.0
      %3769 = vmatprep.subr.mxu0 0.0
      %3770 = vmatpush1.msra.mxu0 0.0
      %3771 = vmatprep.subr.mxu0 0.0
      %3772 = vmatpush1.msra.mxu0 0.0
      %3773 = vmatprep.subr.mxu0 0.0
      %3774 = vmatpush1.msra.mxu0 0.0
      %3775 = vmatprep.subr.mxu0 0.0
      %3776 = vmatpush1.msra.mxu0 0.0
      %3777 = vmatprep.subr.mxu0 0.0
      %3778 = vmatpush1.msra.mxu0 0.0
      %3779 = vmatprep.subr.mxu0 0.0
      %3780 = vmatpush1.msra.mxu0 0.0
      %3781 = vmatprep.subr.mxu0 0.0
      %3782 = vmatpush1.msra.mxu0 0.0
      %3783 = vmatprep.subr.mxu0 0.0
      %3784 = vmatpush1.msra.mxu0 0.0
      %3785 = vmatprep.mubr.f32.mxu0 0.0
      %3786 = vmatmul.mubr.f32.gmra.mrb[0].mxu0 %v3398
      %v3787 = vpop.f32.mrb[0].mxu0
      %v3788 = vadd.f32 0.0, %v3787
      %v3789 = vpop.f32.mrb[0].mxu0
      %3790 = vmatprep.mubr.f32.mxu0 0.0
      %3791 = vmatmul.mubr.f32.gmra.mrb[0].mxu0 %v3401
      %v3792 = vpop.f32.mrb[0].mxu0
      %v3793 = vadd.f32 0.0, %v3792
      %v3794 = vpop.f32.mrb[0].mxu0
      %3795 = vdwg.mxu0
      %3796 = vmatprep.subr.mxu0 0.0
      %3797 = vmatpush1.msra.mxu0 %v3373
      %3798 = vmatprep.subr.mxu0 0.0
      %3799 = vmatpush1.msra.mxu0 %v3374
      %3800 = vmatprep.subr.mxu0 0.0
      %3801 = vmatpush1.msra.mxu0 %v3375
      %3802 = vmatprep.subr.mxu0 0.0
      %3803 = vmatpush1.msra.mxu0 %v3376
      %3804 = vmatprep.subr.mxu0 0.0
      %3805 = vmatpush1.msra.mxu0 %v3377
      %3806 = vmatprep.subr.mxu0 0.0
      %3807 = vmatpush1.msra.mxu0 %v3378
      %3808 = vmatprep.subr.mxu0 0.0
      %3809 = vmatpush1.msra.mxu0 %v3379
      %3810 = vmatprep.subr.mxu0 0.0
      %3811 = vmatpush1.msra.mxu0 %v3380
      %3812 = vmatprep.subr.mxu0 0.0
      %3813 = vmatpush1.msra.mxu0 %v3381
      %3814 = vmatprep.subr.mxu0 0.0
      %3815 = vmatpush1.msra.mxu0 %v3382
      %3816 = vmatprep.subr.mxu0 0.0
      %3817 = vmatpush1.msra.mxu0 %v3383
      %3818 = vmatprep.subr.mxu0 0.0
      %3819 = vmatpush1.msra.mxu0 %v3384
      %3820 = vmatprep.subr.mxu0 0.0
      %3821 = vmatpush1.msra.mxu0 %v3385
      %3822 = vmatprep.subr.mxu0 0.0
      %3823 = vmatpush1.msra.mxu0 %v3386
      %3824 = vmatprep.subr.mxu0 0.0
      %3825 = vmatpush1.msra.mxu0 %v3387
      %3826 = vmatprep.subr.mxu0 0.0
      %3827 = vmatpush1.msra.mxu0 %v3388
      %3828 = vmatprep.subr.mxu0 0.0
      %3829 = vmatpush1.msra.mxu0 0.0
      %3830 = vmatprep.subr.mxu0 0.0
      %3831 = vmatpush1.msra.mxu0 0.0
      %3832 = vmatprep.subr.mxu0 0.0
      %3833 = vmatpush1.msra.mxu0 0.0
      %3834 = vmatprep.subr.mxu0 0.0
      %3835 = vmatpush1.msra.mxu0 0.0
      %3836 = vmatprep.subr.mxu0 0.0
      %3837 = vmatpush1.msra.mxu0 0.0
      %3838 = vmatprep.subr.mxu0 0.0
      %3839 = vmatpush1.msra.mxu0 0.0
      %3840 = vmatprep.subr.mxu0 0.0
      %3841 = vmatpush1.msra.mxu0 0.0
      %3842 = vmatprep.subr.mxu0 0.0
      %3843 = vmatpush1.msra.mxu0 0.0
      %3844 = vmatprep.subr.mxu0 0.0
      %3845 = vmatpush1.msra.mxu0 0.0
      %3846 = vmatprep.subr.mxu0 0.0
      %3847 = vmatpush1.msra.mxu0 0.0
      %3848 = vmatprep.subr.mxu0 0.0
      %3849 = vmatpush1.msra.mxu0 0.0
      %3850 = vmatprep.subr.mxu0 0.0
      %3851 = vmatpush1.msra.mxu0 0.0
      %3852 = vmatprep.subr.mxu0 0.0
      %3853 = vmatpush1.msra.mxu0 0.0
      %3854 = vmatprep.subr.mxu0 0.0
      %3855 = vmatpush1.msra.mxu0 0.0
      %3856 = vmatprep.subr.mxu0 0.0
      %3857 = vmatpush1.msra.mxu0 0.0
      %3858 = vmatprep.subr.mxu0 0.0
      %3859 = vmatpush1.msra.mxu0 0.0
      %3860 = vmatprep.mubr.f32.mxu0 0.0
      %3861 = vmatmul.mubr.f32.gmra.mrb[0].mxu0 %v3788
      %v3862 = vpop.f32.mrb[0].mxu0
      %v3863 = vadd.f32 0.0, %v3862
      %v3864 = vpop.f32.mrb[0].mxu0
      %3865 = vmatprep.mubr.f32.mxu0 0.0
      %3866 = vmatmul.mubr.f32.gmra.mrb[0].mxu0 %v3793
      %v3867 = vpop.f32.mrb[0].mxu0
      %v3868 = vadd.f32 0.0, %v3867
      %v3869 = vpop.f32.mrb[0].mxu0
      %3870 = vdwg.mxu0
      %v3871 = vmul.f32 %v3863, 0.071428575
      %v3872 = vmul.f32 %v3868, 0.071428575
      %v3873 = vadd.f32 %v3871, 1e-05
      %v3874 = vadd.f32 %v3872, 1e-05
      %v3875 = vrsqrt.pop %v3873
      %v3876 = vrsqrt.pop %v3874
      %3878 = vset.pattern.permute.xlu0 0
      %3879 = vperm.xlu0 %3878, %v3395
      %v3880 = vpop.permute.xlu0 %3879
      %3883 = vset.pattern.permute.xlu0 0
      %3884 = vperm.xlu0 %3883, %v3396
      %v3885 = vpop.permute.xlu0 %3884
      %v3887 = vmul.f32 %v3875, %v3880
      %v3888 = vmul.f32 %v3876, %v3885
      %v3890 = vsel %vm1352, %v3887, 0
      %v3893 = vsel %vm1352, %v3888, 0
      %3895 = vmatprep.subr.mxu0 0.0
      %3896 = vmatpush1.msra.mxu0 %v3390
      %3897 = vmatprep.subr.mxu0 0.0
      %3898 = vmatpush1.msra.mxu0 0.0
      %3899 = vmatprep.subr.mxu0 0.0
      %3900 = vmatpush1.msra.mxu0 0.0
      %3901 = vmatprep.subr.mxu0 0.0
      %3902 = vmatpush1.msra.mxu0 0.0
      %3903 = vmatprep.subr.mxu0 0.0
      %3904 = vmatpush1.msra.mxu0 0.0
      %3905 = vmatprep.subr.mxu0 0.0
      %3906 = vmatpush1.msra.mxu0 0.0
      %3907 = vmatprep.subr.mxu0 0.0
      %3908 = vmatpush1.msra.mxu0 0.0
      %3909 = vmatprep.subr.mxu0 0.0
      %3910 = vmatpush1.msra.mxu0 0.0
      %3911 = vmatprep.subr.mxu0 0.0
      %3912 = vmatpush1.msra.mxu0 0.0
      %3913 = vmatprep.subr.mxu0 0.0
      %3914 = vmatpush1.msra.mxu0 0.0
      %3915 = vmatprep.subr.mxu0 0.0
      %3916 = vmatpush1.msra.mxu0 0.0
      %3917 = vmatprep.subr.mxu0 0.0
      %3918 = vmatpush1.msra.mxu0 0.0
      %3919 = vmatprep.subr.mxu0 0.0
      %3920 = vmatpush1.msra.mxu0 0.0
      %3921 = vmatprep.subr.mxu0 0.0
      %3922 = vmatpush1.msra.mxu0 0.0
      %3923 = vmatprep.subr.mxu0 0.0
      %3924 = vmatpush1.msra.mxu0 0.0
      %3925 = vmatprep.subr.mxu0 0.0
      %3926 = vmatpush1.msra.mxu0 0.0
      %3927 = vmatprep.subr.mxu0 0.0
      %3928 = vmatpush1.msra.mxu0 0.0
      %3929 = vmatprep.subr.mxu0 0.0
      %3930 = vmatpush1.msra.mxu0 0.0
      %3931 = vmatprep.subr.mxu0 0.0
      %3932 = vmatpush1.msra.mxu0 0.0
      %3933 = vmatprep.subr.mxu0 0.0
      %3934 = vmatpush1.msra.mxu0 0.0
      %3935 = vmatprep.subr.mxu0 0.0
      %3936 = vmatpush1.msra.mxu0 0.0
      %3937 = vmatprep.subr.mxu0 0.0
      %3938 = vmatpush1.msra.mxu0 0.0
      %3939 = vmatprep.subr.mxu0 0.0
      %3940 = vmatpush1.msra.mxu0 0.0
      %3941 = vmatprep.subr.mxu0 0.0
      %3942 = vmatpush1.msra.mxu0 0.0
      %3943 = vmatprep.subr.mxu0 0.0
      %3944 = vmatpush1.msra.mxu0 0.0
      %3945 = vmatprep.subr.mxu0 0.0
      %3946 = vmatpush1.msra.mxu0 0.0
      %3947 = vmatprep.subr.mxu0 0.0
      %3948 = vmatpush1.msra.mxu0 0.0
      %3949 = vmatprep.subr.mxu0 0.0
      %3950 = vmatpush1.msra.mxu0 0.0
      %3951 = vmatprep.subr.mxu0 0.0
      %3952 = vmatpush1.msra.mxu0 0.0
      %3953 = vmatprep.subr.mxu0 0.0
      %3954 = vmatpush1.msra.mxu0 0.0
      %3955 = vmatprep.subr.mxu0 0.0
      %3956 = vmatpush1.msra.mxu0 0.0
      %3957 = vmatprep.subr.mxu0 0.0
      %3958 = vmatpush1.msra.mxu0 0.0
      %3959 = vmatprep.mubr.f32.mxu0 0.0
      %3960 = vmatmul.mubr.f32.gmra.mrb[0].mxu0 %v3890
      %v3961 = vpop.f32.mrb[0].mxu0
      %v3962 = vadd.f32 0.0, %v3961
      %v3963 = vpop.f32.mrb[0].mxu0
      %3964 = vmatprep.mubr.f32.mxu0 0.0
      %3965 = vmatmul.mubr.f32.gmra.mrb[0].mxu0 %v3893
      %v3966 = vpop.f32.mrb[0].mxu0
      %v3967 = vadd.f32 0.0, %v3966
      %v3968 = vpop.f32.mrb[0].mxu0
      %3969 = vdwg.mxu0
      %3970 = vmatprep.subr.mxu0 0.0
      %3971 = vmatpush1.msra.mxu0 %v3962
      %3972 = vmatprep.subr.mxu0 0.0
      %3973 = vmatpush1.msra.mxu0 %v3967
      %3974 = vmatprep.subr.mxu0 0.0
      %3975 = vmatpush1.msra.mxu0 0.0
      %3976 = vmatprep.subr.mxu0 0.0
      %3977 = vmatpush1.msra.mxu0 0.0
      %3978 = vmatprep.subr.mxu0 0.0
      %3979 = vmatpush1.msra.mxu0 0.0
      %3980 = vmatprep.subr.mxu0 0.0
      %3981 = vmatpush1.msra.mxu0 0.0
      %3982 = vmatprep.subr.mxu0 0.0
      %3983 = vmatpush1.msra.mxu0 0.0
      %3984 = vmatprep.subr.mxu0 0.0
      %3985 = vmatpush1.msra.mxu0 0.0
      %3986 = vmatprep.subr.mxu0 0.0
      %3987 = vmatpush1.msra.mxu0 0.0
      %3988 = vmatprep.subr.mxu0 0.0
      %3989 = vmatpush1.msra.mxu0 0.0
      %3990 = vmatprep.subr.mxu0 0.0
      %3991 = vmatpush1.msra.mxu0 0.0
      %3992 = vmatprep.subr.mxu0 0.0
      %3993 = vmatpush1.msra.mxu0 0.0
      %3994 = vmatprep.subr.mxu0 0.0
      %3995 = vmatpush1.msra.mxu0 0.0
      %3996 = vmatprep.subr.mxu0 0.0
      %3997 = vmatpush1.msra.mxu0 0.0
      %3998 = vmatprep.subr.mxu0 0.0
      %3999 = vmatpush1.msra.mxu0 0.0
      %4000 = vmatprep.subr.mxu0 0.0
      %4001 = vmatpush1.msra.mxu0 0.0
      %4002 = vmatprep.subr.mxu0 0.0
      %4003 = vmatpush1.msra.mxu0 0.0
      %4004 = vmatprep.subr.mxu0 0.0
      %4005 = vmatpush1.msra.mxu0 0.0
      %4006 = vmatprep.subr.mxu0 0.0
      %4007 = vmatpush1.msra.mxu0 0.0
      %4008 = vmatprep.subr.mxu0 0.0
      %4009 = vmatpush1.msra.mxu0 0.0
      %4010 = vmatprep.subr.mxu0 0.0
      %4011 = vmatpush1.msra.mxu0 0.0
      %4012 = vmatprep.subr.mxu0 0.0
      %4013 = vmatpush1.msra.mxu0 0.0
      %4014 = vmatprep.subr.mxu0 0.0
      %4015 = vmatpush1.msra.mxu0 0.0
      %4016 = vmatprep.subr.mxu0 0.0
      %4017 = vmatpush1.msra.mxu0 0.0
      %4018 = vmatprep.subr.mxu0 0.0
      %4019 = vmatpush1.msra.mxu0 0.0
      %4020 = vmatprep.subr.mxu0 0.0
      %4021 = vmatpush1.msra.mxu0 0.0
      %4022 = vmatprep.subr.mxu0 0.0
      %4023 = vmatpush1.msra.mxu0 0.0
      %4024 = vmatprep.subr.mxu0 0.0
      %4025 = vmatpush1.msra.mxu0 0.0
      %4026 = vmatprep.subr.mxu0 0.0
      %4027 = vmatpush1.msra.mxu0 0.0
      %4028 = vmatprep.subr.mxu0 0.0
      %4029 = vmatpush1.msra.mxu0 0.0
      %4030 = vmatprep.subr.mxu0 0.0
      %4031 = vmatpush1.msra.mxu0 0.0
      %4032 = vmatprep.subr.mxu0 0.0
      %4033 = vmatpush1.msra.mxu0 0.0
      %4034 = vmatprep.mubr.f32.mxu0 0.0
      %4035 = vmatmul.mubr.f32.gmra.mrb[0].mxu0 %v3637
      %v4036 = vpop.f32.mrb[0].mxu0
      %v4037 = vadd.f32 0.0, %v4036
      %v4038 = vpop.f32.mrb[0].mxu0
      %4039 = vmatprep.mubr.f32.mxu0 0.0
      %4040 = vmatmul.mubr.f32.gmra.mrb[0].mxu0 %v3640
      %v4041 = vpop.f32.mrb[0].mxu0
      %v4042 = vadd.f32 0.0, %v4041
      %v4043 = vpop.f32.mrb[0].mxu0
      %4044 = vdwg.mxu0
      %v4045 = vmul.f32 %v3717, %v4037
      %v4046 = vmul.f32 %v3718, %v4042
      %4048 = vset.pattern.permute.xlu0 0
      %4049 = vperm.xlu0 %4048, %v3392
      %v4050 = vpop.permute.xlu0 %4049
      %4053 = vset.pattern.permute.xlu0 0
      %4054 = vperm.xlu0 %4053, %v3393
      %v4055 = vpop.permute.xlu0 %4054
      %v4057 = vadd.f32 %v4045, %v4050
      %v4058 = vadd.f32 %v4046, %v4055
      %vm4059 = vcmp.ge.f32.partialorder %v4057, 0.0
      %vm4060 = vcmp.ge.f32.partialorder %v4058, 0.0
      %4061 = vset.pattern.permute.xlu0 1
      %4062 = vperm.xlu0 %4061, %v3392
      %v4063 = vpop.permute.xlu0 %4062
      %4065 = vset.pattern.permute.xlu0 1
      %4066 = vperm.xlu0 %4065, %v3393
      %v4067 = vpop.permute.xlu0 %4066
      %v4069 = vmul.f32 %v4063, %v4057
      %v4070 = vmul.f32 %v4067, %v4058
      %v4071 = vsel %vm4059, %v4057, %v4069
      %v4072 = vsel %vm4060, %v4058, %v4070
      %s4073 = scalar_lea.vmem %s17, 2
      %v4074 = vld [vmem:[%s4073] sm:$0x1]
      %v4076 = vlaneseq
      %v4077 = vshrl.u32 %v4076, 7
      %v4078 = vsub.s32 0, %v4077
      %v4079 = vrot.slane %v4074, %v4078
      %v4081 = vmul.f32 %v4071, %v4079
      %v4082 = vmul.f32 %v4072, %v4079
      %v4083 = vpack.c.bf16 %v4082, %v4081
      %v4084 = vld [vmem:[%s5] sm:$0xf]
      %v4085 = vld [vmem:[%s5 + $0x4] sm:$0xf]
      %v4086 = vld [vmem:[%s5 + $0x8] sm:$0xf]
      %v4087 = vld [vmem:[%s5 + $0xc] sm:$0xf]
      %v4088 = vld [vmem:[%s5 + $0x10] sm:$0xf]
      %v4089 = vld [vmem:[%s5 + $0x14] sm:$0xf]
      %s4090 = scalar_lea.vmem %s5, 24
      %v4091 = vld [vmem:[%s4090] sm:$0xf]
      %v4092 = vld [vmem:[%s4090 + $0x4] sm:$0xf]
      %v4093 = vld [vmem:[%s4090 + $0x8] sm:$0xf]
      %v4094 = vld [vmem:[%s4090 + $0xc] sm:$0xf]
      %v4095 = vld [vmem:[%s4090 + $0x10] sm:$0xf]
      %v4096 = vld [vmem:[%s4090 + $0x14] sm:$0xf]
      %v4103 = vunpack.c.l.b16 %v4091
      %v4104 = vunpack.c.l.b16 %v4092
      %v4105 = vunpack.c.l.b16 %v4093
      %v4106 = vunpack.c.l.b16 %v4094
      %v4107 = vunpack.c.l.b16 %v4095
      %v4108 = vunpack.c.l.b16 %v4096
      %v4109 = vpack.c.b16 %v4104, %v4103
      %v4110 = vpack.c.b16 %v4106, %v4105
      %v4111 = vpack.c.b16 %v4108, %v4107
      %v4113 = vsel %vm1434, %v4109, 0
      %v4116 = vsel %vm1434, %v4110, 0
      %v4119 = vsel %vm1434, %v4111, 0
      %4121 = vmatprep.subr.bf16.mxu0 0
      %4122 = vmatpush1.bf16.msra.mxu0 %v4083
      %4123 = vmatprep.subr.bf16.mxu0 0
      %4124 = vmatpush1.bf16.msra.mxu0 0
      %4125 = vmatprep.subr.bf16.mxu0 0
      %4126 = vmatpush1.bf16.msra.mxu0 0
      %4127 = vmatprep.subr.bf16.mxu0 0
      %4128 = vmatpush1.bf16.msra.mxu0 0
      %4129 = vmatprep.subr.bf16.mxu0 0
      %4130 = vmatpush1.bf16.msra.mxu0 0
      %4131 = vmatprep.subr.bf16.mxu0 0
      %4132 = vmatpush1.bf16.msra.mxu0 0
      %4133 = vmatprep.subr.bf16.mxu0 0
      %4134 = vmatpush1.bf16.msra.mxu0 0
      %4135 = vmatprep.subr.bf16.mxu0 0
      %4136 = vmatpush1.bf16.msra.mxu0 0
      %4137 = vmatprep.subr.bf16.mxu0 0
      %4138 = vmatpush1.bf16.msra.mxu0 0
      %4139 = vmatprep.subr.bf16.mxu0 0
      %4140 = vmatpush1.bf16.msra.mxu0 0
      %4141 = vmatprep.subr.bf16.mxu0 0
      %4142 = vmatpush1.bf16.msra.mxu0 0
      %4143 = vmatprep.subr.bf16.mxu0 0
      %4144 = vmatpush1.bf16.msra.mxu0 0
      %4145 = vmatprep.subr.bf16.mxu0 0
      %4146 = vmatpush1.bf16.msra.mxu0 0
      %4147 = vmatprep.subr.bf16.mxu0 0
      %4148 = vmatpush1.bf16.msra.mxu0 0
      %4149 = vmatprep.subr.bf16.mxu0 0
      %4150 = vmatpush1.bf16.msra.mxu0 0
      %4151 = vmatprep.subr.bf16.mxu0 0
      %4152 = vmatpush1.bf16.msra.mxu0 0
      %4153 = vmatprep.mubr.bf16.mxu0 0
      %4154 = vmatmul.mubr.bf16.gmra.mrb[0].mxu0 %v4113
      %v4155 = vpop.f32.mrb[0].mxu0
      %v4156 = vadd.f32 0.0, %v4155
      %v4157 = vpop.f32.mrb[0].mxu0
      %v4158 = vpop.f32.mrb[0].mxu0
      %v4159 = vadd.f32 0.0, %v4158
      %v4160 = vpop.f32.mrb[0].mxu0
      %4161 = vmatprep.mubr.bf16.mxu0 0
      %4162 = vmatmul.mubr.bf16.gmra.mrb[0].mxu0 %v4116
      %v4163 = vpop.f32.mrb[0].mxu0
      %v4164 = vadd.f32 0.0, %v4163
      %v4165 = vpop.f32.mrb[0].mxu0
      %v4166 = vpop.f32.mrb[0].mxu0
      %v4167 = vadd.f32 0.0, %v4166
      %v4168 = vpop.f32.mrb[0].mxu0
      %4169 = vmatprep.mubr.bf16.mxu0 0
      %4170 = vmatmul.mubr.bf16.gmra.mrb[0].mxu0 %v4119
      %v4171 = vpop.f32.mrb[0].mxu0
      %v4172 = vadd.f32 0.0, %v4171
      %v4173 = vpop.f32.mrb[0].mxu0
      %v4174 = vpop.f32.mrb[0].mxu0
      %v4175 = vadd.f32 0.0, %v4174
      %v4176 = vpop.f32.mrb[0].mxu0
      %4177 = vdwg.mxu0
      %4178 = vrot.lane.b32.xlu0 %v4156, 1
      %v4179 = vpop.permute.xlu0 %4178
      %4180 = vrot.lane.b32.xlu0 %v4159, 1
      %v4181 = vpop.permute.xlu0 %4180
      %4182 = vrot.lane.b32.xlu0 %v4164, 1
      %v4183 = vpop.permute.xlu0 %4182
      %4184 = vrot.lane.b32.xlu0 %v4167, 1
      %v4185 = vpop.permute.xlu0 %4184
      %4186 = vrot.lane.b32.xlu0 %v4172, 1
      %v4187 = vpop.permute.xlu0 %4186
      %4188 = vrot.lane.b32.xlu0 %v4175, 1
      %v4189 = vpop.permute.xlu0 %4188
      %v4196 = vunpack.c.l.b16 %v4084
      %v4197 = vunpack.c.l.b16 %v4085
      %v4198 = vunpack.c.l.b16 %v4086
      %v4199 = vunpack.c.l.b16 %v4087
      %v4200 = vunpack.c.l.b16 %v4088
      %v4201 = vunpack.c.l.b16 %v4089
      %v4202 = vpack.c.b16 %v4197, %v4196
      %v4203 = vpack.c.b16 %v4199, %v4198
      %v4204 = vpack.c.b16 %v4201, %v4200
      %v4206 = vsel %vm1434, %v4202, 0
      %v4209 = vsel %vm1434, %v4203, 0
      %v4212 = vsel %vm1434, %v4204, 0
      %4214 = vmatprep.subr.bf16.mxu0 0
      %4215 = vmatpush1.bf16.msra.mxu0 %v4083
      %4216 = vmatprep.subr.bf16.mxu0 0
      %4217 = vmatpush1.bf16.msra.mxu0 0
      %4218 = vmatprep.subr.bf16.mxu0 0
      %4219 = vmatpush1.bf16.msra.mxu0 0
      %4220 = vmatprep.subr.bf16.mxu0 0
      %4221 = vmatpush1.bf16.msra.mxu0 0
      %4222 = vmatprep.subr.bf16.mxu0 0
      %4223 = vmatpush1.bf16.msra.mxu0 0
      %4224 = vmatprep.subr.bf16.mxu0 0
      %4225 = vmatpush1.bf16.msra.mxu0 0
      %4226 = vmatprep.subr.bf16.mxu0 0
      %4227 = vmatpush1.bf16.msra.mxu0 0
      %4228 = vmatprep.subr.bf16.mxu0 0
      %4229 = vmatpush1.bf16.msra.mxu0 0
      %4230 = vmatprep.subr.bf16.mxu0 0
      %4231 = vmatpush1.bf16.msra.mxu0 0
      %4232 = vmatprep.subr.bf16.mxu0 0
      %4233 = vmatpush1.bf16.msra.mxu0 0
      %4234 = vmatprep.subr.bf16.mxu0 0
      %4235 = vmatpush1.bf16.msra.mxu0 0
      %4236 = vmatprep.subr.bf16.mxu0 0
      %4237 = vmatpush1.bf16.msra.mxu0 0
      %4238 = vmatprep.subr.bf16.mxu0 0
      %4239 = vmatpush1.bf16.msra.mxu0 0
      %4240 = vmatprep.subr.bf16.mxu0 0
      %4241 = vmatpush1.bf16.msra.mxu0 0
      %4242 = vmatprep.subr.bf16.mxu0 0
      %4243 = vmatpush1.bf16.msra.mxu0 0
      %4244 = vmatprep.subr.bf16.mxu0 0
      %4245 = vmatpush1.bf16.msra.mxu0 0
      %4246 = vmatprep.mubr.bf16.mxu0 0
      %4247 = vmatmul.mubr.bf16.gmra.mrb[0].mxu0 %v4206
      %v4248 = vpop.f32.mrb[0].mxu0
      %v4249 = vadd.f32 %v4179, %v4248
      %v4250 = vpop.f32.mrb[0].mxu0
      %v4251 = vpop.f32.mrb[0].mxu0
      %v4252 = vadd.f32 %v4181, %v4251
      %v4253 = vpop.f32.mrb[0].mxu0
      %4254 = vmatprep.mubr.bf16.mxu0 0
      %4255 = vmatmul.mubr.bf16.gmra.mrb[0].mxu0 %v4209
      %v4256 = vpop.f32.mrb[0].mxu0
      %v4257 = vadd.f32 %v4183, %v4256
      %v4258 = vpop.f32.mrb[0].mxu0
      %v4259 = vpop.f32.mrb[0].mxu0
      %v4260 = vadd.f32 %v4185, %v4259
      %v4261 = vpop.f32.mrb[0].mxu0
      %4262 = vmatprep.mubr.bf16.mxu0 0
      %4263 = vmatmul.mubr.bf16.gmra.mrb[0].mxu0 %v4212
      %v4264 = vpop.f32.mrb[0].mxu0
      %v4265 = vadd.f32 %v4187, %v4264
      %v4266 = vpop.f32.mrb[0].mxu0
      %v4267 = vpop.f32.mrb[0].mxu0
      %v4268 = vadd.f32 %v4189, %v4267
      %v4269 = vpop.f32.mrb[0].mxu0
      %4270 = vdwg.mxu0
      %s4271 = scalar_lea.vmem %s7, 336
      %v4272 = vld [vmem:[%s4271] sm:$0xff]
      %v4273 = vld [vmem:[%s4271 + $0x8] sm:$0xff]
      %v4274 = vld [vmem:[%s4271 + $0x10] sm:$0xff]
      %v4275 = vld [vmem:[%s4271 + $0x18] sm:$0xff]
      %v4276 = vld [vmem:[%s4271 + $0x20] sm:$0xff]
      %v4277 = vld [vmem:[%s4271 + $0x28] sm:$0xff]
      %s4278 = scalar_lea.vmem %s8, 48
      %v4279 = vld [vmem:[%s4278] sm:$0xff]
      %v4280 = vld [vmem:[%s4278 + $0x8] sm:$0xff]
      %4281 = vmatprep.subr.mxu0 0.0
      %4282 = vmatpush1.msra.mxu0 %v4249
      %4283 = vmatprep.subr.mxu0 0.0
      %4284 = vmatpush1.msra.mxu0 %v4252
      %4285 = vmatprep.subr.mxu0 0.0
      %4286 = vmatpush1.msra.mxu0 %v4257
      %4287 = vmatprep.subr.mxu0 0.0
      %4288 = vmatpush1.msra.mxu0 %v4260
      %4289 = vmatprep.subr.mxu0 0.0
      %4290 = vmatpush1.msra.mxu0 %v4265
      %4291 = vmatprep.subr.mxu0 0.0
      %4292 = vmatpush1.msra.mxu0 %v4268
      %4293 = vmatprep.subr.mxu0 0.0
      %4294 = vmatpush1.msra.mxu0 0.0
      %4295 = vmatprep.subr.mxu0 0.0
      %4296 = vmatpush1.msra.mxu0 0.0
      %4297 = vmatprep.subr.mxu0 0.0
      %4298 = vmatpush1.msra.mxu0 0.0
      %4299 = vmatprep.subr.mxu0 0.0
      %4300 = vmatpush1.msra.mxu0 0.0
      %4301 = vmatprep.subr.mxu0 0.0
      %4302 = vmatpush1.msra.mxu0 0.0
      %4303 = vmatprep.subr.mxu0 0.0
      %4304 = vmatpush1.msra.mxu0 0.0
      %4305 = vmatprep.subr.mxu0 0.0
      %4306 = vmatpush1.msra.mxu0 0.0
      %4307 = vmatprep.subr.mxu0 0.0
      %4308 = vmatpush1.msra.mxu0 0.0
      %4309 = vmatprep.subr.mxu0 0.0
      %4310 = vmatpush1.msra.mxu0 0.0
      %4311 = vmatprep.subr.mxu0 0.0
      %4312 = vmatpush1.msra.mxu0 0.0
      %4313 = vmatprep.subr.mxu0 0.0
      %4314 = vmatpush1.msra.mxu0 0.0
      %4315 = vmatprep.subr.mxu0 0.0
      %4316 = vmatpush1.msra.mxu0 0.0
      %4317 = vmatprep.subr.mxu0 0.0
      %4318 = vmatpush1.msra.mxu0 0.0
      %4319 = vmatprep.subr.mxu0 0.0
      %4320 = vmatpush1.msra.mxu0 0.0
      %4321 = vmatprep.subr.mxu0 0.0
      %4322 = vmatpush1.msra.mxu0 0.0
      %4323 = vmatprep.subr.mxu0 0.0
      %4324 = vmatpush1.msra.mxu0 0.0
      %4325 = vmatprep.subr.mxu0 0.0
      %4326 = vmatpush1.msra.mxu0 0.0
      %4327 = vmatprep.subr.mxu0 0.0
      %4328 = vmatpush1.msra.mxu0 0.0
      %4329 = vmatprep.subr.mxu0 0.0
      %4330 = vmatpush1.msra.mxu0 0.0
      %4331 = vmatprep.subr.mxu0 0.0
      %4332 = vmatpush1.msra.mxu0 0.0
      %4333 = vmatprep.subr.mxu0 0.0
      %4334 = vmatpush1.msra.mxu0 0.0
      %4335 = vmatprep.subr.mxu0 0.0
      %4336 = vmatpush1.msra.mxu0 0.0
      %4337 = vmatprep.subr.mxu0 0.0
      %4338 = vmatpush1.msra.mxu0 0.0
      %4339 = vmatprep.subr.mxu0 0.0
      %4340 = vmatpush1.msra.mxu0 0.0
      %4341 = vmatprep.subr.mxu0 0.0
      %4342 = vmatpush1.msra.mxu0 0.0
      %4343 = vmatprep.subr.mxu0 0.0
      %4344 = vmatpush1.msra.mxu0 0.0
      %4345 = vmatprep.mubr.f32.mxu0 0.0
      %4346 = vmatmul.mubr.f32.gmra.mrb[0].mxu0 %v2453
      %v4347 = vpop.f32.mrb[0].mxu0
      %v4348 = vadd.f32 0.0, %v4347
      %v4349 = vpop.f32.mrb[0].mxu0
      %4350 = vmatprep.mubr.f32.mxu0 0.0
      %4351 = vmatmul.mubr.f32.gmra.mrb[0].mxu0 %v2456
      %v4352 = vpop.f32.mrb[0].mxu0
      %v4353 = vadd.f32 0.0, %v4352
      %v4354 = vpop.f32.mrb[0].mxu0
      %4355 = vdwg.mxu0
      %4356 = vmatprep.subr.mxu0 0.0
      %4357 = vmatpush1.msra.mxu0 %v2423
      %4358 = vmatprep.subr.mxu0 0.0
      %4359 = vmatpush1.msra.mxu0 %v2424
      %4360 = vmatprep.subr.mxu0 0.0
      %4361 = vmatpush1.msra.mxu0 %v2425
      %4362 = vmatprep.subr.mxu0 0.0
      %4363 = vmatpush1.msra.mxu0 %v2426
      %4364 = vmatprep.subr.mxu0 0.0
      %4365 = vmatpush1.msra.mxu0 %v2427
      %4366 = vmatprep.subr.mxu0 0.0
      %4367 = vmatpush1.msra.mxu0 %v2428
      %4368 = vmatprep.subr.mxu0 0.0
      %4369 = vmatpush1.msra.mxu0 %v2429
      %4370 = vmatprep.subr.mxu0 0.0
      %4371 = vmatpush1.msra.mxu0 %v2430
      %4372 = vmatprep.subr.mxu0 0.0
      %4373 = vmatpush1.msra.mxu0 %v2431
      %4374 = vmatprep.subr.mxu0 0.0
      %4375 = vmatpush1.msra.mxu0 %v2432
      %4376 = vmatprep.subr.mxu0 0.0
      %4377 = vmatpush1.msra.mxu0 %v2433
      %4378 = vmatprep.subr.mxu0 0.0
      %4379 = vmatpush1.msra.mxu0 %v2434
      %4380 = vmatprep.subr.mxu0 0.0
      %4381 = vmatpush1.msra.mxu0 %v2435
      %4382 = vmatprep.subr.mxu0 0.0
      %4383 = vmatpush1.msra.mxu0 %v2436
      %4384 = vmatprep.subr.mxu0 0.0
      %4385 = vmatpush1.msra.mxu0 %v2437
      %4386 = vmatprep.subr.mxu0 0.0
      %4387 = vmatpush1.msra.mxu0 %v2438
      %4388 = vmatprep.subr.mxu0 0.0
      %4389 = vmatpush1.msra.mxu0 0.0
      %4390 = vmatprep.subr.mxu0 0.0
      %4391 = vmatpush1.msra.mxu0 0.0
      %4392 = vmatprep.subr.mxu0 0.0
      %4393 = vmatpush1.msra.mxu0 0.0
      %4394 = vmatprep.subr.mxu0 0.0
      %4395 = vmatpush1.msra.mxu0 0.0
      %4396 = vmatprep.subr.mxu0 0.0
      %4397 = vmatpush1.msra.mxu0 0.0
      %4398 = vmatprep.subr.mxu0 0.0
      %4399 = vmatpush1.msra.mxu0 0.0
      %4400 = vmatprep.subr.mxu0 0.0
      %4401 = vmatpush1.msra.mxu0 0.0
      %4402 = vmatprep.subr.mxu0 0.0
      %4403 = vmatpush1.msra.mxu0 0.0
      %4404 = vmatprep.subr.mxu0 0.0
      %4405 = vmatpush1.msra.mxu0 0.0
      %4406 = vmatprep.subr.mxu0 0.0
      %4407 = vmatpush1.msra.mxu0 0.0
      %4408 = vmatprep.subr.mxu0 0.0
      %4409 = vmatpush1.msra.mxu0 0.0
      %4410 = vmatprep.subr.mxu0 0.0
      %4411 = vmatpush1.msra.mxu0 0.0
      %4412 = vmatprep.subr.mxu0 0.0
      %4413 = vmatpush1.msra.mxu0 0.0
      %4414 = vmatprep.subr.mxu0 0.0
      %4415 = vmatpush1.msra.mxu0 0.0
      %4416 = vmatprep.subr.mxu0 0.0
      %4417 = vmatpush1.msra.mxu0 0.0
      %4418 = vmatprep.subr.mxu0 0.0
      %4419 = vmatpush1.msra.mxu0 0.0
      %4420 = vmatprep.mubr.f32.mxu0 0.0
      %4421 = vmatmul.mubr.f32.gmra.mrb[0].mxu0 %v4348
      %v4422 = vpop.f32.mrb[0].mxu0
      %v4423 = vadd.f32 0.0, %v4422
      %v4424 = vpop.f32.mrb[0].mxu0
      %4425 = vmatprep.mubr.f32.mxu0 0.0
      %4426 = vmatmul.mubr.f32.gmra.mrb[0].mxu0 %v4353
      %v4427 = vpop.f32.mrb[0].mxu0
      %v4428 = vadd.f32 0.0, %v4427
      %v4429 = vpop.f32.mrb[0].mxu0
      %4430 = vdwg.mxu0
      %v4431 = vmul.f32 %v4423, 0.022222223
      %v4432 = vmul.f32 %v4428, 0.022222223
      %v4434 = vsel %vm1352, %v4431, 0
      %v4437 = vsel %vm1352, %v4432, 0
      %4439 = vmatprep.subr.mxu0 0.0
      %4440 = vmatpush1.msra.mxu0 %v2440
      %4441 = vmatprep.subr.mxu0 0.0
      %4442 = vmatpush1.msra.mxu0 0.0
      %4443 = vmatprep.subr.mxu0 0.0
      %4444 = vmatpush1.msra.mxu0 0.0
      %4445 = vmatprep.subr.mxu0 0.0
      %4446 = vmatpush1.msra.mxu0 0.0
      %4447 = vmatprep.subr.mxu0 0.0
      %4448 = vmatpush1.msra.mxu0 0.0
      %4449 = vmatprep.subr.mxu0 0.0
      %4450 = vmatpush1.msra.mxu0 0.0
      %4451 = vmatprep.subr.mxu0 0.0
      %4452 = vmatpush1.msra.mxu0 0.0
      %4453 = vmatprep.subr.mxu0 0.0
      %4454 = vmatpush1.msra.mxu0 0.0
      %4455 = vmatprep.subr.mxu0 0.0
      %4456 = vmatpush1.msra.mxu0 0.0
      %4457 = vmatprep.subr.mxu0 0.0
      %4458 = vmatpush1.msra.mxu0 0.0
      %4459 = vmatprep.subr.mxu0 0.0
      %4460 = vmatpush1.msra.mxu0 0.0
      %4461 = vmatprep.subr.mxu0 0.0
      %4462 = vmatpush1.msra.mxu0 0.0
      %4463 = vmatprep.subr.mxu0 0.0
      %4464 = vmatpush1.msra.mxu0 0.0
      %4465 = vmatprep.subr.mxu0 0.0
      %4466 = vmatpush1.msra.mxu0 0.0
      %4467 = vmatprep.subr.mxu0 0.0
      %4468 = vmatpush1.msra.mxu0 0.0
      %4469 = vmatprep.subr.mxu0 0.0
      %4470 = vmatpush1.msra.mxu0 0.0
      %4471 = vmatprep.subr.mxu0 0.0
      %4472 = vmatpush1.msra.mxu0 0.0
      %4473 = vmatprep.subr.mxu0 0.0
      %4474 = vmatpush1.msra.mxu0 0.0
      %4475 = vmatprep.subr.mxu0 0.0
      %4476 = vmatpush1.msra.mxu0 0.0
      %4477 = vmatprep.subr.mxu0 0.0
      %4478 = vmatpush1.msra.mxu0 0.0
      %4479 = vmatprep.subr.mxu0 0.0
      %4480 = vmatpush1.msra.mxu0 0.0
      %4481 = vmatprep.subr.mxu0 0.0
      %4482 = vmatpush1.msra.mxu0 0.0
      %4483 = vmatprep.subr.mxu0 0.0
      %4484 = vmatpush1.msra.mxu0 0.0
      %4485 = vmatprep.subr.mxu0 0.0
      %4486 = vmatpush1.msra.mxu0 0.0
      %4487 = vmatprep.subr.mxu0 0.0
      %4488 = vmatpush1.msra.mxu0 0.0
      %4489 = vmatprep.subr.mxu0 0.0
      %4490 = vmatpush1.msra.mxu0 0.0
      %4491 = vmatprep.subr.mxu0 0.0
      %4492 = vmatpush1.msra.mxu0 0.0
      %4493 = vmatprep.subr.mxu0 0.0
      %4494 = vmatpush1.msra.mxu0 0.0
      %4495 = vmatprep.subr.mxu0 0.0
      %4496 = vmatpush1.msra.mxu0 0.0
      %4497 = vmatprep.subr.mxu0 0.0
      %4498 = vmatpush1.msra.mxu0 0.0
      %4499 = vmatprep.subr.mxu0 0.0
      %4500 = vmatpush1.msra.mxu0 0.0
      %4501 = vmatprep.subr.mxu0 0.0
      %4502 = vmatpush1.msra.mxu0 0.0
      %4503 = vmatprep.mubr.f32.mxu0 0.0
      %4504 = vmatmul.mubr.f32.gmra.mrb[0].mxu0 %v4434
      %v4505 = vpop.f32.mrb[0].mxu0
      %v4506 = vadd.f32 0.0, %v4505
      %v4507 = vpop.f32.mrb[0].mxu0
      %4508 = vmatprep.mubr.f32.mxu0 0.0
      %4509 = vmatmul.mubr.f32.gmra.mrb[0].mxu0 %v4437
      %v4510 = vpop.f32.mrb[0].mxu0
      %v4511 = vadd.f32 0.0, %v4510
      %v4512 = vpop.f32.mrb[0].mxu0
      %4513 = vdwg.mxu0
      %4514 = vmatprep.subr.mxu0 0.0
      %4515 = vmatpush1.msra.mxu0 %v4506
      %4516 = vmatprep.subr.mxu0 0.0
      %4517 = vmatpush1.msra.mxu0 %v4511
      %4518 = vmatprep.subr.mxu0 0.0
      %4519 = vmatpush1.msra.mxu0 0.0
      %4520 = vmatprep.subr.mxu0 0.0
      %4521 = vmatpush1.msra.mxu0 0.0
      %4522 = vmatprep.subr.mxu0 0.0
      %4523 = vmatpush1.msra.mxu0 0.0
      %4524 = vmatprep.subr.mxu0 0.0
      %4525 = vmatpush1.msra.mxu0 0.0
      %4526 = vmatprep.subr.mxu0 0.0
      %4527 = vmatpush1.msra.mxu0 0.0
      %4528 = vmatprep.subr.mxu0 0.0
      %4529 = vmatpush1.msra.mxu0 0.0
      %4530 = vmatprep.subr.mxu0 0.0
      %4531 = vmatpush1.msra.mxu0 0.0
      %4532 = vmatprep.subr.mxu0 0.0
      %4533 = vmatpush1.msra.mxu0 0.0
      %4534 = vmatprep.subr.mxu0 0.0
      %4535 = vmatpush1.msra.mxu0 0.0
      %4536 = vmatprep.subr.mxu0 0.0
      %4537 = vmatpush1.msra.mxu0 0.0
      %4538 = vmatprep.subr.mxu0 0.0
      %4539 = vmatpush1.msra.mxu0 0.0
      %4540 = vmatprep.subr.mxu0 0.0
      %4541 = vmatpush1.msra.mxu0 0.0
      %4542 = vmatprep.subr.mxu0 0.0
      %4543 = vmatpush1.msra.mxu0 0.0
      %4544 = vmatprep.subr.mxu0 0.0
      %4545 = vmatpush1.msra.mxu0 0.0
      %4546 = vmatprep.subr.mxu0 0.0
      %4547 = vmatpush1.msra.mxu0 0.0
      %4548 = vmatprep.subr.mxu0 0.0
      %4549 = vmatpush1.msra.mxu0 0.0
      %4550 = vmatprep.subr.mxu0 0.0
      %4551 = vmatpush1.msra.mxu0 0.0
      %4552 = vmatprep.subr.mxu0 0.0
      %4553 = vmatpush1.msra.mxu0 0.0
      %4554 = vmatprep.subr.mxu0 0.0
      %4555 = vmatpush1.msra.mxu0 0.0
      %4556 = vmatprep.subr.mxu0 0.0
      %4557 = vmatpush1.msra.mxu0 0.0
      %4558 = vmatprep.subr.mxu0 0.0
      %4559 = vmatpush1.msra.mxu0 0.0
      %4560 = vmatprep.subr.mxu0 0.0
      %4561 = vmatpush1.msra.mxu0 0.0
      %4562 = vmatprep.subr.mxu0 0.0
      %4563 = vmatpush1.msra.mxu0 0.0
      %4564 = vmatprep.subr.mxu0 0.0
      %4565 = vmatpush1.msra.mxu0 0.0
      %4566 = vmatprep.subr.mxu0 0.0
      %4567 = vmatpush1.msra.mxu0 0.0
      %4568 = vmatprep.subr.mxu0 0.0
      %4569 = vmatpush1.msra.mxu0 0.0
      %4570 = vmatprep.subr.mxu0 0.0
      %4571 = vmatpush1.msra.mxu0 0.0
      %4572 = vmatprep.subr.mxu0 0.0
      %4573 = vmatpush1.msra.mxu0 0.0
      %4574 = vmatprep.subr.mxu0 0.0
      %4575 = vmatpush1.msra.mxu0 0.0
      %4576 = vmatprep.subr.mxu0 0.0
      %4577 = vmatpush1.msra.mxu0 0.0
      %4578 = vmatprep.mubr.f32.mxu0 0.0
      %4579 = vmatmul.mubr.f32.gmra.mrb[0].mxu0 %v2692
      %v4580 = vpop.f32.mrb[0].mxu0
      %v4581 = vadd.f32 0.0, %v4580
      %v4582 = vpop.f32.mrb[0].mxu0
      %4583 = vmatprep.mubr.f32.mxu0 0.0
      %4584 = vmatmul.mubr.f32.gmra.mrb[0].mxu0 %v2695
      %v4585 = vpop.f32.mrb[0].mxu0
      %v4586 = vadd.f32 0.0, %v4585
      %v4587 = vpop.f32.mrb[0].mxu0
      %4588 = vmatprep.mubr.f32.mxu0 0.0
      %4589 = vmatmul.mubr.f32.gmra.mrb[0].mxu0 %v2698
      %v4590 = vpop.f32.mrb[0].mxu0
      %v4591 = vadd.f32 0.0, %v4590
      %v4592 = vpop.f32.mrb[0].mxu0
      %4593 = vmatprep.mubr.f32.mxu0 0.0
      %4594 = vmatmul.mubr.f32.gmra.mrb[0].mxu0 %v2701
      %v4595 = vpop.f32.mrb[0].mxu0
      %v4596 = vadd.f32 0.0, %v4595
      %v4597 = vpop.f32.mrb[0].mxu0
      %4598 = vmatprep.mubr.f32.mxu0 0.0
      %4599 = vmatmul.mubr.f32.gmra.mrb[0].mxu0 %v2704
      %v4600 = vpop.f32.mrb[0].mxu0
      %v4601 = vadd.f32 0.0, %v4600
      %v4602 = vpop.f32.mrb[0].mxu0
      %4603 = vmatprep.mubr.f32.mxu0 0.0
      %4604 = vmatmul.mubr.f32.gmra.mrb[0].mxu0 %v2707
      %v4605 = vpop.f32.mrb[0].mxu0
      %v4606 = vadd.f32 0.0, %v4605
      %v4607 = vpop.f32.mrb[0].mxu0
      %4608 = vdwg.mxu0
      %v4609 = vsub.f32 %v4249, %v4581
      %v4610 = vsub.f32 %v4252, %v4586
      %v4611 = vsub.f32 %v4257, %v4591
      %v4612 = vsub.f32 %v4260, %v4596
      %v4613 = vsub.f32 %v4265, %v4601
      %v4614 = vsub.f32 %v4268, %v4606
      %v4615 = vmul.f32 %v4609, %v4609
      %v4616 = vmul.f32 %v4610, %v4610
      %v4617 = vmul.f32 %v4611, %v4611
      %v4618 = vmul.f32 %v4612, %v4612
      %v4619 = vmul.f32 %v4613, %v4613
      %v4620 = vmul.f32 %v4614, %v4614
      %4621 = vmatprep.subr.mxu0 0.0
      %4622 = vmatpush1.msra.mxu0 %v4615
      %4623 = vmatprep.subr.mxu0 0.0
      %4624 = vmatpush1.msra.mxu0 %v4616
      %4625 = vmatprep.subr.mxu0 0.0
      %4626 = vmatpush1.msra.mxu0 %v4617
      %4627 = vmatprep.subr.mxu0 0.0
      %4628 = vmatpush1.msra.mxu0 %v4618
      %4629 = vmatprep.subr.mxu0 0.0
      %4630 = vmatpush1.msra.mxu0 %v4619
      %4631 = vmatprep.subr.mxu0 0.0
      %4632 = vmatpush1.msra.mxu0 %v4620
      %4633 = vmatprep.subr.mxu0 0.0
      %4634 = vmatpush1.msra.mxu0 0.0
      %4635 = vmatprep.subr.mxu0 0.0
      %4636 = vmatpush1.msra.mxu0 0.0
      %4637 = vmatprep.subr.mxu0 0.0
      %4638 = vmatpush1.msra.mxu0 0.0
      %4639 = vmatprep.subr.mxu0 0.0
      %4640 = vmatpush1.msra.mxu0 0.0
      %4641 = vmatprep.subr.mxu0 0.0
      %4642 = vmatpush1.msra.mxu0 0.0
      %4643 = vmatprep.subr.mxu0 0.0
      %4644 = vmatpush1.msra.mxu0 0.0
      %4645 = vmatprep.subr.mxu0 0.0
      %4646 = vmatpush1.msra.mxu0 0.0
      %4647 = vmatprep.subr.mxu0 0.0
      %4648 = vmatpush1.msra.mxu0 0.0
      %4649 = vmatprep.subr.mxu0 0.0
      %4650 = vmatpush1.msra.mxu0 0.0
      %4651 = vmatprep.subr.mxu0 0.0
      %4652 = vmatpush1.msra.mxu0 0.0
      %4653 = vmatprep.subr.mxu0 0.0
      %4654 = vmatpush1.msra.mxu0 0.0
      %4655 = vmatprep.subr.mxu0 0.0
      %4656 = vmatpush1.msra.mxu0 0.0
      %4657 = vmatprep.subr.mxu0 0.0
      %4658 = vmatpush1.msra.mxu0 0.0
      %4659 = vmatprep.subr.mxu0 0.0
      %4660 = vmatpush1.msra.mxu0 0.0
      %4661 = vmatprep.subr.mxu0 0.0
      %4662 = vmatpush1.msra.mxu0 0.0
      %4663 = vmatprep.subr.mxu0 0.0
      %4664 = vmatpush1.msra.mxu0 0.0
      %4665 = vmatprep.subr.mxu0 0.0
      %4666 = vmatpush1.msra.mxu0 0.0
      %4667 = vmatprep.subr.mxu0 0.0
      %4668 = vmatpush1.msra.mxu0 0.0
      %4669 = vmatprep.subr.mxu0 0.0
      %4670 = vmatpush1.msra.mxu0 0.0
      %4671 = vmatprep.subr.mxu0 0.0
      %4672 = vmatpush1.msra.mxu0 0.0
      %4673 = vmatprep.subr.mxu0 0.0
      %4674 = vmatpush1.msra.mxu0 0.0
      %4675 = vmatprep.subr.mxu0 0.0
      %4676 = vmatpush1.msra.mxu0 0.0
      %4677 = vmatprep.subr.mxu0 0.0
      %4678 = vmatpush1.msra.mxu0 0.0
      %4679 = vmatprep.subr.mxu0 0.0
      %4680 = vmatpush1.msra.mxu0 0.0
      %4681 = vmatprep.subr.mxu0 0.0
      %4682 = vmatpush1.msra.mxu0 0.0
      %4683 = vmatprep.subr.mxu0 0.0
      %4684 = vmatpush1.msra.mxu0 0.0
      %4685 = vmatprep.mubr.f32.mxu0 0.0
      %4686 = vmatmul.mubr.f32.gmra.mrb[0].mxu0 %v2453
      %v4687 = vpop.f32.mrb[0].mxu0
      %v4688 = vadd.f32 0.0, %v4687
      %v4689 = vpop.f32.mrb[0].mxu0
      %4690 = vmatprep.mubr.f32.mxu0 0.0
      %4691 = vmatmul.mubr.f32.gmra.mrb[0].mxu0 %v2456
      %v4692 = vpop.f32.mrb[0].mxu0
      %v4693 = vadd.f32 0.0, %v4692
      %v4694 = vpop.f32.mrb[0].mxu0
      %4695 = vdwg.mxu0
      %4696 = vmatprep.subr.mxu0 0.0
      %4697 = vmatpush1.msra.mxu0 %v2423
      %4698 = vmatprep.subr.mxu0 0.0
      %4699 = vmatpush1.msra.mxu0 %v2424
      %4700 = vmatprep.subr.mxu0 0.0
      %4701 = vmatpush1.msra.mxu0 %v2425
      %4702 = vmatprep.subr.mxu0 0.0
      %4703 = vmatpush1.msra.mxu0 %v2426
      %4704 = vmatprep.subr.mxu0 0.0
      %4705 = vmatpush1.msra.mxu0 %v2427
      %4706 = vmatprep.subr.mxu0 0.0
      %4707 = vmatpush1.msra.mxu0 %v2428
      %4708 = vmatprep.subr.mxu0 0.0
      %4709 = vmatpush1.msra.mxu0 %v2429
      %4710 = vmatprep.subr.mxu0 0.0
      %4711 = vmatpush1.msra.mxu0 %v2430
      %4712 = vmatprep.subr.mxu0 0.0
      %4713 = vmatpush1.msra.mxu0 %v2431
      %4714 = vmatprep.subr.mxu0 0.0
      %4715 = vmatpush1.msra.mxu0 %v2432
      %4716 = vmatprep.subr.mxu0 0.0
      %4717 = vmatpush1.msra.mxu0 %v2433
      %4718 = vmatprep.subr.mxu0 0.0
      %4719 = vmatpush1.msra.mxu0 %v2434
      %4720 = vmatprep.subr.mxu0 0.0
      %4721 = vmatpush1.msra.mxu0 %v2435
      %4722 = vmatprep.subr.mxu0 0.0
      %4723 = vmatpush1.msra.mxu0 %v2436
      %4724 = vmatprep.subr.mxu0 0.0
      %4725 = vmatpush1.msra.mxu0 %v2437
      %4726 = vmatprep.subr.mxu0 0.0
      %4727 = vmatpush1.msra.mxu0 %v2438
      %4728 = vmatprep.subr.mxu0 0.0
      %4729 = vmatpush1.msra.mxu0 0.0
      %4730 = vmatprep.subr.mxu0 0.0
      %4731 = vmatpush1.msra.mxu0 0.0
      %4732 = vmatprep.subr.mxu0 0.0
      %4733 = vmatpush1.msra.mxu0 0.0
      %4734 = vmatprep.subr.mxu0 0.0
      %4735 = vmatpush1.msra.mxu0 0.0
      %4736 = vmatprep.subr.mxu0 0.0
      %4737 = vmatpush1.msra.mxu0 0.0
      %4738 = vmatprep.subr.mxu0 0.0
      %4739 = vmatpush1.msra.mxu0 0.0
      %4740 = vmatprep.subr.mxu0 0.0
      %4741 = vmatpush1.msra.mxu0 0.0
      %4742 = vmatprep.subr.mxu0 0.0
      %4743 = vmatpush1.msra.mxu0 0.0
      %4744 = vmatprep.subr.mxu0 0.0
      %4745 = vmatpush1.msra.mxu0 0.0
      %4746 = vmatprep.subr.mxu0 0.0
      %4747 = vmatpush1.msra.mxu0 0.0
      %4748 = vmatprep.subr.mxu0 0.0
      %4749 = vmatpush1.msra.mxu0 0.0
      %4750 = vmatprep.subr.mxu0 0.0
      %4751 = vmatpush1.msra.mxu0 0.0
      %4752 = vmatprep.subr.mxu0 0.0
      %4753 = vmatpush1.msra.mxu0 0.0
      %4754 = vmatprep.subr.mxu0 0.0
      %4755 = vmatpush1.msra.mxu0 0.0
      %4756 = vmatprep.subr.mxu0 0.0
      %4757 = vmatpush1.msra.mxu0 0.0
      %4758 = vmatprep.subr.mxu0 0.0
      %4759 = vmatpush1.msra.mxu0 0.0
      %4760 = vmatprep.mubr.f32.mxu0 0.0
      %4761 = vmatmul.mubr.f32.gmra.mrb[0].mxu0 %v4688
      %v4762 = vpop.f32.mrb[0].mxu0
      %v4763 = vadd.f32 0.0, %v4762
      %v4764 = vpop.f32.mrb[0].mxu0
      %4765 = vmatprep.mubr.f32.mxu0 0.0
      %4766 = vmatmul.mubr.f32.gmra.mrb[0].mxu0 %v4693
      %v4767 = vpop.f32.mrb[0].mxu0
      %v4768 = vadd.f32 0.0, %v4767
      %v4769 = vpop.f32.mrb[0].mxu0
      %4770 = vdwg.mxu0
      %v4771 = vmul.f32 %v4763, 0.022222223
      %v4772 = vmul.f32 %v4768, 0.022222223
      %v4773 = vadd.f32 %v4771, 1e-05
      %v4774 = vadd.f32 %v4772, 1e-05
      %v4775 = vrsqrt.pop %v4773
      %v4776 = vrsqrt.pop %v4774
      %4778 = vset.pattern.permute.xlu0 0
      %4779 = vperm.xlu0 %4778, %v4279
      %v4780 = vpop.permute.xlu0 %4779
      %4783 = vset.pattern.permute.xlu0 0
      %4784 = vperm.xlu0 %4783, %v4280
      %v4785 = vpop.permute.xlu0 %4784
      %v4787 = vmul.f32 %v4775, %v4780
      %v4788 = vmul.f32 %v4776, %v4785
      %v4790 = vsel %vm1352, %v4787, 0
      %v4793 = vsel %vm1352, %v4788, 0
      %4795 = vmatprep.subr.mxu0 0.0
      %4796 = vmatpush1.msra.mxu0 %v2440
      %4797 = vmatprep.subr.mxu0 0.0
      %4798 = vmatpush1.msra.mxu0 0.0
      %4799 = vmatprep.subr.mxu0 0.0
      %4800 = vmatpush1.msra.mxu0 0.0
      %4801 = vmatprep.subr.mxu0 0.0
      %4802 = vmatpush1.msra.mxu0 0.0
      %4803 = vmatprep.subr.mxu0 0.0
      %4804 = vmatpush1.msra.mxu0 0.0
      %4805 = vmatprep.subr.mxu0 0.0
      %4806 = vmatpush1.msra.mxu0 0.0
      %4807 = vmatprep.subr.mxu0 0.0
      %4808 = vmatpush1.msra.mxu0 0.0
      %4809 = vmatprep.subr.mxu0 0.0
      %4810 = vmatpush1.msra.mxu0 0.0
      %4811 = vmatprep.subr.mxu0 0.0
      %4812 = vmatpush1.msra.mxu0 0.0
      %4813 = vmatprep.subr.mxu0 0.0
      %4814 = vmatpush1.msra.mxu0 0.0
      %4815 = vmatprep.subr.mxu0 0.0
      %4816 = vmatpush1.msra.mxu0 0.0
      %4817 = vmatprep.subr.mxu0 0.0
      %4818 = vmatpush1.msra.mxu0 0.0
      %4819 = vmatprep.subr.mxu0 0.0
      %4820 = vmatpush1.msra.mxu0 0.0
      %4821 = vmatprep.subr.mxu0 0.0
      %4822 = vmatpush1.msra.mxu0 0.0
      %4823 = vmatprep.subr.mxu0 0.0
      %4824 = vmatpush1.msra.mxu0 0.0
      %4825 = vmatprep.subr.mxu0 0.0
      %4826 = vmatpush1.msra.mxu0 0.0
      %4827 = vmatprep.subr.mxu0 0.0
      %4828 = vmatpush1.msra.mxu0 0.0
      %4829 = vmatprep.subr.mxu0 0.0
      %4830 = vmatpush1.msra.mxu0 0.0
      %4831 = vmatprep.subr.mxu0 0.0
      %4832 = vmatpush1.msra.mxu0 0.0
      %4833 = vmatprep.subr.mxu0 0.0
      %4834 = vmatpush1.msra.mxu0 0.0
      %4835 = vmatprep.subr.mxu0 0.0
      %4836 = vmatpush1.msra.mxu0 0.0
      %4837 = vmatprep.subr.mxu0 0.0
      %4838 = vmatpush1.msra.mxu0 0.0
      %4839 = vmatprep.subr.mxu0 0.0
      %4840 = vmatpush1.msra.mxu0 0.0
      %4841 = vmatprep.subr.mxu0 0.0
      %4842 = vmatpush1.msra.mxu0 0.0
      %4843 = vmatprep.subr.mxu0 0.0
      %4844 = vmatpush1.msra.mxu0 0.0
      %4845 = vmatprep.subr.mxu0 0.0
      %4846 = vmatpush1.msra.mxu0 0.0
      %4847 = vmatprep.subr.mxu0 0.0
      %4848 = vmatpush1.msra.mxu0 0.0
      %4849 = vmatprep.subr.mxu0 0.0
      %4850 = vmatpush1.msra.mxu0 0.0
      %4851 = vmatprep.subr.mxu0 0.0
      %4852 = vmatpush1.msra.mxu0 0.0
      %4853 = vmatprep.subr.mxu0 0.0
      %4854 = vmatpush1.msra.mxu0 0.0
      %4855 = vmatprep.subr.mxu0 0.0
      %4856 = vmatpush1.msra.mxu0 0.0
      %4857 = vmatprep.subr.mxu0 0.0
      %4858 = vmatpush1.msra.mxu0 0.0
      %4859 = vmatprep.mubr.f32.mxu0 0.0
      %4860 = vmatmul.mubr.f32.gmra.mrb[0].mxu0 %v4790
      %v4861 = vpop.f32.mrb[0].mxu0
      %v4862 = vadd.f32 0.0, %v4861
      %v4863 = vpop.f32.mrb[0].mxu0
      %4864 = vmatprep.mubr.f32.mxu0 0.0
      %4865 = vmatmul.mubr.f32.gmra.mrb[0].mxu0 %v4793
      %v4866 = vpop.f32.mrb[0].mxu0
      %v4867 = vadd.f32 0.0, %v4866
      %v4868 = vpop.f32.mrb[0].mxu0
      %4869 = vdwg.mxu0
      %4870 = vmatprep.subr.mxu0 0.0
      %4871 = vmatpush1.msra.mxu0 %v4862
      %4872 = vmatprep.subr.mxu0 0.0
      %4873 = vmatpush1.msra.mxu0 %v4867
      %4874 = vmatprep.subr.mxu0 0.0
      %4875 = vmatpush1.msra.mxu0 0.0
      %4876 = vmatprep.subr.mxu0 0.0
      %4877 = vmatpush1.msra.mxu0 0.0
      %4878 = vmatprep.subr.mxu0 0.0
      %4879 = vmatpush1.msra.mxu0 0.0
      %4880 = vmatprep.subr.mxu0 0.0
      %4881 = vmatpush1.msra.mxu0 0.0
      %4882 = vmatprep.subr.mxu0 0.0
      %4883 = vmatpush1.msra.mxu0 0.0
      %4884 = vmatprep.subr.mxu0 0.0
      %4885 = vmatpush1.msra.mxu0 0.0
      %4886 = vmatprep.subr.mxu0 0.0
      %4887 = vmatpush1.msra.mxu0 0.0
      %4888 = vmatprep.subr.mxu0 0.0
      %4889 = vmatpush1.msra.mxu0 0.0
      %4890 = vmatprep.subr.mxu0 0.0
      %4891 = vmatpush1.msra.mxu0 0.0
      %4892 = vmatprep.subr.mxu0 0.0
      %4893 = vmatpush1.msra.mxu0 0.0
      %4894 = vmatprep.subr.mxu0 0.0
      %4895 = vmatpush1.msra.mxu0 0.0
      %4896 = vmatprep.subr.mxu0 0.0
      %4897 = vmatpush1.msra.mxu0 0.0
      %4898 = vmatprep.subr.mxu0 0.0
      %4899 = vmatpush1.msra.mxu0 0.0
      %4900 = vmatprep.subr.mxu0 0.0
      %4901 = vmatpush1.msra.mxu0 0.0
      %4902 = vmatprep.subr.mxu0 0.0
      %4903 = vmatpush1.msra.mxu0 0.0
      %4904 = vmatprep.subr.mxu0 0.0
      %4905 = vmatpush1.msra.mxu0 0.0
      %4906 = vmatprep.subr.mxu0 0.0
      %4907 = vmatpush1.msra.mxu0 0.0
      %4908 = vmatprep.subr.mxu0 0.0
      %4909 = vmatpush1.msra.mxu0 0.0
      %4910 = vmatprep.subr.mxu0 0.0
      %4911 = vmatpush1.msra.mxu0 0.0
      %4912 = vmatprep.subr.mxu0 0.0
      %4913 = vmatpush1.msra.mxu0 0.0
      %4914 = vmatprep.subr.mxu0 0.0
      %4915 = vmatpush1.msra.mxu0 0.0
      %4916 = vmatprep.subr.mxu0 0.0
      %4917 = vmatpush1.msra.mxu0 0.0
      %4918 = vmatprep.subr.mxu0 0.0
      %4919 = vmatpush1.msra.mxu0 0.0
      %4920 = vmatprep.subr.mxu0 0.0
      %4921 = vmatpush1.msra.mxu0 0.0
      %4922 = vmatprep.subr.mxu0 0.0
      %4923 = vmatpush1.msra.mxu0 0.0
      %4924 = vmatprep.subr.mxu0 0.0
      %4925 = vmatpush1.msra.mxu0 0.0
      %4926 = vmatprep.subr.mxu0 0.0
      %4927 = vmatpush1.msra.mxu0 0.0
      %4928 = vmatprep.subr.mxu0 0.0
      %4929 = vmatpush1.msra.mxu0 0.0
      %4930 = vmatprep.subr.mxu0 0.0
      %4931 = vmatpush1.msra.mxu0 0.0
      %4932 = vmatprep.subr.mxu0 0.0
      %4933 = vmatpush1.msra.mxu0 0.0
      %4934 = vmatprep.mubr.f32.mxu0 0.0
      %4935 = vmatmul.mubr.f32.gmra.mrb[0].mxu0 %v2692
      %v4936 = vpop.f32.mrb[0].mxu0
      %v4937 = vadd.f32 0.0, %v4936
      %v4938 = vpop.f32.mrb[0].mxu0
      %4939 = vmatprep.mubr.f32.mxu0 0.0
      %4940 = vmatmul.mubr.f32.gmra.mrb[0].mxu0 %v2695
      %v4941 = vpop.f32.mrb[0].mxu0
      %v4942 = vadd.f32 0.0, %v4941
      %v4943 = vpop.f32.mrb[0].mxu0
      %4944 = vmatprep.mubr.f32.mxu0 0.0
      %4945 = vmatmul.mubr.f32.gmra.mrb[0].mxu0 %v2698
      %v4946 = vpop.f32.mrb[0].mxu0
      %v4947 = vadd.f32 0.0, %v4946
      %v4948 = vpop.f32.mrb[0].mxu0
      %4949 = vmatprep.mubr.f32.mxu0 0.0
      %4950 = vmatmul.mubr.f32.gmra.mrb[0].mxu0 %v2701
      %v4951 = vpop.f32.mrb[0].mxu0
      %v4952 = vadd.f32 0.0, %v4951
      %v4953 = vpop.f32.mrb[0].mxu0
      %4954 = vmatprep.mubr.f32.mxu0 0.0
      %4955 = vmatmul.mubr.f32.gmra.mrb[0].mxu0 %v2704
      %v4956 = vpop.f32.mrb[0].mxu0
      %v4957 = vadd.f32 0.0, %v4956
      %v4958 = vpop.f32.mrb[0].mxu0
      %4959 = vmatprep.mubr.f32.mxu0 0.0
      %4960 = vmatmul.mubr.f32.gmra.mrb[0].mxu0 %v2707
      %v4961 = vpop.f32.mrb[0].mxu0
      %v4962 = vadd.f32 0.0, %v4961
      %v4963 = vpop.f32.mrb[0].mxu0
      %4964 = vdwg.mxu0
      %v4965 = vmul.f32 %v4609, %v4937
      %v4966 = vmul.f32 %v4610, %v4942
      %v4967 = vmul.f32 %v4611, %v4947
      %v4968 = vmul.f32 %v4612, %v4952
      %v4969 = vmul.f32 %v4613, %v4957
      %v4970 = vmul.f32 %v4614, %v4962
      %4972 = vset.pattern.permute.xlu0 0
      %4973 = vperm.xlu0 %4972, %v4272
      %v4974 = vpop.permute.xlu0 %4973
      %4977 = vset.pattern.permute.xlu0 0
      %4978 = vperm.xlu0 %4977, %v4273
      %v4979 = vpop.permute.xlu0 %4978
      %4982 = vset.pattern.permute.xlu0 0
      %4983 = vperm.xlu0 %4982, %v4274
      %v4984 = vpop.permute.xlu0 %4983
      %4987 = vset.pattern.permute.xlu0 0
      %4988 = vperm.xlu0 %4987, %v4275
      %v4989 = vpop.permute.xlu0 %4988
      %4992 = vset.pattern.permute.xlu0 0
      %4993 = vperm.xlu0 %4992, %v4276
      %v4994 = vpop.permute.xlu0 %4993
      %4997 = vset.pattern.permute.xlu0 0
      %4998 = vperm.xlu0 %4997, %v4277
      %v4999 = vpop.permute.xlu0 %4998
      %v5001 = vadd.f32 %v4965, %v4974
      %v5002 = vadd.f32 %v4966, %v4979
      %v5003 = vadd.f32 %v4967, %v4984
      %v5004 = vadd.f32 %v4968, %v4989
      %v5005 = vadd.f32 %v4969, %v4994
      %v5006 = vadd.f32 %v4970, %v4999
      %vm5007 = vcmp.ge.f32.partialorder %v5001, 0.0
      %vm5008 = vcmp.ge.f32.partialorder %v5002, 0.0
      %vm5009 = vcmp.ge.f32.partialorder %v5003, 0.0
      %vm5010 = vcmp.ge.f32.partialorder %v5004, 0.0
      %vm5011 = vcmp.ge.f32.partialorder %v5005, 0.0
      %vm5012 = vcmp.ge.f32.partialorder %v5006, 0.0
      %5013 = vset.pattern.permute.xlu0 1
      %5014 = vperm.xlu0 %5013, %v4272
      %v5015 = vpop.permute.xlu0 %5014
      %5017 = vset.pattern.permute.xlu0 1
      %5018 = vperm.xlu0 %5017, %v4273
      %v5019 = vpop.permute.xlu0 %5018
      %5021 = vset.pattern.permute.xlu0 1
      %5022 = vperm.xlu0 %5021, %v4274
      %v5023 = vpop.permute.xlu0 %5022
      %5025 = vset.pattern.permute.xlu0 1
      %5026 = vperm.xlu0 %5025, %v4275
      %v5027 = vpop.permute.xlu0 %5026
      %5029 = vset.pattern.permute.xlu0 1
      %5030 = vperm.xlu0 %5029, %v4276
      %v5031 = vpop.permute.xlu0 %5030
      %5033 = vset.pattern.permute.xlu0 1
      %5034 = vperm.xlu0 %5033, %v4277
      %v5035 = vpop.permute.xlu0 %5034
      %v5037 = vmul.f32 %v5015, %v5001
      %v5038 = vmul.f32 %v5019, %v5002
      %v5039 = vmul.f32 %v5023, %v5003
      %v5040 = vmul.f32 %v5027, %v5004
      %v5041 = vmul.f32 %v5031, %v5005
      %v5042 = vmul.f32 %v5035, %v5006
      %v5043 = vsel %vm5007, %v5001, %v5037
      %v5044 = vsel %vm5008, %v5002, %v5038
      %v5045 = vsel %vm5009, %v5003, %v5039
      %v5046 = vsel %vm5010, %v5004, %v5040
      %v5047 = vsel %vm5011, %v5005, %v5041
      %v5048 = vsel %vm5012, %v5006, %v5042
      %v5049 = vmul.f32 %v5043, %v3250
      %v5050 = vmul.f32 %v5044, %v3250
      %v5051 = vmul.f32 %v5045, %v3250
      %v5052 = vmul.f32 %v5046, %v3250
      %v5053 = vmul.f32 %v5047, %v3250
      %v5054 = vmul.f32 %v5048, %v3250
      %v5055 = vpack.c.bf16 %v5050, %v5049
      %v5056 = vpack.c.bf16 %v5052, %v5051
      %v5057 = vpack.c.bf16 %v5054, %v5053
      %v5058 = vld [vmem:[%s6] sm:$0xf]
      %v5059 = vld [vmem:[%s6 + $0x4] sm:$0xf]
      %v5060 = vld [vmem:[%s6 + $0x8] sm:$0xf]
      %v5061 = vld [vmem:[%s6 + $0xc] sm:$0xf]
      %v5062 = vld [vmem:[%s6 + $0x10] sm:$0xf]
      %v5063 = vld [vmem:[%s6 + $0x14] sm:$0xf]
      %v5064 = vld [vmem:[%s6 + $0x18] sm:$0xf]
      %v5065 = vld [vmem:[%s6 + $0x1c] sm:$0xf]
      %v5066 = vld [vmem:[%s6 + $0x20] sm:$0xf]
      %v5067 = vld [vmem:[%s6 + $0x24] sm:$0xf]
      %v5068 = vld [vmem:[%s6 + $0x28] sm:$0xf]
      %v5069 = vld [vmem:[%s6 + $0x2c] sm:$0xf]
      %v5070 = vld [vmem:[%s6 + $0x30] sm:$0xf]
      %v5071 = vld [vmem:[%s6 + $0x34] sm:$0xf]
      %s5072 = scalar_lea.vmem %s6, 56
      %v5073 = vld [vmem:[%s5072] sm:$0xf]
      %v5074 = vld [vmem:[%s5072 + $0x4] sm:$0xf]
      %v5075 = vld [vmem:[%s5072 + $0x8] sm:$0xf]
      %v5076 = vld [vmem:[%s5072 + $0xc] sm:$0xf]
      %v5077 = vld [vmem:[%s5072 + $0x10] sm:$0xf]
      %v5078 = vld [vmem:[%s5072 + $0x14] sm:$0xf]
      %v5079 = vld [vmem:[%s5072 + $0x18] sm:$0xf]
      %v5080 = vld [vmem:[%s5072 + $0x1c] sm:$0xf]
      %v5081 = vld [vmem:[%s5072 + $0x20] sm:$0xf]
      %v5082 = vld [vmem:[%s5072 + $0x24] sm:$0xf]
      %v5083 = vld [vmem:[%s5072 + $0x28] sm:$0xf]
      %v5084 = vld [vmem:[%s5072 + $0x2c] sm:$0xf]
      %v5085 = vld [vmem:[%s5072 + $0x30] sm:$0xf]
      %v5086 = vld [vmem:[%s5072 + $0x34] sm:$0xf]
      %v5101 = vunpack.c.l.b16 %v5073
      %v5102 = vunpack.c.l.b16 %v5074
      %v5103 = vunpack.c.l.b16 %v5075
      %v5104 = vunpack.c.l.b16 %v5076
      %v5105 = vunpack.c.l.b16 %v5077
      %v5106 = vunpack.c.l.b16 %v5078
      %v5107 = vunpack.c.l.b16 %v5079
      %v5108 = vunpack.c.l.b16 %v5080
      %v5109 = vunpack.c.l.b16 %v5081
      %v5110 = vunpack.c.l.b16 %v5082
      %v5111 = vunpack.c.l.b16 %v5083
      %v5112 = vunpack.c.l.b16 %v5084
      %v5113 = vunpack.c.l.b16 %v5085
      %v5114 = vunpack.c.l.b16 %v5086
      %v5115 = vpack.c.b16 %v5102, %v5101
      %v5116 = vpack.c.b16 %v5104, %v5103
      %v5117 = vpack.c.b16 %v5106, %v5105
      %v5118 = vpack.c.b16 %v5108, %v5107
      %v5119 = vpack.c.b16 %v5110, %v5109
      %v5120 = vpack.c.b16 %v5112, %v5111
      %v5121 = vpack.c.b16 %v5114, %v5113
      %vm5122 = vcmask 785408
      %v5124 = vsel %vm5122, %v5115, 0
      %v5127 = vsel %vm5122, %v5116, 0
      %v5130 = vsel %vm5122, %v5117, 0
      %v5133 = vsel %vm5122, %v5118, 0
      %v5136 = vsel %vm5122, %v5119, 0
      %v5139 = vsel %vm5122, %v5120, 0
      %v5142 = vsel %vm5122, %v5121, 0
      %5144 = vmatprep.subr.bf16.mxu0 0
      %5145 = vmatpush1.bf16.msra.mxu0 %v5055
      %5146 = vmatprep.subr.bf16.mxu0 0
      %5147 = vmatpush1.bf16.msra.mxu0 %v5056
      %5148 = vmatprep.subr.bf16.mxu0 0
      %5149 = vmatpush1.bf16.msra.mxu0 %v5057
      %5150 = vmatprep.subr.bf16.mxu0 0
      %5151 = vmatpush1.bf16.msra.mxu0 %v3258
      %5152 = vmatprep.subr.bf16.mxu0 0
      %5153 = vmatpush1.bf16.msra.mxu0 %v3259
      %5154 = vmatprep.subr.bf16.mxu0 0
      %5155 = vmatpush1.bf16.msra.mxu0 %v3260
      %5156 = vmatprep.subr.bf16.mxu0 0
      %5157 = vmatpush1.bf16.msra.mxu0 0
      %5158 = vmatprep.subr.bf16.mxu0 0
      %5159 = vmatpush1.bf16.msra.mxu0 0
      %5160 = vmatprep.subr.bf16.mxu0 0
      %5161 = vmatpush1.bf16.msra.mxu0 0
      %5162 = vmatprep.subr.bf16.mxu0 0
      %5163 = vmatpush1.bf16.msra.mxu0 0
      %5164 = vmatprep.subr.bf16.mxu0 0
      %5165 = vmatpush1.bf16.msra.mxu0 0
      %5166 = vmatprep.subr.bf16.mxu0 0
      %5167 = vmatpush1.bf16.msra.mxu0 0
      %5168 = vmatprep.subr.bf16.mxu0 0
      %5169 = vmatpush1.bf16.msra.mxu0 0
      %5170 = vmatprep.subr.bf16.mxu0 0
      %5171 = vmatpush1.bf16.msra.mxu0 0
      %5172 = vmatprep.subr.bf16.mxu0 0
      %5173 = vmatpush1.bf16.msra.mxu0 0
      %5174 = vmatprep.subr.bf16.mxu0 0
      %5175 = vmatpush1.bf16.msra.mxu0 0
      %5176 = vmatprep.mubr.bf16.mxu0 0
      %5177 = vmatmul.mubr.bf16.gmra.mrb[0].mxu0 %v5124
      %v5178 = vpop.f32.mrb[0].mxu0
      %v5179 = vadd.f32 0.0, %v5178
      %v5180 = vpop.f32.mrb[0].mxu0
      %v5181 = vpop.f32.mrb[0].mxu0
      %v5182 = vadd.f32 0.0, %v5181
      %v5183 = vpop.f32.mrb[0].mxu0
      %5184 = vmatprep.mubr.bf16.mxu0 0
      %5185 = vmatmul.mubr.bf16.gmra.mrb[0].mxu0 %v5127
      %v5186 = vpop.f32.mrb[0].mxu0
      %v5187 = vadd.f32 0.0, %v5186
      %v5188 = vpop.f32.mrb[0].mxu0
      %v5189 = vpop.f32.mrb[0].mxu0
      %v5190 = vadd.f32 0.0, %v5189
      %v5191 = vpop.f32.mrb[0].mxu0
      %5192 = vmatprep.mubr.bf16.mxu0 0
      %5193 = vmatmul.mubr.bf16.gmra.mrb[0].mxu0 %v5130
      %v5194 = vpop.f32.mrb[0].mxu0
      %v5195 = vadd.f32 0.0, %v5194
      %v5196 = vpop.f32.mrb[0].mxu0
      %v5197 = vpop.f32.mrb[0].mxu0
      %v5198 = vadd.f32 0.0, %v5197
      %v5199 = vpop.f32.mrb[0].mxu0
      %5200 = vmatprep.mubr.bf16.mxu0 0
      %5201 = vmatmul.mubr.bf16.gmra.mrb[0].mxu0 %v5133
      %v5202 = vpop.f32.mrb[0].mxu0
      %v5203 = vadd.f32 0.0, %v5202
      %v5204 = vpop.f32.mrb[0].mxu0
      %v5205 = vpop.f32.mrb[0].mxu0
      %v5206 = vadd.f32 0.0, %v5205
      %v5207 = vpop.f32.mrb[0].mxu0
      %5208 = vmatprep.mubr.bf16.mxu0 0
      %5209 = vmatmul.mubr.bf16.gmra.mrb[0].mxu0 %v5136
      %v5210 = vpop.f32.mrb[0].mxu0
      %v5211 = vadd.f32 0.0, %v5210
      %v5212 = vpop.f32.mrb[0].mxu0
      %v5213 = vpop.f32.mrb[0].mxu0
      %v5214 = vadd.f32 0.0, %v5213
      %v5215 = vpop.f32.mrb[0].mxu0
      %5216 = vmatprep.mubr.bf16.mxu0 0
      %5217 = vmatmul.mubr.bf16.gmra.mrb[0].mxu0 %v5139
      %v5218 = vpop.f32.mrb[0].mxu0
      %v5219 = vadd.f32 0.0, %v5218
      %v5220 = vpop.f32.mrb[0].mxu0
      %v5221 = vpop.f32.mrb[0].mxu0
      %v5222 = vadd.f32 0.0, %v5221
      %v5223 = vpop.f32.mrb[0].mxu0
      %5224 = vmatprep.mubr.bf16.mxu0 0
      %5225 = vmatmul.mubr.bf16.gmra.mrb[0].mxu0 %v5142
      %v5226 = vpop.f32.mrb[0].mxu0
      %v5227 = vadd.f32 0.0, %v5226
      %v5228 = vpop.f32.mrb[0].mxu0
      %v5229 = vpop.f32.mrb[0].mxu0
      %v5230 = vadd.f32 0.0, %v5229
      %v5231 = vpop.f32.mrb[0].mxu0
      %5232 = vdwg.mxu0
      %5233 = vrot.lane.b32.xlu0 %v5179, 1
      %v5234 = vpop.permute.xlu0 %5233
      %5235 = vrot.lane.b32.xlu0 %v5182, 1
      %v5236 = vpop.permute.xlu0 %5235
      %5237 = vrot.lane.b32.xlu0 %v5187, 1
      %v5238 = vpop.permute.xlu0 %5237
      %5239 = vrot.lane.b32.xlu0 %v5190, 1
      %v5240 = vpop.permute.xlu0 %5239
      %5241 = vrot.lane.b32.xlu0 %v5195, 1
      %v5242 = vpop.permute.xlu0 %5241
      %5243 = vrot.lane.b32.xlu0 %v5198, 1
      %v5244 = vpop.permute.xlu0 %5243
      %5245 = vrot.lane.b32.xlu0 %v5203, 1
      %v5246 = vpop.permute.xlu0 %5245
      %5247 = vrot.lane.b32.xlu0 %v5206, 1
      %v5248 = vpop.permute.xlu0 %5247
      %5249 = vrot.lane.b32.xlu0 %v5211, 1
      %v5250 = vpop.permute.xlu0 %5249
      %5251 = vrot.lane.b32.xlu0 %v5214, 1
      %v5252 = vpop.permute.xlu0 %5251
      %5253 = vrot.lane.b32.xlu0 %v5219, 1
      %v5254 = vpop.permute.xlu0 %5253
      %5255 = vrot.lane.b32.xlu0 %v5222, 1
      %v5256 = vpop.permute.xlu0 %5255
      %5257 = vrot.lane.b32.xlu0 %v5227, 1
      %v5258 = vpop.permute.xlu0 %5257
      %5259 = vrot.lane.b32.xlu0 %v5230, 1
      %v5260 = vpop.permute.xlu0 %5259
      %v5275 = vunpack.c.l.b16 %v5058
      %v5276 = vunpack.c.l.b16 %v5059
      %v5277 = vunpack.c.l.b16 %v5060
      %v5278 = vunpack.c.l.b16 %v5061
      %v5279 = vunpack.c.l.b16 %v5062
      %v5280 = vunpack.c.l.b16 %v5063
      %v5281 = vunpack.c.l.b16 %v5064
      %v5282 = vunpack.c.l.b16 %v5065
      %v5283 = vunpack.c.l.b16 %v5066
      %v5284 = vunpack.c.l.b16 %v5067
      %v5285 = vunpack.c.l.b16 %v5068
      %v5286 = vunpack.c.l.b16 %v5069
      %v5287 = vunpack.c.l.b16 %v5070
      %v5288 = vunpack.c.l.b16 %v5071
      %v5289 = vpack.c.b16 %v5276, %v5275
      %v5290 = vpack.c.b16 %v5278, %v5277
      %v5291 = vpack.c.b16 %v5280, %v5279
      %v5292 = vpack.c.b16 %v5282, %v5281
      %v5293 = vpack.c.b16 %v5284, %v5283
      %v5294 = vpack.c.b16 %v5286, %v5285
      %v5295 = vpack.c.b16 %v5288, %v5287
      %v5297 = vsel %vm5122, %v5289, 0
      %v5300 = vsel %vm5122, %v5290, 0
      %v5303 = vsel %vm5122, %v5291, 0
      %v5306 = vsel %vm5122, %v5292, 0
      %v5309 = vsel %vm5122, %v5293, 0
      %v5312 = vsel %vm5122, %v5294, 0
      %v5315 = vsel %vm5122, %v5295, 0
      %5317 = vmatprep.subr.bf16.mxu0 0
      %5318 = vmatpush1.bf16.msra.mxu0 %v5055
      %5319 = vmatprep.subr.bf16.mxu0 0
      %5320 = vmatpush1.bf16.msra.mxu0 %v5056
      %5321 = vmatprep.subr.bf16.mxu0 0
      %5322 = vmatpush1.bf16.msra.mxu0 %v5057
      %5323 = vmatprep.subr.bf16.mxu0 0
      %5324 = vmatpush1.bf16.msra.mxu0 %v3258
      %5325 = vmatprep.subr.bf16.mxu0 0
      %5326 = vmatpush1.bf16.msra.mxu0 %v3259
      %5327 = vmatprep.subr.bf16.mxu0 0
      %5328 = vmatpush1.bf16.msra.mxu0 %v3260
      %5329 = vmatprep.subr.bf16.mxu0 0
      %5330 = vmatpush1.bf16.msra.mxu0 0
      %5331 = vmatprep.subr.bf16.mxu0 0
      %5332 = vmatpush1.bf16.msra.mxu0 0
      %5333 = vmatprep.subr.bf16.mxu0 0
      %5334 = vmatpush1.bf16.msra.mxu0 0
      %5335 = vmatprep.subr.bf16.mxu0 0
      %5336 = vmatpush1.bf16.msra.mxu0 0
      %5337 = vmatprep.subr.bf16.mxu0 0
      %5338 = vmatpush1.bf16.msra.mxu0 0
      %5339 = vmatprep.subr.bf16.mxu0 0
      %5340 = vmatpush1.bf16.msra.mxu0 0
      %5341 = vmatprep.subr.bf16.mxu0 0
      %5342 = vmatpush1.bf16.msra.mxu0 0
      %5343 = vmatprep.subr.bf16.mxu0 0
      %5344 = vmatpush1.bf16.msra.mxu0 0
      %5345 = vmatprep.subr.bf16.mxu0 0
      %5346 = vmatpush1.bf16.msra.mxu0 0
      %5347 = vmatprep.subr.bf16.mxu0 0
      %5348 = vmatpush1.bf16.msra.mxu0 0
      %5349 = vmatprep.mubr.bf16.mxu0 0
      %5350 = vmatmul.mubr.bf16.gmra.mrb[0].mxu0 %v5297
      %v5351 = vpop.f32.mrb[0].mxu0
      %v5352 = vadd.f32 %v5234, %v5351
      %v5353 = vpop.f32.mrb[0].mxu0
      %v5354 = vpop.f32.mrb[0].mxu0
      %v5355 = vadd.f32 %v5236, %v5354
      %v5356 = vpop.f32.mrb[0].mxu0
      %5357 = vmatprep.mubr.bf16.mxu0 0
      %5358 = vmatmul.mubr.bf16.gmra.mrb[0].mxu0 %v5300
      %v5359 = vpop.f32.mrb[0].mxu0
      %v5360 = vadd.f32 %v5238, %v5359
      %v5361 = vpop.f32.mrb[0].mxu0
      %v5362 = vpop.f32.mrb[0].mxu0
      %v5363 = vadd.f32 %v5240, %v5362
      %v5364 = vpop.f32.mrb[0].mxu0
      %5365 = vmatprep.mubr.bf16.mxu0 0
      %5366 = vmatmul.mubr.bf16.gmra.mrb[0].mxu0 %v5303
      %v5367 = vpop.f32.mrb[0].mxu0
      %v5368 = vadd.f32 %v5242, %v5367
      %v5369 = vpop.f32.mrb[0].mxu0
      %v5370 = vpop.f32.mrb[0].mxu0
      %v5371 = vadd.f32 %v5244, %v5370
      %v5372 = vpop.f32.mrb[0].mxu0
      %5373 = vmatprep.mubr.bf16.mxu0 0
      %5374 = vmatmul.mubr.bf16.gmra.mrb[0].mxu0 %v5306
      %v5375 = vpop.f32.mrb[0].mxu0
      %v5376 = vadd.f32 %v5246, %v5375
      %v5377 = vpop.f32.mrb[0].mxu0
      %v5378 = vpop.f32.mrb[0].mxu0
      %v5379 = vadd.f32 %v5248, %v5378
      %v5380 = vpop.f32.mrb[0].mxu0
      %5381 = vmatprep.mubr.bf16.mxu0 0
      %5382 = vmatmul.mubr.bf16.gmra.mrb[0].mxu0 %v5309
      %v5383 = vpop.f32.mrb[0].mxu0
      %v5384 = vadd.f32 %v5250, %v5383
      %v5385 = vpop.f32.mrb[0].mxu0
      %v5386 = vpop.f32.mrb[0].mxu0
      %v5387 = vadd.f32 %v5252, %v5386
      %v5388 = vpop.f32.mrb[0].mxu0
      %5389 = vmatprep.mubr.bf16.mxu0 0
      %5390 = vmatmul.mubr.bf16.gmra.mrb[0].mxu0 %v5312
      %v5391 = vpop.f32.mrb[0].mxu0
      %v5392 = vadd.f32 %v5254, %v5391
      %v5393 = vpop.f32.mrb[0].mxu0
      %v5394 = vpop.f32.mrb[0].mxu0
      %v5395 = vadd.f32 %v5256, %v5394
      %v5396 = vpop.f32.mrb[0].mxu0
      %5397 = vmatprep.mubr.bf16.mxu0 0
      %5398 = vmatmul.mubr.bf16.gmra.mrb[0].mxu0 %v5315
      %v5399 = vpop.f32.mrb[0].mxu0
      %v5400 = vadd.f32 %v5258, %v5399
      %v5401 = vpop.f32.mrb[0].mxu0
      %v5402 = vpop.f32.mrb[0].mxu0
      %v5403 = vadd.f32 %v5260, %v5402
      %v5404 = vpop.f32.mrb[0].mxu0
      %5405 = vdwg.mxu0
      %s5406 = scalar_lea.vmem %s7, 448
      %v5407 = vld [vmem:[%s5406] sm:$0xff]
      %v5408 = vld [vmem:[%s5406 + $0x8] sm:$0xff]
      %v5409 = vld [vmem:[%s5406 + $0x10] sm:$0xff]
      %v5410 = vld [vmem:[%s5406 + $0x18] sm:$0xff]
      %v5411 = vld [vmem:[%s5406 + $0x20] sm:$0xff]
      %v5412 = vld [vmem:[%s5406 + $0x28] sm:$0xff]
      %v5413 = vld [vmem:[%s5406 + $0x30] sm:$0xff]
      %v5414 = vld [vmem:[%s5406 + $0x38] sm:$0xff]
      %v5415 = vld [vmem:[%s5406 + $0x40] sm:$0xff]
      %v5416 = vld [vmem:[%s5406 + $0x48] sm:$0xff]
      %v5417 = vld [vmem:[%s5406 + $0x50] sm:$0xff]
      %v5418 = vld [vmem:[%s5406 + $0x58] sm:$0xff]
      %v5419 = vld [vmem:[%s5406 + $0x60] sm:$0xff]
      %v5420 = vld [vmem:[%s5406 + $0x68] sm:$0xff]
      %s5421 = scalar_lea.vmem %s8, 64
      %v5422 = vld [vmem:[%s5421] sm:$0xff]
      %v5423 = vld [vmem:[%s5421 + $0x8] sm:$0xff]
      %5424 = vmatprep.subr.mxu0 0.0
      %5425 = vmatpush1.msra.mxu0 %v5352
      %5426 = vmatprep.subr.mxu0 0.0
      %5427 = vmatpush1.msra.mxu0 %v5355
      %5428 = vmatprep.subr.mxu0 0.0
      %5429 = vmatpush1.msra.mxu0 %v5360
      %5430 = vmatprep.subr.mxu0 0.0
      %5431 = vmatpush1.msra.mxu0 %v5363
      %5432 = vmatprep.subr.mxu0 0.0
      %5433 = vmatpush1.msra.mxu0 %v5368
      %5434 = vmatprep.subr.mxu0 0.0
      %5435 = vmatpush1.msra.mxu0 %v5371
      %5436 = vmatprep.subr.mxu0 0.0
      %5437 = vmatpush1.msra.mxu0 %v5376
      %5438 = vmatprep.subr.mxu0 0.0
      %5439 = vmatpush1.msra.mxu0 %v5379
      %5440 = vmatprep.subr.mxu0 0.0
      %5441 = vmatpush1.msra.mxu0 %v5384
      %5442 = vmatprep.subr.mxu0 0.0
      %5443 = vmatpush1.msra.mxu0 %v5387
      %5444 = vmatprep.subr.mxu0 0.0
      %5445 = vmatpush1.msra.mxu0 %v5392
      %5446 = vmatprep.subr.mxu0 0.0
      %5447 = vmatpush1.msra.mxu0 %v5395
      %5448 = vmatprep.subr.mxu0 0.0
      %5449 = vmatpush1.msra.mxu0 %v5400
      %5450 = vmatprep.subr.mxu0 0.0
      %5451 = vmatpush1.msra.mxu0 %v5403
      %5452 = vmatprep.subr.mxu0 0.0
      %5453 = vmatpush1.msra.mxu0 0.0
      %5454 = vmatprep.subr.mxu0 0.0
      %5455 = vmatpush1.msra.mxu0 0.0
      %5456 = vmatprep.subr.mxu0 0.0
      %5457 = vmatpush1.msra.mxu0 0.0
      %5458 = vmatprep.subr.mxu0 0.0
      %5459 = vmatpush1.msra.mxu0 0.0
      %5460 = vmatprep.subr.mxu0 0.0
      %5461 = vmatpush1.msra.mxu0 0.0
      %5462 = vmatprep.subr.mxu0 0.0
      %5463 = vmatpush1.msra.mxu0 0.0
      %5464 = vmatprep.subr.mxu0 0.0
      %5465 = vmatpush1.msra.mxu0 0.0
      %5466 = vmatprep.subr.mxu0 0.0
      %5467 = vmatpush1.msra.mxu0 0.0
      %5468 = vmatprep.subr.mxu0 0.0
      %5469 = vmatpush1.msra.mxu0 0.0
      %5470 = vmatprep.subr.mxu0 0.0
      %5471 = vmatpush1.msra.mxu0 0.0
      %5472 = vmatprep.subr.mxu0 0.0
      %5473 = vmatpush1.msra.mxu0 0.0
      %5474 = vmatprep.subr.mxu0 0.0
      %5475 = vmatpush1.msra.mxu0 0.0
      %5476 = vmatprep.subr.mxu0 0.0
      %5477 = vmatpush1.msra.mxu0 0.0
      %5478 = vmatprep.subr.mxu0 0.0
      %5479 = vmatpush1.msra.mxu0 0.0
      %5480 = vmatprep.subr.mxu0 0.0
      %5481 = vmatpush1.msra.mxu0 0.0
      %5482 = vmatprep.subr.mxu0 0.0
      %5483 = vmatpush1.msra.mxu0 0.0
      %5484 = vmatprep.subr.mxu0 0.0
      %5485 = vmatpush1.msra.mxu0 0.0
      %5486 = vmatprep.subr.mxu0 0.0
      %5487 = vmatpush1.msra.mxu0 0.0
      %5488 = vmatprep.mubr.f32.mxu0 0.0
      %5489 = vmatmul.mubr.f32.gmra.mrb[0].mxu0 %v1195
      %v5490 = vpop.f32.mrb[0].mxu0
      %v5491 = vadd.f32 0.0, %v5490
      %v5492 = vpop.f32.mrb[0].mxu0
      %5493 = vmatprep.mubr.f32.mxu0 0.0
      %5494 = vmatmul.mubr.f32.gmra.mrb[0].mxu0 %v1198
      %v5495 = vpop.f32.mrb[0].mxu0
      %v5496 = vadd.f32 0.0, %v5495
      %v5497 = vpop.f32.mrb[0].mxu0
      %5498 = vdwg.mxu0
      %5499 = vmatprep.subr.mxu0 0.0
      %5500 = vmatpush1.msra.mxu0 %v1160
      %5501 = vmatprep.subr.mxu0 0.0
      %5502 = vmatpush1.msra.mxu0 %v1161
      %5503 = vmatprep.subr.mxu0 0.0
      %5504 = vmatpush1.msra.mxu0 %v1162
      %5505 = vmatprep.subr.mxu0 0.0
      %5506 = vmatpush1.msra.mxu0 %v1163
      %5507 = vmatprep.subr.mxu0 0.0
      %5508 = vmatpush1.msra.mxu0 %v1164
      %5509 = vmatprep.subr.mxu0 0.0
      %5510 = vmatpush1.msra.mxu0 %v1165
      %5511 = vmatprep.subr.mxu0 0.0
      %5512 = vmatpush1.msra.mxu0 %v1166
      %5513 = vmatprep.subr.mxu0 0.0
      %5514 = vmatpush1.msra.mxu0 %v1167
      %5515 = vmatprep.subr.mxu0 0.0
      %5516 = vmatpush1.msra.mxu0 %v1168
      %5517 = vmatprep.subr.mxu0 0.0
      %5518 = vmatpush1.msra.mxu0 %v1169
      %5519 = vmatprep.subr.mxu0 0.0
      %5520 = vmatpush1.msra.mxu0 %v1170
      %5521 = vmatprep.subr.mxu0 0.0
      %5522 = vmatpush1.msra.mxu0 %v1171
      %5523 = vmatprep.subr.mxu0 0.0
      %5524 = vmatpush1.msra.mxu0 %v1172
      %5525 = vmatprep.subr.mxu0 0.0
      %5526 = vmatpush1.msra.mxu0 %v1173
      %5527 = vmatprep.subr.mxu0 0.0
      %5528 = vmatpush1.msra.mxu0 %v1174
      %5529 = vmatprep.subr.mxu0 0.0
      %5530 = vmatpush1.msra.mxu0 %v1175
      %5531 = vmatprep.subr.mxu0 0.0
      %5532 = vmatpush1.msra.mxu0 0.0
      %5533 = vmatprep.subr.mxu0 0.0
      %5534 = vmatpush1.msra.mxu0 0.0
      %5535 = vmatprep.subr.mxu0 0.0
      %5536 = vmatpush1.msra.mxu0 0.0
      %5537 = vmatprep.subr.mxu0 0.0
      %5538 = vmatpush1.msra.mxu0 0.0
      %5539 = vmatprep.subr.mxu0 0.0
      %5540 = vmatpush1.msra.mxu0 0.0
      %5541 = vmatprep.subr.mxu0 0.0
      %5542 = vmatpush1.msra.mxu0 0.0
      %5543 = vmatprep.subr.mxu0 0.0
      %5544 = vmatpush1.msra.mxu0 0.0
      %5545 = vmatprep.subr.mxu0 0.0
      %5546 = vmatpush1.msra.mxu0 0.0
      %5547 = vmatprep.subr.mxu0 0.0
      %5548 = vmatpush1.msra.mxu0 0.0
      %5549 = vmatprep.subr.mxu0 0.0
      %5550 = vmatpush1.msra.mxu0 0.0
      %5551 = vmatprep.subr.mxu0 0.0
      %5552 = vmatpush1.msra.mxu0 0.0
      %5553 = vmatprep.subr.mxu0 0.0
      %5554 = vmatpush1.msra.mxu0 0.0
      %5555 = vmatprep.subr.mxu0 0.0
      %5556 = vmatpush1.msra.mxu0 0.0
      %5557 = vmatprep.subr.mxu0 0.0
      %5558 = vmatpush1.msra.mxu0 0.0
      %5559 = vmatprep.subr.mxu0 0.0
      %5560 = vmatpush1.msra.mxu0 0.0
      %5561 = vmatprep.subr.mxu0 0.0
      %5562 = vmatpush1.msra.mxu0 0.0
      %5563 = vmatprep.mubr.f32.mxu0 0.0
      %5564 = vmatmul.mubr.f32.gmra.mrb[0].mxu0 %v5491
      %v5565 = vpop.f32.mrb[0].mxu0
      %v5566 = vadd.f32 0.0, %v5565
      %v5567 = vpop.f32.mrb[0].mxu0
      %5568 = vmatprep.mubr.f32.mxu0 0.0
      %5569 = vmatmul.mubr.f32.gmra.mrb[0].mxu0 %v5496
      %v5570 = vpop.f32.mrb[0].mxu0
      %v5571 = vadd.f32 0.0, %v5570
      %v5572 = vpop.f32.mrb[0].mxu0
      %5573 = vdwg.mxu0
      %v5574 = vmul.f32 %v5566, 0.008928572
      %v5575 = vmul.f32 %v5571, 0.008928572
      %v5577 = vsel %vm1352, %v5574, 0
      %v5580 = vsel %vm1352, %v5575, 0
      %5582 = vmatprep.subr.mxu0 0.0
      %5583 = vmatpush1.msra.mxu0 %v1176
      %5584 = vmatprep.subr.mxu0 0.0
      %5585 = vmatpush1.msra.mxu0 0.0
      %5586 = vmatprep.subr.mxu0 0.0
      %5587 = vmatpush1.msra.mxu0 0.0
      %5588 = vmatprep.subr.mxu0 0.0
      %5589 = vmatpush1.msra.mxu0 0.0
      %5590 = vmatprep.subr.mxu0 0.0
      %5591 = vmatpush1.msra.mxu0 0.0
      %5592 = vmatprep.subr.mxu0 0.0
      %5593 = vmatpush1.msra.mxu0 0.0
      %5594 = vmatprep.subr.mxu0 0.0
      %5595 = vmatpush1.msra.mxu0 0.0
      %5596 = vmatprep.subr.mxu0 0.0
      %5597 = vmatpush1.msra.mxu0 0.0
      %5598 = vmatprep.subr.mxu0 0.0
      %5599 = vmatpush1.msra.mxu0 0.0
      %5600 = vmatprep.subr.mxu0 0.0
      %5601 = vmatpush1.msra.mxu0 0.0
      %5602 = vmatprep.subr.mxu0 0.0
      %5603 = vmatpush1.msra.mxu0 0.0
      %5604 = vmatprep.subr.mxu0 0.0
      %5605 = vmatpush1.msra.mxu0 0.0
      %5606 = vmatprep.subr.mxu0 0.0
      %5607 = vmatpush1.msra.mxu0 0.0
      %5608 = vmatprep.subr.mxu0 0.0
      %5609 = vmatpush1.msra.mxu0 0.0
      %5610 = vmatprep.subr.mxu0 0.0
      %5611 = vmatpush1.msra.mxu0 0.0
      %5612 = vmatprep.subr.mxu0 0.0
      %5613 = vmatpush1.msra.mxu0 0.0
      %5614 = vmatprep.subr.mxu0 0.0
      %5615 = vmatpush1.msra.mxu0 0.0
      %5616 = vmatprep.subr.mxu0 0.0
      %5617 = vmatpush1.msra.mxu0 0.0
      %5618 = vmatprep.subr.mxu0 0.0
      %5619 = vmatpush1.msra.mxu0 0.0
      %5620 = vmatprep.subr.mxu0 0.0
      %5621 = vmatpush1.msra.mxu0 0.0
      %5622 = vmatprep.subr.mxu0 0.0
      %5623 = vmatpush1.msra.mxu0 0.0
      %5624 = vmatprep.subr.mxu0 0.0
      %5625 = vmatpush1.msra.mxu0 0.0
      %5626 = vmatprep.subr.mxu0 0.0
      %5627 = vmatpush1.msra.mxu0 0.0
      %5628 = vmatprep.subr.mxu0 0.0
      %5629 = vmatpush1.msra.mxu0 0.0
      %5630 = vmatprep.subr.mxu0 0.0
      %5631 = vmatpush1.msra.mxu0 0.0
      %5632 = vmatprep.subr.mxu0 0.0
      %5633 = vmatpush1.msra.mxu0 0.0
      %5634 = vmatprep.subr.mxu0 0.0
      %5635 = vmatpush1.msra.mxu0 0.0
      %5636 = vmatprep.subr.mxu0 0.0
      %5637 = vmatpush1.msra.mxu0 0.0
      %5638 = vmatprep.subr.mxu0 0.0
      %5639 = vmatpush1.msra.mxu0 0.0
      %5640 = vmatprep.subr.mxu0 0.0
      %5641 = vmatpush1.msra.mxu0 0.0
      %5642 = vmatprep.subr.mxu0 0.0
      %5643 = vmatpush1.msra.mxu0 0.0
      %5644 = vmatprep.subr.mxu0 0.0
      %5645 = vmatpush1.msra.mxu0 0.0
      %5646 = vmatprep.mubr.f32.mxu0 0.0
      %5647 = vmatmul.mubr.f32.gmra.mrb[0].mxu0 %v5577
      %v5648 = vpop.f32.mrb[0].mxu0
      %v5649 = vadd.f32 0.0, %v5648
      %v5650 = vpop.f32.mrb[0].mxu0
      %5651 = vmatprep.mubr.f32.mxu0 0.0
      %5652 = vmatmul.mubr.f32.gmra.mrb[0].mxu0 %v5580
      %v5653 = vpop.f32.mrb[0].mxu0
      %v5654 = vadd.f32 0.0, %v5653
      %v5655 = vpop.f32.mrb[0].mxu0
      %5656 = vdwg.mxu0
      %5657 = vmatprep.subr.mxu0 0.0
      %5658 = vmatpush1.msra.mxu0 %v5649
      %5659 = vmatprep.subr.mxu0 0.0
      %5660 = vmatpush1.msra.mxu0 %v5654
      %5661 = vmatprep.subr.mxu0 0.0
      %5662 = vmatpush1.msra.mxu0 0.0
      %5663 = vmatprep.subr.mxu0 0.0
      %5664 = vmatpush1.msra.mxu0 0.0
      %5665 = vmatprep.subr.mxu0 0.0
      %5666 = vmatpush1.msra.mxu0 0.0
      %5667 = vmatprep.subr.mxu0 0.0
      %5668 = vmatpush1.msra.mxu0 0.0
      %5669 = vmatprep.subr.mxu0 0.0
      %5670 = vmatpush1.msra.mxu0 0.0
      %5671 = vmatprep.subr.mxu0 0.0
      %5672 = vmatpush1.msra.mxu0 0.0
      %5673 = vmatprep.subr.mxu0 0.0
      %5674 = vmatpush1.msra.mxu0 0.0
      %5675 = vmatprep.subr.mxu0 0.0
      %5676 = vmatpush1.msra.mxu0 0.0
      %5677 = vmatprep.subr.mxu0 0.0
      %5678 = vmatpush1.msra.mxu0 0.0
      %5679 = vmatprep.subr.mxu0 0.0
      %5680 = vmatpush1.msra.mxu0 0.0
      %5681 = vmatprep.subr.mxu0 0.0
      %5682 = vmatpush1.msra.mxu0 0.0
      %5683 = vmatprep.subr.mxu0 0.0
      %5684 = vmatpush1.msra.mxu0 0.0
      %5685 = vmatprep.subr.mxu0 0.0
      %5686 = vmatpush1.msra.mxu0 0.0
      %5687 = vmatprep.subr.mxu0 0.0
      %5688 = vmatpush1.msra.mxu0 0.0
      %5689 = vmatprep.subr.mxu0 0.0
      %5690 = vmatpush1.msra.mxu0 0.0
      %5691 = vmatprep.subr.mxu0 0.0
      %5692 = vmatpush1.msra.mxu0 0.0
      %5693 = vmatprep.subr.mxu0 0.0
      %5694 = vmatpush1.msra.mxu0 0.0
      %5695 = vmatprep.subr.mxu0 0.0
      %5696 = vmatpush1.msra.mxu0 0.0
      %5697 = vmatprep.subr.mxu0 0.0
      %5698 = vmatpush1.msra.mxu0 0.0
      %5699 = vmatprep.subr.mxu0 0.0
      %5700 = vmatpush1.msra.mxu0 0.0
      %5701 = vmatprep.subr.mxu0 0.0
      %5702 = vmatpush1.msra.mxu0 0.0
      %5703 = vmatprep.subr.mxu0 0.0
      %5704 = vmatpush1.msra.mxu0 0.0
      %5705 = vmatprep.subr.mxu0 0.0
      %5706 = vmatpush1.msra.mxu0 0.0
      %5707 = vmatprep.subr.mxu0 0.0
      %5708 = vmatpush1.msra.mxu0 0.0
      %5709 = vmatprep.subr.mxu0 0.0
      %5710 = vmatpush1.msra.mxu0 0.0
      %5711 = vmatprep.subr.mxu0 0.0
      %5712 = vmatpush1.msra.mxu0 0.0
      %5713 = vmatprep.subr.mxu0 0.0
      %5714 = vmatpush1.msra.mxu0 0.0
      %5715 = vmatprep.subr.mxu0 0.0
      %5716 = vmatpush1.msra.mxu0 0.0
      %5717 = vmatprep.subr.mxu0 0.0
      %5718 = vmatpush1.msra.mxu0 0.0
      %5719 = vmatprep.subr.mxu0 0.0
      %5720 = vmatpush1.msra.mxu0 0.0
      %5721 = vmatprep.mubr.f32.mxu0 0.0
      %5722 = vmatmul.mubr.f32.gmra.mrb[0].mxu0 %v1436
      %v5723 = vpop.f32.mrb[0].mxu0
      %v5724 = vadd.f32 0.0, %v5723
      %v5725 = vpop.f32.mrb[0].mxu0
      %5726 = vmatprep.mubr.f32.mxu0 0.0
      %5727 = vmatmul.mubr.f32.gmra.mrb[0].mxu0 %v1439
      %v5728 = vpop.f32.mrb[0].mxu0
      %v5729 = vadd.f32 0.0, %v5728
      %v5730 = vpop.f32.mrb[0].mxu0
      %5731 = vmatprep.mubr.f32.mxu0 0.0
      %5732 = vmatmul.mubr.f32.gmra.mrb[0].mxu0 %v1442
      %v5733 = vpop.f32.mrb[0].mxu0
      %v5734 = vadd.f32 0.0, %v5733
      %v5735 = vpop.f32.mrb[0].mxu0
      %5736 = vmatprep.mubr.f32.mxu0 0.0
      %5737 = vmatmul.mubr.f32.gmra.mrb[0].mxu0 %v1445
      %v5738 = vpop.f32.mrb[0].mxu0
      %v5739 = vadd.f32 0.0, %v5738
      %v5740 = vpop.f32.mrb[0].mxu0
      %5741 = vmatprep.mubr.f32.mxu0 0.0
      %5742 = vmatmul.mubr.f32.gmra.mrb[0].mxu0 %v1448
      %v5743 = vpop.f32.mrb[0].mxu0
      %v5744 = vadd.f32 0.0, %v5743
      %v5745 = vpop.f32.mrb[0].mxu0
      %5746 = vmatprep.mubr.f32.mxu0 0.0
      %5747 = vmatmul.mubr.f32.gmra.mrb[0].mxu0 %v1451
      %v5748 = vpop.f32.mrb[0].mxu0
      %v5749 = vadd.f32 0.0, %v5748
      %v5750 = vpop.f32.mrb[0].mxu0
      %5751 = vmatprep.mubr.f32.mxu0 0.0
      %5752 = vmatmul.mubr.f32.gmra.mrb[0].mxu0 %v1454
      %v5753 = vpop.f32.mrb[0].mxu0
      %v5754 = vadd.f32 0.0, %v5753
      %v5755 = vpop.f32.mrb[0].mxu0
      %5756 = vmatprep.mubr.f32.mxu0 0.0
      %5757 = vmatmul.mubr.f32.gmra.mrb[0].mxu0 %v1457
      %v5758 = vpop.f32.mrb[0].mxu0
      %v5759 = vadd.f32 0.0, %v5758
      %v5760 = vpop.f32.mrb[0].mxu0
      %5761 = vmatprep.mubr.f32.mxu0 0.0
      %5762 = vmatmul.mubr.f32.gmra.mrb[0].mxu0 %v1460
      %v5763 = vpop.f32.mrb[0].mxu0
      %v5764 = vadd.f32 0.0, %v5763
      %v5765 = vpop.f32.mrb[0].mxu0
      %5766 = vmatprep.mubr.f32.mxu0 0.0
      %5767 = vmatmul.mubr.f32.gmra.mrb[0].mxu0 %v1463
      %v5768 = vpop.f32.mrb[0].mxu0
      %v5769 = vadd.f32 0.0, %v5768
      %v5770 = vpop.f32.mrb[0].mxu0
      %5771 = vmatprep.mubr.f32.mxu0 0.0
      %5772 = vmatmul.mubr.f32.gmra.mrb[0].mxu0 %v1466
      %v5773 = vpop.f32.mrb[0].mxu0
      %v5774 = vadd.f32 0.0, %v5773
      %v5775 = vpop.f32.mrb[0].mxu0
      %5776 = vmatprep.mubr.f32.mxu0 0.0
      %5777 = vmatmul.mubr.f32.gmra.mrb[0].mxu0 %v1469
      %v5778 = vpop.f32.mrb[0].mxu0
      %v5779 = vadd.f32 0.0, %v5778
      %v5780 = vpop.f32.mrb[0].mxu0
      %5781 = vmatprep.mubr.f32.mxu0 0.0
      %5782 = vmatmul.mubr.f32.gmra.mrb[0].mxu0 %v1472
      %v5783 = vpop.f32.mrb[0].mxu0
      %v5784 = vadd.f32 0.0, %v5783
      %v5785 = vpop.f32.mrb[0].mxu0
      %5786 = vmatprep.mubr.f32.mxu0 0.0
      %5787 = vmatmul.mubr.f32.gmra.mrb[0].mxu0 %v1475
      %v5788 = vpop.f32.mrb[0].mxu0
      %v5789 = vadd.f32 0.0, %v5788
      %v5790 = vpop.f32.mrb[0].mxu0
      %5791 = vdwg.mxu0
      %v5792 = vsub.f32 %v5352, %v5724
      %v5793 = vsub.f32 %v5355, %v5729
      %v5794 = vsub.f32 %v5360, %v5734
      %v5795 = vsub.f32 %v5363, %v5739
      %v5796 = vsub.f32 %v5368, %v5744
      %v5797 = vsub.f32 %v5371, %v5749
      %v5798 = vsub.f32 %v5376, %v5754
      %v5799 = vsub.f32 %v5379, %v5759
      %v5800 = vsub.f32 %v5384, %v5764
      %v5801 = vsub.f32 %v5387, %v5769
      %v5802 = vsub.f32 %v5392, %v5774
      %v5803 = vsub.f32 %v5395, %v5779
      %v5804 = vsub.f32 %v5400, %v5784
      %v5805 = vsub.f32 %v5403, %v5789
      %v5806 = vmul.f32 %v5792, %v5792
      %v5807 = vmul.f32 %v5793, %v5793
      %v5808 = vmul.f32 %v5794, %v5794
      %v5809 = vmul.f32 %v5795, %v5795
      %v5810 = vmul.f32 %v5796, %v5796
      %v5811 = vmul.f32 %v5797, %v5797
      %v5812 = vmul.f32 %v5798, %v5798
      %v5813 = vmul.f32 %v5799, %v5799
      %v5814 = vmul.f32 %v5800, %v5800
      %v5815 = vmul.f32 %v5801, %v5801
      %v5816 = vmul.f32 %v5802, %v5802
      %v5817 = vmul.f32 %v5803, %v5803
      %v5818 = vmul.f32 %v5804, %v5804
      %v5819 = vmul.f32 %v5805, %v5805
      %5820 = vmatprep.subr.mxu0 0.0
      %5821 = vmatpush1.msra.mxu0 %v5806
      %5822 = vmatprep.subr.mxu0 0.0
      %5823 = vmatpush1.msra.mxu0 %v5807
      %5824 = vmatprep.subr.mxu0 0.0
      %5825 = vmatpush1.msra.mxu0 %v5808
      %5826 = vmatprep.subr.mxu0 0.0
      %5827 = vmatpush1.msra.mxu0 %v5809
      %5828 = vmatprep.subr.mxu0 0.0
      %5829 = vmatpush1.msra.mxu0 %v5810
      %5830 = vmatprep.subr.mxu0 0.0
      %5831 = vmatpush1.msra.mxu0 %v5811
      %5832 = vmatprep.subr.mxu0 0.0
      %5833 = vmatpush1.msra.mxu0 %v5812
      %5834 = vmatprep.subr.mxu0 0.0
      %5835 = vmatpush1.msra.mxu0 %v5813
      %5836 = vmatprep.subr.mxu0 0.0
      %5837 = vmatpush1.msra.mxu0 %v5814
      %5838 = vmatprep.subr.mxu0 0.0
      %5839 = vmatpush1.msra.mxu0 %v5815
      %5840 = vmatprep.subr.mxu0 0.0
      %5841 = vmatpush1.msra.mxu0 %v5816
      %5842 = vmatprep.subr.mxu0 0.0
      %5843 = vmatpush1.msra.mxu0 %v5817
      %5844 = vmatprep.subr.mxu0 0.0
      %5845 = vmatpush1.msra.mxu0 %v5818
      %5846 = vmatprep.subr.mxu0 0.0
      %5847 = vmatpush1.msra.mxu0 %v5819
      %5848 = vmatprep.subr.mxu0 0.0
      %5849 = vmatpush1.msra.mxu0 0.0
      %5850 = vmatprep.subr.mxu0 0.0
      %5851 = vmatpush1.msra.mxu0 0.0
      %5852 = vmatprep.subr.mxu0 0.0
      %5853 = vmatpush1.msra.mxu0 0.0
      %5854 = vmatprep.subr.mxu0 0.0
      %5855 = vmatpush1.msra.mxu0 0.0
      %5856 = vmatprep.subr.mxu0 0.0
      %5857 = vmatpush1.msra.mxu0 0.0
      %5858 = vmatprep.subr.mxu0 0.0
      %5859 = vmatpush1.msra.mxu0 0.0
      %5860 = vmatprep.subr.mxu0 0.0
      %5861 = vmatpush1.msra.mxu0 0.0
      %5862 = vmatprep.subr.mxu0 0.0
      %5863 = vmatpush1.msra.mxu0 0.0
      %5864 = vmatprep.subr.mxu0 0.0
      %5865 = vmatpush1.msra.mxu0 0.0
      %5866 = vmatprep.subr.mxu0 0.0
      %5867 = vmatpush1.msra.mxu0 0.0
      %5868 = vmatprep.subr.mxu0 0.0
      %5869 = vmatpush1.msra.mxu0 0.0
      %5870 = vmatprep.subr.mxu0 0.0
      %5871 = vmatpush1.msra.mxu0 0.0
      %5872 = vmatprep.subr.mxu0 0.0
      %5873 = vmatpush1.msra.mxu0 0.0
      %5874 = vmatprep.subr.mxu0 0.0
      %5875 = vmatpush1.msra.mxu0 0.0
      %5876 = vmatprep.subr.mxu0 0.0
      %5877 = vmatpush1.msra.mxu0 0.0
      %5878 = vmatprep.subr.mxu0 0.0
      %5879 = vmatpush1.msra.mxu0 0.0
      %5880 = vmatprep.subr.mxu0 0.0
      %5881 = vmatpush1.msra.mxu0 0.0
      %5882 = vmatprep.subr.mxu0 0.0
      %5883 = vmatpush1.msra.mxu0 0.0
      %5884 = vmatprep.mubr.f32.mxu0 0.0
      %5885 = vmatmul.mubr.f32.gmra.mrb[0].mxu0 %v1195
      %v5886 = vpop.f32.mrb[0].mxu0
      %v5887 = vadd.f32 0.0, %v5886
      %v5888 = vpop.f32.mrb[0].mxu0
      %5889 = vmatprep.mubr.f32.mxu0 0.0
      %5890 = vmatmul.mubr.f32.gmra.mrb[0].mxu0 %v1198
      %v5891 = vpop.f32.mrb[0].mxu0
      %v5892 = vadd.f32 0.0, %v5891
      %v5893 = vpop.f32.mrb[0].mxu0
      %5894 = vdwg.mxu0
      %5895 = vmatprep.subr.mxu0 0.0
      %5896 = vmatpush1.msra.mxu0 %v1160
      %5897 = vmatprep.subr.mxu0 0.0
      %5898 = vmatpush1.msra.mxu0 %v1161
      %5899 = vmatprep.subr.mxu0 0.0
      %5900 = vmatpush1.msra.mxu0 %v1162
      %5901 = vmatprep.subr.mxu0 0.0
      %5902 = vmatpush1.msra.mxu0 %v1163
      %5903 = vmatprep.subr.mxu0 0.0
      %5904 = vmatpush1.msra.mxu0 %v1164
      %5905 = vmatprep.subr.mxu0 0.0
      %5906 = vmatpush1.msra.mxu0 %v1165
      %5907 = vmatprep.subr.mxu0 0.0
      %5908 = vmatpush1.msra.mxu0 %v1166
      %5909 = vmatprep.subr.mxu0 0.0
      %5910 = vmatpush1.msra.mxu0 %v1167
      %5911 = vmatprep.subr.mxu0 0.0
      %5912 = vmatpush1.msra.mxu0 %v1168
      %5913 = vmatprep.subr.mxu0 0.0
      %5914 = vmatpush1.msra.mxu0 %v1169
      %5915 = vmatprep.subr.mxu0 0.0
      %5916 = vmatpush1.msra.mxu0 %v1170
      %5917 = vmatprep.subr.mxu0 0.0
      %5918 = vmatpush1.msra.mxu0 %v1171
      %5919 = vmatprep.subr.mxu0 0.0
      %5920 = vmatpush1.msra.mxu0 %v1172
      %5921 = vmatprep.subr.mxu0 0.0
      %5922 = vmatpush1.msra.mxu0 %v1173
      %5923 = vmatprep.subr.mxu0 0.0
      %5924 = vmatpush1.msra.mxu0 %v1174
      %5925 = vmatprep.subr.mxu0 0.0
      %5926 = vmatpush1.msra.mxu0 %v1175
      %5927 = vmatprep.subr.mxu0 0.0
      %5928 = vmatpush1.msra.mxu0 0.0
      %5929 = vmatprep.subr.mxu0 0.0
      %5930 = vmatpush1.msra.mxu0 0.0
      %5931 = vmatprep.subr.mxu0 0.0
      %5932 = vmatpush1.msra.mxu0 0.0
      %5933 = vmatprep.subr.mxu0 0.0
      %5934 = vmatpush1.msra.mxu0 0.0
      %5935 = vmatprep.subr.mxu0 0.0
      %5936 = vmatpush1.msra.mxu0 0.0
      %5937 = vmatprep.subr.mxu0 0.0
      %5938 = vmatpush1.msra.mxu0 0.0
      %5939 = vmatprep.subr.mxu0 0.0
      %5940 = vmatpush1.msra.mxu0 0.0
      %5941 = vmatprep.subr.mxu0 0.0
      %5942 = vmatpush1.msra.mxu0 0.0
      %5943 = vmatprep.subr.mxu0 0.0
      %5944 = vmatpush1.msra.mxu0 0.0
      %5945 = vmatprep.subr.mxu0 0.0
      %5946 = vmatpush1.msra.mxu0 0.0
      %5947 = vmatprep.subr.mxu0 0.0
      %5948 = vmatpush1.msra.mxu0 0.0
      %5949 = vmatprep.subr.mxu0 0.0
      %5950 = vmatpush1.msra.mxu0 0.0
      %5951 = vmatprep.subr.mxu0 0.0
      %5952 = vmatpush1.msra.mxu0 0.0
      %5953 = vmatprep.subr.mxu0 0.0
      %5954 = vmatpush1.msra.mxu0 0.0
      %5955 = vmatprep.subr.mxu0 0.0
      %5956 = vmatpush1.msra.mxu0 0.0
      %5957 = vmatprep.subr.mxu0 0.0
      %5958 = vmatpush1.msra.mxu0 0.0
      %5959 = vmatprep.mubr.f32.mxu0 0.0
      %5960 = vmatmul.mubr.f32.gmra.mrb[0].mxu0 %v5887
      %v5961 = vpop.f32.mrb[0].mxu0
      %v5962 = vadd.f32 0.0, %v5961
      %v5963 = vpop.f32.mrb[0].mxu0
      %5964 = vmatprep.mubr.f32.mxu0 0.0
      %5965 = vmatmul.mubr.f32.gmra.mrb[0].mxu0 %v5892
      %v5966 = vpop.f32.mrb[0].mxu0
      %v5967 = vadd.f32 0.0, %v5966
      %v5968 = vpop.f32.mrb[0].mxu0
      %5969 = vdwg.mxu0
      %v5970 = vmul.f32 %v5962, 0.008928572
      %v5971 = vmul.f32 %v5967, 0.008928572
      %v5972 = vadd.f32 %v5970, 1e-05
      %v5973 = vadd.f32 %v5971, 1e-05
      %v5974 = vrsqrt.pop %v5972
      %v5975 = vrsqrt.pop %v5973
      %5977 = vset.pattern.permute.xlu0 0
      %5978 = vperm.xlu0 %5977, %v5422
      %v5979 = vpop.permute.xlu0 %5978
      %5982 = vset.pattern.permute.xlu0 0
      %5983 = vperm.xlu0 %5982, %v5423
      %v5984 = vpop.permute.xlu0 %5983
      %v5986 = vmul.f32 %v5974, %v5979
      %v5987 = vmul.f32 %v5975, %v5984
      %v5989 = vsel %vm1352, %v5986, 0
      %v5992 = vsel %vm1352, %v5987, 0
      %5994 = vmatprep.subr.mxu0 0.0
      %5995 = vmatpush1.msra.mxu0 %v1176
      %5996 = vmatprep.subr.mxu0 0.0
      %5997 = vmatpush1.msra.mxu0 0.0
      %5998 = vmatprep.subr.mxu0 0.0
      %5999 = vmatpush1.msra.mxu0 0.0
      %6000 = vmatprep.subr.mxu0 0.0
      %6001 = vmatpush1.msra.mxu0 0.0
      %6002 = vmatprep.subr.mxu0 0.0
      %6003 = vmatpush1.msra.mxu0 0.0
      %6004 = vmatprep.subr.mxu0 0.0
      %6005 = vmatpush1.msra.mxu0 0.0
      %6006 = vmatprep.subr.mxu0 0.0
      %6007 = vmatpush1.msra.mxu0 0.0
      %6008 = vmatprep.subr.mxu0 0.0
      %6009 = vmatpush1.msra.mxu0 0.0
      %6010 = vmatprep.subr.mxu0 0.0
      %6011 = vmatpush1.msra.mxu0 0.0
      %6012 = vmatprep.subr.mxu0 0.0
      %6013 = vmatpush1.msra.mxu0 0.0
      %6014 = vmatprep.subr.mxu0 0.0
      %6015 = vmatpush1.msra.mxu0 0.0
      %6016 = vmatprep.subr.mxu0 0.0
      %6017 = vmatpush1.msra.mxu0 0.0
      %6018 = vmatprep.subr.mxu0 0.0
      %6019 = vmatpush1.msra.mxu0 0.0
      %6020 = vmatprep.subr.mxu0 0.0
      %6021 = vmatpush1.msra.mxu0 0.0
      %6022 = vmatprep.subr.mxu0 0.0
      %6023 = vmatpush1.msra.mxu0 0.0
      %6024 = vmatprep.subr.mxu0 0.0
      %6025 = vmatpush1.msra.mxu0 0.0
      %6026 = vmatprep.subr.mxu0 0.0
      %6027 = vmatpush1.msra.mxu0 0.0
      %6028 = vmatprep.subr.mxu0 0.0
      %6029 = vmatpush1.msra.mxu0 0.0
      %6030 = vmatprep.subr.mxu0 0.0
      %6031 = vmatpush1.msra.mxu0 0.0
      %6032 = vmatprep.subr.mxu0 0.0
      %6033 = vmatpush1.msra.mxu0 0.0
      %6034 = vmatprep.subr.mxu0 0.0
      %6035 = vmatpush1.msra.mxu0 0.0
      %6036 = vmatprep.subr.mxu0 0.0
      %6037 = vmatpush1.msra.mxu0 0.0
      %6038 = vmatprep.subr.mxu0 0.0
      %6039 = vmatpush1.msra.mxu0 0.0
      %6040 = vmatprep.subr.mxu0 0.0
      %6041 = vmatpush1.msra.mxu0 0.0
      %6042 = vmatprep.subr.mxu0 0.0
      %6043 = vmatpush1.msra.mxu0 0.0
      %6044 = vmatprep.subr.mxu0 0.0
      %6045 = vmatpush1.msra.mxu0 0.0
      %6046 = vmatprep.subr.mxu0 0.0
      %6047 = vmatpush1.msra.mxu0 0.0
      %6048 = vmatprep.subr.mxu0 0.0
      %6049 = vmatpush1.msra.mxu0 0.0
      %6050 = vmatprep.subr.mxu0 0.0
      %6051 = vmatpush1.msra.mxu0 0.0
      %6052 = vmatprep.subr.mxu0 0.0
      %6053 = vmatpush1.msra.mxu0 0.0
      %6054 = vmatprep.subr.mxu0 0.0
      %6055 = vmatpush1.msra.mxu0 0.0
      %6056 = vmatprep.subr.mxu0 0.0
      %6057 = vmatpush1.msra.mxu0 0.0
      %6058 = vmatprep.mubr.f32.mxu0 0.0
      %6059 = vmatmul.mubr.f32.gmra.mrb[0].mxu0 %v5989
      %v6060 = vpop.f32.mrb[0].mxu0
      %v6061 = vadd.f32 0.0, %v6060
      %v6062 = vpop.f32.mrb[0].mxu0
      %6063 = vmatprep.mubr.f32.mxu0 0.0
      %6064 = vmatmul.mubr.f32.gmra.mrb[0].mxu0 %v5992
      %v6065 = vpop.f32.mrb[0].mxu0
      %v6066 = vadd.f32 0.0, %v6065
      %v6067 = vpop.f32.mrb[0].mxu0
      %6068 = vdwg.mxu0
      %6069 = vmatprep.subr.mxu0 0.0
      %6070 = vmatpush1.msra.mxu0 %v6061
      %6071 = vmatprep.subr.mxu0 0.0
      %6072 = vmatpush1.msra.mxu0 %v6066
      %6073 = vmatprep.subr.mxu0 0.0
      %6074 = vmatpush1.msra.mxu0 0.0
      %6075 = vmatprep.subr.mxu0 0.0
      %6076 = vmatpush1.msra.mxu0 0.0
      %6077 = vmatprep.subr.mxu0 0.0
      %6078 = vmatpush1.msra.mxu0 0.0
      %6079 = vmatprep.subr.mxu0 0.0
      %6080 = vmatpush1.msra.mxu0 0.0
      %6081 = vmatprep.subr.mxu0 0.0
      %6082 = vmatpush1.msra.mxu0 0.0
      %6083 = vmatprep.subr.mxu0 0.0
      %6084 = vmatpush1.msra.mxu0 0.0
      %6085 = vmatprep.subr.mxu0 0.0
      %6086 = vmatpush1.msra.mxu0 0.0
      %6087 = vmatprep.subr.mxu0 0.0
      %6088 = vmatpush1.msra.mxu0 0.0
      %6089 = vmatprep.subr.mxu0 0.0
      %6090 = vmatpush1.msra.mxu0 0.0
      %6091 = vmatprep.subr.mxu0 0.0
      %6092 = vmatpush1.msra.mxu0 0.0
      %6093 = vmatprep.subr.mxu0 0.0
      %6094 = vmatpush1.msra.mxu0 0.0
      %6095 = vmatprep.subr.mxu0 0.0
      %6096 = vmatpush1.msra.mxu0 0.0
      %6097 = vmatprep.subr.mxu0 0.0
      %6098 = vmatpush1.msra.mxu0 0.0
      %6099 = vmatprep.subr.mxu0 0.0
      %6100 = vmatpush1.msra.mxu0 0.0
      %6101 = vmatprep.subr.mxu0 0.0
      %6102 = vmatpush1.msra.mxu0 0.0
      %6103 = vmatprep.subr.mxu0 0.0
      %6104 = vmatpush1.msra.mxu0 0.0
      %6105 = vmatprep.subr.mxu0 0.0
      %6106 = vmatpush1.msra.mxu0 0.0
      %6107 = vmatprep.subr.mxu0 0.0
      %6108 = vmatpush1.msra.mxu0 0.0
      %6109 = vmatprep.subr.mxu0 0.0
      %6110 = vmatpush1.msra.mxu0 0.0
      %6111 = vmatprep.subr.mxu0 0.0
      %6112 = vmatpush1.msra.mxu0 0.0
      %6113 = vmatprep.subr.mxu0 0.0
      %6114 = vmatpush1.msra.mxu0 0.0
      %6115 = vmatprep.subr.mxu0 0.0
      %6116 = vmatpush1.msra.mxu0 0.0
      %6117 = vmatprep.subr.mxu0 0.0
      %6118 = vmatpush1.msra.mxu0 0.0
      %6119 = vmatprep.subr.mxu0 0.0
      %6120 = vmatpush1.msra.mxu0 0.0
      %6121 = vmatprep.subr.mxu0 0.0
      %6122 = vmatpush1.msra.mxu0 0.0
      %6123 = vmatprep.subr.mxu0 0.0
      %6124 = vmatpush1.msra.mxu0 0.0
      %6125 = vmatprep.subr.mxu0 0.0
      %6126 = vmatpush1.msra.mxu0 0.0
      %6127 = vmatprep.subr.mxu0 0.0
      %6128 = vmatpush1.msra.mxu0 0.0
      %6129 = vmatprep.subr.mxu0 0.0
      %6130 = vmatpush1.msra.mxu0 0.0
      %6131 = vmatprep.subr.mxu0 0.0
      %6132 = vmatpush1.msra.mxu0 0.0
      %6133 = vmatprep.mubr.f32.mxu0 0.0
      %6134 = vmatmul.mubr.f32.gmra.mrb[0].mxu0 %v1436
      %v6135 = vpop.f32.mrb[0].mxu0
      %v6136 = vadd.f32 0.0, %v6135
      %v6137 = vpop.f32.mrb[0].mxu0
      %6138 = vmatprep.mubr.f32.mxu0 0.0
      %6139 = vmatmul.mubr.f32.gmra.mrb[0].mxu0 %v1439
      %v6140 = vpop.f32.mrb[0].mxu0
      %v6141 = vadd.f32 0.0, %v6140
      %v6142 = vpop.f32.mrb[0].mxu0
      %6143 = vmatprep.mubr.f32.mxu0 0.0
      %6144 = vmatmul.mubr.f32.gmra.mrb[0].mxu0 %v1442
      %v6145 = vpop.f32.mrb[0].mxu0
      %v6146 = vadd.f32 0.0, %v6145
      %v6147 = vpop.f32.mrb[0].mxu0
      %6148 = vmatprep.mubr.f32.mxu0 0.0
      %6149 = vmatmul.mubr.f32.gmra.mrb[0].mxu0 %v1445
      %v6150 = vpop.f32.mrb[0].mxu0
      %v6151 = vadd.f32 0.0, %v6150
      %v6152 = vpop.f32.mrb[0].mxu0
      %6153 = vmatprep.mubr.f32.mxu0 0.0
      %6154 = vmatmul.mubr.f32.gmra.mrb[0].mxu0 %v1448
      %v6155 = vpop.f32.mrb[0].mxu0
      %v6156 = vadd.f32 0.0, %v6155
      %v6157 = vpop.f32.mrb[0].mxu0
      %6158 = vmatprep.mubr.f32.mxu0 0.0
      %6159 = vmatmul.mubr.f32.gmra.mrb[0].mxu0 %v1451
      %v6160 = vpop.f32.mrb[0].mxu0
      %v6161 = vadd.f32 0.0, %v6160
      %v6162 = vpop.f32.mrb[0].mxu0
      %6163 = vmatprep.mubr.f32.mxu0 0.0
      %6164 = vmatmul.mubr.f32.gmra.mrb[0].mxu0 %v1454
      %v6165 = vpop.f32.mrb[0].mxu0
      %v6166 = vadd.f32 0.0, %v6165
      %v6167 = vpop.f32.mrb[0].mxu0
      %6168 = vmatprep.mubr.f32.mxu0 0.0
      %6169 = vmatmul.mubr.f32.gmra.mrb[0].mxu0 %v1457
      %v6170 = vpop.f32.mrb[0].mxu0
      %v6171 = vadd.f32 0.0, %v6170
      %v6172 = vpop.f32.mrb[0].mxu0
      %6173 = vmatprep.mubr.f32.mxu0 0.0
      %6174 = vmatmul.mubr.f32.gmra.mrb[0].mxu0 %v1460
      %v6175 = vpop.f32.mrb[0].mxu0
      %v6176 = vadd.f32 0.0, %v6175
      %v6177 = vpop.f32.mrb[0].mxu0
      %6178 = vmatprep.mubr.f32.mxu0 0.0
      %6179 = vmatmul.mubr.f32.gmra.mrb[0].mxu0 %v1463
      %v6180 = vpop.f32.mrb[0].mxu0
      %v6181 = vadd.f32 0.0, %v6180
      %v6182 = vpop.f32.mrb[0].mxu0
      %6183 = vmatprep.mubr.f32.mxu0 0.0
      %6184 = vmatmul.mubr.f32.gmra.mrb[0].mxu0 %v1466
      %v6185 = vpop.f32.mrb[0].mxu0
      %v6186 = vadd.f32 0.0, %v6185
      %v6187 = vpop.f32.mrb[0].mxu0
      %6188 = vmatprep.mubr.f32.mxu0 0.0
      %6189 = vmatmul.mubr.f32.gmra.mrb[0].mxu0 %v1469
      %v6190 = vpop.f32.mrb[0].mxu0
      %v6191 = vadd.f32 0.0, %v6190
      %v6192 = vpop.f32.mrb[0].mxu0
      %6193 = vmatprep.mubr.f32.mxu0 0.0
      %6194 = vmatmul.mubr.f32.gmra.mrb[0].mxu0 %v1472
      %v6195 = vpop.f32.mrb[0].mxu0
      %v6196 = vadd.f32 0.0, %v6195
      %v6197 = vpop.f32.mrb[0].mxu0
      %6198 = vmatprep.mubr.f32.mxu0 0.0
      %6199 = vmatmul.mubr.f32.gmra.mrb[0].mxu0 %v1475
      %v6200 = vpop.f32.mrb[0].mxu0
      %v6201 = vadd.f32 0.0, %v6200
      %v6202 = vpop.f32.mrb[0].mxu0
      %6203 = vdwg.mxu0
      %v6204 = vmul.f32 %v5792, %v6136
      %v6205 = vmul.f32 %v5793, %v6141
      %v6206 = vmul.f32 %v5794, %v6146
      %v6207 = vmul.f32 %v5795, %v6151
      %v6208 = vmul.f32 %v5796, %v6156
      %v6209 = vmul.f32 %v5797, %v6161
      %v6210 = vmul.f32 %v5798, %v6166
      %v6211 = vmul.f32 %v5799, %v6171
      %v6212 = vmul.f32 %v5800, %v6176
      %v6213 = vmul.f32 %v5801, %v6181
      %v6214 = vmul.f32 %v5802, %v6186
      %v6215 = vmul.f32 %v5803, %v6191
      %v6216 = vmul.f32 %v5804, %v6196
      %v6217 = vmul.f32 %v5805, %v6201
      %6219 = vset.pattern.permute.xlu0 0
      %6220 = vperm.xlu0 %6219, %v5407
      %v6221 = vpop.permute.xlu0 %6220
      %6224 = vset.pattern.permute.xlu0 0
      %6225 = vperm.xlu0 %6224, %v5408
      %v6226 = vpop.permute.xlu0 %6225
      %6229 = vset.pattern.permute.xlu0 0
      %6230 = vperm.xlu0 %6229, %v5409
      %v6231 = vpop.permute.xlu0 %6230
      %6234 = vset.pattern.permute.xlu0 0
      %6235 = vperm.xlu0 %6234, %v5410
      %v6236 = vpop.permute.xlu0 %6235
      %6239 = vset.pattern.permute.xlu0 0
      %6240 = vperm.xlu0 %6239, %v5411
      %v6241 = vpop.permute.xlu0 %6240
      %6244 = vset.pattern.permute.xlu0 0
      %6245 = vperm.xlu0 %6244, %v5412
      %v6246 = vpop.permute.xlu0 %6245
      %6249 = vset.pattern.permute.xlu0 0
      %6250 = vperm.xlu0 %6249, %v5413
      %v6251 = vpop.permute.xlu0 %6250
      %6254 = vset.pattern.permute.xlu0 0
      %6255 = vperm.xlu0 %6254, %v5414
      %v6256 = vpop.permute.xlu0 %6255
      %6259 = vset.pattern.permute.xlu0 0
      %6260 = vperm.xlu0 %6259, %v5415
      %v6261 = vpop.permute.xlu0 %6260
      %6264 = vset.pattern.permute.xlu0 0
      %6265 = vperm.xlu0 %6264, %v5416
      %v6266 = vpop.permute.xlu0 %6265
      %6269 = vset.pattern.permute.xlu0 0
      %6270 = vperm.xlu0 %6269, %v5417
      %v6271 = vpop.permute.xlu0 %6270
      %6274 = vset.pattern.permute.xlu0 0
      %6275 = vperm.xlu0 %6274, %v5418
      %v6276 = vpop.permute.xlu0 %6275
      %6279 = vset.pattern.permute.xlu0 0
      %6280 = vperm.xlu0 %6279, %v5419
      %v6281 = vpop.permute.xlu0 %6280
      %6284 = vset.pattern.permute.xlu0 0
      %6285 = vperm.xlu0 %6284, %v5420
      %v6286 = vpop.permute.xlu0 %6285
      %v6288 = vadd.f32 %v6204, %v6221
      %v6289 = vadd.f32 %v6205, %v6226
      %v6290 = vadd.f32 %v6206, %v6231
      %v6291 = vadd.f32 %v6207, %v6236
      %v6292 = vadd.f32 %v6208, %v6241
      %v6293 = vadd.f32 %v6209, %v6246
      %v6294 = vadd.f32 %v6210, %v6251
      %v6295 = vadd.f32 %v6211, %v6256
      %v6296 = vadd.f32 %v6212, %v6261
      %v6297 = vadd.f32 %v6213, %v6266
      %v6298 = vadd.f32 %v6214, %v6271
      %v6299 = vadd.f32 %v6215, %v6276
      %v6300 = vadd.f32 %v6216, %v6281
      %v6301 = vadd.f32 %v6217, %v6286
      %vm6302 = vcmp.ge.f32.partialorder %v6288, 0.0
      %vm6303 = vcmp.ge.f32.partialorder %v6289, 0.0
      %vm6304 = vcmp.ge.f32.partialorder %v6290, 0.0
      %vm6305 = vcmp.ge.f32.partialorder %v6291, 0.0
      %vm6306 = vcmp.ge.f32.partialorder %v6292, 0.0
      %vm6307 = vcmp.ge.f32.partialorder %v6293, 0.0
      %vm6308 = vcmp.ge.f32.partialorder %v6294, 0.0
      %vm6309 = vcmp.ge.f32.partialorder %v6295, 0.0
      %vm6310 = vcmp.ge.f32.partialorder %v6296, 0.0
      %vm6311 = vcmp.ge.f32.partialorder %v6297, 0.0
      %vm6312 = vcmp.ge.f32.partialorder %v6298, 0.0
      %vm6313 = vcmp.ge.f32.partialorder %v6299, 0.0
      %vm6314 = vcmp.ge.f32.partialorder %v6300, 0.0
      %vm6315 = vcmp.ge.f32.partialorder %v6301, 0.0
      %6316 = vset.pattern.permute.xlu0 1
      %6317 = vperm.xlu0 %6316, %v5407
      %v6318 = vpop.permute.xlu0 %6317
      %6320 = vset.pattern.permute.xlu0 1
      %6321 = vperm.xlu0 %6320, %v5408
      %v6322 = vpop.permute.xlu0 %6321
      %6324 = vset.pattern.permute.xlu0 1
      %6325 = vperm.xlu0 %6324, %v5409
      %v6326 = vpop.permute.xlu0 %6325
      %6328 = vset.pattern.permute.xlu0 1
      %6329 = vperm.xlu0 %6328, %v5410
      %v6330 = vpop.permute.xlu0 %6329
      %6332 = vset.pattern.permute.xlu0 1
      %6333 = vperm.xlu0 %6332, %v5411
      %v6334 = vpop.permute.xlu0 %6333
      %6336 = vset.pattern.permute.xlu0 1
      %6337 = vperm.xlu0 %6336, %v5412
      %v6338 = vpop.permute.xlu0 %6337
      %6340 = vset.pattern.permute.xlu0 1
      %6341 = vperm.xlu0 %6340, %v5413
      %v6342 = vpop.permute.xlu0 %6341
      %6344 = vset.pattern.permute.xlu0 1
      %6345 = vperm.xlu0 %6344, %v5414
      %v6346 = vpop.permute.xlu0 %6345
      %6348 = vset.pattern.permute.xlu0 1
      %6349 = vperm.xlu0 %6348, %v5415
      %v6350 = vpop.permute.xlu0 %6349
      %6352 = vset.pattern.permute.xlu0 1
      %6353 = vperm.xlu0 %6352, %v5416
      %v6354 = vpop.permute.xlu0 %6353
      %6356 = vset.pattern.permute.xlu0 1
      %6357 = vperm.xlu0 %6356, %v5417
      %v6358 = vpop.permute.xlu0 %6357
      %6360 = vset.pattern.permute.xlu0 1
      %6361 = vperm.xlu0 %6360, %v5418
      %v6362 = vpop.permute.xlu0 %6361
      %6364 = vset.pattern.permute.xlu0 1
      %6365 = vperm.xlu0 %6364, %v5419
      %v6366 = vpop.permute.xlu0 %6365
      %6368 = vset.pattern.permute.xlu0 1
      %6369 = vperm.xlu0 %6368, %v5420
      %v6370 = vpop.permute.xlu0 %6369
      %v6372 = vmul.f32 %v6318, %v6288
      %v6373 = vmul.f32 %v6322, %v6289
      %v6374 = vmul.f32 %v6326, %v6290
      %v6375 = vmul.f32 %v6330, %v6291
      %v6376 = vmul.f32 %v6334, %v6292
      %v6377 = vmul.f32 %v6338, %v6293
      %v6378 = vmul.f32 %v6342, %v6294
      %v6379 = vmul.f32 %v6346, %v6295
      %v6380 = vmul.f32 %v6350, %v6296
      %v6381 = vmul.f32 %v6354, %v6297
      %v6382 = vmul.f32 %v6358, %v6298
      %v6383 = vmul.f32 %v6362, %v6299
      %v6384 = vmul.f32 %v6366, %v6300
      %v6385 = vmul.f32 %v6370, %v6301
      %v6386 = vsel %vm6302, %v6288, %v6372
      %v6387 = vsel %vm6303, %v6289, %v6373
      %v6388 = vsel %vm6304, %v6290, %v6374
      %v6389 = vsel %vm6305, %v6291, %v6375
      %v6390 = vsel %vm6306, %v6292, %v6376
      %v6391 = vsel %vm6307, %v6293, %v6377
      %v6392 = vsel %vm6308, %v6294, %v6378
      %v6393 = vsel %vm6309, %v6295, %v6379
      %v6394 = vsel %vm6310, %v6296, %v6380
      %v6395 = vsel %vm6311, %v6297, %v6381
      %v6396 = vsel %vm6312, %v6298, %v6382
      %v6397 = vsel %vm6313, %v6299, %v6383
      %v6398 = vsel %vm6314, %v6300, %v6384
      %v6399 = vsel %vm6315, %v6301, %v6385
      %v6400 = vadd.f32 %v2206, %v6386
      %v6401 = vadd.f32 %v2207, %v6387
      %v6402 = vadd.f32 %v2208, %v6388
      %v6403 = vadd.f32 %v2209, %v6389
      %v6404 = vadd.f32 %v2210, %v6390
      %v6405 = vadd.f32 %v2211, %v6391
      %v6406 = vadd.f32 %v2212, %v6392
      %v6407 = vadd.f32 %v2213, %v6393
      %v6408 = vadd.f32 %v2214, %v6394
      %v6409 = vadd.f32 %v2215, %v6395
      %v6410 = vadd.f32 %v2216, %v6396
      %v6411 = vadd.f32 %v2217, %v6397
      %v6412 = vadd.f32 %v2218, %v6398
      %v6413 = vadd.f32 %v2219, %v6399
      %6414 = vst [vmem:[%s575] sm:$0xff] %v6400
      %6415 = vst [vmem:[%s575 + $0x8] sm:$0xff] %v6401
      %6416 = vst [vmem:[%s575 + $0x10] sm:$0xff] %v6402
      %6417 = vst [vmem:[%s575 + $0x18] sm:$0xff] %v6403
      %6418 = vst [vmem:[%s575 + $0x20] sm:$0xff] %v6404
      %6419 = vst [vmem:[%s575 + $0x28] sm:$0xff] %v6405
      %6420 = vst [vmem:[%s575 + $0x30] sm:$0xff] %v6406
      %6421 = vst [vmem:[%s575 + $0x38] sm:$0xff] %v6407
      %6422 = vst [vmem:[%s575 + $0x40] sm:$0xff] %v6408
      %6423 = vst [vmem:[%s575 + $0x48] sm:$0xff] %v6409
      %6424 = vst [vmem:[%s575 + $0x50] sm:$0xff] %v6410
      %6425 = vst [vmem:[%s575 + $0x58] sm:$0xff] %v6411
      %6426 = vst [vmem:[%s575 + $0x60] sm:$0xff] %v6412
      %6427 = vst [vmem:[%s575 + $0x68] sm:$0xff] %v6413
      %p6428 = scmp.lt.s32.totalorder %s29, 1
      %s6429 = scalar_select %p6428, %s29, 1
      %s6430 = smul.addr %s6429, 14
      %s6431 = smul.addr %s6430, 8
      %s6432 = scalar_lea.vmem %s18, %s6431
      // Predicated region
      $region93: #{forward.1} parent=91 // pred_check
        %p6433 = pneg %p430
      $region94: #{forward.1} parent=91 // pred_check_branch
        %6435 = sbr.rel (%p6433) target = $region96
      $region95: #{forward.1} parent=91 // pred_region
        _
      $region96: #{forward.1} parent=91 // pred_fallthru
        _
    $region92: #{forward.1} parent=5 // pred_fallthru
      _
    %p6436 = scmp.le.s32.totalorder 2, %s24
    // Predicated region
    $region97: #{forward.1} parent=5 // pred_check
      %p6437 = pneg %p6436
    $region98: #{forward.1} parent=5 // pred_check_branch
      %6439 = sbr.rel (%p6437) target = $region100
    $region99: #{forward.1} parent=5 // pred_region
      %s6440 = ssub.s32 %s24, 2
      // Predicated region
      $region101: #{forward.1} parent=99 // pred_check
        %p6441 = pneg %p436
      $region102: #{forward.1} parent=99 // pred_check_branch
        %6443 = sbr.rel (%p6441) target = $region104
      $region103: #{forward.1} parent=99 // pred_region
        %p6444 = scmp.lt.s32.totalorder %s30, 1
        %s6445 = scalar_select %p6444, %s30, 1
        %s6446 = smul.addr %s6445, 14
        %s6447 = smul.addr %s6446, 8
        %s6448 = scalar_lea.vmem %s18, %s6447
      $region104: #{forward.1} parent=99 // pred_fallthru
        _
    $region100: #{forward.1} parent=5 // pred_fallthru
      _
  $region6: #{forward.1} parent=0 // loop_footer
    %s28 = sadd.s32 1, %s24
  $region7: #{forward.1} parent=0 // loop_footer_branch
    %23 = sbr.rel target = $region3
  $region8: #{forward.1} parent=0 // loop_exit
    _

</llo_original>
